<compile_context>
chip_gen: v7x
topology: tpu7x:2x2x1
jax: 0.10.0
libtpu: 0.0.40
codegen_flags: <defaults>
</compile_context>

<pallas_src>
import functools

import jax
import jax.numpy as jnp
from jax.experimental import pallas as pl
from jax.experimental.pallas import tpu as pltpu


def _round_up(x, m):
    return (x + m - 1) // m * m


# ----------------------------- Pallas kernels -----------------------------

def _convT_bn_relu_kernel(a_ref, b_ref, gamma_ref, beta_ref, o_ref,
                          sum_ref, sq_ref, *, tm, mp, cnt, eps):
    """Fused ConvT-matmul + BatchNorm (batch stats) + ReLU for one layer.

    o_ref is the ENTIRE (P*Mp, Np) activation, VMEM-resident across the grid
    (constant-index output block).  Grid = (phase, row-tile): each step writes
    its matmul tile into o_ref and accumulates column sums; the last step
    finalizes mean/var and applies the affine + ReLU in place.
    """
    p = pl.program_id(0)
    i = pl.program_id(1)
    np_ = o_ref.shape[-1]

    @pl.when((p == 0) & (i == 0))
    def _():
        sum_ref[...] = jnp.zeros_like(sum_ref)
        sq_ref[...] = jnp.zeros_like(sq_ref)

    # Matmul + stats in 256-row chunks: bounds the live f32 set (~32 vregs)
    # so spill stores never contend with the y / accumulator stores (v5e has
    # a single vector-store slot).
    ch = 256 if tm > 256 else tm
    base = p * mp + i * tm
    for c in range(tm // ch):
        start = pl.multiple_of(base + c * ch, ch)
        y = jnp.dot(a_ref[c * ch:(c + 1) * ch, :], b_ref[...],
                    preferred_element_type=jnp.float32)
        o_ref[pl.ds(start, ch), :] = y.astype(o_ref.dtype)
        yr = y.reshape(ch // 8, 8, np_)           # sublane-resident partials
        sum_ref[...] += jnp.sum(yr, axis=0)
        sq_ref[...] += jnp.sum(yr * yr, axis=0)

    @pl.when((p == pl.num_programs(0) - 1) & (i == pl.num_programs(1) - 1))
    def _():
        mean = jnp.sum(sum_ref[...], axis=0, keepdims=True) / cnt
        var = jnp.maximum(
            jnp.sum(sq_ref[...], axis=0, keepdims=True) / cnt - mean * mean,
            0.0)
        inv = jax.lax.rsqrt(var + eps)
        scale = gamma_ref[...] * inv                    # (1, Np)
        shift = beta_ref[...] - mean * scale            # (1, Np)
        ch2 = 256 if mp > 256 else mp
        n_phase = o_ref.shape[0] // mp
        for pp in range(n_phase):
            for c in range(mp // ch2):
                s0 = pp * mp + c * ch2
                v = o_ref[s0:s0 + ch2, :].astype(jnp.float32) * scale + shift
                o_ref[s0:s0 + ch2, :] = jnp.maximum(v, 0.0).astype(o_ref.dtype)


def _convT_tanh_kernel(a_ref, b_ref, o_ref, *, tm):
    """Stats-free ConvT-matmul with tanh fused in the epilogue (final layer)."""
    ch = 256 if tm > 256 else tm
    for c in range(tm // ch):
        y = jnp.dot(a_ref[c * ch:(c + 1) * ch, :], b_ref[...],
                    preferred_element_type=jnp.float32)
        o_ref[c * ch:(c + 1) * ch, :] = jnp.tanh(y).astype(o_ref.dtype)


# ----------------------------- Pallas wrappers -----------------------------

def fused_convT_bn_relu(a, b, gamma_p, beta_p, cnt, eps, tm):
    """a: (P, Mp, Kp) bf16, b: (P, Kp, Np) bf16, gamma_p/beta_p: (1, Np) f32.
    Returns the BN-normalized + ReLU activation, (P, Mp, Np) bf16."""
    P, Mp, Kp = a.shape
    _, _, Np = b.shape
    kern = functools.partial(_convT_bn_relu_kernel, tm=tm, mp=Mp,
                             cnt=cnt, eps=eps)
    out2d = pl.pallas_call(
        kern,
        out_shape=jax.ShapeDtypeStruct((P * Mp, Np), jnp.bfloat16),
        grid=(P, Mp // tm),
        in_specs=[pl.BlockSpec((None, tm, Kp), lambda p, i: (p, i, 0)),
                  pl.BlockSpec((None, Kp, Np), lambda p, i: (p, 0, 0)),
                  pl.BlockSpec((1, Np), lambda p, i: (0, 0)),
                  pl.BlockSpec((1, Np), lambda p, i: (0, 0))],
        # Whole activation resident in VMEM (constant block index): written
        # tile-by-tile over the grid, normalized in place at the last step,
        # then written back to HBM once.
        out_specs=pl.BlockSpec((P * Mp, Np), lambda p, i: (0, 0)),
        scratch_shapes=[pltpu.VMEM((8, Np), jnp.float32),
                        pltpu.VMEM((8, Np), jnp.float32)],
        compiler_params=pltpu.CompilerParams(
            dimension_semantics=("arbitrary", "arbitrary")),
    )(a, b, gamma_p, beta_p)
    return out2d.reshape(P, Mp, Np)


def convT_tanh(a, b, tm):
    P, Mp, Kp = a.shape
    _, _, Np = b.shape
    kern = functools.partial(_convT_tanh_kernel, tm=tm)
    return pl.pallas_call(
        kern,
        out_shape=jax.ShapeDtypeStruct((P, Mp, Np), jnp.bfloat16),
        grid=(P, Mp // tm),
        in_specs=[pl.BlockSpec((None, tm, Kp), lambda p, i: (p, i, 0)),
                  pl.BlockSpec((None, Kp, Np), lambda p, i: (p, 0, 0))],
        out_specs=pl.BlockSpec((None, tm, Np), lambda p, i: (p, i, 0)),
        compiler_params=pltpu.CompilerParams(
            dimension_semantics=("parallel", "parallel")),  # v7x: 2 TCs
    )(a, b)


# ----------------------------- im2col glue -----------------------------

def _pad_last(x, n):
    c = x.shape[-1]
    if n > c:
        x = jnp.pad(x, [(0, 0)] * (x.ndim - 1) + [(0, n - c)])
    return x


def _build_stride1(x, w, np_pad):
    """ConvTranspose2d(k=4, stride=1, padding=0) as flipped-kernel conv.

    x: (N, H, W, Ci) bf16; w: (Ci, Co, 4, 4) f32.
    Returns A (1, M, Kp) bf16, B (1, Kp, Np) bf16, output spatial (N, OH, OW).
    """
    N, H, W, ci_x = x.shape
    ci_w, Co, k, _ = w.shape
    ci_pad = _round_up(max(ci_x, ci_w), max(1, 128 // (k * k)))
    pad = k - 1                                     # k - 1 - padding, padding=0
    xp = jnp.pad(_pad_last(x, ci_pad), ((0, 0), (pad, pad), (pad, pad), (0, 0)))
    OH, OW = H + k - 1, W + k - 1

    cols = [xp[:, jh:jh + OH, jw:jw + OW, :]
            for jh in range(k) for jw in range(k)]
    a = jnp.stack(cols, axis=3).reshape(N * OH * OW, k * k * ci_pad)

    taps = [(k - 1 - jh, k - 1 - jw) for jh in range(k) for jw in range(k)]
    wt = jnp.stack([w[:, :, kh, kw] for kh, kw in taps], axis=0)   # (T, Ci, Co)
    wt = jnp.pad(wt, ((0, 0), (0, ci_pad - ci_w), (0, np_pad - Co)))
    b = wt.reshape(k * k * ci_pad, np_pad).astype(jnp.bfloat16)
    return a[None], b[None], (N, OH, OW)


# (input-row offset, kernel row index) pairs per output-row phase for
# ConvTranspose2d(kernel=4, stride=2, padding=1): oy = 2*iy - 1 + kh.
_PHASE_TAPS = (((-1, 3), (0, 1)),    # even output rows/cols
               ((0, 2), (1, 0)))     # odd  output rows/cols


def _build_stride2(x, w, np_pad):
    """ConvTranspose2d(k=4, stride=2, padding=1) as 4 sub-pixel phases.

    Each phase only sees 2x2 kernel taps, so K = 4*Ci (vs 16*Ci naive).
    Returns A (4, M, Kp) bf16, B (4, Kp, Np) bf16, phase spatial (N, H, W).
    """
    N, H, W, ci_x = x.shape
    ci_w, Co, _, _ = w.shape
    ci_pad = _round_up(max(ci_x, ci_w), 32)         # 4*ci_pad % 128 == 0
    xp = jnp.pad(_pad_last(x, ci_pad), ((0, 0), (1, 1), (1, 1), (0, 0)))

    a_list, b_list = [], []
    for py in range(2):
        for px in range(2):
            taps = [(dy, kh, dx, kw)
                    for dy, kh in _PHASE_TAPS[py]
                    for dx, kw in _PHASE_TAPS[px]]
            cols = [xp[:, 1 + dy:1 + dy + H, 1 + dx:1 + dx + W, :]
                    for dy, kh, dx, kw in taps]
            a_list.append(jnp.stack(cols, axis=3).reshape(N * H * W, 4 * ci_pad))
            wt = jnp.stack([w[:, :, kh, kw] for dy, kh, dx, kw in taps], axis=0)
            wt = jnp.pad(wt, ((0, 0), (0, ci_pad - ci_w), (0, np_pad - Co)))
            b_list.append(wt.reshape(4 * ci_pad, np_pad))
    a = jnp.stack(a_list, axis=0)                          # (4, M, Kp) bf16
    b = jnp.stack(b_list, axis=0).astype(jnp.bfloat16)     # (4, Kp, Np)
    return a, b, (N, H, W)


# ----------------------------- layer -----------------------------

def _pick_tm(m):
    # Per-grid-step fixed cost (~0.35 us) rivals the per-tile compute at these
    # sizes -> use the largest row tile <= 1024 (VMEM worst case is a few MB).
    if m <= 256:
        return _round_up(m, 8)
    return min(_round_up(m, 256), 1024)


def gen_block(x, w, gamma, beta, stride, use_bn, eps=1e-5):
    Co = w.shape[1]
    np_pad = _round_up(Co, 128)
    c_keep = min(_round_up(Co, 32), np_pad)   # next layer's padded Ci

    if stride == 1:
        a, b, (N, OH, OW) = _build_stride1(x, w, np_pad)
    else:
        a, b, (N, PH, PW) = _build_stride2(x, w, np_pad)

    P, M, _ = a.shape
    tm = _pick_tm(M)
    Mp = _round_up(M, tm)
    if Mp != M:
        # Padded rows MUST stay zero: cnt below relies on them contributing
        # nothing to the BN sums.
        a = jnp.pad(a, ((0, 0), (0, Mp - M), (0, 0)))

    if use_bn:
        # BatchNorm2d train-mode semantics: batch stats, biased variance.
        cnt = float(P * M)
        gamma_p = jnp.pad(gamma, (0, np_pad - Co)).reshape(1, np_pad)
        beta_p = jnp.pad(beta, (0, np_pad - Co)).reshape(1, np_pad)
        out = fused_convT_bn_relu(a, b, gamma_p.astype(jnp.float32),
                                  beta_p.astype(jnp.float32), cnt, eps, tm)
    else:
        out = convT_tanh(a, b, tm)               # final layer: tanh epilogue

    if stride == 1:
        return out[0, :M, :c_keep].reshape(N, OH, OW, c_keep)

    # Interleave the 4 sub-pixel phases back into (N, 2H, 2W, .) keeping the
    # last dim lane-dense (128) through the transpose; narrow channels after.
    np_lanes = out.shape[-1]
    ph = out[:, :M, :].reshape(2, 2, N, PH, PW, np_lanes)
    ph = jnp.transpose(ph, (2, 3, 0, 4, 1, 5)).reshape(N, 2 * PH, 2 * PW,
                                                       np_lanes)
    return ph[..., :c_keep]


def generator_forward(x_nchw, params):
    # NCHW at the boundary (PyTorch convention); NHWC + bf16 internally.
    x = jnp.transpose(x_nchw, (0, 2, 3, 1)).astype(jnp.bfloat16)
    x = gen_block(x, params["w1"], params["g1"], params["b1"], 1, True)
    x = gen_block(x, params["w2"], params["g2"], params["b2"], 2, True)
    x = gen_block(x, params["w3"], params["g3"], params["b3"], 2, True)
    x = gen_block(x, params["w4"], params["g4"], params["b4"], 2, True)
    x = gen_block(x, params["w5"], None, None, 2, False)
    channels_img = params["w5"].shape[1]
    return jnp.transpose(x[..., :channels_img], (0, 3, 1, 2)).astype(jnp.float32)


# ----------------------------- parameters -----------------------------

def init_params(key, channels_noise, channels_img, features_g):
    fg = features_g
    w_shapes = [
        (channels_noise, fg * 8, 4, 4),
        (fg * 8, fg * 4, 4, 4),
        (fg * 4, fg * 2, 4, 4),
        (fg * 2, fg, 4, 4),
        (fg, channels_img, 4, 4),
    ]
    keys = jax.random.split(key, len(w_shapes))
    params = {}
    for i, (kk, sh) in enumerate(zip(keys, w_shapes), start=1):
        params[f"w{i}"] = jax.random.normal(kk, sh, jnp.float32) * 0.02
    for i, c in enumerate([fg * 8, fg * 4, fg * 2, fg], start=1):
        params[f"g{i}"] = jnp.ones((c,), jnp.float32)    # BN weight
        params[f"b{i}"] = jnp.zeros((c,), jnp.float32)   # BN bias
    return params


if __name__ == "__main__":
    channels_noise, channels_img, features_g = 8, 3, 8
    key = jax.random.PRNGKey(0)
    kp, kx = jax.random.split(key)

    params = init_params(kp, channels_noise, channels_img, features_g)
    x = jax.random.normal(kx, (2, channels_noise, 1, 1), jnp.float32)

    fwd = jax.jit(generator_forward)
    y = fwd(x, params)
    jax.block_until_ready(y)

    assert y.shape == (2, channels_img, 64, 64), y.shape
    assert bool(jnp.all(jnp.isfinite(y)))
    assert bool(jnp.max(jnp.abs(y)) <= 1.0 + 1e-3)   # tanh output range
    print("KERNEL_OK")
</pallas_src>

<mosaic_0001>
module attributes {stable_mosaic.version = 11 : i64} {
  func.func @_convT_bn_relu_kernel(%arg0: i32, %arg1: i32, %arg2: memref<1x32x128xbf16, #tpu.memory_space<vmem>>, %arg3: memref<1x128x128xbf16, #tpu.memory_space<vmem>>, %arg4: memref<1x128xf32, #tpu.memory_space<vmem>>, %arg5: memref<1x128xf32, #tpu.memory_space<vmem>>, %arg6: memref<32x128xbf16, #tpu.memory_space<vmem>>, %arg7: memref<8x128xf32, #tpu.memory_space<vmem>>, %arg8: memref<8x128xf32, #tpu.memory_space<vmem>>) attributes {dimension_semantics = [#tpu.dimension_semantics<arbitrary>, #tpu.dimension_semantics<arbitrary>], iteration_bounds = array<i64: 1, 1>, scalar_prefetch = 0 : i64, scratch_operands = 2 : i64, tpu.core_type = #tpu.core_type<tc>, window_params = [{transform_indices = @transform_0, window_bounds = array<i64: 1, 32, 128>}, {transform_indices = @transform_1, window_bounds = array<i64: 1, 128, 128>}, {pipeline_mode = #tpu.pipeline_mode<synchronous>, transform_indices = @transform_2, window_bounds = array<i64: 1, 128>}, {pipeline_mode = #tpu.pipeline_mode<synchronous>, transform_indices = @transform_3, window_bounds = array<i64: 1, 128>}, {pipeline_mode = #tpu.pipeline_mode<synchronous>, transform_indices = @transform_4, window_bounds = array<i64: 32, 128>}]} {
    %c0_i32 = arith.constant 0 : i32
    %0 = arith.cmpi eq, %arg0, %c0_i32 : i32
    %c0_i32_0 = arith.constant 0 : i32
    %1 = arith.cmpi eq, %arg1, %c0_i32_0 : i32
    %2 = arith.andi %0, %1 : i1
    %3 = arith.extui %2 : i1 to i32
    %c0_i32_1 = arith.constant 0 : i32
    %4 = arith.cmpi ne, %3, %c0_i32_1 : i32
    scf.if %4 {
      %cst_23 = arith.constant 0.000000e+00 : f32
      %33 = vector.broadcast %cst_23 : f32 to vector<8x128xf32>
      %c0_24 = arith.constant 0 : index
      %c0_25 = arith.constant 0 : index
      %34 = vector.load %arg7[%c0_24, %c0_25] : memref<8x128xf32, #tpu.memory_space<vmem>>, vector<8x128xf32>
      tpu.vector_store %arg7[%c0_24, %c0_25], %33 {strides = array<i32>} : memref<8x128xf32, #tpu.memory_space<vmem>>, vector<8x128xf32>,
      %cst_26 = arith.constant 0.000000e+00 : f32
      %35 = vector.broadcast %cst_26 : f32 to vector<8x128xf32>
      %c0_27 = arith.constant 0 : index
      %c0_28 = arith.constant 0 : index
      %36 = vector.load %arg8[%c0_27, %c0_28] : memref<8x128xf32, #tpu.memory_space<vmem>>, vector<8x128xf32>
      tpu.vector_store %arg8[%c0_27, %c0_28], %35 {strides = array<i32>} : memref<8x128xf32, #tpu.memory_space<vmem>>, vector<8x128xf32>,
    } else {
    }
    %c32_i32 = arith.constant 32 : i32
    %5 = arith.muli %arg0, %c32_i32 : i32
    %c32_i32_2 = arith.constant 32 : i32
    %6 = arith.muli %arg1, %c32_i32_2 : i32
    %7 = arith.addi %5, %6 : i32
    %c0_i32_3 = arith.constant 0 : i32
    %8 = arith.addi %7, %c0_i32_3 : i32
    %9 = tpu.assume_multiple %8, 32 : i32
    %c0 = arith.constant 0 : index
    %c0_4 = arith.constant 0 : index
    %c0_5 = arith.constant 0 : index
    %10 = vector.load %arg2[%c0, %c0_4, %c0_5] : memref<1x32x128xbf16, #tpu.memory_space<vmem>>, vector<1x32x128xbf16>
    %11 = vector.shape_cast %10 : vector<1x32x128xbf16> to vector<32x128xbf16>
    %c0_6 = arith.constant 0 : index
    %c0_7 = arith.constant 0 : index
    %c0_8 = arith.constant 0 : index
    %12 = vector.load %arg3[%c0_6, %c0_7, %c0_8] : memref<1x128x128xbf16, #tpu.memory_space<vmem>>, vector<1x128x128xbf16>
    %13 = vector.shape_cast %12 : vector<1x128x128xbf16> to vector<128x128xbf16>
    %cst = arith.constant dense<0.000000e+00> : vector<32x128xf32>
    %14 = tpu.matmul %11, %13, %cst {dimension_numbers = #tpu.dot_dimension_numbers<[1], [0], [0], [1], [0, 0, 1, 1], [], []>} : vector<32x128xbf16>, vector<128x128xbf16>, vector<32x128xf32> -> vector<32x128xf32>
    %15 = arith.truncf %14 : vector<32x128xf32> to vector<32x128xbf16>
    %16 = arith.index_cast %9 : i32 to index
    %c0_9 = arith.constant 0 : index
    %17 = vector.load %arg6[%16, %c0_9] : memref<32x128xbf16, #tpu.memory_space<vmem>>, vector<32x128xbf16>
    tpu.vector_store %arg6[%16, %c0_9], %15 {strides = array<i32>} : memref<32x128xbf16, #tpu.memory_space<vmem>>, vector<32x128xbf16>,
    %18 = vector.shape_cast %14 : vector<32x128xf32> to vector<4x8x128xf32>
    %c0_10 = arith.constant 0 : index
    %c0_11 = arith.constant 0 : index
    %19 = vector.load %arg7[%c0_10, %c0_11] : memref<8x128xf32, #tpu.memory_space<vmem>>, vector<8x128xf32>
    %cst_12 = arith.constant dense<0.000000e+00> : vector<8x128xf32>
    %20 = vector.multi_reduction <add>, %18, %cst_12 [0] : vector<4x8x128xf32> to vector<8x128xf32>
    %21 = arith.addf %19, %20 : vector<8x128xf32>
    %c0_13 = arith.constant 0 : index
    %c0_14 = arith.constant 0 : index
    %22 = vector.load %arg7[%c0_13, %c0_14] : memref<8x128xf32, #tpu.memory_space<vmem>>, vector<8x128xf32>
    tpu.vector_store %arg7[%c0_13, %c0_14], %21 {strides = array<i32>} : memref<8x128xf32, #tpu.memory_space<vmem>>, vector<8x128xf32>,
    %c0_15 = arith.constant 0 : index
    %c0_16 = arith.constant 0 : index
    %23 = vector.load %arg8[%c0_15, %c0_16] : memref<8x128xf32, #tpu.memory_space<vmem>>, vector<8x128xf32>
    %24 = arith.mulf %18, %18 : vector<4x8x128xf32>
    %cst_17 = arith.constant dense<0.000000e+00> : vector<8x128xf32>
    %25 = vector.multi_reduction <add>, %24, %cst_17 [0] : vector<4x8x128xf32> to vector<8x128xf32>
    %26 = arith.addf %23, %25 : vector<8x128xf32>
    %c0_18 = arith.constant 0 : index
    %c0_19 = arith.constant 0 : index
    %27 = vector.load %arg8[%c0_18, %c0_19] : memref<8x128xf32, #tpu.memory_space<vmem>>, vector<8x128xf32>
    tpu.vector_store %arg8[%c0_18, %c0_19], %26 {strides = array<i32>} : memref<8x128xf32, #tpu.memory_space<vmem>>, vector<8x128xf32>,
    %c0_i32_20 = arith.constant 0 : i32
    %28 = arith.cmpi eq, %arg0, %c0_i32_20 : i32
    %c0_i32_21 = arith.constant 0 : i32
    %29 = arith.cmpi eq, %arg1, %c0_i32_21 : i32
    %30 = arith.andi %28, %29 : i1
    %31 = arith.extui %30 : i1 to i32
    %c0_i32_22 = arith.constant 0 : i32
    %32 = arith.cmpi ne, %31, %c0_i32_22 : i32
    scf.if %32 {
      %c0_23 = arith.constant 0 : index
      %c0_24 = arith.constant 0 : index
      %33 = vector.load %arg7[%c0_23, %c0_24] : memref<8x128xf32, #tpu.memory_space<vmem>>, vector<8x128xf32>
      %cst_25 = arith.constant dense<0.000000e+00> : vector<128xf32>
      %34 = vector.multi_reduction <add>, %33, %cst_25 [0] : vector<8x128xf32> to vector<128xf32>
      %35 = vector.shape_cast %34 : vector<128xf32> to vector<1x128xf32>
      %cst_26 = arith.constant 3.200000e+01 : f32
      %36 = vector.broadcast %cst_26 : f32 to vector<1x128xf32>
      %37 = arith.divf %35, %36 : vector<1x128xf32>
      %c0_27 = arith.constant 0 : index
      %c0_28 = arith.constant 0 : index
      %38 = vector.load %arg8[%c0_27, %c0_28] : memref<8x128xf32, #tpu.memory_space<vmem>>, vector<8x128xf32>
      %cst_29 = arith.constant dense<0.000000e+00> : vector<128xf32>
      %39 = vector.multi_reduction <add>, %38, %cst_29 [0] : vector<8x128xf32> to vector<128xf32>
      %40 = vector.shape_cast %39 : vector<128xf32> to vector<1x128xf32>
      %cst_30 = arith.constant 3.200000e+01 : f32
      %41 = vector.broadcast %cst_30 : f32 to vector<1x128xf32>
      %42 = arith.divf %40, %41 : vector<1x128xf32>
      %43 = arith.mulf %37, %37 : vector<1x128xf32>
      %44 = arith.subf %42, %43 : vector<1x128xf32>
      %cst_31 = arith.constant 0.000000e+00 : f32
      %45 = vector.broadcast %cst_31 : f32 to vector<1x128xf32>
      %46 = arith.maximumf %44, %45 : vector<1x128xf32>
      %cst_32 = arith.constant 9.99999974E-6 : f32
      %47 = vector.broadcast %cst_32 : f32 to vector<1x128xf32>
      %48 = arith.addf %46, %47 : vector<1x128xf32>
      %49 = math.rsqrt %48 : vector<1x128xf32>
      %c0_33 = arith.constant 0 : index
      %c0_34 = arith.constant 0 : index
      %50 = vector.load %arg4[%c0_33, %c0_34] : memref<1x128xf32, #tpu.memory_space<vmem>>, vector<1x128xf32>
      %51 = arith.mulf %50, %49 : vector<1x128xf32>
      %c0_35 = arith.constant 0 : index
      %c0_36 = arith.constant 0 : index
      %52 = vector.load %arg5[%c0_35, %c0_36] : memref<1x128xf32, #tpu.memory_space<vmem>>, vector<1x128xf32>
      %53 = arith.mulf %37, %51 : vector<1x128xf32>
      %54 = arith.subf %52, %53 : vector<1x128xf32>
      %c0_37 = arith.constant 0 : index
      %c0_38 = arith.constant 0 : index
      %55 = vector.load %arg6[%c0_37, %c0_38] : memref<32x128xbf16, #tpu.memory_space<vmem>>, vector<32x128xbf16>
      %56 = arith.extf %55 : vector<32x128xbf16> to vector<32x128xf32>
      %57 = vector.broadcast %51 : vector<1x128xf32> to vector<32x128xf32>
      %58 = arith.mulf %56, %57 : vector<32x128xf32>
      %59 = vector.broadcast %54 : vector<1x128xf32> to vector<32x128xf32>
      %60 = arith.addf %58, %59 : vector<32x128xf32>
      %cst_39 = arith.constant 0.000000e+00 : f32
      %61 = vector.broadcast %cst_39 : f32 to vector<32x128xf32>
      %62 = arith.maximumf %60, %61 : vector<32x128xf32>
      %63 = arith.truncf %62 : vector<32x128xf32> to vector<32x128xbf16>
      %c0_40 = arith.constant 0 : index
      %c0_41 = arith.constant 0 : index
      %64 = vector.load %arg6[%c0_40, %c0_41] : memref<32x128xbf16, #tpu.memory_space<vmem>>, vector<32x128xbf16>
      tpu.vector_store %arg6[%c0_40, %c0_41], %63 {strides = array<i32>} : memref<32x128xbf16, #tpu.memory_space<vmem>>, vector<32x128xbf16>,
    } else {
    }
    return
  }
  func.func @transform_0(%arg0: i32, %arg1: i32) -> (i32, i32, i32) {
    %c0_i32 = arith.constant 0 : i32
    %c0_i32_0 = arith.constant 0 : i32
    return %arg0, %arg1, %c0_i32 : i32, i32, i32
  }
  func.func @transform_1(%arg0: i32, %arg1: i32) -> (i32, i32, i32) {
    %c0_i32 = arith.constant 0 : i32
    %c0_i32_0 = arith.constant 0 : i32
    %c0_i32_1 = arith.constant 0 : i32
    return %arg0, %c0_i32, %c0_i32_0 : i32, i32, i32
  }
  func.func @transform_2(%arg0: i32, %arg1: i32) -> (i32, i32) {
    %c0_i32 = arith.constant 0 : i32
    %c0_i32_0 = arith.constant 0 : i32
    %c0_i32_1 = arith.constant 0 : i32
    return %c0_i32, %c0_i32_0 : i32, i32
  }
  func.func @transform_3(%arg0: i32, %arg1: i32) -> (i32, i32) {
    %c0_i32 = arith.constant 0 : i32
    %c0_i32_0 = arith.constant 0 : i32
    %c0_i32_1 = arith.constant 0 : i32
    return %c0_i32, %c0_i32_0 : i32, i32
  }
  func.func @transform_4(%arg0: i32, %arg1: i32) -> (i32, i32) {
    %c0_i32 = arith.constant 0 : i32
    %c0_i32_0 = arith.constant 0 : i32
    %c0_i32_1 = arith.constant 0 : i32
    return %c0_i32, %c0_i32_0 : i32, i32
  }
}

module attributes {stable_mosaic.version = 11 : i64} {
  func.func @_convT_bn_relu_kernel(%arg0: i32, %arg1: i32, %arg2: memref<1x32x256xbf16, #tpu.memory_space<vmem>>, %arg3: memref<1x256x128xbf16, #tpu.memory_space<vmem>>, %arg4: memref<1x128xf32, #tpu.memory_space<vmem>>, %arg5: memref<1x128xf32, #tpu.memory_space<vmem>>, %arg6: memref<128x128xbf16, #tpu.memory_space<vmem>>, %arg7: memref<8x128xf32, #tpu.memory_space<vmem>>, %arg8: memref<8x128xf32, #tpu.memory_space<vmem>>) attributes {dimension_semantics = [#tpu.dimension_semantics<arbitrary>, #tpu.dimension_semantics<arbitrary>], iteration_bounds = array<i64: 4, 1>, scalar_prefetch = 0 : i64, scratch_operands = 2 : i64, tpu.core_type = #tpu.core_type<tc>, window_params = [{transform_indices = @transform_0, window_bounds = array<i64: 1, 32, 256>}, {transform_indices = @transform_1, window_bounds = array<i64: 1, 256, 128>}, {pipeline_mode = #tpu.pipeline_mode<synchronous>, transform_indices = @transform_2, window_bounds = array<i64: 1, 128>}, {pipeline_mode = #tpu.pipeline_mode<synchronous>, transform_indices = @transform_3, window_bounds = array<i64: 1, 128>}, {pipeline_mode = #tpu.pipeline_mode<synchronous>, transform_indices = @transform_4, window_bounds = array<i64: 128, 128>}]} {
    %c0_i32 = arith.constant 0 : i32
    %0 = arith.cmpi eq, %arg0, %c0_i32 : i32
    %c0_i32_0 = arith.constant 0 : i32
    %1 = arith.cmpi eq, %arg1, %c0_i32_0 : i32
    %2 = arith.andi %0, %1 : i1
    %3 = arith.extui %2 : i1 to i32
    %c0_i32_1 = arith.constant 0 : i32
    %4 = arith.cmpi ne, %3, %c0_i32_1 : i32
    scf.if %4 {
      %cst_22 = arith.constant 0.000000e+00 : f32
      %33 = vector.broadcast %cst_22 : f32 to vector<8x128xf32>
      %c0_23 = arith.constant 0 : index
      %c0_24 = arith.constant 0 : index
      %34 = vector.load %arg7[%c0_23, %c0_24] : memref<8x128xf32, #tpu.memory_space<vmem>>, vector<8x128xf32>
      tpu.vector_store %arg7[%c0_23, %c0_24], %33 {strides = array<i32>} : memref<8x128xf32, #tpu.memory_space<vmem>>, vector<8x128xf32>,
      %cst_25 = arith.constant 0.000000e+00 : f32
      %35 = vector.broadcast %cst_25 : f32 to vector<8x128xf32>
      %c0_26 = arith.constant 0 : index
      %c0_27 = arith.constant 0 : index
      %36 = vector.load %arg8[%c0_26, %c0_27] : memref<8x128xf32, #tpu.memory_space<vmem>>, vector<8x128xf32>
      tpu.vector_store %arg8[%c0_26, %c0_27], %35 {strides = array<i32>} : memref<8x128xf32, #tpu.memory_space<vmem>>, vector<8x128xf32>,
    } else {
    }
    %c32_i32 = arith.constant 32 : i32
    %5 = arith.muli %arg0, %c32_i32 : i32
    %c32_i32_2 = arith.constant 32 : i32
    %6 = arith.muli %arg1, %c32_i32_2 : i32
    %7 = arith.addi %5, %6 : i32
    %c0_i32_3 = arith.constant 0 : i32
    %8 = arith.addi %7, %c0_i32_3 : i32
    %9 = tpu.assume_multiple %8, 32 : i32
    %c0 = arith.constant 0 : index
    %c0_4 = arith.constant 0 : index
    %c0_5 = arith.constant 0 : index
    %10 = vector.load %arg2[%c0, %c0_4, %c0_5] : memref<1x32x256xbf16, #tpu.memory_space<vmem>>, vector<1x32x256xbf16>
    %11 = vector.shape_cast %10 : vector<1x32x256xbf16> to vector<32x256xbf16>
    %c0_6 = arith.constant 0 : index
    %c0_7 = arith.constant 0 : index
    %c0_8 = arith.constant 0 : index
    %12 = vector.load %arg3[%c0_6, %c0_7, %c0_8] : memref<1x256x128xbf16, #tpu.memory_space<vmem>>, vector<1x256x128xbf16>
    %13 = vector.shape_cast %12 : vector<1x256x128xbf16> to vector<256x128xbf16>
    %cst = arith.constant dense<0.000000e+00> : vector<32x128xf32>
    %14 = tpu.matmul %11, %13, %cst {dimension_numbers = #tpu.dot_dimension_numbers<[1], [0], [0], [1], [0, 0, 1, 1], [], []>} : vector<32x256xbf16>, vector<256x128xbf16>, vector<32x128xf32> -> vector<32x128xf32>
    %15 = arith.truncf %14 : vector<32x128xf32> to vector<32x128xbf16>
    %16 = arith.index_cast %9 : i32 to index
    %c0_9 = arith.constant 0 : index
    %17 = vector.load %arg6[%16, %c0_9] : memref<128x128xbf16, #tpu.memory_space<vmem>>, vector<32x128xbf16>
    tpu.vector_store %arg6[%16, %c0_9], %15 {strides = array<i32>} : memref<128x128xbf16, #tpu.memory_space<vmem>>, vector<32x128xbf16>,
    %18 = vector.shape_cast %14 : vector<32x128xf32> to vector<4x8x128xf32>
    %c0_10 = arith.constant 0 : index
    %c0_11 = arith.constant 0 : index
    %19 = vector.load %arg7[%c0_10, %c0_11] : memref<8x128xf32, #tpu.memory_space<vmem>>, vector<8x128xf32>
    %cst_12 = arith.constant dense<0.000000e+00> : vector<8x128xf32>
    %20 = vector.multi_reduction <add>, %18, %cst_12 [0] : vector<4x8x128xf32> to vector<8x128xf32>
    %21 = arith.addf %19, %20 : vector<8x128xf32>
    %c0_13 = arith.constant 0 : index
    %c0_14 = arith.constant 0 : index
    %22 = vector.load %arg7[%c0_13, %c0_14] : memref<8x128xf32, #tpu.memory_space<vmem>>, vector<8x128xf32>
    tpu.vector_store %arg7[%c0_13, %c0_14], %21 {strides = array<i32>} : memref<8x128xf32, #tpu.memory_space<vmem>>, vector<8x128xf32>,
    %c0_15 = arith.constant 0 : index
    %c0_16 = arith.constant 0 : index
    %23 = vector.load %arg8[%c0_15, %c0_16] : memref<8x128xf32, #tpu.memory_space<vmem>>, vector<8x128xf32>
    %24 = arith.mulf %18, %18 : vector<4x8x128xf32>
    %cst_17 = arith.constant dense<0.000000e+00> : vector<8x128xf32>
    %25 = vector.multi_reduction <add>, %24, %cst_17 [0] : vector<4x8x128xf32> to vector<8x128xf32>
    %26 = arith.addf %23, %25 : vector<8x128xf32>
    %c0_18 = arith.constant 0 : index
    %c0_19 = arith.constant 0 : index
    %27 = vector.load %arg8[%c0_18, %c0_19] : memref<8x128xf32, #tpu.memory_space<vmem>>, vector<8x128xf32>
    tpu.vector_store %arg8[%c0_18, %c0_19], %26 {strides = array<i32>} : memref<8x128xf32, #tpu.memory_space<vmem>>, vector<8x128xf32>,
    %c3_i32 = arith.constant 3 : i32
    %28 = arith.cmpi eq, %arg0, %c3_i32 : i32
    %c0_i32_20 = arith.constant 0 : i32
    %29 = arith.cmpi eq, %arg1, %c0_i32_20 : i32
    %30 = arith.andi %28, %29 : i1
    %31 = arith.extui %30 : i1 to i32
    %c0_i32_21 = arith.constant 0 : i32
    %32 = arith.cmpi ne, %31, %c0_i32_21 : i32
    scf.if %32 {
      %c0_22 = arith.constant 0 : index
      %c0_23 = arith.constant 0 : index
      %33 = vector.load %arg7[%c0_22, %c0_23] : memref<8x128xf32, #tpu.memory_space<vmem>>, vector<8x128xf32>
      %cst_24 = arith.constant dense<0.000000e+00> : vector<128xf32>
      %34 = vector.multi_reduction <add>, %33, %cst_24 [0] : vector<8x128xf32> to vector<128xf32>
      %35 = vector.shape_cast %34 : vector<128xf32> to vector<1x128xf32>
      %cst_25 = arith.constant 1.280000e+02 : f32
      %36 = vector.broadcast %cst_25 : f32 to vector<1x128xf32>
      %37 = arith.divf %35, %36 : vector<1x128xf32>
      %c0_26 = arith.constant 0 : index
      %c0_27 = arith.constant 0 : index
      %38 = vector.load %arg8[%c0_26, %c0_27] : memref<8x128xf32, #tpu.memory_space<vmem>>, vector<8x128xf32>
      %cst_28 = arith.constant dense<0.000000e+00> : vector<128xf32>
      %39 = vector.multi_reduction <add>, %38, %cst_28 [0] : vector<8x128xf32> to vector<128xf32>
      %40 = vector.shape_cast %39 : vector<128xf32> to vector<1x128xf32>
      %cst_29 = arith.constant 1.280000e+02 : f32
      %41 = vector.broadcast %cst_29 : f32 to vector<1x128xf32>
      %42 = arith.divf %40, %41 : vector<1x128xf32>
      %43 = arith.mulf %37, %37 : vector<1x128xf32>
      %44 = arith.subf %42, %43 : vector<1x128xf32>
      %cst_30 = arith.constant 0.000000e+00 : f32
      %45 = vector.broadcast %cst_30 : f32 to vector<1x128xf32>
      %46 = arith.maximumf %44, %45 : vector<1x128xf32>
      %cst_31 = arith.constant 9.99999974E-6 : f32
      %47 = vector.broadcast %cst_31 : f32 to vector<1x128xf32>
      %48 = arith.addf %46, %47 : vector<1x128xf32>
      %49 = math.rsqrt %48 : vector<1x128xf32>
      %c0_32 = arith.constant 0 : index
      %c0_33 = arith.constant 0 : index
      %50 = vector.load %arg4[%c0_32, %c0_33] : memref<1x128xf32, #tpu.memory_space<vmem>>, vector<1x128xf32>
      %51 = arith.mulf %50, %49 : vector<1x128xf32>
      %c0_34 = arith.constant 0 : index
      %c0_35 = arith.constant 0 : index
      %52 = vector.load %arg5[%c0_34, %c0_35] : memref<1x128xf32, #tpu.memory_space<vmem>>, vector<1x128xf32>
      %53 = arith.mulf %37, %51 : vector<1x128xf32>
      %54 = arith.subf %52, %53 : vector<1x128xf32>
      %c0_36 = arith.constant 0 : index
      %c0_37 = arith.constant 0 : index
      %55 = vector.load %arg6[%c0_36, %c0_37] : memref<128x128xbf16, #tpu.memory_space<vmem>>, vector<32x128xbf16>
      %56 = arith.extf %55 : vector<32x128xbf16> to vector<32x128xf32>
      %57 = vector.broadcast %51 : vector<1x128xf32> to vector<32x128xf32>
      %58 = arith.mulf %56, %57 : vector<32x128xf32>
      %59 = vector.broadcast %54 : vector<1x128xf32> to vector<32x128xf32>
      %60 = arith.addf %58, %59 : vector<32x128xf32>
      %cst_38 = arith.constant 0.000000e+00 : f32
      %61 = vector.broadcast %cst_38 : f32 to vector<32x128xf32>
      %62 = arith.maximumf %60, %61 : vector<32x128xf32>
      %63 = arith.truncf %62 : vector<32x128xf32> to vector<32x128xbf16>
      %c0_39 = arith.constant 0 : index
      %c0_40 = arith.constant 0 : index
      %64 = vector.load %arg6[%c0_39, %c0_40] : memref<128x128xbf16, #tpu.memory_space<vmem>>, vector<32x128xbf16>
      tpu.vector_store %arg6[%c0_39, %c0_40], %63 {strides = array<i32>} : memref<128x128xbf16, #tpu.memory_space<vmem>>, vector<32x128xbf16>,
      %c32 = arith.constant 32 : index
      %c0_41 = arith.constant 0 : index
      %65 = vector.load %arg6[%c32, %c0_41] : memref<128x128xbf16, #tpu.memory_space<vmem>>, vector<32x128xbf16>
      %66 = arith.extf %65 : vector<32x128xbf16> to vector<32x128xf32>
      %67 = vector.broadcast %51 : vector<1x128xf32> to vector<32x128xf32>
      %68 = arith.mulf %66, %67 : vector<32x128xf32>
      %69 = vector.broadcast %54 : vector<1x128xf32> to vector<32x128xf32>
      %70 = arith.addf %68, %69 : vector<32x128xf32>
      %cst_42 = arith.constant 0.000000e+00 : f32
      %71 = vector.broadcast %cst_42 : f32 to vector<32x128xf32>
      %72 = arith.maximumf %70, %71 : vector<32x128xf32>
      %73 = arith.truncf %72 : vector<32x128xf32> to vector<32x128xbf16>
      %c32_43 = arith.constant 32 : index
      %c0_44 = arith.constant 0 : index
      %74 = vector.load %arg6[%c32_43, %c0_44] : memref<128x128xbf16, #tpu.memory_space<vmem>>, vector<32x128xbf16>
      tpu.vector_store %arg6[%c32_43, %c0_44], %73 {strides = array<i32>} : memref<128x128xbf16, #tpu.memory_space<vmem>>, vector<32x128xbf16>,
      %c64 = arith.constant 64 : index
      %c0_45 = arith.constant 0 : index
      %75 = vector.load %arg6[%c64, %c0_45] : memref<128x128xbf16, #tpu.memory_space<vmem>>, vector<32x128xbf16>
      %76 = arith.extf %75 : vector<32x128xbf16> to vector<32x128xf32>
      %77 = vector.broadcast %51 : vector<1x128xf32> to vector<32x128xf32>
      %78 = arith.mulf %76, %77 : vector<32x128xf32>
      %79 = vector.broadcast %54 : vector<1x128xf32> to vector<32x128xf32>
      %80 = arith.addf %78, %79 : vector<32x128xf32>
      %cst_46 = arith.constant 0.000000e+00 : f32
      %81 = vector.broadcast %cst_46 : f32 to vector<32x128xf32>
      %82 = arith.maximumf %80, %81 : vector<32x128xf32>
      %83 = arith.truncf %82 : vector<32x128xf32> to vector<32x128xbf16>
      %c64_47 = arith.constant 64 : index
      %c0_48 = arith.constant 0 : index
      %84 = vector.load %arg6[%c64_47, %c0_48] : memref<128x128xbf16, #tpu.memory_space<vmem>>, vector<32x128xbf16>
      tpu.vector_store %arg6[%c64_47, %c0_48], %83 {strides = array<i32>} : memref<128x128xbf16, #tpu.memory_space<vmem>>, vector<32x128xbf16>,
      %c96 = arith.constant 96 : index
      %c0_49 = arith.constant 0 : index
      %85 = vector.load %arg6[%c96, %c0_49] : memref<128x128xbf16, #tpu.memory_space<vmem>>, vector<32x128xbf16>
      %86 = arith.extf %85 : vector<32x128xbf16> to vector<32x128xf32>
      %87 = vector.broadcast %51 : vector<1x128xf32> to vector<32x128xf32>
      %88 = arith.mulf %86, %87 : vector<32x128xf32>
      %89 = vector.broadcast %54 : vector<1x128xf32> to vector<32x128xf32>
      %90 = arith.addf %88, %89 : vector<32x128xf32>
      %cst_50 = arith.constant 0.000000e+00 : f32
      %91 = vector.broadcast %cst_50 : f32 to vector<32x128xf32>
      %92 = arith.maximumf %90, %91 : vector<32x128xf32>
      %93 = arith.truncf %92 : vector<32x128xf32> to vector<32x128xbf16>
      %c96_51 = arith.constant 96 : index
      %c0_52 = arith.constant 0 : index
      %94 = vector.load %arg6[%c96_51, %c0_52] : memref<128x128xbf16, #tpu.memory_space<vmem>>, vector<32x128xbf16>
      tpu.vector_store %arg6[%c96_51, %c0_52], %93 {strides = array<i32>} : memref<128x128xbf16, #tpu.memory_space<vmem>>, vector<32x128xbf16>,
    } else {
    }
    return
  }
  func.func @transform_0(%arg0: i32, %arg1: i32) -> (i32, i32, i32) {
    %c0_i32 = arith.constant 0 : i32
    %c0_i32_0 = arith.constant 0 : i32
    return %arg0, %arg1, %c0_i32 : i32, i32, i32
  }
  func.func @transform_1(%arg0: i32, %arg1: i32) -> (i32, i32, i32) {
    %c0_i32 = arith.constant 0 : i32
    %c0_i32_0 = arith.constant 0 : i32
    %c0_i32_1 = arith.constant 0 : i32
    return %arg0, %c0_i32, %c0_i32_0 : i32, i32, i32
  }
  func.func @transform_2(%arg0: i32, %arg1: i32) -> (i32, i32) {
    %c0_i32 = arith.constant 0 : i32
    %c0_i32_0 = arith.constant 0 : i32
    %c0_i32_1 = arith.constant 0 : i32
    return %c0_i32, %c0_i32_0 : i32, i32
  }
  func.func @transform_3(%arg0: i32, %arg1: i32) -> (i32, i32) {
    %c0_i32 = arith.constant 0 : i32
    %c0_i32_0 = arith.constant 0 : i32
    %c0_i32_1 = arith.constant 0 : i32
    return %c0_i32, %c0_i32_0 : i32, i32
  }
  func.func @transform_4(%arg0: i32, %arg1: i32) -> (i32, i32) {
    %c0_i32 = arith.constant 0 : i32
    %c0_i32_0 = arith.constant 0 : i32
    %c0_i32_1 = arith.constant 0 : i32
    return %c0_i32, %c0_i32_0 : i32, i32
  }
}

module attributes {stable_mosaic.version = 11 : i64} {
  func.func @_convT_bn_relu_kernel(%arg0: i32, %arg1: i32, %arg2: memref<1x128x128xbf16, #tpu.memory_space<vmem>>, %arg3: memref<1x128x128xbf16, #tpu.memory_space<vmem>>, %arg4: memref<1x128xf32, #tpu.memory_space<vmem>>, %arg5: memref<1x128xf32, #tpu.memory_space<vmem>>, %arg6: memref<512x128xbf16, #tpu.memory_space<vmem>>, %arg7: memref<8x128xf32, #tpu.memory_space<vmem>>, %arg8: memref<8x128xf32, #tpu.memory_space<vmem>>) attributes {dimension_semantics = [#tpu.dimension_semantics<arbitrary>, #tpu.dimension_semantics<arbitrary>], iteration_bounds = array<i64: 4, 1>, scalar_prefetch = 0 : i64, scratch_operands = 2 : i64, tpu.core_type = #tpu.core_type<tc>, window_params = [{transform_indices = @transform_0, window_bounds = array<i64: 1, 128, 128>}, {transform_indices = @transform_1, window_bounds = array<i64: 1, 128, 128>}, {pipeline_mode = #tpu.pipeline_mode<synchronous>, transform_indices = @transform_2, window_bounds = array<i64: 1, 128>}, {pipeline_mode = #tpu.pipeline_mode<synchronous>, transform_indices = @transform_3, window_bounds = array<i64: 1, 128>}, {pipeline_mode = #tpu.pipeline_mode<synchronous>, transform_indices = @transform_4, window_bounds = array<i64: 512, 128>}]} {
    %c0_i32 = arith.constant 0 : i32
    %0 = arith.cmpi eq, %arg0, %c0_i32 : i32
    %c0_i32_0 = arith.constant 0 : i32
    %1 = arith.cmpi eq, %arg1, %c0_i32_0 : i32
    %2 = arith.andi %0, %1 : i1
    %3 = arith.extui %2 : i1 to i32
    %c0_i32_1 = arith.constant 0 : i32
    %4 = arith.cmpi ne, %3, %c0_i32_1 : i32
    scf.if %4 {
      %cst_22 = arith.constant 0.000000e+00 : f32
      %33 = vector.broadcast %cst_22 : f32 to vector<8x128xf32>
      %c0_23 = arith.constant 0 : index
      %c0_24 = arith.constant 0 : index
      %34 = vector.load %arg7[%c0_23, %c0_24] : memref<8x128xf32, #tpu.memory_space<vmem>>, vector<8x128xf32>
      tpu.vector_store %arg7[%c0_23, %c0_24], %33 {strides = array<i32>} : memref<8x128xf32, #tpu.memory_space<vmem>>, vector<8x128xf32>,
      %cst_25 = arith.constant 0.000000e+00 : f32
      %35 = vector.broadcast %cst_25 : f32 to vector<8x128xf32>
      %c0_26 = arith.constant 0 : index
      %c0_27 = arith.constant 0 : index
      %36 = vector.load %arg8[%c0_26, %c0_27] : memref<8x128xf32, #tpu.memory_space<vmem>>, vector<8x128xf32>
      tpu.vector_store %arg8[%c0_26, %c0_27], %35 {strides = array<i32>} : memref<8x128xf32, #tpu.memory_space<vmem>>, vector<8x128xf32>,
    } else {
    }
    %c128_i32 = arith.constant 128 : i32
    %5 = arith.muli %arg0, %c128_i32 : i32
    %c128_i32_2 = arith.constant 128 : i32
    %6 = arith.muli %arg1, %c128_i32_2 : i32
    %7 = arith.addi %5, %6 : i32
    %c0_i32_3 = arith.constant 0 : i32
    %8 = arith.addi %7, %c0_i32_3 : i32
    %9 = tpu.assume_multiple %8, 128 : i32
    %c0 = arith.constant 0 : index
    %c0_4 = arith.constant 0 : index
    %c0_5 = arith.constant 0 : index
    %10 = vector.load %arg2[%c0, %c0_4, %c0_5] : memref<1x128x128xbf16, #tpu.memory_space<vmem>>, vector<1x128x128xbf16>
    %11 = vector.shape_cast %10 : vector<1x128x128xbf16> to vector<128x128xbf16>
    %c0_6 = arith.constant 0 : index
    %c0_7 = arith.constant 0 : index
    %c0_8 = arith.constant 0 : index
    %12 = vector.load %arg3[%c0_6, %c0_7, %c0_8] : memref<1x128x128xbf16, #tpu.memory_space<vmem>>, vector<1x128x128xbf16>
    %13 = vector.shape_cast %12 : vector<1x128x128xbf16> to vector<128x128xbf16>
    %cst = arith.constant dense<0.000000e+00> : vector<128x128xf32>
    %14 = tpu.matmul %11, %13, %cst {dimension_numbers = #tpu.dot_dimension_numbers<[1], [0], [0], [1], [0, 0, 1, 1], [], []>} : vector<128x128xbf16>, vector<128x128xbf16>, vector<128x128xf32> -> vector<128x128xf32>
    %15 = arith.truncf %14 : vector<128x128xf32> to vector<128x128xbf16>
    %16 = arith.index_cast %9 : i32 to index
    %c0_9 = arith.constant 0 : index
    %17 = vector.load %arg6[%16, %c0_9] : memref<512x128xbf16, #tpu.memory_space<vmem>>, vector<128x128xbf16>
    tpu.vector_store %arg6[%16, %c0_9], %15 {strides = array<i32>} : memref<512x128xbf16, #tpu.memory_space<vmem>>, vector<128x128xbf16>,
    %18 = vector.shape_cast %14 : vector<128x128xf32> to vector<16x8x128xf32>
    %c0_10 = arith.constant 0 : index
    %c0_11 = arith.constant 0 : index
    %19 = vector.load %arg7[%c0_10, %c0_11] : memref<8x128xf32, #tpu.memory_space<vmem>>, vector<8x128xf32>
    %cst_12 = arith.constant dense<0.000000e+00> : vector<8x128xf32>
    %20 = vector.multi_reduction <add>, %18, %cst_12 [0] : vector<16x8x128xf32> to vector<8x128xf32>
    %21 = arith.addf %19, %20 : vector<8x128xf32>
    %c0_13 = arith.constant 0 : index
    %c0_14 = arith.constant 0 : index
    %22 = vector.load %arg7[%c0_13, %c0_14] : memref<8x128xf32, #tpu.memory_space<vmem>>, vector<8x128xf32>
    tpu.vector_store %arg7[%c0_13, %c0_14], %21 {strides = array<i32>} : memref<8x128xf32, #tpu.memory_space<vmem>>, vector<8x128xf32>,
    %c0_15 = arith.constant 0 : index
    %c0_16 = arith.constant 0 : index
    %23 = vector.load %arg8[%c0_15, %c0_16] : memref<8x128xf32, #tpu.memory_space<vmem>>, vector<8x128xf32>
    %24 = arith.mulf %18, %18 : vector<16x8x128xf32>
    %cst_17 = arith.constant dense<0.000000e+00> : vector<8x128xf32>
    %25 = vector.multi_reduction <add>, %24, %cst_17 [0] : vector<16x8x128xf32> to vector<8x128xf32>
    %26 = arith.addf %23, %25 : vector<8x128xf32>
    %c0_18 = arith.constant 0 : index
    %c0_19 = arith.constant 0 : index
    %27 = vector.load %arg8[%c0_18, %c0_19] : memref<8x128xf32, #tpu.memory_space<vmem>>, vector<8x128xf32>
    tpu.vector_store %arg8[%c0_18, %c0_19], %26 {strides = array<i32>} : memref<8x128xf32, #tpu.memory_space<vmem>>, vector<8x128xf32>,
    %c3_i32 = arith.constant 3 : i32
    %28 = arith.cmpi eq, %arg0, %c3_i32 : i32
    %c0_i32_20 = arith.constant 0 : i32
    %29 = arith.cmpi eq, %arg1, %c0_i32_20 : i32
    %30 = arith.andi %28, %29 : i1
    %31 = arith.extui %30 : i1 to i32
    %c0_i32_21 = arith.constant 0 : i32
    %32 = arith.cmpi ne, %31, %c0_i32_21 : i32
    scf.if %32 {
      %c0_22 = arith.constant 0 : index
      %c0_23 = arith.constant 0 : index
      %33 = vector.load %arg7[%c0_22, %c0_23] : memref<8x128xf32, #tpu.memory_space<vmem>>, vector<8x128xf32>
      %cst_24 = arith.constant dense<0.000000e+00> : vector<128xf32>
      %34 = vector.multi_reduction <add>, %33, %cst_24 [0] : vector<8x128xf32> to vector<128xf32>
      %35 = vector.shape_cast %34 : vector<128xf32> to vector<1x128xf32>
      %cst_25 = arith.constant 5.120000e+02 : f32
      %36 = vector.broadcast %cst_25 : f32 to vector<1x128xf32>
      %37 = arith.divf %35, %36 : vector<1x128xf32>
      %c0_26 = arith.constant 0 : index
      %c0_27 = arith.constant 0 : index
      %38 = vector.load %arg8[%c0_26, %c0_27] : memref<8x128xf32, #tpu.memory_space<vmem>>, vector<8x128xf32>
      %cst_28 = arith.constant dense<0.000000e+00> : vector<128xf32>
      %39 = vector.multi_reduction <add>, %38, %cst_28 [0] : vector<8x128xf32> to vector<128xf32>
      %40 = vector.shape_cast %39 : vector<128xf32> to vector<1x128xf32>
      %cst_29 = arith.constant 5.120000e+02 : f32
      %41 = vector.broadcast %cst_29 : f32 to vector<1x128xf32>
      %42 = arith.divf %40, %41 : vector<1x128xf32>
      %43 = arith.mulf %37, %37 : vector<1x128xf32>
      %44 = arith.subf %42, %43 : vector<1x128xf32>
      %cst_30 = arith.constant 0.000000e+00 : f32
      %45 = vector.broadcast %cst_30 : f32 to vector<1x128xf32>
      %46 = arith.maximumf %44, %45 : vector<1x128xf32>
      %cst_31 = arith.constant 9.99999974E-6 : f32
      %47 = vector.broadcast %cst_31 : f32 to vector<1x128xf32>
      %48 = arith.addf %46, %47 : vector<1x128xf32>
      %49 = math.rsqrt %48 : vector<1x128xf32>
      %c0_32 = arith.constant 0 : index
      %c0_33 = arith.constant 0 : index
      %50 = vector.load %arg4[%c0_32, %c0_33] : memref<1x128xf32, #tpu.memory_space<vmem>>, vector<1x128xf32>
      %51 = arith.mulf %50, %49 : vector<1x128xf32>
      %c0_34 = arith.constant 0 : index
      %c0_35 = arith.constant 0 : index
      %52 = vector.load %arg5[%c0_34, %c0_35] : memref<1x128xf32, #tpu.memory_space<vmem>>, vector<1x128xf32>
      %53 = arith.mulf %37, %51 : vector<1x128xf32>
      %54 = arith.subf %52, %53 : vector<1x128xf32>
      %c0_36 = arith.constant 0 : index
      %c0_37 = arith.constant 0 : index
      %55 = vector.load %arg6[%c0_36, %c0_37] : memref<512x128xbf16, #tpu.memory_space<vmem>>, vector<128x128xbf16>
      %56 = arith.extf %55 : vector<128x128xbf16> to vector<128x128xf32>
      %57 = vector.broadcast %51 : vector<1x128xf32> to vector<128x128xf32>
      %58 = arith.mulf %56, %57 : vector<128x128xf32>
      %59 = vector.broadcast %54 : vector<1x128xf32> to vector<128x128xf32>
      %60 = arith.addf %58, %59 : vector<128x128xf32>
      %cst_38 = arith.constant 0.000000e+00 : f32
      %61 = vector.broadcast %cst_38 : f32 to vector<128x128xf32>
      %62 = arith.maximumf %60, %61 : vector<128x128xf32>
      %63 = arith.truncf %62 : vector<128x128xf32> to vector<128x128xbf16>
      %c0_39 = arith.constant 0 : index
      %c0_40 = arith.constant 0 : index
      %64 = vector.load %arg6[%c0_39, %c0_40] : memref<512x128xbf16, #tpu.memory_space<vmem>>, vector<128x128xbf16>
      tpu.vector_store %arg6[%c0_39, %c0_40], %63 {strides = array<i32>} : memref<512x128xbf16, #tpu.memory_space<vmem>>, vector<128x128xbf16>,
      %c128 = arith.constant 128 : index
      %c0_41 = arith.constant 0 : index
      %65 = vector.load %arg6[%c128, %c0_41] : memref<512x128xbf16, #tpu.memory_space<vmem>>, vector<128x128xbf16>
      %66 = arith.extf %65 : vector<128x128xbf16> to vector<128x128xf32>
      %67 = vector.broadcast %51 : vector<1x128xf32> to vector<128x128xf32>
      %68 = arith.mulf %66, %67 : vector<128x128xf32>
      %69 = vector.broadcast %54 : vector<1x128xf32> to vector<128x128xf32>
      %70 = arith.addf %68, %69 : vector<128x128xf32>
      %cst_42 = arith.constant 0.000000e+00 : f32
      %71 = vector.broadcast %cst_42 : f32 to vector<128x128xf32>
      %72 = arith.maximumf %70, %71 : vector<128x128xf32>
      %73 = arith.truncf %72 : vector<128x128xf32> to vector<128x128xbf16>
      %c128_43 = arith.constant 128 : index
      %c0_44 = arith.constant 0 : index
      %74 = vector.load %arg6[%c128_43, %c0_44] : memref<512x128xbf16, #tpu.memory_space<vmem>>, vector<128x128xbf16>
      tpu.vector_store %arg6[%c128_43, %c0_44], %73 {strides = array<i32>} : memref<512x128xbf16, #tpu.memory_space<vmem>>, vector<128x128xbf16>,
      %c256 = arith.constant 256 : index
      %c0_45 = arith.constant 0 : index
      %75 = vector.load %arg6[%c256, %c0_45] : memref<512x128xbf16, #tpu.memory_space<vmem>>, vector<128x128xbf16>
      %76 = arith.extf %75 : vector<128x128xbf16> to vector<128x128xf32>
      %77 = vector.broadcast %51 : vector<1x128xf32> to vector<128x128xf32>
      %78 = arith.mulf %76, %77 : vector<128x128xf32>
      %79 = vector.broadcast %54 : vector<1x128xf32> to vector<128x128xf32>
      %80 = arith.addf %78, %79 : vector<128x128xf32>
      %cst_46 = arith.constant 0.000000e+00 : f32
      %81 = vector.broadcast %cst_46 : f32 to vector<128x128xf32>
      %82 = arith.maximumf %80, %81 : vector<128x128xf32>
      %83 = arith.truncf %82 : vector<128x128xf32> to vector<128x128xbf16>
      %c256_47 = arith.constant 256 : index
      %c0_48 = arith.constant 0 : index
      %84 = vector.load %arg6[%c256_47, %c0_48] : memref<512x128xbf16, #tpu.memory_space<vmem>>, vector<128x128xbf16>
      tpu.vector_store %arg6[%c256_47, %c0_48], %83 {strides = array<i32>} : memref<512x128xbf16, #tpu.memory_space<vmem>>, vector<128x128xbf16>,
      %c384 = arith.constant 384 : index
      %c0_49 = arith.constant 0 : index
      %85 = vector.load %arg6[%c384, %c0_49] : memref<512x128xbf16, #tpu.memory_space<vmem>>, vector<128x128xbf16>
      %86 = arith.extf %85 : vector<128x128xbf16> to vector<128x128xf32>
      %87 = vector.broadcast %51 : vector<1x128xf32> to vector<128x128xf32>
      %88 = arith.mulf %86, %87 : vector<128x128xf32>
      %89 = vector.broadcast %54 : vector<1x128xf32> to vector<128x128xf32>
      %90 = arith.addf %88, %89 : vector<128x128xf32>
      %cst_50 = arith.constant 0.000000e+00 : f32
      %91 = vector.broadcast %cst_50 : f32 to vector<128x128xf32>
      %92 = arith.maximumf %90, %91 : vector<128x128xf32>
      %93 = arith.truncf %92 : vector<128x128xf32> to vector<128x128xbf16>
      %c384_51 = arith.constant 384 : index
      %c0_52 = arith.constant 0 : index
      %94 = vector.load %arg6[%c384_51, %c0_52] : memref<512x128xbf16, #tpu.memory_space<vmem>>, vector<128x128xbf16>
      tpu.vector_store %arg6[%c384_51, %c0_52], %93 {strides = array<i32>} : memref<512x128xbf16, #tpu.memory_space<vmem>>, vector<128x128xbf16>,
    } else {
    }
    return
  }
  func.func @transform_0(%arg0: i32, %arg1: i32) -> (i32, i32, i32) {
    %c0_i32 = arith.constant 0 : i32
    %c0_i32_0 = arith.constant 0 : i32
    return %arg0, %arg1, %c0_i32 : i32, i32, i32
  }
  func.func @transform_1(%arg0: i32, %arg1: i32) -> (i32, i32, i32) {
    %c0_i32 = arith.constant 0 : i32
    %c0_i32_0 = arith.constant 0 : i32
    %c0_i32_1 = arith.constant 0 : i32
    return %arg0, %c0_i32, %c0_i32_0 : i32, i32, i32
  }
  func.func @transform_2(%arg0: i32, %arg1: i32) -> (i32, i32) {
    %c0_i32 = arith.constant 0 : i32
    %c0_i32_0 = arith.constant 0 : i32
    %c0_i32_1 = arith.constant 0 : i32
    return %c0_i32, %c0_i32_0 : i32, i32
  }
  func.func @transform_3(%arg0: i32, %arg1: i32) -> (i32, i32) {
    %c0_i32 = arith.constant 0 : i32
    %c0_i32_0 = arith.constant 0 : i32
    %c0_i32_1 = arith.constant 0 : i32
    return %c0_i32, %c0_i32_0 : i32, i32
  }
  func.func @transform_4(%arg0: i32, %arg1: i32) -> (i32, i32) {
    %c0_i32 = arith.constant 0 : i32
    %c0_i32_0 = arith.constant 0 : i32
    %c0_i32_1 = arith.constant 0 : i32
    return %c0_i32, %c0_i32_0 : i32, i32
  }
}

module attributes {stable_mosaic.version = 11 : i64} {
  func.func @_convT_bn_relu_kernel(%arg0: i32, %arg1: i32, %arg2: memref<1x512x128xbf16, #tpu.memory_space<vmem>>, %arg3: memref<1x128x128xbf16, #tpu.memory_space<vmem>>, %arg4: memref<1x128xf32, #tpu.memory_space<vmem>>, %arg5: memref<1x128xf32, #tpu.memory_space<vmem>>, %arg6: memref<2048x128xbf16, #tpu.memory_space<vmem>>, %arg7: memref<8x128xf32, #tpu.memory_space<vmem>>, %arg8: memref<8x128xf32, #tpu.memory_space<vmem>>) attributes {dimension_semantics = [#tpu.dimension_semantics<arbitrary>, #tpu.dimension_semantics<arbitrary>], iteration_bounds = array<i64: 4, 1>, scalar_prefetch = 0 : i64, scratch_operands = 2 : i64, tpu.core_type = #tpu.core_type<tc>, window_params = [{transform_indices = @transform_0, window_bounds = array<i64: 1, 512, 128>}, {transform_indices = @transform_1, window_bounds = array<i64: 1, 128, 128>}, {pipeline_mode = #tpu.pipeline_mode<synchronous>, transform_indices = @transform_2, window_bounds = array<i64: 1, 128>}, {pipeline_mode = #tpu.pipeline_mode<synchronous>, transform_indices = @transform_3, window_bounds = array<i64: 1, 128>}, {pipeline_mode = #tpu.pipeline_mode<synchronous>, transform_indices = @transform_4, window_bounds = array<i64: 2048, 128>}]} {
    %c0_i32 = arith.constant 0 : i32
    %0 = arith.cmpi eq, %arg0, %c0_i32 : i32
    %c0_i32_0 = arith.constant 0 : i32
    %1 = arith.cmpi eq, %arg1, %c0_i32_0 : i32
    %2 = arith.andi %0, %1 : i1
    %3 = arith.extui %2 : i1 to i32
    %c0_i32_1 = arith.constant 0 : i32
    %4 = arith.cmpi ne, %3, %c0_i32_1 : i32
    scf.if %4 {
      %cst_39 = arith.constant 0.000000e+00 : f32
      %53 = vector.broadcast %cst_39 : f32 to vector<8x128xf32>
      %c0_40 = arith.constant 0 : index
      %c0_41 = arith.constant 0 : index
      %54 = vector.load %arg7[%c0_40, %c0_41] : memref<8x128xf32, #tpu.memory_space<vmem>>, vector<8x128xf32>
      tpu.vector_store %arg7[%c0_40, %c0_41], %53 {strides = array<i32>} : memref<8x128xf32, #tpu.memory_space<vmem>>, vector<8x128xf32>,
      %cst_42 = arith.constant 0.000000e+00 : f32
      %55 = vector.broadcast %cst_42 : f32 to vector<8x128xf32>
      %c0_43 = arith.constant 0 : index
      %c0_44 = arith.constant 0 : index
      %56 = vector.load %arg8[%c0_43, %c0_44] : memref<8x128xf32, #tpu.memory_space<vmem>>, vector<8x128xf32>
      tpu.vector_store %arg8[%c0_43, %c0_44], %55 {strides = array<i32>} : memref<8x128xf32, #tpu.memory_space<vmem>>, vector<8x128xf32>,
    } else {
    }
    %c512_i32 = arith.constant 512 : i32
    %5 = arith.muli %arg0, %c512_i32 : i32
    %c512_i32_2 = arith.constant 512 : i32
    %6 = arith.muli %arg1, %c512_i32_2 : i32
    %7 = arith.addi %5, %6 : i32
    %c0_i32_3 = arith.constant 0 : i32
    %8 = arith.addi %7, %c0_i32_3 : i32
    %9 = tpu.assume_multiple %8, 256 : i32
    %c0 = arith.constant 0 : index
    %c0_4 = arith.constant 0 : index
    %c0_5 = arith.constant 0 : index
    %10 = vector.load %arg2[%c0, %c0_4, %c0_5] : memref<1x512x128xbf16, #tpu.memory_space<vmem>>, vector<1x256x128xbf16>
    %11 = vector.shape_cast %10 : vector<1x256x128xbf16> to vector<256x128xbf16>
    %c0_6 = arith.constant 0 : index
    %c0_7 = arith.constant 0 : index
    %c0_8 = arith.constant 0 : index
    %12 = vector.load %arg3[%c0_6, %c0_7, %c0_8] : memref<1x128x128xbf16, #tpu.memory_space<vmem>>, vector<1x128x128xbf16>
    %13 = vector.shape_cast %12 : vector<1x128x128xbf16> to vector<128x128xbf16>
    %cst = arith.constant dense<0.000000e+00> : vector<256x128xf32>
    %14 = tpu.matmul %11, %13, %cst {dimension_numbers = #tpu.dot_dimension_numbers<[1], [0], [0], [1], [0, 0, 1, 1], [], []>} : vector<256x128xbf16>, vector<128x128xbf16>, vector<256x128xf32> -> vector<256x128xf32>
    %15 = arith.truncf %14 : vector<256x128xf32> to vector<256x128xbf16>
    %16 = arith.index_cast %9 : i32 to index
    %c0_9 = arith.constant 0 : index
    %17 = vector.load %arg6[%16, %c0_9] : memref<2048x128xbf16, #tpu.memory_space<vmem>>, vector<256x128xbf16>
    tpu.vector_store %arg6[%16, %c0_9], %15 {strides = array<i32>} : memref<2048x128xbf16, #tpu.memory_space<vmem>>, vector<256x128xbf16>,
    %18 = vector.shape_cast %14 : vector<256x128xf32> to vector<32x8x128xf32>
    %c0_10 = arith.constant 0 : index
    %c0_11 = arith.constant 0 : index
    %19 = vector.load %arg7[%c0_10, %c0_11] : memref<8x128xf32, #tpu.memory_space<vmem>>, vector<8x128xf32>
    %cst_12 = arith.constant dense<0.000000e+00> : vector<8x128xf32>
    %20 = vector.multi_reduction <add>, %18, %cst_12 [0] : vector<32x8x128xf32> to vector<8x128xf32>
    %21 = arith.addf %19, %20 : vector<8x128xf32>
    %c0_13 = arith.constant 0 : index
    %c0_14 = arith.constant 0 : index
    %22 = vector.load %arg7[%c0_13, %c0_14] : memref<8x128xf32, #tpu.memory_space<vmem>>, vector<8x128xf32>
    tpu.vector_store %arg7[%c0_13, %c0_14], %21 {strides = array<i32>} : memref<8x128xf32, #tpu.memory_space<vmem>>, vector<8x128xf32>,
    %c0_15 = arith.constant 0 : index
    %c0_16 = arith.constant 0 : index
    %23 = vector.load %arg8[%c0_15, %c0_16] : memref<8x128xf32, #tpu.memory_space<vmem>>, vector<8x128xf32>
    %24 = arith.mulf %18, %18 : vector<32x8x128xf32>
    %cst_17 = arith.constant dense<0.000000e+00> : vector<8x128xf32>
    %25 = vector.multi_reduction <add>, %24, %cst_17 [0] : vector<32x8x128xf32> to vector<8x128xf32>
    %26 = arith.addf %23, %25 : vector<8x128xf32>
    %c0_18 = arith.constant 0 : index
    %c0_19 = arith.constant 0 : index
    %27 = vector.load %arg8[%c0_18, %c0_19] : memref<8x128xf32, #tpu.memory_space<vmem>>, vector<8x128xf32>
    tpu.vector_store %arg8[%c0_18, %c0_19], %26 {strides = array<i32>} : memref<8x128xf32, #tpu.memory_space<vmem>>, vector<8x128xf32>,
    %c256_i32 = arith.constant 256 : i32
    %28 = arith.addi %7, %c256_i32 : i32
    %29 = tpu.assume_multiple %28, 256 : i32
    %c0_20 = arith.constant 0 : index
    %c256 = arith.constant 256 : index
    %c0_21 = arith.constant 0 : index
    %30 = vector.load %arg2[%c0_20, %c256, %c0_21] : memref<1x512x128xbf16, #tpu.memory_space<vmem>>, vector<1x256x128xbf16>
    %31 = vector.shape_cast %30 : vector<1x256x128xbf16> to vector<256x128xbf16>
    %c0_22 = arith.constant 0 : index
    %c0_23 = arith.constant 0 : index
    %c0_24 = arith.constant 0 : index
    %32 = vector.load %arg3[%c0_22, %c0_23, %c0_24] : memref<1x128x128xbf16, #tpu.memory_space<vmem>>, vector<1x128x128xbf16>
    %33 = vector.shape_cast %32 : vector<1x128x128xbf16> to vector<128x128xbf16>
    %cst_25 = arith.constant dense<0.000000e+00> : vector<256x128xf32>
    %34 = tpu.matmul %31, %33, %cst_25 {dimension_numbers = #tpu.dot_dimension_numbers<[1], [0], [0], [1], [0, 0, 1, 1], [], []>} : vector<256x128xbf16>, vector<128x128xbf16>, vector<256x128xf32> -> vector<256x128xf32>
    %35 = arith.truncf %34 : vector<256x128xf32> to vector<256x128xbf16>
    %36 = arith.index_cast %29 : i32 to index
    %c0_26 = arith.constant 0 : index
    %37 = vector.load %arg6[%36, %c0_26] : memref<2048x128xbf16, #tpu.memory_space<vmem>>, vector<256x128xbf16>
    tpu.vector_store %arg6[%36, %c0_26], %35 {strides = array<i32>} : memref<2048x128xbf16, #tpu.memory_space<vmem>>, vector<256x128xbf16>,
    %38 = vector.shape_cast %34 : vector<256x128xf32> to vector<32x8x128xf32>
    %c0_27 = arith.constant 0 : index
    %c0_28 = arith.constant 0 : index
    %39 = vector.load %arg7[%c0_27, %c0_28] : memref<8x128xf32, #tpu.memory_space<vmem>>, vector<8x128xf32>
    %cst_29 = arith.constant dense<0.000000e+00> : vector<8x128xf32>
    %40 = vector.multi_reduction <add>, %38, %cst_29 [0] : vector<32x8x128xf32> to vector<8x128xf32>
    %41 = arith.addf %39, %40 : vector<8x128xf32>
    %c0_30 = arith.constant 0 : index
    %c0_31 = arith.constant 0 : index
    %42 = vector.load %arg7[%c0_30, %c0_31] : memref<8x128xf32, #tpu.memory_space<vmem>>, vector<8x128xf32>
    tpu.vector_store %arg7[%c0_30, %c0_31], %41 {strides = array<i32>} : memref<8x128xf32, #tpu.memory_space<vmem>>, vector<8x128xf32>,
    %c0_32 = arith.constant 0 : index
    %c0_33 = arith.constant 0 : index
    %43 = vector.load %arg8[%c0_32, %c0_33] : memref<8x128xf32, #tpu.memory_space<vmem>>, vector<8x128xf32>
    %44 = arith.mulf %38, %38 : vector<32x8x128xf32>
    %cst_34 = arith.constant dense<0.000000e+00> : vector<8x128xf32>
    %45 = vector.multi_reduction <add>, %44, %cst_34 [0] : vector<32x8x128xf32> to vector<8x128xf32>
    %46 = arith.addf %43, %45 : vector<8x128xf32>
    %c0_35 = arith.constant 0 : index
    %c0_36 = arith.constant 0 : index
    %47 = vector.load %arg8[%c0_35, %c0_36] : memref<8x128xf32, #tpu.memory_space<vmem>>, vector<8x128xf32>
    tpu.vector_store %arg8[%c0_35, %c0_36], %46 {strides = array<i32>} : memref<8x128xf32, #tpu.memory_space<vmem>>, vector<8x128xf32>,
    %c3_i32 = arith.constant 3 : i32
    %48 = arith.cmpi eq, %arg0, %c3_i32 : i32
    %c0_i32_37 = arith.constant 0 : i32
    %49 = arith.cmpi eq, %arg1, %c0_i32_37 : i32
    %50 = arith.andi %48, %49 : i1
    %51 = arith.extui %50 : i1 to i32
    %c0_i32_38 = arith.constant 0 : i32
    %52 = arith.cmpi ne, %51, %c0_i32_38 : i32
    scf.if %52 {
      %c0_39 = arith.constant 0 : index
      %c0_40 = arith.constant 0 : index
      %53 = vector.load %arg7[%c0_39, %c0_40] : memref<8x128xf32, #tpu.memory_space<vmem>>, vector<8x128xf32>
      %cst_41 = arith.constant dense<0.000000e+00> : vector<128xf32>
      %54 = vector.multi_reduction <add>, %53, %cst_41 [0] : vector<8x128xf32> to vector<128xf32>
      %55 = vector.shape_cast %54 : vector<128xf32> to vector<1x128xf32>
      %cst_42 = arith.constant 2.048000e+03 : f32
      %56 = vector.broadcast %cst_42 : f32 to vector<1x128xf32>
      %57 = arith.divf %55, %56 : vector<1x128xf32>
      %c0_43 = arith.constant 0 : index
      %c0_44 = arith.constant 0 : index
      %58 = vector.load %arg8[%c0_43, %c0_44] : memref<8x128xf32, #tpu.memory_space<vmem>>, vector<8x128xf32>
      %cst_45 = arith.constant dense<0.000000e+00> : vector<128xf32>
      %59 = vector.multi_reduction <add>, %58, %cst_45 [0] : vector<8x128xf32> to vector<128xf32>
      %60 = vector.shape_cast %59 : vector<128xf32> to vector<1x128xf32>
      %cst_46 = arith.constant 2.048000e+03 : f32
      %61 = vector.broadcast %cst_46 : f32 to vector<1x128xf32>
      %62 = arith.divf %60, %61 : vector<1x128xf32>
      %63 = arith.mulf %57, %57 : vector<1x128xf32>
      %64 = arith.subf %62, %63 : vector<1x128xf32>
      %cst_47 = arith.constant 0.000000e+00 : f32
      %65 = vector.broadcast %cst_47 : f32 to vector<1x128xf32>
      %66 = arith.maximumf %64, %65 : vector<1x128xf32>
      %cst_48 = arith.constant 9.99999974E-6 : f32
      %67 = vector.broadcast %cst_48 : f32 to vector<1x128xf32>
      %68 = arith.addf %66, %67 : vector<1x128xf32>
      %69 = math.rsqrt %68 : vector<1x128xf32>
      %c0_49 = arith.constant 0 : index
      %c0_50 = arith.constant 0 : index
      %70 = vector.load %arg4[%c0_49, %c0_50] : memref<1x128xf32, #tpu.memory_space<vmem>>, vector<1x128xf32>
      %71 = arith.mulf %70, %69 : vector<1x128xf32>
      %c0_51 = arith.constant 0 : index
      %c0_52 = arith.constant 0 : index
      %72 = vector.load %arg5[%c0_51, %c0_52] : memref<1x128xf32, #tpu.memory_space<vmem>>, vector<1x128xf32>
      %73 = arith.mulf %57, %71 : vector<1x128xf32>
      %74 = arith.subf %72, %73 : vector<1x128xf32>
      %c0_53 = arith.constant 0 : index
      %c0_54 = arith.constant 0 : index
      %75 = vector.load %arg6[%c0_53, %c0_54] : memref<2048x128xbf16, #tpu.memory_space<vmem>>, vector<256x128xbf16>
      %76 = arith.extf %75 : vector<256x128xbf16> to vector<256x128xf32>
      %77 = vector.broadcast %71 : vector<1x128xf32> to vector<256x128xf32>
      %78 = arith.mulf %76, %77 : vector<256x128xf32>
      %79 = vector.broadcast %74 : vector<1x128xf32> to vector<256x128xf32>
      %80 = arith.addf %78, %79 : vector<256x128xf32>
      %cst_55 = arith.constant 0.000000e+00 : f32
      %81 = vector.broadcast %cst_55 : f32 to vector<256x128xf32>
      %82 = arith.maximumf %80, %81 : vector<256x128xf32>
      %83 = arith.truncf %82 : vector<256x128xf32> to vector<256x128xbf16>
      %c0_56 = arith.constant 0 : index
      %c0_57 = arith.constant 0 : index
      %84 = vector.load %arg6[%c0_56, %c0_57] : memref<2048x128xbf16, #tpu.memory_space<vmem>>, vector<256x128xbf16>
      tpu.vector_store %arg6[%c0_56, %c0_57], %83 {strides = array<i32>} : memref<2048x128xbf16, #tpu.memory_space<vmem>>, vector<256x128xbf16>,
      %c256_58 = arith.constant 256 : index
      %c0_59 = arith.constant 0 : index
      %85 = vector.load %arg6[%c256_58, %c0_59] : memref<2048x128xbf16, #tpu.memory_space<vmem>>, vector<256x128xbf16>
      %86 = arith.extf %85 : vector<256x128xbf16> to vector<256x128xf32>
      %87 = vector.broadcast %71 : vector<1x128xf32> to vector<256x128xf32>
      %88 = arith.mulf %86, %87 : vector<256x128xf32>
      %89 = vector.broadcast %74 : vector<1x128xf32> to vector<256x128xf32>
      %90 = arith.addf %88, %89 : vector<256x128xf32>
      %cst_60 = arith.constant 0.000000e+00 : f32
      %91 = vector.broadcast %cst_60 : f32 to vector<256x128xf32>
      %92 = arith.maximumf %90, %91 : vector<256x128xf32>
      %93 = arith.truncf %92 : vector<256x128xf32> to vector<256x128xbf16>
      %c256_61 = arith.constant 256 : index
      %c0_62 = arith.constant 0 : index
      %94 = vector.load %arg6[%c256_61, %c0_62] : memref<2048x128xbf16, #tpu.memory_space<vmem>>, vector<256x128xbf16>
      tpu.vector_store %arg6[%c256_61, %c0_62], %93 {strides = array<i32>} : memref<2048x128xbf16, #tpu.memory_space<vmem>>, vector<256x128xbf16>,
      %c512 = arith.constant 512 : index
      %c0_63 = arith.constant 0 : index
      %95 = vector.load %arg6[%c512, %c0_63] : memref<2048x128xbf16, #tpu.memory_space<vmem>>, vector<256x128xbf16>
      %96 = arith.extf %95 : vector<256x128xbf16> to vector<256x128xf32>
      %97 = vector.broadcast %71 : vector<1x128xf32> to vector<256x128xf32>
      %98 = arith.mulf %96, %97 : vector<256x128xf32>
      %99 = vector.broadcast %74 : vector<1x128xf32> to vector<256x128xf32>
      %100 = arith.addf %98, %99 : vector<256x128xf32>
      %cst_64 = arith.constant 0.000000e+00 : f32
      %101 = vector.broadcast %cst_64 : f32 to vector<256x128xf32>
      %102 = arith.maximumf %100, %101 : vector<256x128xf32>
      %103 = arith.truncf %102 : vector<256x128xf32> to vector<256x128xbf16>
      %c512_65 = arith.constant 512 : index
      %c0_66 = arith.constant 0 : index
      %104 = vector.load %arg6[%c512_65, %c0_66] : memref<2048x128xbf16, #tpu.memory_space<vmem>>, vector<256x128xbf16>
      tpu.vector_store %arg6[%c512_65, %c0_66], %103 {strides = array<i32>} : memref<2048x128xbf16, #tpu.memory_space<vmem>>, vector<256x128xbf16>,
      %c768 = arith.constant 768 : index
      %c0_67 = arith.constant 0 : index
      %105 = vector.load %arg6[%c768, %c0_67] : memref<2048x128xbf16, #tpu.memory_space<vmem>>, vector<256x128xbf16>
      %106 = arith.extf %105 : vector<256x128xbf16> to vector<256x128xf32>
      %107 = vector.broadcast %71 : vector<1x128xf32> to vector<256x128xf32>
      %108 = arith.mulf %106, %107 : vector<256x128xf32>
      %109 = vector.broadcast %74 : vector<1x128xf32> to vector<256x128xf32>
      %110 = arith.addf %108, %109 : vector<256x128xf32>
      %cst_68 = arith.constant 0.000000e+00 : f32
      %111 = vector.broadcast %cst_68 : f32 to vector<256x128xf32>
      %112 = arith.maximumf %110, %111 : vector<256x128xf32>
      %113 = arith.truncf %112 : vector<256x128xf32> to vector<256x128xbf16>
      %c768_69 = arith.constant 768 : index
      %c0_70 = arith.constant 0 : index
      %114 = vector.load %arg6[%c768_69, %c0_70] : memref<2048x128xbf16, #tpu.memory_space<vmem>>, vector<256x128xbf16>
      tpu.vector_store %arg6[%c768_69, %c0_70], %113 {strides = array<i32>} : memref<2048x128xbf16, #tpu.memory_space<vmem>>, vector<256x128xbf16>,
      %c1024 = arith.constant 1024 : index
      %c0_71 = arith.constant 0 : index
      %115 = vector.load %arg6[%c1024, %c0_71] : memref<2048x128xbf16, #tpu.memory_space<vmem>>, vector<256x128xbf16>
      %116 = arith.extf %115 : vector<256x128xbf16> to vector<256x128xf32>
      %117 = vector.broadcast %71 : vector<1x128xf32> to vector<256x128xf32>
      %118 = arith.mulf %116, %117 : vector<256x128xf32>
      %119 = vector.broadcast %74 : vector<1x128xf32> to vector<256x128xf32>
      %120 = arith.addf %118, %119 : vector<256x128xf32>
      %cst_72 = arith.constant 0.000000e+00 : f32
      %121 = vector.broadcast %cst_72 : f32 to vector<256x128xf32>
      %122 = arith.maximumf %120, %121 : vector<256x128xf32>
      %123 = arith.truncf %122 : vector<256x128xf32> to vector<256x128xbf16>
      %c1024_73 = arith.constant 1024 : index
      %c0_74 = arith.constant 0 : index
      %124 = vector.load %arg6[%c1024_73, %c0_74] : memref<2048x128xbf16, #tpu.memory_space<vmem>>, vector<256x128xbf16>
      tpu.vector_store %arg6[%c1024_73, %c0_74], %123 {strides = array<i32>} : memref<2048x128xbf16, #tpu.memory_space<vmem>>, vector<256x128xbf16>,
      %c1280 = arith.constant 1280 : index
      %c0_75 = arith.constant 0 : index
      %125 = vector.load %arg6[%c1280, %c0_75] : memref<2048x128xbf16, #tpu.memory_space<vmem>>, vector<256x128xbf16>
      %126 = arith.extf %125 : vector<256x128xbf16> to vector<256x128xf32>
      %127 = vector.broadcast %71 : vector<1x128xf32> to vector<256x128xf32>
      %128 = arith.mulf %126, %127 : vector<256x128xf32>
      %129 = vector.broadcast %74 : vector<1x128xf32> to vector<256x128xf32>
      %130 = arith.addf %128, %129 : vector<256x128xf32>
      %cst_76 = arith.constant 0.000000e+00 : f32
      %131 = vector.broadcast %cst_76 : f32 to vector<256x128xf32>
      %132 = arith.maximumf %130, %131 : vector<256x128xf32>
      %133 = arith.truncf %132 : vector<256x128xf32> to vector<256x128xbf16>
      %c1280_77 = arith.constant 1280 : index
      %c0_78 = arith.constant 0 : index
      %134 = vector.load %arg6[%c1280_77, %c0_78] : memref<2048x128xbf16, #tpu.memory_space<vmem>>, vector<256x128xbf16>
      tpu.vector_store %arg6[%c1280_77, %c0_78], %133 {strides = array<i32>} : memref<2048x128xbf16, #tpu.memory_space<vmem>>, vector<256x128xbf16>,
      %c1536 = arith.constant 1536 : index
      %c0_79 = arith.constant 0 : index
      %135 = vector.load %arg6[%c1536, %c0_79] : memref<2048x128xbf16, #tpu.memory_space<vmem>>, vector<256x128xbf16>
      %136 = arith.extf %135 : vector<256x128xbf16> to vector<256x128xf32>
      %137 = vector.broadcast %71 : vector<1x128xf32> to vector<256x128xf32>
      %138 = arith.mulf %136, %137 : vector<256x128xf32>
      %139 = vector.broadcast %74 : vector<1x128xf32> to vector<256x128xf32>
      %140 = arith.addf %138, %139 : vector<256x128xf32>
      %cst_80 = arith.constant 0.000000e+00 : f32
      %141 = vector.broadcast %cst_80 : f32 to vector<256x128xf32>
      %142 = arith.maximumf %140, %141 : vector<256x128xf32>
      %143 = arith.truncf %142 : vector<256x128xf32> to vector<256x128xbf16>
      %c1536_81 = arith.constant 1536 : index
      %c0_82 = arith.constant 0 : index
      %144 = vector.load %arg6[%c1536_81, %c0_82] : memref<2048x128xbf16, #tpu.memory_space<vmem>>, vector<256x128xbf16>
      tpu.vector_store %arg6[%c1536_81, %c0_82], %143 {strides = array<i32>} : memref<2048x128xbf16, #tpu.memory_space<vmem>>, vector<256x128xbf16>,
      %c1792 = arith.constant 1792 : index
      %c0_83 = arith.constant 0 : index
      %145 = vector.load %arg6[%c1792, %c0_83] : memref<2048x128xbf16, #tpu.memory_space<vmem>>, vector<256x128xbf16>
      %146 = arith.extf %145 : vector<256x128xbf16> to vector<256x128xf32>
      %147 = vector.broadcast %71 : vector<1x128xf32> to vector<256x128xf32>
      %148 = arith.mulf %146, %147 : vector<256x128xf32>
      %149 = vector.broadcast %74 : vector<1x128xf32> to vector<256x128xf32>
      %150 = arith.addf %148, %149 : vector<256x128xf32>
      %cst_84 = arith.constant 0.000000e+00 : f32
      %151 = vector.broadcast %cst_84 : f32 to vector<256x128xf32>
      %152 = arith.maximumf %150, %151 : vector<256x128xf32>
      %153 = arith.truncf %152 : vector<256x128xf32> to vector<256x128xbf16>
      %c1792_85 = arith.constant 1792 : index
      %c0_86 = arith.constant 0 : index
      %154 = vector.load %arg6[%c1792_85, %c0_86] : memref<2048x128xbf16, #tpu.memory_space<vmem>>, vector<256x128xbf16>
      tpu.vector_store %arg6[%c1792_85, %c0_86], %153 {strides = array<i32>} : memref<2048x128xbf16, #tpu.memory_space<vmem>>, vector<256x128xbf16>,
    } else {
    }
    return
  }
  func.func @transform_0(%arg0: i32, %arg1: i32) -> (i32, i32, i32) {
    %c0_i32 = arith.constant 0 : i32
    %c0_i32_0 = arith.constant 0 : i32
    return %arg0, %arg1, %c0_i32 : i32, i32, i32
  }
  func.func @transform_1(%arg0: i32, %arg1: i32) -> (i32, i32, i32) {
    %c0_i32 = arith.constant 0 : i32
    %c0_i32_0 = arith.constant 0 : i32
    %c0_i32_1 = arith.constant 0 : i32
    return %arg0, %c0_i32, %c0_i32_0 : i32, i32, i32
  }
  func.func @transform_2(%arg0: i32, %arg1: i32) -> (i32, i32) {
    %c0_i32 = arith.constant 0 : i32
    %c0_i32_0 = arith.constant 0 : i32
    %c0_i32_1 = arith.constant 0 : i32
    return %c0_i32, %c0_i32_0 : i32, i32
  }
  func.func @transform_3(%arg0: i32, %arg1: i32) -> (i32, i32) {
    %c0_i32 = arith.constant 0 : i32
    %c0_i32_0 = arith.constant 0 : i32
    %c0_i32_1 = arith.constant 0 : i32
    return %c0_i32, %c0_i32_0 : i32, i32
  }
  func.func @transform_4(%arg0: i32, %arg1: i32) -> (i32, i32) {
    %c0_i32 = arith.constant 0 : i32
    %c0_i32_0 = arith.constant 0 : i32
    %c0_i32_1 = arith.constant 0 : i32
    return %c0_i32, %c0_i32_0 : i32, i32
  }
}

module attributes {stable_mosaic.version = 11 : i64} {
  func.func @_convT_tanh_kernel(%arg0: i32, %arg1: i32, %arg2: memref<1x1024x128xbf16, #tpu.memory_space<vmem>>, %arg3: memref<1x128x128xbf16, #tpu.memory_space<vmem>>, %arg4: memref<1x1024x128xbf16, #tpu.memory_space<vmem>>) attributes {dimension_semantics = [#tpu.dimension_semantics<parallel>, #tpu.dimension_semantics<parallel>], iteration_bounds = array<i64: 4, 2>, scalar_prefetch = 0 : i64, scratch_operands = 0 : i64, tpu.core_type = #tpu.core_type<tc>, window_params = [{transform_indices = @transform_0, window_bounds = array<i64: 1, 1024, 128>}, {transform_indices = @transform_1, window_bounds = array<i64: 1, 128, 128>}, {transform_indices = @transform_2, window_bounds = array<i64: 1, 1024, 128>}]} {
    %c0 = arith.constant 0 : index
    %c0_0 = arith.constant 0 : index
    %c0_1 = arith.constant 0 : index
    %0 = vector.load %arg2[%c0, %c0_0, %c0_1] : memref<1x1024x128xbf16, #tpu.memory_space<vmem>>, vector<1x256x128xbf16>
    %1 = vector.shape_cast %0 : vector<1x256x128xbf16> to vector<256x128xbf16>
    %c0_2 = arith.constant 0 : index
    %c0_3 = arith.constant 0 : index
    %c0_4 = arith.constant 0 : index
    %2 = vector.load %arg3[%c0_2, %c0_3, %c0_4] : memref<1x128x128xbf16, #tpu.memory_space<vmem>>, vector<1x128x128xbf16>
    %3 = vector.shape_cast %2 : vector<1x128x128xbf16> to vector<128x128xbf16>
    %cst = arith.constant dense<0.000000e+00> : vector<256x128xf32>
    %4 = tpu.matmul %1, %3, %cst {dimension_numbers = #tpu.dot_dimension_numbers<[1], [0], [0], [1], [0, 0, 1, 1], [], []>} : vector<256x128xbf16>, vector<128x128xbf16>, vector<256x128xf32> -> vector<256x128xf32>
    %5 = math.tanh %4 : vector<256x128xf32>
    %6 = arith.truncf %5 : vector<256x128xf32> to vector<256x128xbf16>
    %c0_5 = arith.constant 0 : index
    %c0_6 = arith.constant 0 : index
    %c0_7 = arith.constant 0 : index
    %7 = vector.load %arg4[%c0_5, %c0_6, %c0_7] : memref<1x1024x128xbf16, #tpu.memory_space<vmem>>, vector<1x256x128xbf16>
    %8 = vector.shape_cast %7 : vector<1x256x128xbf16> to vector<256x128xbf16>
    %9 = vector.shape_cast %6 : vector<256x128xbf16> to vector<1x256x128xbf16>
    tpu.vector_store %arg4[%c0_5, %c0_6, %c0_7], %9 {strides = array<i32>} : memref<1x1024x128xbf16, #tpu.memory_space<vmem>>, vector<1x256x128xbf16>,
    %c0_8 = arith.constant 0 : index
    %c256 = arith.constant 256 : index
    %c0_9 = arith.constant 0 : index
    %10 = vector.load %arg2[%c0_8, %c256, %c0_9] : memref<1x1024x128xbf16, #tpu.memory_space<vmem>>, vector<1x256x128xbf16>
    %11 = vector.shape_cast %10 : vector<1x256x128xbf16> to vector<256x128xbf16>
    %c0_10 = arith.constant 0 : index
    %c0_11 = arith.constant 0 : index
    %c0_12 = arith.constant 0 : index
    %12 = vector.load %arg3[%c0_10, %c0_11, %c0_12] : memref<1x128x128xbf16, #tpu.memory_space<vmem>>, vector<1x128x128xbf16>
    %13 = vector.shape_cast %12 : vector<1x128x128xbf16> to vector<128x128xbf16>
    %cst_13 = arith.constant dense<0.000000e+00> : vector<256x128xf32>
    %14 = tpu.matmul %11, %13, %cst_13 {dimension_numbers = #tpu.dot_dimension_numbers<[1], [0], [0], [1], [0, 0, 1, 1], [], []>} : vector<256x128xbf16>, vector<128x128xbf16>, vector<256x128xf32> -> vector<256x128xf32>
    %15 = math.tanh %14 : vector<256x128xf32>
    %16 = arith.truncf %15 : vector<256x128xf32> to vector<256x128xbf16>
    %c0_14 = arith.constant 0 : index
    %c256_15 = arith.constant 256 : index
    %c0_16 = arith.constant 0 : index
    %17 = vector.load %arg4[%c0_14, %c256_15, %c0_16] : memref<1x1024x128xbf16, #tpu.memory_space<vmem>>, vector<1x256x128xbf16>
    %18 = vector.shape_cast %17 : vector<1x256x128xbf16> to vector<256x128xbf16>
    %19 = vector.shape_cast %16 : vector<256x128xbf16> to vector<1x256x128xbf16>
    tpu.vector_store %arg4[%c0_14, %c256_15, %c0_16], %19 {strides = array<i32>} : memref<1x1024x128xbf16, #tpu.memory_space<vmem>>, vector<1x256x128xbf16>,
    %c0_17 = arith.constant 0 : index
    %c512 = arith.constant 512 : index
    %c0_18 = arith.constant 0 : index
    %20 = vector.load %arg2[%c0_17, %c512, %c0_18] : memref<1x1024x128xbf16, #tpu.memory_space<vmem>>, vector<1x256x128xbf16>
    %21 = vector.shape_cast %20 : vector<1x256x128xbf16> to vector<256x128xbf16>
    %c0_19 = arith.constant 0 : index
    %c0_20 = arith.constant 0 : index
    %c0_21 = arith.constant 0 : index
    %22 = vector.load %arg3[%c0_19, %c0_20, %c0_21] : memref<1x128x128xbf16, #tpu.memory_space<vmem>>, vector<1x128x128xbf16>
    %23 = vector.shape_cast %22 : vector<1x128x128xbf16> to vector<128x128xbf16>
    %cst_22 = arith.constant dense<0.000000e+00> : vector<256x128xf32>
    %24 = tpu.matmul %21, %23, %cst_22 {dimension_numbers = #tpu.dot_dimension_numbers<[1], [0], [0], [1], [0, 0, 1, 1], [], []>} : vector<256x128xbf16>, vector<128x128xbf16>, vector<256x128xf32> -> vector<256x128xf32>
    %25 = math.tanh %24 : vector<256x128xf32>
    %26 = arith.truncf %25 : vector<256x128xf32> to vector<256x128xbf16>
    %c0_23 = arith.constant 0 : index
    %c512_24 = arith.constant 512 : index
    %c0_25 = arith.constant 0 : index
    %27 = vector.load %arg4[%c0_23, %c512_24, %c0_25] : memref<1x1024x128xbf16, #tpu.memory_space<vmem>>, vector<1x256x128xbf16>
    %28 = vector.shape_cast %27 : vector<1x256x128xbf16> to vector<256x128xbf16>
    %29 = vector.shape_cast %26 : vector<256x128xbf16> to vector<1x256x128xbf16>
    tpu.vector_store %arg4[%c0_23, %c512_24, %c0_25], %29 {strides = array<i32>} : memref<1x1024x128xbf16, #tpu.memory_space<vmem>>, vector<1x256x128xbf16>,
    %c0_26 = arith.constant 0 : index
    %c768 = arith.constant 768 : index
    %c0_27 = arith.constant 0 : index
    %30 = vector.load %arg2[%c0_26, %c768, %c0_27] : memref<1x1024x128xbf16, #tpu.memory_space<vmem>>, vector<1x256x128xbf16>
    %31 = vector.shape_cast %30 : vector<1x256x128xbf16> to vector<256x128xbf16>
    %c0_28 = arith.constant 0 : index
    %c0_29 = arith.constant 0 : index
    %c0_30 = arith.constant 0 : index
    %32 = vector.load %arg3[%c0_28, %c0_29, %c0_30] : memref<1x128x128xbf16, #tpu.memory_space<vmem>>, vector<1x128x128xbf16>
    %33 = vector.shape_cast %32 : vector<1x128x128xbf16> to vector<128x128xbf16>
    %cst_31 = arith.constant dense<0.000000e+00> : vector<256x128xf32>
    %34 = tpu.matmul %31, %33, %cst_31 {dimension_numbers = #tpu.dot_dimension_numbers<[1], [0], [0], [1], [0, 0, 1, 1], [], []>} : vector<256x128xbf16>, vector<128x128xbf16>, vector<256x128xf32> -> vector<256x128xf32>
    %35 = math.tanh %34 : vector<256x128xf32>
    %36 = arith.truncf %35 : vector<256x128xf32> to vector<256x128xbf16>
    %c0_32 = arith.constant 0 : index
    %c768_33 = arith.constant 768 : index
    %c0_34 = arith.constant 0 : index
    %37 = vector.load %arg4[%c0_32, %c768_33, %c0_34] : memref<1x1024x128xbf16, #tpu.memory_space<vmem>>, vector<1x256x128xbf16>
    %38 = vector.shape_cast %37 : vector<1x256x128xbf16> to vector<256x128xbf16>
    %39 = vector.shape_cast %36 : vector<256x128xbf16> to vector<1x256x128xbf16>
    tpu.vector_store %arg4[%c0_32, %c768_33, %c0_34], %39 {strides = array<i32>} : memref<1x1024x128xbf16, #tpu.memory_space<vmem>>, vector<1x256x128xbf16>,
    return
  }
  func.func @transform_0(%arg0: i32, %arg1: i32) -> (i32, i32, i32) {
    %c0_i32 = arith.constant 0 : i32
    %c0_i32_0 = arith.constant 0 : i32
    return %arg0, %arg1, %c0_i32 : i32, i32, i32
  }
  func.func @transform_1(%arg0: i32, %arg1: i32) -> (i32, i32, i32) {
    %c0_i32 = arith.constant 0 : i32
    %c0_i32_0 = arith.constant 0 : i32
    %c0_i32_1 = arith.constant 0 : i32
    return %arg0, %c0_i32, %c0_i32_0 : i32, i32, i32
  }
  func.func @transform_2(%arg0: i32, %arg1: i32) -> (i32, i32, i32) {
    %c0_i32 = arith.constant 0 : i32
    %c0_i32_0 = arith.constant 0 : i32
    return %arg0, %arg1, %c0_i32 : i32, i32, i32
  }
}

</mosaic_0001>

<llo_original>
// kernel: generator_forward.5
$region0: #{generator_forward.5}
  #allocation0 [shape = 'u32[]', space=smem, size = 0x4, offset = 0x4, fixed_abs, tag = 'smem constant byte address 0x4 - core index']
  #allocation1 [shape = 'u32[144,128]{1,0:T(1,128)}', space=vmem, size = 0x12000, scoped, tag = 'internal scratch']
  #allocation2 [shape = 'f32[8,128]{1,0:T(8,128)}', space=vmem, size = 0x1000, scoped, tag = 'scratch operand']
  #allocation3 [shape = 'f32[8,128]{1,0:T(8,128)}', space=vmem, size = 0x1000, scoped, tag = 'scratch operand']
  %s0 = inlined_call_operand.vmem [shape: bf16[1,32,128], index: 0, kind: input, shape index: {}]
  %s1 = inlined_call_operand.vmem [shape: bf16[1,128,128], index: 1, kind: input, shape index: {}]
  %s2 = inlined_call_operand.vmem [shape: f32[1,128], index: 2, kind: input, shape index: {}]
  %s3 = inlined_call_operand.vmem [shape: f32[1,128], index: 3, kind: input, shape index: {}]
  %s4 = inlined_call_operand.vmem [shape: bf16[32,128], index: 4, kind: output, shape index: {}]
  %s5 = sld [smem:[#allocation0]]
  $region34: #{generator_forward.5} parent=0
    _
  %s7 = ssub.s32 1, %s5
  %s8 = scalar_select 0, %s7, %s5
  // Predicated region
  $region2: #{generator_forward.5} parent=0 // pred_check
    _
  $region3: #{generator_forward.5} parent=0 // pred_check_branch
    %10 = sbr.rel (0) target = $region5
  $region4: #{generator_forward.5} parent=0 // pred_region
    _
  $region5: #{generator_forward.5} parent=0 // pred_fallthru
    _
  // Predicated region
  $region6: #{generator_forward.5} parent=0 // pred_check
    _
  $region7: #{generator_forward.5} parent=0 // pred_check_branch
    %12 = sbr.rel (0) target = $region9
  $region8: #{generator_forward.5} parent=0 // pred_region
    _
  $region9: #{generator_forward.5} parent=0 // pred_fallthru
    _
  // Predicated region
  $region10: #{generator_forward.5} parent=0 // pred_check
    _
  $region11: #{generator_forward.5} parent=0 // pred_check_branch
    %14 = sbr.rel (0) target = $region13
  $region12: #{generator_forward.5} parent=0 // pred_region
    _
  $region13: #{generator_forward.5} parent=0 // pred_fallthru
    _
  // Predicated region
  $region14: #{generator_forward.5} parent=0 // pred_check
    _
  $region15: #{generator_forward.5} parent=0 // pred_check_branch
    %16 = sbr.rel (0) target = $region17
  $region16: #{generator_forward.5} parent=0 // pred_region
    _
  $region17: #{generator_forward.5} parent=0 // pred_fallthru
    _
  %p18 = scmp.eq.s32.totalorder 0, 0
  %p19 = scmp.eq.s32.totalorder 0, 0
  %p20 = pnand %p18, %p19
  %p21 = pneg %p20
  // Predicated region
  $region18: #{generator_forward.5} parent=0 // pred_check
    _
  $region19: #{generator_forward.5} parent=0 // pred_check_branch
    %23 = sbr.rel (%p20) target = $region21
  $region20: #{generator_forward.5} parent=0 // pred_region
    %24 = vst [vmem:[#allocation2] sm:$0xff] 0.0
    %25 = vst [vmem:[#allocation3] sm:$0xff] 0.0
  $region21: #{generator_forward.5} parent=0 // pred_fallthru
    _
  %s26 = smul.u32 0, 32
  %s27 = smul.u32 0, 32
  %s28 = sadd.s32 %s26, %s27
  %v29 = vld [vmem:[%s0] sm:$0xf]
  %v30 = vld [vmem:[%s0 + $0x4] sm:$0xf]
  %v31 = vld [vmem:[%s0 + $0x8] sm:$0xf]
  %v32 = vld [vmem:[%s0 + $0xc] sm:$0xf]
  %v33 = vld [vmem:[%s1] sm:$0xf]
  %v34 = vld [vmem:[%s1 + $0x4] sm:$0xf]
  %v35 = vld [vmem:[%s1 + $0x8] sm:$0xf]
  %v36 = vld [vmem:[%s1 + $0xc] sm:$0xf]
  %v37 = vld [vmem:[%s1 + $0x10] sm:$0xf]
  %v38 = vld [vmem:[%s1 + $0x14] sm:$0xf]
  %v39 = vld [vmem:[%s1 + $0x18] sm:$0xf]
  %v40 = vld [vmem:[%s1 + $0x1c] sm:$0xf]
  %v41 = vld [vmem:[%s1 + $0x20] sm:$0xf]
  %v42 = vld [vmem:[%s1 + $0x24] sm:$0xf]
  %v43 = vld [vmem:[%s1 + $0x28] sm:$0xf]
  %v44 = vld [vmem:[%s1 + $0x2c] sm:$0xf]
  %v45 = vld [vmem:[%s1 + $0x30] sm:$0xf]
  %v46 = vld [vmem:[%s1 + $0x34] sm:$0xf]
  %v47 = vld [vmem:[%s1 + $0x38] sm:$0xf]
  %v48 = vld [vmem:[%s1 + $0x3c] sm:$0xf]
  %v53 = vunpack.c.l.b16 %v29
  %v54 = vunpack.c.l.b16 %v30
  %v55 = vunpack.c.l.b16 %v31
  %v56 = vunpack.c.l.b16 %v32
  %v57 = vpack.c.b16 %v54, %v53
  %v58 = vpack.c.b16 %v56, %v55
  %v77 = vunpack.c.l.b16 %v33
  %v78 = vunpack.c.l.b16 %v34
  %v79 = vunpack.c.l.b16 %v35
  %v80 = vunpack.c.l.b16 %v36
  %v81 = vunpack.c.l.b16 %v37
  %v82 = vunpack.c.l.b16 %v38
  %v83 = vunpack.c.l.b16 %v39
  %v84 = vunpack.c.l.b16 %v40
  %v85 = vunpack.c.l.b16 %v41
  %v86 = vunpack.c.l.b16 %v42
  %v87 = vunpack.c.l.b16 %v43
  %v88 = vunpack.c.l.b16 %v44
  %v89 = vunpack.c.l.b16 %v45
  %v90 = vunpack.c.l.b16 %v46
  %v91 = vunpack.c.l.b16 %v47
  %v92 = vunpack.c.l.b16 %v48
  %v93 = vpack.c.b16 %v78, %v77
  %v94 = vpack.c.b16 %v80, %v79
  %v95 = vpack.c.b16 %v82, %v81
  %v96 = vpack.c.b16 %v84, %v83
  %v97 = vpack.c.b16 %v86, %v85
  %v98 = vpack.c.b16 %v88, %v87
  %v99 = vpack.c.b16 %v90, %v89
  %v100 = vpack.c.b16 %v92, %v91
  %109 = vmatprep.subr.bf16.mxu0 0
  %110 = vmatpush1.bf16.msra.mxu0 %v93
  %111 = vmatprep.subr.bf16.mxu0 0
  %112 = vmatpush1.bf16.msra.mxu0 %v94
  %113 = vmatprep.subr.bf16.mxu0 0
  %114 = vmatpush1.bf16.msra.mxu0 %v95
  %115 = vmatprep.subr.bf16.mxu0 0
  %116 = vmatpush1.bf16.msra.mxu0 %v96
  %117 = vmatprep.subr.bf16.mxu0 0
  %118 = vmatpush1.bf16.msra.mxu0 %v97
  %119 = vmatprep.subr.bf16.mxu0 0
  %120 = vmatpush1.bf16.msra.mxu0 %v98
  %121 = vmatprep.subr.bf16.mxu0 0
  %122 = vmatpush1.bf16.msra.mxu0 %v99
  %123 = vmatprep.subr.bf16.mxu0 0
  %124 = vmatpush1.bf16.msra.mxu0 %v100
  %125 = vmatprep.subr.bf16.mxu0 0
  %126 = vmatpush1.bf16.msra.mxu0 0
  %127 = vmatprep.subr.bf16.mxu0 0
  %128 = vmatpush1.bf16.msra.mxu0 0
  %129 = vmatprep.subr.bf16.mxu0 0
  %130 = vmatpush1.bf16.msra.mxu0 0
  %131 = vmatprep.subr.bf16.mxu0 0
  %132 = vmatpush1.bf16.msra.mxu0 0
  %133 = vmatprep.subr.bf16.mxu0 0
  %134 = vmatpush1.bf16.msra.mxu0 0
  %135 = vmatprep.subr.bf16.mxu0 0
  %136 = vmatpush1.bf16.msra.mxu0 0
  %137 = vmatprep.subr.bf16.mxu0 0
  %138 = vmatpush1.bf16.msra.mxu0 0
  %139 = vmatprep.subr.bf16.mxu0 0
  %140 = vmatpush1.bf16.msra.mxu0 0
  %141 = vmatprep.mubr.bf16.mxu0 0
  %142 = vmatmul.mubr.bf16.gmra.mrb[0].mxu0 %v57
  %v143 = vpop.f32.mrb[0].mxu0
  %v144 = vadd.f32 0.0, %v143
  %v145 = vpop.f32.mrb[0].mxu0
  %v146 = vpop.f32.mrb[0].mxu0
  %v147 = vadd.f32 0.0, %v146
  %v148 = vpop.f32.mrb[0].mxu0
  %149 = vmatprep.mubr.bf16.mxu0 0
  %150 = vmatmul.mubr.bf16.gmra.mrb[0].mxu0 %v58
  %v151 = vpop.f32.mrb[0].mxu0
  %v152 = vadd.f32 0.0, %v151
  %v153 = vpop.f32.mrb[0].mxu0
  %v154 = vpop.f32.mrb[0].mxu0
  %v155 = vadd.f32 0.0, %v154
  %v156 = vpop.f32.mrb[0].mxu0
  %157 = vdwg.mxu0
  %v158 = vpack.c.bf16 %v147, %v144
  %v159 = vpack.c.bf16 %v155, %v152
  %v162 = vunpack.c.l.b16 %v158
  %v163 = vunpack.c.h.b16 %v158
  %v164 = vunpack.c.l.b16 %v159
  %v165 = vunpack.c.h.b16 %v159
  %v166 = vpack.c.b16 %v162, %v162
  %v167 = vpack.c.b16 %v163, %v163
  %v168 = vpack.c.b16 %v164, %v164
  %v169 = vpack.c.b16 %v165, %v165
  %s174 = sshra.s32 %s28, 3
  %s175 = sand.u32 %s28, 7
  %s176 = smul.addr %s174, 4
  %s177 = scalar_lea.vmem %s4, %s176
  %178 = vst [vmem:[%s177] sm:$0xf] %v166
  %179 = vst [vmem:[%s177 + $0x4] sm:$0xf] %v167
  %180 = vst [vmem:[%s177 + $0x8] sm:$0xf] %v168
  %181 = vst [vmem:[%s177 + $0xc] sm:$0xf] %v169
  %v182 = vld [vmem:[#allocation2] sm:$0xff]
  %v183 = vadd.f32 %v144, %v147
  %v184 = vadd.f32 %v183, %v152
  %v185 = vadd.f32 %v184, %v155
  %v186 = vadd.f32 %v182, %v185
  %187 = vst [vmem:[#allocation2] sm:$0xff] %v186
  %v188 = vld [vmem:[#allocation3] sm:$0xff]
  %v189 = vmul.f32 %v144, %v144
  %v190 = vmul.f32 %v147, %v147
  %v191 = vmul.f32 %v152, %v152
  %v192 = vmul.f32 %v155, %v155
  %v193 = vadd.f32 %v189, %v190
  %v194 = vadd.f32 %v193, %v191
  %v195 = vadd.f32 %v194, %v192
  %v196 = vadd.f32 %v188, %v195
  %197 = vst [vmem:[#allocation3] sm:$0xff] %v196
  // Predicated region
  $region22: #{generator_forward.5} parent=0 // pred_check
    _
  $region23: #{generator_forward.5} parent=0 // pred_check_branch
    %199 = sbr.rel (%p20) target = $region25
  $region24: #{generator_forward.5} parent=0 // pred_region
    %v200 = vld [vmem:[#allocation2] sm:$0xff]
    %v201 = vrot.slane %v200, 4
    %v202 = vadd.f32 %v200, %v201
    %v203 = vrot.slane %v202, 2
    %v204 = vadd.f32 %v202, %v203
    %v205 = vrot.slane %v204, 1
    %v206 = vadd.f32 %v204, %v205
    %v207 = vrcp.pop 32.0
    %v208 = vmul.f32 %v206, %v207
    %v209 = vld [vmem:[#allocation3] sm:$0xff]
    %v210 = vrot.slane %v209, 4
    %v211 = vadd.f32 %v209, %v210
    %v212 = vrot.slane %v211, 2
    %v213 = vadd.f32 %v211, %v212
    %v214 = vrot.slane %v213, 1
    %v215 = vadd.f32 %v213, %v214
    %v216 = vmul.f32 %v215, %v207
    %v217 = vmul.f32 %v208, %v208
    %v218 = vsub.f32 %v216, %v217
    %v219 = vmax.f32 %v218, 0.0
    %v220 = vadd.f32 %v219, 1e-05
    %v221 = vrsqrt.pop %v220
    %v222 = vld [vmem:[%s2] sm:$0x1]
    %v223 = vmul.f32 %v222, %v221
    %v224 = vld [vmem:[%s3] sm:$0x1]
    %v225 = vmul.f32 %v208, %v223
    %v226 = vsub.f32 %v224, %v225
    %v227 = vld [vmem:[%s4] sm:$0xf]
    %v228 = vld [vmem:[%s4 + $0x4] sm:$0xf]
    %v229 = vld [vmem:[%s4 + $0x8] sm:$0xf]
    %v230 = vld [vmem:[%s4 + $0xc] sm:$0xf]
    %v231 = vunpack.c.l.bf16 %v227
    %v232 = vunpack.c.l.bf16 %v228
    %v233 = vunpack.c.l.bf16 %v229
    %v234 = vunpack.c.l.bf16 %v230
    %v236 = vlaneseq
    %v237 = vshrl.u32 %v236, 7
    %v238 = vsub.s32 0, %v237
    %v239 = vrot.slane %v223, %v238
    %v241 = vmul.f32 %v231, %v239
    %v242 = vmul.f32 %v232, %v239
    %v243 = vmul.f32 %v233, %v239
    %v244 = vmul.f32 %v234, %v239
    %v246 = vlaneseq
    %v247 = vshrl.u32 %v246, 7
    %v248 = vsub.s32 0, %v247
    %v249 = vrot.slane %v226, %v248
    %v251 = vadd.f32 %v241, %v249
    %v252 = vadd.f32 %v242, %v249
    %v253 = vadd.f32 %v243, %v249
    %v254 = vadd.f32 %v244, %v249
    %v255 = vmax.f32 %v251, 0.0
    %v256 = vmax.f32 %v252, 0.0
    %v257 = vmax.f32 %v253, 0.0
    %v258 = vmax.f32 %v254, 0.0
    %v259 = vpack.c.bf16 %v256, %v255
    %v260 = vpack.c.bf16 %v258, %v257
    %v263 = vunpack.c.l.b16 %v259
    %v264 = vunpack.c.h.b16 %v259
    %v265 = vunpack.c.l.b16 %v260
    %v266 = vunpack.c.h.b16 %v260
    %v267 = vpack.c.b16 %v263, %v263
    %v268 = vpack.c.b16 %v264, %v264
    %v269 = vpack.c.b16 %v265, %v265
    %v270 = vpack.c.b16 %v266, %v266
    %275 = vst [vmem:[%s4] sm:$0xf] %v267
    %276 = vst [vmem:[%s4 + $0x4] sm:$0xf] %v268
    %277 = vst [vmem:[%s4 + $0x8] sm:$0xf] %v269
    %278 = vst [vmem:[%s4 + $0xc] sm:$0xf] %v270
  $region25: #{generator_forward.5} parent=0 // pred_fallthru
    _
  // Predicated region
  $region26: #{generator_forward.5} parent=0 // pred_check
    _
  $region27: #{generator_forward.5} parent=0 // pred_check_branch
    %280 = sbr.rel (0) target = $region29
  $region28: #{generator_forward.5} parent=0 // pred_region
    _
  $region29: #{generator_forward.5} parent=0 // pred_fallthru
    _
  // Predicated region
  $region30: #{generator_forward.5} parent=0 // pred_check
    _
  $region31: #{generator_forward.5} parent=0 // pred_check_branch
    %282 = sbr.rel (0) target = $region33
  $region32: #{generator_forward.5} parent=0 // pred_region
    _
  $region33: #{generator_forward.5} parent=0 // pred_fallthru
    _

// kernel: generator_forward.6
$region0: #{generator_forward.6}
  #allocation0 [shape = 'u32[]', space=smem, size = 0x4, offset = 0x4, fixed_abs, tag = 'smem constant byte address 0x4 - core index']
  #allocation1 [shape = 'u32[144,128]{1,0:T(1,128)}', space=vmem, size = 0x12000, scoped, tag = 'internal scratch']
  #allocation2 [shape = 'f32[8,128]{1,0:T(8,128)}', space=vmem, size = 0x1000, scoped, tag = 'scratch operand']
  #allocation3 [shape = 'f32[8,128]{1,0:T(8,128)}', space=vmem, size = 0x1000, scoped, tag = 'scratch operand']
  %s0 = inlined_call_operand.vmem [shape: bf16[4,32,256], index: 0, kind: input, shape index: {}]
  %s1 = inlined_call_operand.vmem [shape: bf16[4,256,128], index: 1, kind: input, shape index: {}]
  %s2 = inlined_call_operand.vmem [shape: f32[1,128], index: 2, kind: input, shape index: {}]
  %s3 = inlined_call_operand.vmem [shape: f32[1,128], index: 3, kind: input, shape index: {}]
  %s4 = inlined_call_operand.vmem [shape: bf16[128,128], index: 4, kind: output, shape index: {}]
  %s5 = sld [smem:[#allocation0]]
  $region57: #{generator_forward.6} parent=0
    _
  %s7 = ssub.s32 1, %s5
  %s8 = scalar_select 0, %s7, %s5
  loop: start=0, step=1, limit=6
  $region2: #{generator_forward.6} parent=0 // loop_pre_header
    _
  $region3: #{generator_forward.6} parent=0 // loop_header
    %s10 = sphi 0, %s14
    %p11 = scmp.ge.s32.totalorder %s10, 6
    %s17 = sphi 0, %s29
    %s18 = sphi 0, %s25
    %s19 = sphi 0, %s17
    %s20 = sphi 0, %s18
    %s21 = sphi 0, %s19
    %s22 = sphi 0, %s20
    %s34 = sphi 0, %s36
    %s37 = sphi 0, %s34
    %s38 = sphi 0, %s37
    %s54 = sphi 0, %s38
    %s60 = sphi 0, %s62
    %s63 = sphi 0, %s60
    %s64 = sphi 0, %s63
    %s80 = sphi 0, %s64
    %s84 = sphi 0, %s84
    %s86 = sphi 0, %s84
    %s87 = sphi 0, %s86
    %s101 = sphi 0, %s87
    %s105 = sphi 0, %s105
    %s107 = sphi 0, %s105
    %s108 = sphi 0, %s107
    %s122 = sphi 0, %s108
    %s126 = sphi 0, %s126
    %s128 = sphi 0, %s126
    %s129 = sphi 0, %s128
    %s143 = sphi 0, %s129
  $region4: #{generator_forward.6} parent=0 // loop_header_branch
    %13 = sbr.rel (%p11) target = $region8
  $region5: #{generator_forward.6} parent=0 // loop_body
    %s15 = ssub.s32 %s10, 1
    %s16 = ssub.s32 %s10, 2
    %s23 = sadd.s32 1, %s18
    %p24 = scmp.ge.s32.totalorder %s23, 1
    %s25 = scalar_select %p24, 0, %s23
    %s26 = sadd.s32 1, %s17
    %s27 = scalar_select %p24, %s26, %s17
    %p28 = scmp.ge.s32.totalorder %s27, 4
    %s29 = scalar_select %p28, 0, %s27
    %s30 = ssub.s32 %s17, %s29
    %s31 = ssub.s32 %s18, %s25
    %s32 = sor.u32 %s30, %s31
    %p33 = scmp.eq.s32.totalorder %s32, 0
    %s35 = sadd.s32 %s34, 1
    %s36 = scalar_select %p33, %s34, %s35
    %p39 = pneg %p33
    %p40 = scmp.eq.s32.totalorder %s10, 3
    %p41 = por %p39, %p40
    %p42 = scmp.ne.s32.totalorder %s34, %s37
    %p43 = scmp.eq.s32.totalorder %s10, 0
    %p44 = por %p42, %p43
    %p45 = scmp.ne.s32.totalorder %s34, %s37
    %p46 = scmp.eq.s32.totalorder %s15, 3
    %p47 = por %p45, %p46
    %p48 = scmp.ne.s32.totalorder %s37, %s38
    %p49 = scmp.eq.s32.totalorder %s15, 0
    %p50 = por %p48, %p49
    %p51 = scmp.ne.s32.totalorder %s37, %s38
    %p52 = scmp.eq.s32.totalorder %s16, 3
    %p53 = por %p51, %p52
    %p55 = scmp.ne.s32.totalorder %s38, %s54
    %p56 = scmp.eq.s32.totalorder %s16, 0
    %p57 = por %p55, %p56
    %s58 = ssub.s32 %s17, %s29
    %p59 = scmp.eq.s32.totalorder %s58, 0
    %s61 = sadd.s32 %s60, 1
    %s62 = scalar_select %p59, %s60, %s61
    %p65 = pneg %p59
    %p66 = scmp.eq.s32.totalorder %s10, 3
    %p67 = por %p65, %p66
    %p68 = scmp.ne.s32.totalorder %s60, %s63
    %p69 = scmp.eq.s32.totalorder %s10, 0
    %p70 = por %p68, %p69
    %p71 = scmp.ne.s32.totalorder %s60, %s63
    %p72 = scmp.eq.s32.totalorder %s15, 3
    %p73 = por %p71, %p72
    %p74 = scmp.ne.s32.totalorder %s63, %s64
    %p75 = scmp.eq.s32.totalorder %s15, 0
    %p76 = por %p74, %p75
    %p77 = scmp.ne.s32.totalorder %s63, %s64
    %p78 = scmp.eq.s32.totalorder %s16, 3
    %p79 = por %p77, %p78
    %p81 = scmp.ne.s32.totalorder %s64, %s80
    %p82 = scmp.eq.s32.totalorder %s16, 0
    %p83 = por %p81, %p82
    %s85 = sadd.s32 %s84, 1
    %p88 = scmp.eq.s32.totalorder %s10, 3
    %p89 = scmp.ne.s32.totalorder %s84, %s86
    %p90 = scmp.eq.s32.totalorder %s10, 0
    %p91 = por %p89, %p90
    %p92 = scmp.ne.s32.totalorder %s84, %s86
    %p93 = scmp.eq.s32.totalorder %s15, 3
    %p94 = por %p92, %p93
    %p95 = scmp.ne.s32.totalorder %s86, %s87
    %p96 = scmp.eq.s32.totalorder %s15, 0
    %p97 = por %p95, %p96
    %p98 = scmp.ne.s32.totalorder %s86, %s87
    %p99 = scmp.eq.s32.totalorder %s16, 3
    %p100 = por %p98, %p99
    %p102 = scmp.ne.s32.totalorder %s87, %s101
    %p103 = scmp.eq.s32.totalorder %s16, 0
    %p104 = por %p102, %p103
    %s106 = sadd.s32 %s105, 1
    %p109 = scmp.eq.s32.totalorder %s10, 3
    %p110 = scmp.ne.s32.totalorder %s105, %s107
    %p111 = scmp.eq.s32.totalorder %s10, 0
    %p112 = por %p110, %p111
    %p113 = scmp.ne.s32.totalorder %s105, %s107
    %p114 = scmp.eq.s32.totalorder %s15, 3
    %p115 = por %p113, %p114
    %p116 = scmp.ne.s32.totalorder %s107, %s108
    %p117 = scmp.eq.s32.totalorder %s15, 0
    %p118 = por %p116, %p117
    %p119 = scmp.ne.s32.totalorder %s107, %s108
    %p120 = scmp.eq.s32.totalorder %s16, 3
    %p121 = por %p119, %p120
    %p123 = scmp.ne.s32.totalorder %s108, %s122
    %p124 = scmp.eq.s32.totalorder %s16, 0
    %p125 = por %p123, %p124
    %s127 = sadd.s32 %s126, 1
    %p130 = scmp.eq.s32.totalorder %s10, 3
    %p131 = scmp.ne.s32.totalorder %s126, %s128
    %p132 = scmp.eq.s32.totalorder %s10, 0
    %p133 = por %p131, %p132
    %p134 = scmp.ne.s32.totalorder %s126, %s128
    %p135 = scmp.eq.s32.totalorder %s15, 3
    %p136 = por %p134, %p135
    %p137 = scmp.ne.s32.totalorder %s128, %s129
    %p138 = scmp.eq.s32.totalorder %s15, 0
    %p139 = por %p137, %p138
    %p140 = scmp.ne.s32.totalorder %s128, %s129
    %p141 = scmp.eq.s32.totalorder %s16, 3
    %p142 = por %p140, %p141
    %p144 = scmp.ne.s32.totalorder %s129, %s143
    %p145 = scmp.eq.s32.totalorder %s16, 0
    %p146 = por %p144, %p145
    %p147 = scmp.le.s32.totalorder 1, %s10
    %p148 = scmp.lt.s32.totalorder %s10, 5
    %p149 = pnand %p147, %p148
    %p150 = pneg %p149
    // Predicated region
    $region9: #{generator_forward.6} parent=5 // pred_check
      _
    $region10: #{generator_forward.6} parent=5 // pred_check_branch
      %152 = sbr.rel (%p149) target = $region12
    $region11: #{generator_forward.6} parent=5 // pred_region
      %s153 = ssub.s32 %s10, 1
      // Predicated region
      $region13: #{generator_forward.6} parent=11 // pred_check
        %p154 = pneg %p97
      $region14: #{generator_forward.6} parent=11 // pred_check_branch
        %156 = sbr.rel (%p154) target = $region16
      $region15: #{generator_forward.6} parent=11 // pred_region
        _
      $region16: #{generator_forward.6} parent=11 // pred_fallthru
        _
      // Predicated region
      $region17: #{generator_forward.6} parent=11 // pred_check
        %p157 = pneg %p118
      $region18: #{generator_forward.6} parent=11 // pred_check_branch
        %159 = sbr.rel (%p157) target = $region20
      $region19: #{generator_forward.6} parent=11 // pred_region
        _
      $region20: #{generator_forward.6} parent=11 // pred_fallthru
        _
    $region12: #{generator_forward.6} parent=5 // pred_fallthru
      _
    %p160 = scmp.lt.s32.totalorder %s10, 4
    // Predicated region
    $region21: #{generator_forward.6} parent=5 // pred_check
      %p161 = pneg %p160
    $region22: #{generator_forward.6} parent=5 // pred_check_branch
      %163 = sbr.rel (%p161) target = $region24
    $region23: #{generator_forward.6} parent=5 // pred_region
      // Predicated region
      $region25: #{generator_forward.6} parent=23 // pred_check
        %p164 = pneg %p44
      $region26: #{generator_forward.6} parent=23 // pred_check_branch
        %166 = sbr.rel (%p164) target = $region28
      $region27: #{generator_forward.6} parent=23 // pred_region
        %s167 = smul.u32 4, %s18
        %p168 = scmp.lt.s32.totalorder %s17, 3
        %s169 = scalar_select %p168, %s17, 3
        %p170 = scmp.lt.s32.totalorder %s167, 3
        %s171 = scalar_select %p170, %s167, 3
        %s172 = smul.addr %s171, 2
        %s173 = smul.addr %s169, 8
        %s174 = sadd.s32 %s172, %s173
        %s175 = smul.addr %s174, 4
        %s176 = scalar_lea.vmem %s0, %s175
        %s177 = smul.u32 4, %s18
      $region28: #{generator_forward.6} parent=23 // pred_fallthru
        _
      // Predicated region
      $region29: #{generator_forward.6} parent=23 // pred_check
        %p178 = pneg %p70
      $region30: #{generator_forward.6} parent=23 // pred_check_branch
        %180 = sbr.rel (%p178) target = $region32
      $region31: #{generator_forward.6} parent=23 // pred_region
        %p181 = scmp.lt.s32.totalorder %s17, 3
        %s182 = scalar_select %p181, %s17, 3
        %s183 = smul.addr %s182, 32
        %s184 = smul.addr %s183, 4
        %s185 = scalar_lea.vmem %s1, %s184
      $region32: #{generator_forward.6} parent=23 // pred_fallthru
        _
    $region24: #{generator_forward.6} parent=5 // pred_fallthru
      _
    %p186 = scmp.le.s32.totalorder 1, %s10
    %p187 = scmp.lt.s32.totalorder %s10, 5
    %p188 = pnand %p186, %p187
    %p189 = pneg %p188
    // Predicated region
    $region33: #{generator_forward.6} parent=5 // pred_check
      _
    $region34: #{generator_forward.6} parent=5 // pred_check_branch
      %191 = sbr.rel (%p188) target = $region36
    $region35: #{generator_forward.6} parent=5 // pred_region
      %s192 = ssub.s32 %s10, 1
      %s193 = smul.u32 4, %s20
      %p194 = scmp.lt.s32.totalorder %s19, 3
      %s195 = scalar_select %p194, %s19, 3
      %p196 = scmp.lt.s32.totalorder %s193, 3
      %s197 = scalar_select %p196, %s193, 3
      %s198 = smul.addr %s197, 2
      %s199 = smul.addr %s195, 8
      %s200 = sadd.s32 %s198, %s199
      %s201 = smul.addr %s200, 4
      %s202 = scalar_lea.vmem %s0, %s201
      %p203 = pneg %p50
      %p204 = pneg %p47
      %p205 = scmp.lt.s32.totalorder %s19, 3
      %s206 = scalar_select %p205, %s19, 3
      %s207 = smul.addr %s206, 32
      %s208 = smul.addr %s207, 4
      %s209 = scalar_lea.vmem %s1, %s208
      %p210 = pneg %p76
      %p211 = pneg %p73
      %p212 = pneg %p97
      %p213 = pneg %p94
      %p214 = pneg %p118
      %p215 = pneg %p115
      %p216 = pneg %p139
      %p217 = pneg %p136
      %s218 = smul.u32 4, %s20
      %p219 = scmp.lt.s32.totalorder %s19, 3
      %s220 = scalar_select %p219, %s19, 3
      %p221 = scmp.lt.s32.totalorder %s218, 3
      %s222 = scalar_select %p221, %s218, 3
      %s223 = smul.addr %s222, 2
      %s224 = smul.addr %s220, 8
      %s225 = sadd.s32 %s223, %s224
      %s226 = smul.addr %s225, 4
      %s227 = scalar_lea.vmem %s0, %s226
      %s228 = smul.u32 4, %s20
      %p229 = scmp.lt.s32.totalorder %s19, 3
      %s230 = scalar_select %p229, %s19, 3
      %s231 = smul.addr %s230, 32
      %s232 = smul.addr %s231, 4
      %s233 = scalar_lea.vmem %s1, %s232
      %p235 = scmp.eq.s32.totalorder %s19, 0
      %p236 = scmp.eq.s32.totalorder %s20, 0
      %p237 = pnand %p235, %p236
      %p238 = pneg %p237
      // Predicated region
      $region37: #{generator_forward.6} parent=35 // pred_check
        _
      $region38: #{generator_forward.6} parent=35 // pred_check_branch
        %240 = sbr.rel (%p237) target = $region40
      $region39: #{generator_forward.6} parent=35 // pred_region
        %241 = vst [vmem:[#allocation2] sm:$0xff] 0.0
        %242 = vst [vmem:[#allocation3] sm:$0xff] 0.0
      $region40: #{generator_forward.6} parent=35 // pred_fallthru
        _
      %s243 = smul.u32 %s19, 32
      %s244 = smul.u32 %s20, 32
      %s245 = sadd.s32 %s243, %s244
      %v246 = vld [vmem:[%s227] sm:$0xff]
      %v247 = vld [vmem:[%s227 + $0x8] sm:$0xff]
      %v248 = vld [vmem:[%s227 + $0x10] sm:$0xff]
      %v249 = vld [vmem:[%s227 + $0x18] sm:$0xff]
      %v250 = vld [vmem:[%s233] sm:$0xf]
      %v251 = vld [vmem:[%s233 + $0x4] sm:$0xf]
      %v252 = vld [vmem:[%s233 + $0x8] sm:$0xf]
      %v253 = vld [vmem:[%s233 + $0xc] sm:$0xf]
      %v254 = vld [vmem:[%s233 + $0x10] sm:$0xf]
      %v255 = vld [vmem:[%s233 + $0x14] sm:$0xf]
      %v256 = vld [vmem:[%s233 + $0x18] sm:$0xf]
      %v257 = vld [vmem:[%s233 + $0x1c] sm:$0xf]
      %v258 = vld [vmem:[%s233 + $0x20] sm:$0xf]
      %v259 = vld [vmem:[%s233 + $0x24] sm:$0xf]
      %v260 = vld [vmem:[%s233 + $0x28] sm:$0xf]
      %v261 = vld [vmem:[%s233 + $0x2c] sm:$0xf]
      %v262 = vld [vmem:[%s233 + $0x30] sm:$0xf]
      %v263 = vld [vmem:[%s233 + $0x34] sm:$0xf]
      %v264 = vld [vmem:[%s233 + $0x38] sm:$0xf]
      %v265 = vld [vmem:[%s233 + $0x3c] sm:$0xf]
      %v266 = vld [vmem:[%s233 + $0x40] sm:$0xf]
      %v267 = vld [vmem:[%s233 + $0x44] sm:$0xf]
      %v268 = vld [vmem:[%s233 + $0x48] sm:$0xf]
      %v269 = vld [vmem:[%s233 + $0x4c] sm:$0xf]
      %v270 = vld [vmem:[%s233 + $0x50] sm:$0xf]
      %v271 = vld [vmem:[%s233 + $0x54] sm:$0xf]
      %v272 = vld [vmem:[%s233 + $0x58] sm:$0xf]
      %v273 = vld [vmem:[%s233 + $0x5c] sm:$0xf]
      %v274 = vld [vmem:[%s233 + $0x60] sm:$0xf]
      %v275 = vld [vmem:[%s233 + $0x64] sm:$0xf]
      %v276 = vld [vmem:[%s233 + $0x68] sm:$0xf]
      %v277 = vld [vmem:[%s233 + $0x6c] sm:$0xf]
      %v278 = vld [vmem:[%s233 + $0x70] sm:$0xf]
      %v279 = vld [vmem:[%s233 + $0x74] sm:$0xf]
      %v280 = vld [vmem:[%s233 + $0x78] sm:$0xf]
      %v281 = vld [vmem:[%s233 + $0x7c] sm:$0xf]
      %v286 = vunpack.c.l.b16 %v246
      %v287 = vunpack.c.h.b16 %v246
      %v288 = vunpack.c.l.b16 %v247
      %v289 = vunpack.c.h.b16 %v247
      %v290 = vunpack.c.l.b16 %v248
      %v291 = vunpack.c.h.b16 %v248
      %v292 = vunpack.c.l.b16 %v249
      %v293 = vunpack.c.h.b16 %v249
      %v294 = vpack.c.b16 %v288, %v286
      %v295 = vpack.c.b16 %v289, %v287
      %v296 = vpack.c.b16 %v292, %v290
      %v297 = vpack.c.b16 %v293, %v291
      %v334 = vunpack.c.l.b16 %v250
      %v335 = vunpack.c.l.b16 %v251
      %v336 = vunpack.c.l.b16 %v252
      %v337 = vunpack.c.l.b16 %v253
      %v338 = vunpack.c.l.b16 %v254
      %v339 = vunpack.c.l.b16 %v255
      %v340 = vunpack.c.l.b16 %v256
      %v341 = vunpack.c.l.b16 %v257
      %v342 = vunpack.c.l.b16 %v258
      %v343 = vunpack.c.l.b16 %v259
      %v344 = vunpack.c.l.b16 %v260
      %v345 = vunpack.c.l.b16 %v261
      %v346 = vunpack.c.l.b16 %v262
      %v347 = vunpack.c.l.b16 %v263
      %v348 = vunpack.c.l.b16 %v264
      %v349 = vunpack.c.l.b16 %v265
      %v350 = vunpack.c.l.b16 %v266
      %v351 = vunpack.c.l.b16 %v267
      %v352 = vunpack.c.l.b16 %v268
      %v353 = vunpack.c.l.b16 %v269
      %v354 = vunpack.c.l.b16 %v270
      %v355 = vunpack.c.l.b16 %v271
      %v356 = vunpack.c.l.b16 %v272
      %v357 = vunpack.c.l.b16 %v273
      %v358 = vunpack.c.l.b16 %v274
      %v359 = vunpack.c.l.b16 %v275
      %v360 = vunpack.c.l.b16 %v276
      %v361 = vunpack.c.l.b16 %v277
      %v362 = vunpack.c.l.b16 %v278
      %v363 = vunpack.c.l.b16 %v279
      %v364 = vunpack.c.l.b16 %v280
      %v365 = vunpack.c.l.b16 %v281
      %v366 = vpack.c.b16 %v335, %v334
      %v367 = vpack.c.b16 %v337, %v336
      %v368 = vpack.c.b16 %v339, %v338
      %v369 = vpack.c.b16 %v341, %v340
      %v370 = vpack.c.b16 %v343, %v342
      %v371 = vpack.c.b16 %v345, %v344
      %v372 = vpack.c.b16 %v347, %v346
      %v373 = vpack.c.b16 %v349, %v348
      %v374 = vpack.c.b16 %v351, %v350
      %v375 = vpack.c.b16 %v353, %v352
      %v376 = vpack.c.b16 %v355, %v354
      %v377 = vpack.c.b16 %v357, %v356
      %v378 = vpack.c.b16 %v359, %v358
      %v379 = vpack.c.b16 %v361, %v360
      %v380 = vpack.c.b16 %v363, %v362
      %v381 = vpack.c.b16 %v365, %v364
      %398 = vmatprep.subr.bf16.mxu0 0
      %399 = vmatpush1.bf16.msra.mxu0 %v366
      %400 = vmatprep.subr.bf16.mxu0 0
      %401 = vmatpush1.bf16.msra.mxu0 %v367
      %402 = vmatprep.subr.bf16.mxu0 0
      %403 = vmatpush1.bf16.msra.mxu0 %v368
      %404 = vmatprep.subr.bf16.mxu0 0
      %405 = vmatpush1.bf16.msra.mxu0 %v369
      %406 = vmatprep.subr.bf16.mxu0 0
      %407 = vmatpush1.bf16.msra.mxu0 %v370
      %408 = vmatprep.subr.bf16.mxu0 0
      %409 = vmatpush1.bf16.msra.mxu0 %v371
      %410 = vmatprep.subr.bf16.mxu0 0
      %411 = vmatpush1.bf16.msra.mxu0 %v372
      %412 = vmatprep.subr.bf16.mxu0 0
      %413 = vmatpush1.bf16.msra.mxu0 %v373
      %414 = vmatprep.subr.bf16.mxu0 0
      %415 = vmatpush1.bf16.msra.mxu0 %v374
      %416 = vmatprep.subr.bf16.mxu0 0
      %417 = vmatpush1.bf16.msra.mxu0 %v375
      %418 = vmatprep.subr.bf16.mxu0 0
      %419 = vmatpush1.bf16.msra.mxu0 %v376
      %420 = vmatprep.subr.bf16.mxu0 0
      %421 = vmatpush1.bf16.msra.mxu0 %v377
      %422 = vmatprep.subr.bf16.mxu0 0
      %423 = vmatpush1.bf16.msra.mxu0 %v378
      %424 = vmatprep.subr.bf16.mxu0 0
      %425 = vmatpush1.bf16.msra.mxu0 %v379
      %426 = vmatprep.subr.bf16.mxu0 0
      %427 = vmatpush1.bf16.msra.mxu0 %v380
      %428 = vmatprep.subr.bf16.mxu0 0
      %429 = vmatpush1.bf16.msra.mxu0 %v381
      %430 = vmatprep.mubr.bf16.mxu0 %v295
      %431 = vmatmul.mubr.bf16.gmra.mrb[0].mxu0 %v294
      %v432 = vpop.f32.mrb[0].mxu0
      %v433 = vadd.f32 0.0, %v432
      %v434 = vpop.f32.mrb[0].mxu0
      %v435 = vpop.f32.mrb[0].mxu0
      %v436 = vadd.f32 0.0, %v435
      %v437 = vpop.f32.mrb[0].mxu0
      %438 = vmatprep.mubr.bf16.mxu0 %v297
      %439 = vmatmul.mubr.bf16.gmra.mrb[0].mxu0 %v296
      %v440 = vpop.f32.mrb[0].mxu0
      %v441 = vadd.f32 0.0, %v440
      %v442 = vpop.f32.mrb[0].mxu0
      %v443 = vpop.f32.mrb[0].mxu0
      %v444 = vadd.f32 0.0, %v443
      %v445 = vpop.f32.mrb[0].mxu0
      %446 = vdwg.mxu0
      %v447 = vpack.c.bf16 %v436, %v433
      %v448 = vpack.c.bf16 %v444, %v441
      %v451 = vunpack.c.l.b16 %v447
      %v452 = vunpack.c.h.b16 %v447
      %v453 = vunpack.c.l.b16 %v448
      %v454 = vunpack.c.h.b16 %v448
      %v455 = vpack.c.b16 %v451, %v451
      %v456 = vpack.c.b16 %v452, %v452
      %v457 = vpack.c.b16 %v453, %v453
      %v458 = vpack.c.b16 %v454, %v454
      %s463 = sshra.s32 %s245, 3
      %s464 = sand.u32 %s245, 7
      %s465 = smul.addr %s463, 4
      %s466 = scalar_lea.vmem %s4, %s465
      %467 = vst [vmem:[%s466] sm:$0xf] %v455
      %468 = vst [vmem:[%s466 + $0x4] sm:$0xf] %v456
      %469 = vst [vmem:[%s466 + $0x8] sm:$0xf] %v457
      %470 = vst [vmem:[%s466 + $0xc] sm:$0xf] %v458
      %v471 = vld [vmem:[#allocation2] sm:$0xff]
      %v472 = vadd.f32 %v433, %v436
      %v473 = vadd.f32 %v472, %v441
      %v474 = vadd.f32 %v473, %v444
      %v475 = vadd.f32 %v471, %v474
      %476 = vst [vmem:[#allocation2] sm:$0xff] %v475
      %v477 = vld [vmem:[#allocation3] sm:$0xff]
      %v478 = vmul.f32 %v433, %v433
      %v479 = vmul.f32 %v436, %v436
      %v480 = vmul.f32 %v441, %v441
      %v481 = vmul.f32 %v444, %v444
      %v482 = vadd.f32 %v478, %v479
      %v483 = vadd.f32 %v482, %v480
      %v484 = vadd.f32 %v483, %v481
      %v485 = vadd.f32 %v477, %v484
      %486 = vst [vmem:[#allocation3] sm:$0xff] %v485
      %p487 = scmp.eq.s32.totalorder %s19, 3
      %p488 = pnand %p487, %p236
      %p489 = pneg %p488
      // Predicated region
      $region41: #{generator_forward.6} parent=35 // pred_check
        _
      $region42: #{generator_forward.6} parent=35 // pred_check_branch
        %491 = sbr.rel (%p488) target = $region44
      $region43: #{generator_forward.6} parent=35 // pred_region
        %v492 = vld [vmem:[#allocation2] sm:$0xff]
        %v493 = vrot.slane %v492, 4
        %v494 = vadd.f32 %v492, %v493
        %v495 = vrot.slane %v494, 2
        %v496 = vadd.f32 %v494, %v495
        %v497 = vrot.slane %v496, 1
        %v498 = vadd.f32 %v496, %v497
        %v499 = vrcp.pop 128.0
        %v500 = vmul.f32 %v498, %v499
        %v501 = vld [vmem:[#allocation3] sm:$0xff]
        %v502 = vrot.slane %v501, 4
        %v503 = vadd.f32 %v501, %v502
        %v504 = vrot.slane %v503, 2
        %v505 = vadd.f32 %v503, %v504
        %v506 = vrot.slane %v505, 1
        %v507 = vadd.f32 %v505, %v506
        %v508 = vmul.f32 %v507, %v499
        %v509 = vmul.f32 %v500, %v500
        %v510 = vsub.f32 %v508, %v509
        %v511 = vmax.f32 %v510, 0.0
        %v512 = vadd.f32 %v511, 1e-05
        %v513 = vrsqrt.pop %v512
        %v514 = vld [vmem:[%s2] sm:$0x1]
        %v515 = vmul.f32 %v514, %v513
        %v516 = vld [vmem:[%s3] sm:$0x1]
        %v517 = vmul.f32 %v500, %v515
        %v518 = vsub.f32 %v516, %v517
        %v519 = vld [vmem:[%s4] sm:$0xf]
        %v520 = vld [vmem:[%s4 + $0x4] sm:$0xf]
        %v521 = vld [vmem:[%s4 + $0x8] sm:$0xf]
        %v522 = vld [vmem:[%s4 + $0xc] sm:$0xf]
        %v523 = vunpack.c.l.bf16 %v519
        %v524 = vunpack.c.l.bf16 %v520
        %v525 = vunpack.c.l.bf16 %v521
        %v526 = vunpack.c.l.bf16 %v522
        %v528 = vlaneseq
        %v529 = vshrl.u32 %v528, 7
        %v530 = vsub.s32 0, %v529
        %v531 = vrot.slane %v515, %v530
        %v533 = vmul.f32 %v523, %v531
        %v534 = vmul.f32 %v524, %v531
        %v535 = vmul.f32 %v525, %v531
        %v536 = vmul.f32 %v526, %v531
        %v538 = vlaneseq
        %v539 = vshrl.u32 %v538, 7
        %v540 = vsub.s32 0, %v539
        %v541 = vrot.slane %v518, %v540
        %v543 = vadd.f32 %v533, %v541
        %v544 = vadd.f32 %v534, %v541
        %v545 = vadd.f32 %v535, %v541
        %v546 = vadd.f32 %v536, %v541
        %v547 = vmax.f32 %v543, 0.0
        %v548 = vmax.f32 %v544, 0.0
        %v549 = vmax.f32 %v545, 0.0
        %v550 = vmax.f32 %v546, 0.0
        %v551 = vpack.c.bf16 %v548, %v547
        %v552 = vpack.c.bf16 %v550, %v549
        %v555 = vunpack.c.l.b16 %v551
        %v556 = vunpack.c.h.b16 %v551
        %v557 = vunpack.c.l.b16 %v552
        %v558 = vunpack.c.h.b16 %v552
        %v559 = vpack.c.b16 %v555, %v555
        %v560 = vpack.c.b16 %v556, %v556
        %v561 = vpack.c.b16 %v557, %v557
        %v562 = vpack.c.b16 %v558, %v558
        %567 = vst [vmem:[%s4] sm:$0xf] %v559
        %568 = vst [vmem:[%s4 + $0x4] sm:$0xf] %v560
        %569 = vst [vmem:[%s4 + $0x8] sm:$0xf] %v561
        %570 = vst [vmem:[%s4 + $0xc] sm:$0xf] %v562
        %v571 = vld [vmem:[%s4 + $0x10] sm:$0xf]
        %v572 = vld [vmem:[%s4 + $0x14] sm:$0xf]
        %v573 = vld [vmem:[%s4 + $0x18] sm:$0xf]
        %v574 = vld [vmem:[%s4 + $0x1c] sm:$0xf]
        %v575 = vunpack.c.l.bf16 %v571
        %v576 = vunpack.c.l.bf16 %v572
        %v577 = vunpack.c.l.bf16 %v573
        %v578 = vunpack.c.l.bf16 %v574
        %v579 = vmul.f32 %v575, %v531
        %v580 = vmul.f32 %v576, %v531
        %v581 = vmul.f32 %v577, %v531
        %v582 = vmul.f32 %v578, %v531
        %v583 = vadd.f32 %v579, %v541
        %v584 = vadd.f32 %v580, %v541
        %v585 = vadd.f32 %v581, %v541
        %v586 = vadd.f32 %v582, %v541
        %v587 = vmax.f32 %v583, 0.0
        %v588 = vmax.f32 %v584, 0.0
        %v589 = vmax.f32 %v585, 0.0
        %v590 = vmax.f32 %v586, 0.0
        %v591 = vpack.c.bf16 %v588, %v587
        %v592 = vpack.c.bf16 %v590, %v589
        %v595 = vunpack.c.l.b16 %v591
        %v596 = vunpack.c.h.b16 %v591
        %v597 = vunpack.c.l.b16 %v592
        %v598 = vunpack.c.h.b16 %v592
        %v599 = vpack.c.b16 %v595, %v595
        %v600 = vpack.c.b16 %v596, %v596
        %v601 = vpack.c.b16 %v597, %v597
        %v602 = vpack.c.b16 %v598, %v598
        %607 = vst [vmem:[%s4 + $0x10] sm:$0xf] %v599
        %608 = vst [vmem:[%s4 + $0x14] sm:$0xf] %v600
        %609 = vst [vmem:[%s4 + $0x18] sm:$0xf] %v601
        %610 = vst [vmem:[%s4 + $0x1c] sm:$0xf] %v602
        %v611 = vld [vmem:[%s4 + $0x20] sm:$0xf]
        %v612 = vld [vmem:[%s4 + $0x24] sm:$0xf]
        %v613 = vld [vmem:[%s4 + $0x28] sm:$0xf]
        %v614 = vld [vmem:[%s4 + $0x2c] sm:$0xf]
        %v615 = vunpack.c.l.bf16 %v611
        %v616 = vunpack.c.l.bf16 %v612
        %v617 = vunpack.c.l.bf16 %v613
        %v618 = vunpack.c.l.bf16 %v614
        %v619 = vmul.f32 %v615, %v531
        %v620 = vmul.f32 %v616, %v531
        %v621 = vmul.f32 %v617, %v531
        %v622 = vmul.f32 %v618, %v531
        %v623 = vadd.f32 %v619, %v541
        %v624 = vadd.f32 %v620, %v541
        %v625 = vadd.f32 %v621, %v541
        %v626 = vadd.f32 %v622, %v541
        %v627 = vmax.f32 %v623, 0.0
        %v628 = vmax.f32 %v624, 0.0
        %v629 = vmax.f32 %v625, 0.0
        %v630 = vmax.f32 %v626, 0.0
        %v631 = vpack.c.bf16 %v628, %v627
        %v632 = vpack.c.bf16 %v630, %v629
        %v635 = vunpack.c.l.b16 %v631
        %v636 = vunpack.c.h.b16 %v631
        %v637 = vunpack.c.l.b16 %v632
        %v638 = vunpack.c.h.b16 %v632
        %v639 = vpack.c.b16 %v635, %v635
        %v640 = vpack.c.b16 %v636, %v636
        %v641 = vpack.c.b16 %v637, %v637
        %v642 = vpack.c.b16 %v638, %v638
        %647 = vst [vmem:[%s4 + $0x20] sm:$0xf] %v639
        %648 = vst [vmem:[%s4 + $0x24] sm:$0xf] %v640
        %649 = vst [vmem:[%s4 + $0x28] sm:$0xf] %v641
        %650 = vst [vmem:[%s4 + $0x2c] sm:$0xf] %v642
        %v651 = vld [vmem:[%s4 + $0x30] sm:$0xf]
        %v652 = vld [vmem:[%s4 + $0x34] sm:$0xf]
        %v653 = vld [vmem:[%s4 + $0x38] sm:$0xf]
        %v654 = vld [vmem:[%s4 + $0x3c] sm:$0xf]
        %v655 = vunpack.c.l.bf16 %v651
        %v656 = vunpack.c.l.bf16 %v652
        %v657 = vunpack.c.l.bf16 %v653
        %v658 = vunpack.c.l.bf16 %v654
        %v659 = vmul.f32 %v655, %v531
        %v660 = vmul.f32 %v656, %v531
        %v661 = vmul.f32 %v657, %v531
        %v662 = vmul.f32 %v658, %v531
        %v663 = vadd.f32 %v659, %v541
        %v664 = vadd.f32 %v660, %v541
        %v665 = vadd.f32 %v661, %v541
        %v666 = vadd.f32 %v662, %v541
        %v667 = vmax.f32 %v663, 0.0
        %v668 = vmax.f32 %v664, 0.0
        %v669 = vmax.f32 %v665, 0.0
        %v670 = vmax.f32 %v666, 0.0
        %v671 = vpack.c.bf16 %v668, %v667
        %v672 = vpack.c.bf16 %v670, %v669
        %v675 = vunpack.c.l.b16 %v671
        %v676 = vunpack.c.h.b16 %v671
        %v677 = vunpack.c.l.b16 %v672
        %v678 = vunpack.c.h.b16 %v672
        %v679 = vpack.c.b16 %v675, %v675
        %v680 = vpack.c.b16 %v676, %v676
        %v681 = vpack.c.b16 %v677, %v677
        %v682 = vpack.c.b16 %v678, %v678
        %687 = vst [vmem:[%s4 + $0x30] sm:$0xf] %v679
        %688 = vst [vmem:[%s4 + $0x34] sm:$0xf] %v680
        %689 = vst [vmem:[%s4 + $0x38] sm:$0xf] %v681
        %690 = vst [vmem:[%s4 + $0x3c] sm:$0xf] %v682
      $region44: #{generator_forward.6} parent=35 // pred_fallthru
        _
      // Predicated region
      $region45: #{generator_forward.6} parent=35 // pred_check
        %p691 = pneg %p136
      $region46: #{generator_forward.6} parent=35 // pred_check_branch
        %693 = sbr.rel (%p691) target = $region48
      $region47: #{generator_forward.6} parent=35 // pred_region
        _
      $region48: #{generator_forward.6} parent=35 // pred_fallthru
        _
      // Predicated region
      $region49: #{generator_forward.6} parent=35 // pred_check
        %p694 = pneg %p136
      $region50: #{generator_forward.6} parent=35 // pred_check_branch
        %696 = sbr.rel (%p694) target = $region52
      $region51: #{generator_forward.6} parent=35 // pred_region
        _
      $region52: #{generator_forward.6} parent=35 // pred_fallthru
        _
    $region36: #{generator_forward.6} parent=5 // pred_fallthru
      _
    %p697 = scmp.le.s32.totalorder 2, %s10
    // Predicated region
    $region53: #{generator_forward.6} parent=5 // pred_check
      %p698 = pneg %p697
    $region54: #{generator_forward.6} parent=5 // pred_check_branch
      %700 = sbr.rel (%p698) target = $region56
    $region55: #{generator_forward.6} parent=5 // pred_region
      %s701 = ssub.s32 %s10, 2
    $region56: #{generator_forward.6} parent=5 // pred_fallthru
      _
  $region6: #{generator_forward.6} parent=0 // loop_footer
    %s14 = sadd.s32 1, %s10
  $region7: #{generator_forward.6} parent=0 // loop_footer_branch
    %9 = sbr.rel target = $region3
  $region8: #{generator_forward.6} parent=0 // loop_exit
    _

// kernel: generator_forward.7
$region0: #{generator_forward.7}
  #allocation0 [shape = 'u32[]', space=smem, size = 0x4, offset = 0x4, fixed_abs, tag = 'smem constant byte address 0x4 - core index']
  #allocation1 [shape = 'u32[144,128]{1,0:T(1,128)}', space=vmem, size = 0x12000, scoped, tag = 'internal scratch']
  #allocation2 [shape = 'f32[8,128]{1,0:T(8,128)}', space=vmem, size = 0x1000, scoped, tag = 'scratch operand']
  #allocation3 [shape = 'f32[8,128]{1,0:T(8,128)}', space=vmem, size = 0x1000, scoped, tag = 'scratch operand']
  %s0 = inlined_call_operand.vmem [shape: bf16[4,128,128], index: 0, kind: input, shape index: {}]
  %s1 = inlined_call_operand.vmem [shape: bf16[4,128,128], index: 1, kind: input, shape index: {}]
  %s2 = inlined_call_operand.vmem [shape: f32[1,128], index: 2, kind: input, shape index: {}]
  %s3 = inlined_call_operand.vmem [shape: f32[1,128], index: 3, kind: input, shape index: {}]
  %s4 = inlined_call_operand.vmem [shape: bf16[512,128], index: 4, kind: output, shape index: {}]
  %s5 = sld [smem:[#allocation0]]
  $region57: #{generator_forward.7} parent=0
    _
  %s7 = ssub.s32 1, %s5
  %s8 = scalar_select 0, %s7, %s5
  loop: start=0, step=1, limit=6
  $region2: #{generator_forward.7} parent=0 // loop_pre_header
    _
  $region3: #{generator_forward.7} parent=0 // loop_header
    %s10 = sphi 0, %s14
    %p11 = scmp.ge.s32.totalorder %s10, 6
    %s17 = sphi 0, %s29
    %s18 = sphi 0, %s25
    %s19 = sphi 0, %s17
    %s20 = sphi 0, %s18
    %s21 = sphi 0, %s19
    %s22 = sphi 0, %s20
    %s34 = sphi 0, %s36
    %s37 = sphi 0, %s34
    %s38 = sphi 0, %s37
    %s54 = sphi 0, %s38
    %s60 = sphi 0, %s62
    %s63 = sphi 0, %s60
    %s64 = sphi 0, %s63
    %s80 = sphi 0, %s64
    %s84 = sphi 0, %s84
    %s86 = sphi 0, %s84
    %s87 = sphi 0, %s86
    %s101 = sphi 0, %s87
    %s105 = sphi 0, %s105
    %s107 = sphi 0, %s105
    %s108 = sphi 0, %s107
    %s122 = sphi 0, %s108
    %s126 = sphi 0, %s126
    %s128 = sphi 0, %s126
    %s129 = sphi 0, %s128
    %s143 = sphi 0, %s129
  $region4: #{generator_forward.7} parent=0 // loop_header_branch
    %13 = sbr.rel (%p11) target = $region8
  $region5: #{generator_forward.7} parent=0 // loop_body
    %s15 = ssub.s32 %s10, 1
    %s16 = ssub.s32 %s10, 2
    %s23 = sadd.s32 1, %s18
    %p24 = scmp.ge.s32.totalorder %s23, 1
    %s25 = scalar_select %p24, 0, %s23
    %s26 = sadd.s32 1, %s17
    %s27 = scalar_select %p24, %s26, %s17
    %p28 = scmp.ge.s32.totalorder %s27, 4
    %s29 = scalar_select %p28, 0, %s27
    %s30 = ssub.s32 %s17, %s29
    %s31 = ssub.s32 %s18, %s25
    %s32 = sor.u32 %s30, %s31
    %p33 = scmp.eq.s32.totalorder %s32, 0
    %s35 = sadd.s32 %s34, 1
    %s36 = scalar_select %p33, %s34, %s35
    %p39 = pneg %p33
    %p40 = scmp.eq.s32.totalorder %s10, 3
    %p41 = por %p39, %p40
    %p42 = scmp.ne.s32.totalorder %s34, %s37
    %p43 = scmp.eq.s32.totalorder %s10, 0
    %p44 = por %p42, %p43
    %p45 = scmp.ne.s32.totalorder %s34, %s37
    %p46 = scmp.eq.s32.totalorder %s15, 3
    %p47 = por %p45, %p46
    %p48 = scmp.ne.s32.totalorder %s37, %s38
    %p49 = scmp.eq.s32.totalorder %s15, 0
    %p50 = por %p48, %p49
    %p51 = scmp.ne.s32.totalorder %s37, %s38
    %p52 = scmp.eq.s32.totalorder %s16, 3
    %p53 = por %p51, %p52
    %p55 = scmp.ne.s32.totalorder %s38, %s54
    %p56 = scmp.eq.s32.totalorder %s16, 0
    %p57 = por %p55, %p56
    %s58 = ssub.s32 %s17, %s29
    %p59 = scmp.eq.s32.totalorder %s58, 0
    %s61 = sadd.s32 %s60, 1
    %s62 = scalar_select %p59, %s60, %s61
    %p65 = pneg %p59
    %p66 = scmp.eq.s32.totalorder %s10, 3
    %p67 = por %p65, %p66
    %p68 = scmp.ne.s32.totalorder %s60, %s63
    %p69 = scmp.eq.s32.totalorder %s10, 0
    %p70 = por %p68, %p69
    %p71 = scmp.ne.s32.totalorder %s60, %s63
    %p72 = scmp.eq.s32.totalorder %s15, 3
    %p73 = por %p71, %p72
    %p74 = scmp.ne.s32.totalorder %s63, %s64
    %p75 = scmp.eq.s32.totalorder %s15, 0
    %p76 = por %p74, %p75
    %p77 = scmp.ne.s32.totalorder %s63, %s64
    %p78 = scmp.eq.s32.totalorder %s16, 3
    %p79 = por %p77, %p78
    %p81 = scmp.ne.s32.totalorder %s64, %s80
    %p82 = scmp.eq.s32.totalorder %s16, 0
    %p83 = por %p81, %p82
    %s85 = sadd.s32 %s84, 1
    %p88 = scmp.eq.s32.totalorder %s10, 3
    %p89 = scmp.ne.s32.totalorder %s84, %s86
    %p90 = scmp.eq.s32.totalorder %s10, 0
    %p91 = por %p89, %p90
    %p92 = scmp.ne.s32.totalorder %s84, %s86
    %p93 = scmp.eq.s32.totalorder %s15, 3
    %p94 = por %p92, %p93
    %p95 = scmp.ne.s32.totalorder %s86, %s87
    %p96 = scmp.eq.s32.totalorder %s15, 0
    %p97 = por %p95, %p96
    %p98 = scmp.ne.s32.totalorder %s86, %s87
    %p99 = scmp.eq.s32.totalorder %s16, 3
    %p100 = por %p98, %p99
    %p102 = scmp.ne.s32.totalorder %s87, %s101
    %p103 = scmp.eq.s32.totalorder %s16, 0
    %p104 = por %p102, %p103
    %s106 = sadd.s32 %s105, 1
    %p109 = scmp.eq.s32.totalorder %s10, 3
    %p110 = scmp.ne.s32.totalorder %s105, %s107
    %p111 = scmp.eq.s32.totalorder %s10, 0
    %p112 = por %p110, %p111
    %p113 = scmp.ne.s32.totalorder %s105, %s107
    %p114 = scmp.eq.s32.totalorder %s15, 3
    %p115 = por %p113, %p114
    %p116 = scmp.ne.s32.totalorder %s107, %s108
    %p117 = scmp.eq.s32.totalorder %s15, 0
    %p118 = por %p116, %p117
    %p119 = scmp.ne.s32.totalorder %s107, %s108
    %p120 = scmp.eq.s32.totalorder %s16, 3
    %p121 = por %p119, %p120
    %p123 = scmp.ne.s32.totalorder %s108, %s122
    %p124 = scmp.eq.s32.totalorder %s16, 0
    %p125 = por %p123, %p124
    %s127 = sadd.s32 %s126, 1
    %p130 = scmp.eq.s32.totalorder %s10, 3
    %p131 = scmp.ne.s32.totalorder %s126, %s128
    %p132 = scmp.eq.s32.totalorder %s10, 0
    %p133 = por %p131, %p132
    %p134 = scmp.ne.s32.totalorder %s126, %s128
    %p135 = scmp.eq.s32.totalorder %s15, 3
    %p136 = por %p134, %p135
    %p137 = scmp.ne.s32.totalorder %s128, %s129
    %p138 = scmp.eq.s32.totalorder %s15, 0
    %p139 = por %p137, %p138
    %p140 = scmp.ne.s32.totalorder %s128, %s129
    %p141 = scmp.eq.s32.totalorder %s16, 3
    %p142 = por %p140, %p141
    %p144 = scmp.ne.s32.totalorder %s129, %s143
    %p145 = scmp.eq.s32.totalorder %s16, 0
    %p146 = por %p144, %p145
    %p147 = scmp.le.s32.totalorder 1, %s10
    %p148 = scmp.lt.s32.totalorder %s10, 5
    %p149 = pnand %p147, %p148
    %p150 = pneg %p149
    // Predicated region
    $region9: #{generator_forward.7} parent=5 // pred_check
      _
    $region10: #{generator_forward.7} parent=5 // pred_check_branch
      %152 = sbr.rel (%p149) target = $region12
    $region11: #{generator_forward.7} parent=5 // pred_region
      %s153 = ssub.s32 %s10, 1
      // Predicated region
      $region13: #{generator_forward.7} parent=11 // pred_check
        %p154 = pneg %p97
      $region14: #{generator_forward.7} parent=11 // pred_check_branch
        %156 = sbr.rel (%p154) target = $region16
      $region15: #{generator_forward.7} parent=11 // pred_region
        _
      $region16: #{generator_forward.7} parent=11 // pred_fallthru
        _
      // Predicated region
      $region17: #{generator_forward.7} parent=11 // pred_check
        %p157 = pneg %p118
      $region18: #{generator_forward.7} parent=11 // pred_check_branch
        %159 = sbr.rel (%p157) target = $region20
      $region19: #{generator_forward.7} parent=11 // pred_region
        _
      $region20: #{generator_forward.7} parent=11 // pred_fallthru
        _
    $region12: #{generator_forward.7} parent=5 // pred_fallthru
      _
    %p160 = scmp.lt.s32.totalorder %s10, 4
    // Predicated region
    $region21: #{generator_forward.7} parent=5 // pred_check
      %p161 = pneg %p160
    $region22: #{generator_forward.7} parent=5 // pred_check_branch
      %163 = sbr.rel (%p161) target = $region24
    $region23: #{generator_forward.7} parent=5 // pred_region
      // Predicated region
      $region25: #{generator_forward.7} parent=23 // pred_check
        %p164 = pneg %p44
      $region26: #{generator_forward.7} parent=23 // pred_check_branch
        %166 = sbr.rel (%p164) target = $region28
      $region27: #{generator_forward.7} parent=23 // pred_region
        %s167 = smul.u32 16, %s18
        %p168 = scmp.lt.s32.totalorder %s17, 3
        %s169 = scalar_select %p168, %s17, 3
        %p170 = scmp.lt.s32.totalorder %s167, 15
        %s171 = scalar_select %p170, %s167, 15
        %s172 = smul.addr %s169, 16
        %s173 = sadd.s32 %s171, %s172
        %s174 = smul.addr %s173, 4
        %s175 = scalar_lea.vmem %s0, %s174
        %s176 = smul.u32 16, %s18
      $region28: #{generator_forward.7} parent=23 // pred_fallthru
        _
      // Predicated region
      $region29: #{generator_forward.7} parent=23 // pred_check
        %p177 = pneg %p70
      $region30: #{generator_forward.7} parent=23 // pred_check_branch
        %179 = sbr.rel (%p177) target = $region32
      $region31: #{generator_forward.7} parent=23 // pred_region
        %p180 = scmp.lt.s32.totalorder %s17, 3
        %s181 = scalar_select %p180, %s17, 3
        %s182 = smul.addr %s181, 16
        %s183 = smul.addr %s182, 4
        %s184 = scalar_lea.vmem %s1, %s183
      $region32: #{generator_forward.7} parent=23 // pred_fallthru
        _
    $region24: #{generator_forward.7} parent=5 // pred_fallthru
      _
    %p185 = scmp.le.s32.totalorder 1, %s10
    %p186 = scmp.lt.s32.totalorder %s10, 5
    %p187 = pnand %p185, %p186
    %p188 = pneg %p187
    // Predicated region
    $region33: #{generator_forward.7} parent=5 // pred_check
      _
    $region34: #{generator_forward.7} parent=5 // pred_check_branch
      %190 = sbr.rel (%p187) target = $region36
    $region35: #{generator_forward.7} parent=5 // pred_region
      %s191 = ssub.s32 %s10, 1
      %s192 = smul.u32 16, %s20
      %p193 = scmp.lt.s32.totalorder %s19, 3
      %s194 = scalar_select %p193, %s19, 3
      %p195 = scmp.lt.s32.totalorder %s192, 15
      %s196 = scalar_select %p195, %s192, 15
      %s197 = smul.addr %s194, 16
      %s198 = sadd.s32 %s196, %s197
      %s199 = smul.addr %s198, 4
      %s200 = scalar_lea.vmem %s0, %s199
      %p201 = pneg %p50
      %p202 = pneg %p47
      %p203 = scmp.lt.s32.totalorder %s19, 3
      %s204 = scalar_select %p203, %s19, 3
      %s205 = smul.addr %s204, 16
      %s206 = smul.addr %s205, 4
      %s207 = scalar_lea.vmem %s1, %s206
      %p208 = pneg %p76
      %p209 = pneg %p73
      %p210 = pneg %p97
      %p211 = pneg %p94
      %p212 = pneg %p118
      %p213 = pneg %p115
      %p214 = pneg %p139
      %p215 = pneg %p136
      %s216 = smul.u32 16, %s20
      %p217 = scmp.lt.s32.totalorder %s19, 3
      %s218 = scalar_select %p217, %s19, 3
      %p219 = scmp.lt.s32.totalorder %s216, 15
      %s220 = scalar_select %p219, %s216, 15
      %s221 = smul.addr %s218, 16
      %s222 = sadd.s32 %s220, %s221
      %s223 = smul.addr %s222, 4
      %s224 = scalar_lea.vmem %s0, %s223
      %s225 = smul.u32 16, %s20
      %p226 = scmp.lt.s32.totalorder %s19, 3
      %s227 = scalar_select %p226, %s19, 3
      %s228 = smul.addr %s227, 16
      %s229 = smul.addr %s228, 4
      %s230 = scalar_lea.vmem %s1, %s229
      %p232 = scmp.eq.s32.totalorder %s19, 0
      %p233 = scmp.eq.s32.totalorder %s20, 0
      %p234 = pnand %p232, %p233
      %p235 = pneg %p234
      // Predicated region
      $region37: #{generator_forward.7} parent=35 // pred_check
        _
      $region38: #{generator_forward.7} parent=35 // pred_check_branch
        %237 = sbr.rel (%p234) target = $region40
      $region39: #{generator_forward.7} parent=35 // pred_region
        %238 = vst [vmem:[#allocation2] sm:$0xff] 0.0
        %239 = vst [vmem:[#allocation3] sm:$0xff] 0.0
      $region40: #{generator_forward.7} parent=35 // pred_fallthru
        _
      %s240 = smul.u32 %s19, 128
      %s241 = smul.u32 %s20, 128
      %s242 = sadd.s32 %s240, %s241
      %v243 = vld [vmem:[%s224] sm:$0xf]
      %v244 = vld [vmem:[%s224 + $0x4] sm:$0xf]
      %v245 = vld [vmem:[%s224 + $0x8] sm:$0xf]
      %v246 = vld [vmem:[%s224 + $0xc] sm:$0xf]
      %v247 = vld [vmem:[%s224 + $0x10] sm:$0xf]
      %v248 = vld [vmem:[%s224 + $0x14] sm:$0xf]
      %v249 = vld [vmem:[%s224 + $0x18] sm:$0xf]
      %v250 = vld [vmem:[%s224 + $0x1c] sm:$0xf]
      %v251 = vld [vmem:[%s224 + $0x20] sm:$0xf]
      %v252 = vld [vmem:[%s224 + $0x24] sm:$0xf]
      %v253 = vld [vmem:[%s224 + $0x28] sm:$0xf]
      %v254 = vld [vmem:[%s224 + $0x2c] sm:$0xf]
      %v255 = vld [vmem:[%s224 + $0x30] sm:$0xf]
      %v256 = vld [vmem:[%s224 + $0x34] sm:$0xf]
      %v257 = vld [vmem:[%s224 + $0x38] sm:$0xf]
      %v258 = vld [vmem:[%s224 + $0x3c] sm:$0xf]
      %v259 = vld [vmem:[%s230] sm:$0xf]
      %v260 = vld [vmem:[%s230 + $0x4] sm:$0xf]
      %v261 = vld [vmem:[%s230 + $0x8] sm:$0xf]
      %v262 = vld [vmem:[%s230 + $0xc] sm:$0xf]
      %v263 = vld [vmem:[%s230 + $0x10] sm:$0xf]
      %v264 = vld [vmem:[%s230 + $0x14] sm:$0xf]
      %v265 = vld [vmem:[%s230 + $0x18] sm:$0xf]
      %v266 = vld [vmem:[%s230 + $0x1c] sm:$0xf]
      %v267 = vld [vmem:[%s230 + $0x20] sm:$0xf]
      %v268 = vld [vmem:[%s230 + $0x24] sm:$0xf]
      %v269 = vld [vmem:[%s230 + $0x28] sm:$0xf]
      %v270 = vld [vmem:[%s230 + $0x2c] sm:$0xf]
      %v271 = vld [vmem:[%s230 + $0x30] sm:$0xf]
      %v272 = vld [vmem:[%s230 + $0x34] sm:$0xf]
      %v273 = vld [vmem:[%s230 + $0x38] sm:$0xf]
      %v274 = vld [vmem:[%s230 + $0x3c] sm:$0xf]
      %v291 = vunpack.c.l.b16 %v243
      %v292 = vunpack.c.l.b16 %v244
      %v293 = vunpack.c.l.b16 %v245
      %v294 = vunpack.c.l.b16 %v246
      %v295 = vunpack.c.l.b16 %v247
      %v296 = vunpack.c.l.b16 %v248
      %v297 = vunpack.c.l.b16 %v249
      %v298 = vunpack.c.l.b16 %v250
      %v299 = vunpack.c.l.b16 %v251
      %v300 = vunpack.c.l.b16 %v252
      %v301 = vunpack.c.l.b16 %v253
      %v302 = vunpack.c.l.b16 %v254
      %v303 = vunpack.c.l.b16 %v255
      %v304 = vunpack.c.l.b16 %v256
      %v305 = vunpack.c.l.b16 %v257
      %v306 = vunpack.c.l.b16 %v258
      %v307 = vpack.c.b16 %v292, %v291
      %v308 = vpack.c.b16 %v294, %v293
      %v309 = vpack.c.b16 %v296, %v295
      %v310 = vpack.c.b16 %v298, %v297
      %v311 = vpack.c.b16 %v300, %v299
      %v312 = vpack.c.b16 %v302, %v301
      %v313 = vpack.c.b16 %v304, %v303
      %v314 = vpack.c.b16 %v306, %v305
      %v339 = vunpack.c.l.b16 %v259
      %v340 = vunpack.c.l.b16 %v260
      %v341 = vunpack.c.l.b16 %v261
      %v342 = vunpack.c.l.b16 %v262
      %v343 = vunpack.c.l.b16 %v263
      %v344 = vunpack.c.l.b16 %v264
      %v345 = vunpack.c.l.b16 %v265
      %v346 = vunpack.c.l.b16 %v266
      %v347 = vunpack.c.l.b16 %v267
      %v348 = vunpack.c.l.b16 %v268
      %v349 = vunpack.c.l.b16 %v269
      %v350 = vunpack.c.l.b16 %v270
      %v351 = vunpack.c.l.b16 %v271
      %v352 = vunpack.c.l.b16 %v272
      %v353 = vunpack.c.l.b16 %v273
      %v354 = vunpack.c.l.b16 %v274
      %v355 = vpack.c.b16 %v340, %v339
      %v356 = vpack.c.b16 %v342, %v341
      %v357 = vpack.c.b16 %v344, %v343
      %v358 = vpack.c.b16 %v346, %v345
      %v359 = vpack.c.b16 %v348, %v347
      %v360 = vpack.c.b16 %v350, %v349
      %v361 = vpack.c.b16 %v352, %v351
      %v362 = vpack.c.b16 %v354, %v353
      %371 = vmatprep.subr.bf16.mxu0 0
      %372 = vmatpush1.bf16.msra.mxu0 %v355
      %373 = vmatprep.subr.bf16.mxu0 0
      %374 = vmatpush1.bf16.msra.mxu0 %v356
      %375 = vmatprep.subr.bf16.mxu0 0
      %376 = vmatpush1.bf16.msra.mxu0 %v357
      %377 = vmatprep.subr.bf16.mxu0 0
      %378 = vmatpush1.bf16.msra.mxu0 %v358
      %379 = vmatprep.subr.bf16.mxu0 0
      %380 = vmatpush1.bf16.msra.mxu0 %v359
      %381 = vmatprep.subr.bf16.mxu0 0
      %382 = vmatpush1.bf16.msra.mxu0 %v360
      %383 = vmatprep.subr.bf16.mxu0 0
      %384 = vmatpush1.bf16.msra.mxu0 %v361
      %385 = vmatprep.subr.bf16.mxu0 0
      %386 = vmatpush1.bf16.msra.mxu0 %v362
      %387 = vmatprep.subr.bf16.mxu0 0
      %388 = vmatpush1.bf16.msra.mxu0 0
      %389 = vmatprep.subr.bf16.mxu0 0
      %390 = vmatpush1.bf16.msra.mxu0 0
      %391 = vmatprep.subr.bf16.mxu0 0
      %392 = vmatpush1.bf16.msra.mxu0 0
      %393 = vmatprep.subr.bf16.mxu0 0
      %394 = vmatpush1.bf16.msra.mxu0 0
      %395 = vmatprep.subr.bf16.mxu0 0
      %396 = vmatpush1.bf16.msra.mxu0 0
      %397 = vmatprep.subr.bf16.mxu0 0
      %398 = vmatpush1.bf16.msra.mxu0 0
      %399 = vmatprep.subr.bf16.mxu0 0
      %400 = vmatpush1.bf16.msra.mxu0 0
      %401 = vmatprep.subr.bf16.mxu0 0
      %402 = vmatpush1.bf16.msra.mxu0 0
      %403 = vmatprep.mubr.bf16.mxu0 0
      %404 = vmatmul.mubr.bf16.gmra.mrb[0].mxu0 %v307
      %v405 = vpop.f32.mrb[0].mxu0
      %v406 = vadd.f32 0.0, %v405
      %v407 = vpop.f32.mrb[0].mxu0
      %v408 = vpop.f32.mrb[0].mxu0
      %v409 = vadd.f32 0.0, %v408
      %v410 = vpop.f32.mrb[0].mxu0
      %411 = vmatprep.mubr.bf16.mxu0 0
      %412 = vmatmul.mubr.bf16.gmra.mrb[0].mxu0 %v308
      %v413 = vpop.f32.mrb[0].mxu0
      %v414 = vadd.f32 0.0, %v413
      %v415 = vpop.f32.mrb[0].mxu0
      %v416 = vpop.f32.mrb[0].mxu0
      %v417 = vadd.f32 0.0, %v416
      %v418 = vpop.f32.mrb[0].mxu0
      %419 = vmatprep.mubr.bf16.mxu0 0
      %420 = vmatmul.mubr.bf16.gmra.mrb[0].mxu0 %v309
      %v421 = vpop.f32.mrb[0].mxu0
      %v422 = vadd.f32 0.0, %v421
      %v423 = vpop.f32.mrb[0].mxu0
      %v424 = vpop.f32.mrb[0].mxu0
      %v425 = vadd.f32 0.0, %v424
      %v426 = vpop.f32.mrb[0].mxu0
      %427 = vmatprep.mubr.bf16.mxu0 0
      %428 = vmatmul.mubr.bf16.gmra.mrb[0].mxu0 %v310
      %v429 = vpop.f32.mrb[0].mxu0
      %v430 = vadd.f32 0.0, %v429
      %v431 = vpop.f32.mrb[0].mxu0
      %v432 = vpop.f32.mrb[0].mxu0
      %v433 = vadd.f32 0.0, %v432
      %v434 = vpop.f32.mrb[0].mxu0
      %435 = vmatprep.mubr.bf16.mxu0 0
      %436 = vmatmul.mubr.bf16.gmra.mrb[0].mxu0 %v311
      %v437 = vpop.f32.mrb[0].mxu0
      %v438 = vadd.f32 0.0, %v437
      %v439 = vpop.f32.mrb[0].mxu0
      %v440 = vpop.f32.mrb[0].mxu0
      %v441 = vadd.f32 0.0, %v440
      %v442 = vpop.f32.mrb[0].mxu0
      %443 = vmatprep.mubr.bf16.mxu0 0
      %444 = vmatmul.mubr.bf16.gmra.mrb[0].mxu0 %v312
      %v445 = vpop.f32.mrb[0].mxu0
      %v446 = vadd.f32 0.0, %v445
      %v447 = vpop.f32.mrb[0].mxu0
      %v448 = vpop.f32.mrb[0].mxu0
      %v449 = vadd.f32 0.0, %v448
      %v450 = vpop.f32.mrb[0].mxu0
      %451 = vmatprep.mubr.bf16.mxu0 0
      %452 = vmatmul.mubr.bf16.gmra.mrb[0].mxu0 %v313
      %v453 = vpop.f32.mrb[0].mxu0
      %v454 = vadd.f32 0.0, %v453
      %v455 = vpop.f32.mrb[0].mxu0
      %v456 = vpop.f32.mrb[0].mxu0
      %v457 = vadd.f32 0.0, %v456
      %v458 = vpop.f32.mrb[0].mxu0
      %459 = vmatprep.mubr.bf16.mxu0 0
      %460 = vmatmul.mubr.bf16.gmra.mrb[0].mxu0 %v314
      %v461 = vpop.f32.mrb[0].mxu0
      %v462 = vadd.f32 0.0, %v461
      %v463 = vpop.f32.mrb[0].mxu0
      %v464 = vpop.f32.mrb[0].mxu0
      %v465 = vadd.f32 0.0, %v464
      %v466 = vpop.f32.mrb[0].mxu0
      %467 = vdwg.mxu0
      %v468 = vpack.c.bf16 %v409, %v406
      %v469 = vpack.c.bf16 %v417, %v414
      %v470 = vpack.c.bf16 %v425, %v422
      %v471 = vpack.c.bf16 %v433, %v430
      %v472 = vpack.c.bf16 %v441, %v438
      %v473 = vpack.c.bf16 %v449, %v446
      %v474 = vpack.c.bf16 %v457, %v454
      %v475 = vpack.c.bf16 %v465, %v462
      %v484 = vunpack.c.l.b16 %v468
      %v485 = vunpack.c.h.b16 %v468
      %v486 = vunpack.c.l.b16 %v469
      %v487 = vunpack.c.h.b16 %v469
      %v488 = vunpack.c.l.b16 %v470
      %v489 = vunpack.c.h.b16 %v470
      %v490 = vunpack.c.l.b16 %v471
      %v491 = vunpack.c.h.b16 %v471
      %v492 = vunpack.c.l.b16 %v472
      %v493 = vunpack.c.h.b16 %v472
      %v494 = vunpack.c.l.b16 %v473
      %v495 = vunpack.c.h.b16 %v473
      %v496 = vunpack.c.l.b16 %v474
      %v497 = vunpack.c.h.b16 %v474
      %v498 = vunpack.c.l.b16 %v475
      %v499 = vunpack.c.h.b16 %v475
      %v500 = vpack.c.b16 %v484, %v484
      %v501 = vpack.c.b16 %v485, %v485
      %v502 = vpack.c.b16 %v486, %v486
      %v503 = vpack.c.b16 %v487, %v487
      %v504 = vpack.c.b16 %v488, %v488
      %v505 = vpack.c.b16 %v489, %v489
      %v506 = vpack.c.b16 %v490, %v490
      %v507 = vpack.c.b16 %v491, %v491
      %v508 = vpack.c.b16 %v492, %v492
      %v509 = vpack.c.b16 %v493, %v493
      %v510 = vpack.c.b16 %v494, %v494
      %v511 = vpack.c.b16 %v495, %v495
      %v512 = vpack.c.b16 %v496, %v496
      %v513 = vpack.c.b16 %v497, %v497
      %v514 = vpack.c.b16 %v498, %v498
      %v515 = vpack.c.b16 %v499, %v499
      %s532 = sshra.s32 %s242, 3
      %s533 = sand.u32 %s242, 7
      %s534 = smul.addr %s532, 4
      %s535 = scalar_lea.vmem %s4, %s534
      %536 = vst [vmem:[%s535] sm:$0xf] %v500
      %537 = vst [vmem:[%s535 + $0x4] sm:$0xf] %v501
      %538 = vst [vmem:[%s535 + $0x8] sm:$0xf] %v502
      %539 = vst [vmem:[%s535 + $0xc] sm:$0xf] %v503
      %540 = vst [vmem:[%s535 + $0x10] sm:$0xf] %v504
      %541 = vst [vmem:[%s535 + $0x14] sm:$0xf] %v505
      %542 = vst [vmem:[%s535 + $0x18] sm:$0xf] %v506
      %543 = vst [vmem:[%s535 + $0x1c] sm:$0xf] %v507
      %544 = vst [vmem:[%s535 + $0x20] sm:$0xf] %v508
      %545 = vst [vmem:[%s535 + $0x24] sm:$0xf] %v509
      %546 = vst [vmem:[%s535 + $0x28] sm:$0xf] %v510
      %547 = vst [vmem:[%s535 + $0x2c] sm:$0xf] %v511
      %548 = vst [vmem:[%s535 + $0x30] sm:$0xf] %v512
      %549 = vst [vmem:[%s535 + $0x34] sm:$0xf] %v513
      %550 = vst [vmem:[%s535 + $0x38] sm:$0xf] %v514
      %551 = vst [vmem:[%s535 + $0x3c] sm:$0xf] %v515
      %v552 = vld [vmem:[#allocation2] sm:$0xff]
      %v553 = vadd.f32 %v406, %v409
      %v554 = vadd.f32 %v553, %v414
      %v555 = vadd.f32 %v554, %v417
      %v556 = vadd.f32 %v555, %v422
      %v557 = vadd.f32 %v556, %v425
      %v558 = vadd.f32 %v557, %v430
      %v559 = vadd.f32 %v558, %v433
      %v560 = vadd.f32 %v559, %v438
      %v561 = vadd.f32 %v560, %v441
      %v562 = vadd.f32 %v561, %v446
      %v563 = vadd.f32 %v562, %v449
      %v564 = vadd.f32 %v563, %v454
      %v565 = vadd.f32 %v564, %v457
      %v566 = vadd.f32 %v565, %v462
      %v567 = vadd.f32 %v566, %v465
      %v568 = vadd.f32 %v552, %v567
      %569 = vst [vmem:[#allocation2] sm:$0xff] %v568
      %v570 = vld [vmem:[#allocation3] sm:$0xff]
      %v571 = vmul.f32 %v406, %v406
      %v572 = vmul.f32 %v409, %v409
      %v573 = vmul.f32 %v414, %v414
      %v574 = vmul.f32 %v417, %v417
      %v575 = vmul.f32 %v422, %v422
      %v576 = vmul.f32 %v425, %v425
      %v577 = vmul.f32 %v430, %v430
      %v578 = vmul.f32 %v433, %v433
      %v579 = vmul.f32 %v438, %v438
      %v580 = vmul.f32 %v441, %v441
      %v581 = vmul.f32 %v446, %v446
      %v582 = vmul.f32 %v449, %v449
      %v583 = vmul.f32 %v454, %v454
      %v584 = vmul.f32 %v457, %v457
      %v585 = vmul.f32 %v462, %v462
      %v586 = vmul.f32 %v465, %v465
      %v587 = vadd.f32 %v571, %v572
      %v588 = vadd.f32 %v587, %v573
      %v589 = vadd.f32 %v588, %v574
      %v590 = vadd.f32 %v589, %v575
      %v591 = vadd.f32 %v590, %v576
      %v592 = vadd.f32 %v591, %v577
      %v593 = vadd.f32 %v592, %v578
      %v594 = vadd.f32 %v593, %v579
      %v595 = vadd.f32 %v594, %v580
      %v596 = vadd.f32 %v595, %v581
      %v597 = vadd.f32 %v596, %v582
      %v598 = vadd.f32 %v597, %v583
      %v599 = vadd.f32 %v598, %v584
      %v600 = vadd.f32 %v599, %v585
      %v601 = vadd.f32 %v600, %v586
      %v602 = vadd.f32 %v570, %v601
      %603 = vst [vmem:[#allocation3] sm:$0xff] %v602
      %p604 = scmp.eq.s32.totalorder %s19, 3
      %p605 = pnand %p604, %p233
      %p606 = pneg %p605
      // Predicated region
      $region41: #{generator_forward.7} parent=35 // pred_check
        _
      $region42: #{generator_forward.7} parent=35 // pred_check_branch
        %608 = sbr.rel (%p605) target = $region44
      $region43: #{generator_forward.7} parent=35 // pred_region
        %v609 = vld [vmem:[#allocation2] sm:$0xff]
        %v610 = vrot.slane %v609, 4
        %v611 = vadd.f32 %v609, %v610
        %v612 = vrot.slane %v611, 2
        %v613 = vadd.f32 %v611, %v612
        %v614 = vrot.slane %v613, 1
        %v615 = vadd.f32 %v613, %v614
        %v616 = vrcp.pop 512.0
        %v617 = vmul.f32 %v615, %v616
        %v618 = vld [vmem:[#allocation3] sm:$0xff]
        %v619 = vrot.slane %v618, 4
        %v620 = vadd.f32 %v618, %v619
        %v621 = vrot.slane %v620, 2
        %v622 = vadd.f32 %v620, %v621
        %v623 = vrot.slane %v622, 1
        %v624 = vadd.f32 %v622, %v623
        %v625 = vmul.f32 %v624, %v616
        %v626 = vmul.f32 %v617, %v617
        %v627 = vsub.f32 %v625, %v626
        %v628 = vmax.f32 %v627, 0.0
        %v629 = vadd.f32 %v628, 1e-05
        %v630 = vrsqrt.pop %v629
        %v631 = vld [vmem:[%s2] sm:$0x1]
        %v632 = vmul.f32 %v631, %v630
        %v633 = vld [vmem:[%s3] sm:$0x1]
        %v634 = vmul.f32 %v617, %v632
        %v635 = vsub.f32 %v633, %v634
        %v636 = vld [vmem:[%s4] sm:$0xf]
        %v637 = vld [vmem:[%s4 + $0x4] sm:$0xf]
        %v638 = vld [vmem:[%s4 + $0x8] sm:$0xf]
        %v639 = vld [vmem:[%s4 + $0xc] sm:$0xf]
        %v640 = vld [vmem:[%s4 + $0x10] sm:$0xf]
        %v641 = vld [vmem:[%s4 + $0x14] sm:$0xf]
        %v642 = vld [vmem:[%s4 + $0x18] sm:$0xf]
        %v643 = vld [vmem:[%s4 + $0x1c] sm:$0xf]
        %v644 = vld [vmem:[%s4 + $0x20] sm:$0xf]
        %v645 = vld [vmem:[%s4 + $0x24] sm:$0xf]
        %v646 = vld [vmem:[%s4 + $0x28] sm:$0xf]
        %v647 = vld [vmem:[%s4 + $0x2c] sm:$0xf]
        %v648 = vld [vmem:[%s4 + $0x30] sm:$0xf]
        %v649 = vld [vmem:[%s4 + $0x34] sm:$0xf]
        %v650 = vld [vmem:[%s4 + $0x38] sm:$0xf]
        %v651 = vld [vmem:[%s4 + $0x3c] sm:$0xf]
        %v652 = vunpack.c.l.bf16 %v636
        %v653 = vunpack.c.l.bf16 %v637
        %v654 = vunpack.c.l.bf16 %v638
        %v655 = vunpack.c.l.bf16 %v639
        %v656 = vunpack.c.l.bf16 %v640
        %v657 = vunpack.c.l.bf16 %v641
        %v658 = vunpack.c.l.bf16 %v642
        %v659 = vunpack.c.l.bf16 %v643
        %v660 = vunpack.c.l.bf16 %v644
        %v661 = vunpack.c.l.bf16 %v645
        %v662 = vunpack.c.l.bf16 %v646
        %v663 = vunpack.c.l.bf16 %v647
        %v664 = vunpack.c.l.bf16 %v648
        %v665 = vunpack.c.l.bf16 %v649
        %v666 = vunpack.c.l.bf16 %v650
        %v667 = vunpack.c.l.bf16 %v651
        %v669 = vlaneseq
        %v670 = vshrl.u32 %v669, 7
        %v671 = vsub.s32 0, %v670
        %v672 = vrot.slane %v632, %v671
        %v674 = vmul.f32 %v652, %v672
        %v675 = vmul.f32 %v653, %v672
        %v676 = vmul.f32 %v654, %v672
        %v677 = vmul.f32 %v655, %v672
        %v678 = vmul.f32 %v656, %v672
        %v679 = vmul.f32 %v657, %v672
        %v680 = vmul.f32 %v658, %v672
        %v681 = vmul.f32 %v659, %v672
        %v682 = vmul.f32 %v660, %v672
        %v683 = vmul.f32 %v661, %v672
        %v684 = vmul.f32 %v662, %v672
        %v685 = vmul.f32 %v663, %v672
        %v686 = vmul.f32 %v664, %v672
        %v687 = vmul.f32 %v665, %v672
        %v688 = vmul.f32 %v666, %v672
        %v689 = vmul.f32 %v667, %v672
        %v691 = vlaneseq
        %v692 = vshrl.u32 %v691, 7
        %v693 = vsub.s32 0, %v692
        %v694 = vrot.slane %v635, %v693
        %v696 = vadd.f32 %v674, %v694
        %v697 = vadd.f32 %v675, %v694
        %v698 = vadd.f32 %v676, %v694
        %v699 = vadd.f32 %v677, %v694
        %v700 = vadd.f32 %v678, %v694
        %v701 = vadd.f32 %v679, %v694
        %v702 = vadd.f32 %v680, %v694
        %v703 = vadd.f32 %v681, %v694
        %v704 = vadd.f32 %v682, %v694
        %v705 = vadd.f32 %v683, %v694
        %v706 = vadd.f32 %v684, %v694
        %v707 = vadd.f32 %v685, %v694
        %v708 = vadd.f32 %v686, %v694
        %v709 = vadd.f32 %v687, %v694
        %v710 = vadd.f32 %v688, %v694
        %v711 = vadd.f32 %v689, %v694
        %v712 = vmax.f32 %v696, 0.0
        %v713 = vmax.f32 %v697, 0.0
        %v714 = vmax.f32 %v698, 0.0
        %v715 = vmax.f32 %v699, 0.0
        %v716 = vmax.f32 %v700, 0.0
        %v717 = vmax.f32 %v701, 0.0
        %v718 = vmax.f32 %v702, 0.0
        %v719 = vmax.f32 %v703, 0.0
        %v720 = vmax.f32 %v704, 0.0
        %v721 = vmax.f32 %v705, 0.0
        %v722 = vmax.f32 %v706, 0.0
        %v723 = vmax.f32 %v707, 0.0
        %v724 = vmax.f32 %v708, 0.0
        %v725 = vmax.f32 %v709, 0.0
        %v726 = vmax.f32 %v710, 0.0
        %v727 = vmax.f32 %v711, 0.0
        %v728 = vpack.c.bf16 %v713, %v712
        %v729 = vpack.c.bf16 %v715, %v714
        %v730 = vpack.c.bf16 %v717, %v716
        %v731 = vpack.c.bf16 %v719, %v718
        %v732 = vpack.c.bf16 %v721, %v720
        %v733 = vpack.c.bf16 %v723, %v722
        %v734 = vpack.c.bf16 %v725, %v724
        %v735 = vpack.c.bf16 %v727, %v726
        %v744 = vunpack.c.l.b16 %v728
        %v745 = vunpack.c.h.b16 %v728
        %v746 = vunpack.c.l.b16 %v729
        %v747 = vunpack.c.h.b16 %v729
        %v748 = vunpack.c.l.b16 %v730
        %v749 = vunpack.c.h.b16 %v730
        %v750 = vunpack.c.l.b16 %v731
        %v751 = vunpack.c.h.b16 %v731
        %v752 = vunpack.c.l.b16 %v732
        %v753 = vunpack.c.h.b16 %v732
        %v754 = vunpack.c.l.b16 %v733
        %v755 = vunpack.c.h.b16 %v733
        %v756 = vunpack.c.l.b16 %v734
        %v757 = vunpack.c.h.b16 %v734
        %v758 = vunpack.c.l.b16 %v735
        %v759 = vunpack.c.h.b16 %v735
        %v760 = vpack.c.b16 %v744, %v744
        %v761 = vpack.c.b16 %v745, %v745
        %v762 = vpack.c.b16 %v746, %v746
        %v763 = vpack.c.b16 %v747, %v747
        %v764 = vpack.c.b16 %v748, %v748
        %v765 = vpack.c.b16 %v749, %v749
        %v766 = vpack.c.b16 %v750, %v750
        %v767 = vpack.c.b16 %v751, %v751
        %v768 = vpack.c.b16 %v752, %v752
        %v769 = vpack.c.b16 %v753, %v753
        %v770 = vpack.c.b16 %v754, %v754
        %v771 = vpack.c.b16 %v755, %v755
        %v772 = vpack.c.b16 %v756, %v756
        %v773 = vpack.c.b16 %v757, %v757
        %v774 = vpack.c.b16 %v758, %v758
        %v775 = vpack.c.b16 %v759, %v759
        %792 = vst [vmem:[%s4] sm:$0xf] %v760
        %793 = vst [vmem:[%s4 + $0x4] sm:$0xf] %v761
        %794 = vst [vmem:[%s4 + $0x8] sm:$0xf] %v762
        %795 = vst [vmem:[%s4 + $0xc] sm:$0xf] %v763
        %796 = vst [vmem:[%s4 + $0x10] sm:$0xf] %v764
        %797 = vst [vmem:[%s4 + $0x14] sm:$0xf] %v765
        %798 = vst [vmem:[%s4 + $0x18] sm:$0xf] %v766
        %799 = vst [vmem:[%s4 + $0x1c] sm:$0xf] %v767
        %800 = vst [vmem:[%s4 + $0x20] sm:$0xf] %v768
        %801 = vst [vmem:[%s4 + $0x24] sm:$0xf] %v769
        %802 = vst [vmem:[%s4 + $0x28] sm:$0xf] %v770
        %803 = vst [vmem:[%s4 + $0x2c] sm:$0xf] %v771
        %804 = vst [vmem:[%s4 + $0x30] sm:$0xf] %v772
        %805 = vst [vmem:[%s4 + $0x34] sm:$0xf] %v773
        %806 = vst [vmem:[%s4 + $0x38] sm:$0xf] %v774
        %807 = vst [vmem:[%s4 + $0x3c] sm:$0xf] %v775
        %v808 = vld [vmem:[%s4 + $0x40] sm:$0xf]
        %v809 = vld [vmem:[%s4 + $0x44] sm:$0xf]
        %v810 = vld [vmem:[%s4 + $0x48] sm:$0xf]
        %v811 = vld [vmem:[%s4 + $0x4c] sm:$0xf]
        %v812 = vld [vmem:[%s4 + $0x50] sm:$0xf]
        %v813 = vld [vmem:[%s4 + $0x54] sm:$0xf]
        %v814 = vld [vmem:[%s4 + $0x58] sm:$0xf]
        %v815 = vld [vmem:[%s4 + $0x5c] sm:$0xf]
        %v816 = vld [vmem:[%s4 + $0x60] sm:$0xf]
        %v817 = vld [vmem:[%s4 + $0x64] sm:$0xf]
        %v818 = vld [vmem:[%s4 + $0x68] sm:$0xf]
        %v819 = vld [vmem:[%s4 + $0x6c] sm:$0xf]
        %v820 = vld [vmem:[%s4 + $0x70] sm:$0xf]
        %v821 = vld [vmem:[%s4 + $0x74] sm:$0xf]
        %v822 = vld [vmem:[%s4 + $0x78] sm:$0xf]
        %v823 = vld [vmem:[%s4 + $0x7c] sm:$0xf]
        %v824 = vunpack.c.l.bf16 %v808
        %v825 = vunpack.c.l.bf16 %v809
        %v826 = vunpack.c.l.bf16 %v810
        %v827 = vunpack.c.l.bf16 %v811
        %v828 = vunpack.c.l.bf16 %v812
        %v829 = vunpack.c.l.bf16 %v813
        %v830 = vunpack.c.l.bf16 %v814
        %v831 = vunpack.c.l.bf16 %v815
        %v832 = vunpack.c.l.bf16 %v816
        %v833 = vunpack.c.l.bf16 %v817
        %v834 = vunpack.c.l.bf16 %v818
        %v835 = vunpack.c.l.bf16 %v819
        %v836 = vunpack.c.l.bf16 %v820
        %v837 = vunpack.c.l.bf16 %v821
        %v838 = vunpack.c.l.bf16 %v822
        %v839 = vunpack.c.l.bf16 %v823
        %v840 = vmul.f32 %v824, %v672
        %v841 = vmul.f32 %v825, %v672
        %v842 = vmul.f32 %v826, %v672
        %v843 = vmul.f32 %v827, %v672
        %v844 = vmul.f32 %v828, %v672
        %v845 = vmul.f32 %v829, %v672
        %v846 = vmul.f32 %v830, %v672
        %v847 = vmul.f32 %v831, %v672
        %v848 = vmul.f32 %v832, %v672
        %v849 = vmul.f32 %v833, %v672
        %v850 = vmul.f32 %v834, %v672
        %v851 = vmul.f32 %v835, %v672
        %v852 = vmul.f32 %v836, %v672
        %v853 = vmul.f32 %v837, %v672
        %v854 = vmul.f32 %v838, %v672
        %v855 = vmul.f32 %v839, %v672
        %v856 = vadd.f32 %v840, %v694
        %v857 = vadd.f32 %v841, %v694
        %v858 = vadd.f32 %v842, %v694
        %v859 = vadd.f32 %v843, %v694
        %v860 = vadd.f32 %v844, %v694
        %v861 = vadd.f32 %v845, %v694
        %v862 = vadd.f32 %v846, %v694
        %v863 = vadd.f32 %v847, %v694
        %v864 = vadd.f32 %v848, %v694
        %v865 = vadd.f32 %v849, %v694
        %v866 = vadd.f32 %v850, %v694
        %v867 = vadd.f32 %v851, %v694
        %v868 = vadd.f32 %v852, %v694
        %v869 = vadd.f32 %v853, %v694
        %v870 = vadd.f32 %v854, %v694
        %v871 = vadd.f32 %v855, %v694
        %v872 = vmax.f32 %v856, 0.0
        %v873 = vmax.f32 %v857, 0.0
        %v874 = vmax.f32 %v858, 0.0
        %v875 = vmax.f32 %v859, 0.0
        %v876 = vmax.f32 %v860, 0.0
        %v877 = vmax.f32 %v861, 0.0
        %v878 = vmax.f32 %v862, 0.0
        %v879 = vmax.f32 %v863, 0.0
        %v880 = vmax.f32 %v864, 0.0
        %v881 = vmax.f32 %v865, 0.0
        %v882 = vmax.f32 %v866, 0.0
        %v883 = vmax.f32 %v867, 0.0
        %v884 = vmax.f32 %v868, 0.0
        %v885 = vmax.f32 %v869, 0.0
        %v886 = vmax.f32 %v870, 0.0
        %v887 = vmax.f32 %v871, 0.0
        %v888 = vpack.c.bf16 %v873, %v872
        %v889 = vpack.c.bf16 %v875, %v874
        %v890 = vpack.c.bf16 %v877, %v876
        %v891 = vpack.c.bf16 %v879, %v878
        %v892 = vpack.c.bf16 %v881, %v880
        %v893 = vpack.c.bf16 %v883, %v882
        %v894 = vpack.c.bf16 %v885, %v884
        %v895 = vpack.c.bf16 %v887, %v886
        %v904 = vunpack.c.l.b16 %v888
        %v905 = vunpack.c.h.b16 %v888
        %v906 = vunpack.c.l.b16 %v889
        %v907 = vunpack.c.h.b16 %v889
        %v908 = vunpack.c.l.b16 %v890
        %v909 = vunpack.c.h.b16 %v890
        %v910 = vunpack.c.l.b16 %v891
        %v911 = vunpack.c.h.b16 %v891
        %v912 = vunpack.c.l.b16 %v892
        %v913 = vunpack.c.h.b16 %v892
        %v914 = vunpack.c.l.b16 %v893
        %v915 = vunpack.c.h.b16 %v893
        %v916 = vunpack.c.l.b16 %v894
        %v917 = vunpack.c.h.b16 %v894
        %v918 = vunpack.c.l.b16 %v895
        %v919 = vunpack.c.h.b16 %v895
        %v920 = vpack.c.b16 %v904, %v904
        %v921 = vpack.c.b16 %v905, %v905
        %v922 = vpack.c.b16 %v906, %v906
        %v923 = vpack.c.b16 %v907, %v907
        %v924 = vpack.c.b16 %v908, %v908
        %v925 = vpack.c.b16 %v909, %v909
        %v926 = vpack.c.b16 %v910, %v910
        %v927 = vpack.c.b16 %v911, %v911
        %v928 = vpack.c.b16 %v912, %v912
        %v929 = vpack.c.b16 %v913, %v913
        %v930 = vpack.c.b16 %v914, %v914
        %v931 = vpack.c.b16 %v915, %v915
        %v932 = vpack.c.b16 %v916, %v916
        %v933 = vpack.c.b16 %v917, %v917
        %v934 = vpack.c.b16 %v918, %v918
        %v935 = vpack.c.b16 %v919, %v919
        %952 = vst [vmem:[%s4 + $0x40] sm:$0xf] %v920
        %953 = vst [vmem:[%s4 + $0x44] sm:$0xf] %v921
        %954 = vst [vmem:[%s4 + $0x48] sm:$0xf] %v922
        %955 = vst [vmem:[%s4 + $0x4c] sm:$0xf] %v923
        %956 = vst [vmem:[%s4 + $0x50] sm:$0xf] %v924
        %957 = vst [vmem:[%s4 + $0x54] sm:$0xf] %v925
        %958 = vst [vmem:[%s4 + $0x58] sm:$0xf] %v926
        %959 = vst [vmem:[%s4 + $0x5c] sm:$0xf] %v927
        %960 = vst [vmem:[%s4 + $0x60] sm:$0xf] %v928
        %961 = vst [vmem:[%s4 + $0x64] sm:$0xf] %v929
        %962 = vst [vmem:[%s4 + $0x68] sm:$0xf] %v930
        %963 = vst [vmem:[%s4 + $0x6c] sm:$0xf] %v931
        %964 = vst [vmem:[%s4 + $0x70] sm:$0xf] %v932
        %965 = vst [vmem:[%s4 + $0x74] sm:$0xf] %v933
        %966 = vst [vmem:[%s4 + $0x78] sm:$0xf] %v934
        %967 = vst [vmem:[%s4 + $0x7c] sm:$0xf] %v935
        %v968 = vld [vmem:[%s4 + $0x80] sm:$0xf]
        %v969 = vld [vmem:[%s4 + $0x84] sm:$0xf]
        %v970 = vld [vmem:[%s4 + $0x88] sm:$0xf]
        %v971 = vld [vmem:[%s4 + $0x8c] sm:$0xf]
        %v972 = vld [vmem:[%s4 + $0x90] sm:$0xf]
        %v973 = vld [vmem:[%s4 + $0x94] sm:$0xf]
        %v974 = vld [vmem:[%s4 + $0x98] sm:$0xf]
        %v975 = vld [vmem:[%s4 + $0x9c] sm:$0xf]
        %v976 = vld [vmem:[%s4 + $0xa0] sm:$0xf]
        %v977 = vld [vmem:[%s4 + $0xa4] sm:$0xf]
        %v978 = vld [vmem:[%s4 + $0xa8] sm:$0xf]
        %v979 = vld [vmem:[%s4 + $0xac] sm:$0xf]
        %v980 = vld [vmem:[%s4 + $0xb0] sm:$0xf]
        %v981 = vld [vmem:[%s4 + $0xb4] sm:$0xf]
        %v982 = vld [vmem:[%s4 + $0xb8] sm:$0xf]
        %v983 = vld [vmem:[%s4 + $0xbc] sm:$0xf]
        %v984 = vunpack.c.l.bf16 %v968
        %v985 = vunpack.c.l.bf16 %v969
        %v986 = vunpack.c.l.bf16 %v970
        %v987 = vunpack.c.l.bf16 %v971
        %v988 = vunpack.c.l.bf16 %v972
        %v989 = vunpack.c.l.bf16 %v973
        %v990 = vunpack.c.l.bf16 %v974
        %v991 = vunpack.c.l.bf16 %v975
        %v992 = vunpack.c.l.bf16 %v976
        %v993 = vunpack.c.l.bf16 %v977
        %v994 = vunpack.c.l.bf16 %v978
        %v995 = vunpack.c.l.bf16 %v979
        %v996 = vunpack.c.l.bf16 %v980
        %v997 = vunpack.c.l.bf16 %v981
        %v998 = vunpack.c.l.bf16 %v982
        %v999 = vunpack.c.l.bf16 %v983
        %v1000 = vmul.f32 %v984, %v672
        %v1001 = vmul.f32 %v985, %v672
        %v1002 = vmul.f32 %v986, %v672
        %v1003 = vmul.f32 %v987, %v672
        %v1004 = vmul.f32 %v988, %v672
        %v1005 = vmul.f32 %v989, %v672
        %v1006 = vmul.f32 %v990, %v672
        %v1007 = vmul.f32 %v991, %v672
        %v1008 = vmul.f32 %v992, %v672
        %v1009 = vmul.f32 %v993, %v672
        %v1010 = vmul.f32 %v994, %v672
        %v1011 = vmul.f32 %v995, %v672
        %v1012 = vmul.f32 %v996, %v672
        %v1013 = vmul.f32 %v997, %v672
        %v1014 = vmul.f32 %v998, %v672
        %v1015 = vmul.f32 %v999, %v672
        %v1016 = vadd.f32 %v1000, %v694
        %v1017 = vadd.f32 %v1001, %v694
        %v1018 = vadd.f32 %v1002, %v694
        %v1019 = vadd.f32 %v1003, %v694
        %v1020 = vadd.f32 %v1004, %v694
        %v1021 = vadd.f32 %v1005, %v694
        %v1022 = vadd.f32 %v1006, %v694
        %v1023 = vadd.f32 %v1007, %v694
        %v1024 = vadd.f32 %v1008, %v694
        %v1025 = vadd.f32 %v1009, %v694
        %v1026 = vadd.f32 %v1010, %v694
        %v1027 = vadd.f32 %v1011, %v694
        %v1028 = vadd.f32 %v1012, %v694
        %v1029 = vadd.f32 %v1013, %v694
        %v1030 = vadd.f32 %v1014, %v694
        %v1031 = vadd.f32 %v1015, %v694
        %v1032 = vmax.f32 %v1016, 0.0
        %v1033 = vmax.f32 %v1017, 0.0
        %v1034 = vmax.f32 %v1018, 0.0
        %v1035 = vmax.f32 %v1019, 0.0
        %v1036 = vmax.f32 %v1020, 0.0
        %v1037 = vmax.f32 %v1021, 0.0
        %v1038 = vmax.f32 %v1022, 0.0
        %v1039 = vmax.f32 %v1023, 0.0
        %v1040 = vmax.f32 %v1024, 0.0
        %v1041 = vmax.f32 %v1025, 0.0
        %v1042 = vmax.f32 %v1026, 0.0
        %v1043 = vmax.f32 %v1027, 0.0
        %v1044 = vmax.f32 %v1028, 0.0
        %v1045 = vmax.f32 %v1029, 0.0
        %v1046 = vmax.f32 %v1030, 0.0
        %v1047 = vmax.f32 %v1031, 0.0
        %v1048 = vpack.c.bf16 %v1033, %v1032
        %v1049 = vpack.c.bf16 %v1035, %v1034
        %v1050 = vpack.c.bf16 %v1037, %v1036
        %v1051 = vpack.c.bf16 %v1039, %v1038
        %v1052 = vpack.c.bf16 %v1041, %v1040
        %v1053 = vpack.c.bf16 %v1043, %v1042
        %v1054 = vpack.c.bf16 %v1045, %v1044
        %v1055 = vpack.c.bf16 %v1047, %v1046
        %v1064 = vunpack.c.l.b16 %v1048
        %v1065 = vunpack.c.h.b16 %v1048
        %v1066 = vunpack.c.l.b16 %v1049
        %v1067 = vunpack.c.h.b16 %v1049
        %v1068 = vunpack.c.l.b16 %v1050
        %v1069 = vunpack.c.h.b16 %v1050
        %v1070 = vunpack.c.l.b16 %v1051
        %v1071 = vunpack.c.h.b16 %v1051
        %v1072 = vunpack.c.l.b16 %v1052
        %v1073 = vunpack.c.h.b16 %v1052
        %v1074 = vunpack.c.l.b16 %v1053
        %v1075 = vunpack.c.h.b16 %v1053
        %v1076 = vunpack.c.l.b16 %v1054
        %v1077 = vunpack.c.h.b16 %v1054
        %v1078 = vunpack.c.l.b16 %v1055
        %v1079 = vunpack.c.h.b16 %v1055
        %v1080 = vpack.c.b16 %v1064, %v1064
        %v1081 = vpack.c.b16 %v1065, %v1065
        %v1082 = vpack.c.b16 %v1066, %v1066
        %v1083 = vpack.c.b16 %v1067, %v1067
        %v1084 = vpack.c.b16 %v1068, %v1068
        %v1085 = vpack.c.b16 %v1069, %v1069
        %v1086 = vpack.c.b16 %v1070, %v1070
        %v1087 = vpack.c.b16 %v1071, %v1071
        %v1088 = vpack.c.b16 %v1072, %v1072
        %v1089 = vpack.c.b16 %v1073, %v1073
        %v1090 = vpack.c.b16 %v1074, %v1074
        %v1091 = vpack.c.b16 %v1075, %v1075
        %v1092 = vpack.c.b16 %v1076, %v1076
        %v1093 = vpack.c.b16 %v1077, %v1077
        %v1094 = vpack.c.b16 %v1078, %v1078
        %v1095 = vpack.c.b16 %v1079, %v1079
        %1112 = vst [vmem:[%s4 + $0x80] sm:$0xf] %v1080
        %1113 = vst [vmem:[%s4 + $0x84] sm:$0xf] %v1081
        %1114 = vst [vmem:[%s4 + $0x88] sm:$0xf] %v1082
        %1115 = vst [vmem:[%s4 + $0x8c] sm:$0xf] %v1083
        %1116 = vst [vmem:[%s4 + $0x90] sm:$0xf] %v1084
        %1117 = vst [vmem:[%s4 + $0x94] sm:$0xf] %v1085
        %1118 = vst [vmem:[%s4 + $0x98] sm:$0xf] %v1086
        %1119 = vst [vmem:[%s4 + $0x9c] sm:$0xf] %v1087
        %1120 = vst [vmem:[%s4 + $0xa0] sm:$0xf] %v1088
        %1121 = vst [vmem:[%s4 + $0xa4] sm:$0xf] %v1089
        %1122 = vst [vmem:[%s4 + $0xa8] sm:$0xf] %v1090
        %1123 = vst [vmem:[%s4 + $0xac] sm:$0xf] %v1091
        %1124 = vst [vmem:[%s4 + $0xb0] sm:$0xf] %v1092
        %1125 = vst [vmem:[%s4 + $0xb4] sm:$0xf] %v1093
        %1126 = vst [vmem:[%s4 + $0xb8] sm:$0xf] %v1094
        %1127 = vst [vmem:[%s4 + $0xbc] sm:$0xf] %v1095
        %v1128 = vld [vmem:[%s4 + $0xc0] sm:$0xf]
        %v1129 = vld [vmem:[%s4 + $0xc4] sm:$0xf]
        %v1130 = vld [vmem:[%s4 + $0xc8] sm:$0xf]
        %v1131 = vld [vmem:[%s4 + $0xcc] sm:$0xf]
        %v1132 = vld [vmem:[%s4 + $0xd0] sm:$0xf]
        %v1133 = vld [vmem:[%s4 + $0xd4] sm:$0xf]
        %v1134 = vld [vmem:[%s4 + $0xd8] sm:$0xf]
        %v1135 = vld [vmem:[%s4 + $0xdc] sm:$0xf]
        %v1136 = vld [vmem:[%s4 + $0xe0] sm:$0xf]
        %v1137 = vld [vmem:[%s4 + $0xe4] sm:$0xf]
        %v1138 = vld [vmem:[%s4 + $0xe8] sm:$0xf]
        %v1139 = vld [vmem:[%s4 + $0xec] sm:$0xf]
        %v1140 = vld [vmem:[%s4 + $0xf0] sm:$0xf]
        %v1141 = vld [vmem:[%s4 + $0xf4] sm:$0xf]
        %v1142 = vld [vmem:[%s4 + $0xf8] sm:$0xf]
        %v1143 = vld [vmem:[%s4 + $0xfc] sm:$0xf]
        %v1144 = vunpack.c.l.bf16 %v1128
        %v1145 = vunpack.c.l.bf16 %v1129
        %v1146 = vunpack.c.l.bf16 %v1130
        %v1147 = vunpack.c.l.bf16 %v1131
        %v1148 = vunpack.c.l.bf16 %v1132
        %v1149 = vunpack.c.l.bf16 %v1133
        %v1150 = vunpack.c.l.bf16 %v1134
        %v1151 = vunpack.c.l.bf16 %v1135
        %v1152 = vunpack.c.l.bf16 %v1136
        %v1153 = vunpack.c.l.bf16 %v1137
        %v1154 = vunpack.c.l.bf16 %v1138
        %v1155 = vunpack.c.l.bf16 %v1139
        %v1156 = vunpack.c.l.bf16 %v1140
        %v1157 = vunpack.c.l.bf16 %v1141
        %v1158 = vunpack.c.l.bf16 %v1142
        %v1159 = vunpack.c.l.bf16 %v1143
        %v1160 = vmul.f32 %v1144, %v672
        %v1161 = vmul.f32 %v1145, %v672
        %v1162 = vmul.f32 %v1146, %v672
        %v1163 = vmul.f32 %v1147, %v672
        %v1164 = vmul.f32 %v1148, %v672
        %v1165 = vmul.f32 %v1149, %v672
        %v1166 = vmul.f32 %v1150, %v672
        %v1167 = vmul.f32 %v1151, %v672
        %v1168 = vmul.f32 %v1152, %v672
        %v1169 = vmul.f32 %v1153, %v672
        %v1170 = vmul.f32 %v1154, %v672
        %v1171 = vmul.f32 %v1155, %v672
        %v1172 = vmul.f32 %v1156, %v672
        %v1173 = vmul.f32 %v1157, %v672
        %v1174 = vmul.f32 %v1158, %v672
        %v1175 = vmul.f32 %v1159, %v672
        %v1176 = vadd.f32 %v1160, %v694
        %v1177 = vadd.f32 %v1161, %v694
        %v1178 = vadd.f32 %v1162, %v694
        %v1179 = vadd.f32 %v1163, %v694
        %v1180 = vadd.f32 %v1164, %v694
        %v1181 = vadd.f32 %v1165, %v694
        %v1182 = vadd.f32 %v1166, %v694
        %v1183 = vadd.f32 %v1167, %v694
        %v1184 = vadd.f32 %v1168, %v694
        %v1185 = vadd.f32 %v1169, %v694
        %v1186 = vadd.f32 %v1170, %v694
        %v1187 = vadd.f32 %v1171, %v694
        %v1188 = vadd.f32 %v1172, %v694
        %v1189 = vadd.f32 %v1173, %v694
        %v1190 = vadd.f32 %v1174, %v694
        %v1191 = vadd.f32 %v1175, %v694
        %v1192 = vmax.f32 %v1176, 0.0
        %v1193 = vmax.f32 %v1177, 0.0
        %v1194 = vmax.f32 %v1178, 0.0
        %v1195 = vmax.f32 %v1179, 0.0
        %v1196 = vmax.f32 %v1180, 0.0
        %v1197 = vmax.f32 %v1181, 0.0
        %v1198 = vmax.f32 %v1182, 0.0
        %v1199 = vmax.f32 %v1183, 0.0
        %v1200 = vmax.f32 %v1184, 0.0
        %v1201 = vmax.f32 %v1185, 0.0
        %v1202 = vmax.f32 %v1186, 0.0
        %v1203 = vmax.f32 %v1187, 0.0
        %v1204 = vmax.f32 %v1188, 0.0
        %v1205 = vmax.f32 %v1189, 0.0
        %v1206 = vmax.f32 %v1190, 0.0
        %v1207 = vmax.f32 %v1191, 0.0
        %v1208 = vpack.c.bf16 %v1193, %v1192
        %v1209 = vpack.c.bf16 %v1195, %v1194
        %v1210 = vpack.c.bf16 %v1197, %v1196
        %v1211 = vpack.c.bf16 %v1199, %v1198
        %v1212 = vpack.c.bf16 %v1201, %v1200
        %v1213 = vpack.c.bf16 %v1203, %v1202
        %v1214 = vpack.c.bf16 %v1205, %v1204
        %v1215 = vpack.c.bf16 %v1207, %v1206
        %v1224 = vunpack.c.l.b16 %v1208
        %v1225 = vunpack.c.h.b16 %v1208
        %v1226 = vunpack.c.l.b16 %v1209
        %v1227 = vunpack.c.h.b16 %v1209
        %v1228 = vunpack.c.l.b16 %v1210
        %v1229 = vunpack.c.h.b16 %v1210
        %v1230 = vunpack.c.l.b16 %v1211
        %v1231 = vunpack.c.h.b16 %v1211
        %v1232 = vunpack.c.l.b16 %v1212
        %v1233 = vunpack.c.h.b16 %v1212
        %v1234 = vunpack.c.l.b16 %v1213
        %v1235 = vunpack.c.h.b16 %v1213
        %v1236 = vunpack.c.l.b16 %v1214
        %v1237 = vunpack.c.h.b16 %v1214
        %v1238 = vunpack.c.l.b16 %v1215
        %v1239 = vunpack.c.h.b16 %v1215
        %v1240 = vpack.c.b16 %v1224, %v1224
        %v1241 = vpack.c.b16 %v1225, %v1225
        %v1242 = vpack.c.b16 %v1226, %v1226
        %v1243 = vpack.c.b16 %v1227, %v1227
        %v1244 = vpack.c.b16 %v1228, %v1228
        %v1245 = vpack.c.b16 %v1229, %v1229
        %v1246 = vpack.c.b16 %v1230, %v1230
        %v1247 = vpack.c.b16 %v1231, %v1231
        %v1248 = vpack.c.b16 %v1232, %v1232
        %v1249 = vpack.c.b16 %v1233, %v1233
        %v1250 = vpack.c.b16 %v1234, %v1234
        %v1251 = vpack.c.b16 %v1235, %v1235
        %v1252 = vpack.c.b16 %v1236, %v1236
        %v1253 = vpack.c.b16 %v1237, %v1237
        %v1254 = vpack.c.b16 %v1238, %v1238
        %v1255 = vpack.c.b16 %v1239, %v1239
        %1272 = vst [vmem:[%s4 + $0xc0] sm:$0xf] %v1240
        %1273 = vst [vmem:[%s4 + $0xc4] sm:$0xf] %v1241
        %1274 = vst [vmem:[%s4 + $0xc8] sm:$0xf] %v1242
        %1275 = vst [vmem:[%s4 + $0xcc] sm:$0xf] %v1243
        %1276 = vst [vmem:[%s4 + $0xd0] sm:$0xf] %v1244
        %1277 = vst [vmem:[%s4 + $0xd4] sm:$0xf] %v1245
        %1278 = vst [vmem:[%s4 + $0xd8] sm:$0xf] %v1246
        %1279 = vst [vmem:[%s4 + $0xdc] sm:$0xf] %v1247
        %1280 = vst [vmem:[%s4 + $0xe0] sm:$0xf] %v1248
        %1281 = vst [vmem:[%s4 + $0xe4] sm:$0xf] %v1249
        %1282 = vst [vmem:[%s4 + $0xe8] sm:$0xf] %v1250
        %1283 = vst [vmem:[%s4 + $0xec] sm:$0xf] %v1251
        %1284 = vst [vmem:[%s4 + $0xf0] sm:$0xf] %v1252
        %1285 = vst [vmem:[%s4 + $0xf4] sm:$0xf] %v1253
        %1286 = vst [vmem:[%s4 + $0xf8] sm:$0xf] %v1254
        %1287 = vst [vmem:[%s4 + $0xfc] sm:$0xf] %v1255
      $region44: #{generator_forward.7} parent=35 // pred_fallthru
        _
      // Predicated region
      $region45: #{generator_forward.7} parent=35 // pred_check
        %p1288 = pneg %p136
      $region46: #{generator_forward.7} parent=35 // pred_check_branch
        %1290 = sbr.rel (%p1288) target = $region48
      $region47: #{generator_forward.7} parent=35 // pred_region
        _
      $region48: #{generator_forward.7} parent=35 // pred_fallthru
        _
      // Predicated region
      $region49: #{generator_forward.7} parent=35 // pred_check
        %p1291 = pneg %p136
      $region50: #{generator_forward.7} parent=35 // pred_check_branch
        %1293 = sbr.rel (%p1291) target = $region52
      $region51: #{generator_forward.7} parent=35 // pred_region
        _
      $region52: #{generator_forward.7} parent=35 // pred_fallthru
        _
    $region36: #{generator_forward.7} parent=5 // pred_fallthru
      _
    %p1294 = scmp.le.s32.totalorder 2, %s10
    // Predicated region
    $region53: #{generator_forward.7} parent=5 // pred_check
      %p1295 = pneg %p1294
    $region54: #{generator_forward.7} parent=5 // pred_check_branch
      %1297 = sbr.rel (%p1295) target = $region56
    $region55: #{generator_forward.7} parent=5 // pred_region
      %s1298 = ssub.s32 %s10, 2
    $region56: #{generator_forward.7} parent=5 // pred_fallthru
      _
  $region6: #{generator_forward.7} parent=0 // loop_footer
    %s14 = sadd.s32 1, %s10
  $region7: #{generator_forward.7} parent=0 // loop_footer_branch
    %9 = sbr.rel target = $region3
  $region8: #{generator_forward.7} parent=0 // loop_exit
    _

// kernel: generator_forward.8
$region0: #{generator_forward.8}
  #allocation0 [shape = 'u32[]', space=smem, size = 0x4, offset = 0x4, fixed_abs, tag = 'smem constant byte address 0x4 - core index']
  #allocation1 [shape = 'u32[144,128]{1,0:T(1,128)}', space=vmem, size = 0x12000, scoped, tag = 'internal scratch']
  #allocation2 [shape = 'f32[8,128]{1,0:T(8,128)}', space=vmem, size = 0x1000, scoped, tag = 'scratch operand']
  #allocation3 [shape = 'f32[8,128]{1,0:T(8,128)}', space=vmem, size = 0x1000, scoped, tag = 'scratch operand']
  %s0 = inlined_call_operand.vmem [shape: bf16[4,512,128], index: 0, kind: input, shape index: {}]
  %s1 = inlined_call_operand.vmem [shape: bf16[4,128,128], index: 1, kind: input, shape index: {}]
  %s2 = inlined_call_operand.vmem [shape: f32[1,128], index: 2, kind: input, shape index: {}]
  %s3 = inlined_call_operand.vmem [shape: f32[1,128], index: 3, kind: input, shape index: {}]
  %s4 = inlined_call_operand.vmem [shape: bf16[2048,128], index: 4, kind: output, shape index: {}]
  %s5 = sld [smem:[#allocation0]]
  $region57: #{generator_forward.8} parent=0
    _
  %s7 = ssub.s32 1, %s5
  %s8 = scalar_select 0, %s7, %s5
  loop: start=0, step=1, limit=6
  $region2: #{generator_forward.8} parent=0 // loop_pre_header
    _
  $region3: #{generator_forward.8} parent=0 // loop_header
    %s10 = sphi 0, %s14
    %p11 = scmp.ge.s32.totalorder %s10, 6
    %s17 = sphi 0, %s29
    %s18 = sphi 0, %s25
    %s19 = sphi 0, %s17
    %s20 = sphi 0, %s18
    %s21 = sphi 0, %s19
    %s22 = sphi 0, %s20
    %s34 = sphi 0, %s36
    %s37 = sphi 0, %s34
    %s38 = sphi 0, %s37
    %s54 = sphi 0, %s38
    %s60 = sphi 0, %s62
    %s63 = sphi 0, %s60
    %s64 = sphi 0, %s63
    %s80 = sphi 0, %s64
    %s84 = sphi 0, %s84
    %s86 = sphi 0, %s84
    %s87 = sphi 0, %s86
    %s101 = sphi 0, %s87
    %s105 = sphi 0, %s105
    %s107 = sphi 0, %s105
    %s108 = sphi 0, %s107
    %s122 = sphi 0, %s108
    %s126 = sphi 0, %s126
    %s128 = sphi 0, %s126
    %s129 = sphi 0, %s128
    %s143 = sphi 0, %s129
  $region4: #{generator_forward.8} parent=0 // loop_header_branch
    %13 = sbr.rel (%p11) target = $region8
  $region5: #{generator_forward.8} parent=0 // loop_body
    %s15 = ssub.s32 %s10, 1
    %s16 = ssub.s32 %s10, 2
    %s23 = sadd.s32 1, %s18
    %p24 = scmp.ge.s32.totalorder %s23, 1
    %s25 = scalar_select %p24, 0, %s23
    %s26 = sadd.s32 1, %s17
    %s27 = scalar_select %p24, %s26, %s17
    %p28 = scmp.ge.s32.totalorder %s27, 4
    %s29 = scalar_select %p28, 0, %s27
    %s30 = ssub.s32 %s17, %s29
    %s31 = ssub.s32 %s18, %s25
    %s32 = sor.u32 %s30, %s31
    %p33 = scmp.eq.s32.totalorder %s32, 0
    %s35 = sadd.s32 %s34, 1
    %s36 = scalar_select %p33, %s34, %s35
    %p39 = pneg %p33
    %p40 = scmp.eq.s32.totalorder %s10, 3
    %p41 = por %p39, %p40
    %p42 = scmp.ne.s32.totalorder %s34, %s37
    %p43 = scmp.eq.s32.totalorder %s10, 0
    %p44 = por %p42, %p43
    %p45 = scmp.ne.s32.totalorder %s34, %s37
    %p46 = scmp.eq.s32.totalorder %s15, 3
    %p47 = por %p45, %p46
    %p48 = scmp.ne.s32.totalorder %s37, %s38
    %p49 = scmp.eq.s32.totalorder %s15, 0
    %p50 = por %p48, %p49
    %p51 = scmp.ne.s32.totalorder %s37, %s38
    %p52 = scmp.eq.s32.totalorder %s16, 3
    %p53 = por %p51, %p52
    %p55 = scmp.ne.s32.totalorder %s38, %s54
    %p56 = scmp.eq.s32.totalorder %s16, 0
    %p57 = por %p55, %p56
    %s58 = ssub.s32 %s17, %s29
    %p59 = scmp.eq.s32.totalorder %s58, 0
    %s61 = sadd.s32 %s60, 1
    %s62 = scalar_select %p59, %s60, %s61
    %p65 = pneg %p59
    %p66 = scmp.eq.s32.totalorder %s10, 3
    %p67 = por %p65, %p66
    %p68 = scmp.ne.s32.totalorder %s60, %s63
    %p69 = scmp.eq.s32.totalorder %s10, 0
    %p70 = por %p68, %p69
    %p71 = scmp.ne.s32.totalorder %s60, %s63
    %p72 = scmp.eq.s32.totalorder %s15, 3
    %p73 = por %p71, %p72
    %p74 = scmp.ne.s32.totalorder %s63, %s64
    %p75 = scmp.eq.s32.totalorder %s15, 0
    %p76 = por %p74, %p75
    %p77 = scmp.ne.s32.totalorder %s63, %s64
    %p78 = scmp.eq.s32.totalorder %s16, 3
    %p79 = por %p77, %p78
    %p81 = scmp.ne.s32.totalorder %s64, %s80
    %p82 = scmp.eq.s32.totalorder %s16, 0
    %p83 = por %p81, %p82
    %s85 = sadd.s32 %s84, 1
    %p88 = scmp.eq.s32.totalorder %s10, 3
    %p89 = scmp.ne.s32.totalorder %s84, %s86
    %p90 = scmp.eq.s32.totalorder %s10, 0
    %p91 = por %p89, %p90
    %p92 = scmp.ne.s32.totalorder %s84, %s86
    %p93 = scmp.eq.s32.totalorder %s15, 3
    %p94 = por %p92, %p93
    %p95 = scmp.ne.s32.totalorder %s86, %s87
    %p96 = scmp.eq.s32.totalorder %s15, 0
    %p97 = por %p95, %p96
    %p98 = scmp.ne.s32.totalorder %s86, %s87
    %p99 = scmp.eq.s32.totalorder %s16, 3
    %p100 = por %p98, %p99
    %p102 = scmp.ne.s32.totalorder %s87, %s101
    %p103 = scmp.eq.s32.totalorder %s16, 0
    %p104 = por %p102, %p103
    %s106 = sadd.s32 %s105, 1
    %p109 = scmp.eq.s32.totalorder %s10, 3
    %p110 = scmp.ne.s32.totalorder %s105, %s107
    %p111 = scmp.eq.s32.totalorder %s10, 0
    %p112 = por %p110, %p111
    %p113 = scmp.ne.s32.totalorder %s105, %s107
    %p114 = scmp.eq.s32.totalorder %s15, 3
    %p115 = por %p113, %p114
    %p116 = scmp.ne.s32.totalorder %s107, %s108
    %p117 = scmp.eq.s32.totalorder %s15, 0
    %p118 = por %p116, %p117
    %p119 = scmp.ne.s32.totalorder %s107, %s108
    %p120 = scmp.eq.s32.totalorder %s16, 3
    %p121 = por %p119, %p120
    %p123 = scmp.ne.s32.totalorder %s108, %s122
    %p124 = scmp.eq.s32.totalorder %s16, 0
    %p125 = por %p123, %p124
    %s127 = sadd.s32 %s126, 1
    %p130 = scmp.eq.s32.totalorder %s10, 3
    %p131 = scmp.ne.s32.totalorder %s126, %s128
    %p132 = scmp.eq.s32.totalorder %s10, 0
    %p133 = por %p131, %p132
    %p134 = scmp.ne.s32.totalorder %s126, %s128
    %p135 = scmp.eq.s32.totalorder %s15, 3
    %p136 = por %p134, %p135
    %p137 = scmp.ne.s32.totalorder %s128, %s129
    %p138 = scmp.eq.s32.totalorder %s15, 0
    %p139 = por %p137, %p138
    %p140 = scmp.ne.s32.totalorder %s128, %s129
    %p141 = scmp.eq.s32.totalorder %s16, 3
    %p142 = por %p140, %p141
    %p144 = scmp.ne.s32.totalorder %s129, %s143
    %p145 = scmp.eq.s32.totalorder %s16, 0
    %p146 = por %p144, %p145
    %p147 = scmp.le.s32.totalorder 1, %s10
    %p148 = scmp.lt.s32.totalorder %s10, 5
    %p149 = pnand %p147, %p148
    %p150 = pneg %p149
    // Predicated region
    $region9: #{generator_forward.8} parent=5 // pred_check
      _
    $region10: #{generator_forward.8} parent=5 // pred_check_branch
      %152 = sbr.rel (%p149) target = $region12
    $region11: #{generator_forward.8} parent=5 // pred_region
      %s153 = ssub.s32 %s10, 1
      // Predicated region
      $region13: #{generator_forward.8} parent=11 // pred_check
        %p154 = pneg %p97
      $region14: #{generator_forward.8} parent=11 // pred_check_branch
        %156 = sbr.rel (%p154) target = $region16
      $region15: #{generator_forward.8} parent=11 // pred_region
        _
      $region16: #{generator_forward.8} parent=11 // pred_fallthru
        _
      // Predicated region
      $region17: #{generator_forward.8} parent=11 // pred_check
        %p157 = pneg %p118
      $region18: #{generator_forward.8} parent=11 // pred_check_branch
        %159 = sbr.rel (%p157) target = $region20
      $region19: #{generator_forward.8} parent=11 // pred_region
        _
      $region20: #{generator_forward.8} parent=11 // pred_fallthru
        _
    $region12: #{generator_forward.8} parent=5 // pred_fallthru
      _
    %p160 = scmp.lt.s32.totalorder %s10, 4
    // Predicated region
    $region21: #{generator_forward.8} parent=5 // pred_check
      %p161 = pneg %p160
    $region22: #{generator_forward.8} parent=5 // pred_check_branch
      %163 = sbr.rel (%p161) target = $region24
    $region23: #{generator_forward.8} parent=5 // pred_region
      // Predicated region
      $region25: #{generator_forward.8} parent=23 // pred_check
        %p164 = pneg %p44
      $region26: #{generator_forward.8} parent=23 // pred_check_branch
        %166 = sbr.rel (%p164) target = $region28
      $region27: #{generator_forward.8} parent=23 // pred_region
        %s167 = smul.u32 64, %s18
        %p168 = scmp.lt.s32.totalorder %s17, 3
        %s169 = scalar_select %p168, %s17, 3
        %p170 = scmp.lt.s32.totalorder %s167, 63
        %s171 = scalar_select %p170, %s167, 63
        %s172 = smul.addr %s169, 64
        %s173 = sadd.s32 %s171, %s172
        %s174 = smul.addr %s173, 4
        %s175 = scalar_lea.vmem %s0, %s174
        %s176 = smul.u32 64, %s18
      $region28: #{generator_forward.8} parent=23 // pred_fallthru
        _
      // Predicated region
      $region29: #{generator_forward.8} parent=23 // pred_check
        %p177 = pneg %p70
      $region30: #{generator_forward.8} parent=23 // pred_check_branch
        %179 = sbr.rel (%p177) target = $region32
      $region31: #{generator_forward.8} parent=23 // pred_region
        %p180 = scmp.lt.s32.totalorder %s17, 3
        %s181 = scalar_select %p180, %s17, 3
        %s182 = smul.addr %s181, 16
        %s183 = smul.addr %s182, 4
        %s184 = scalar_lea.vmem %s1, %s183
      $region32: #{generator_forward.8} parent=23 // pred_fallthru
        _
    $region24: #{generator_forward.8} parent=5 // pred_fallthru
      _
    %p185 = scmp.le.s32.totalorder 1, %s10
    %p186 = scmp.lt.s32.totalorder %s10, 5
    %p187 = pnand %p185, %p186
    %p188 = pneg %p187
    // Predicated region
    $region33: #{generator_forward.8} parent=5 // pred_check
      _
    $region34: #{generator_forward.8} parent=5 // pred_check_branch
      %190 = sbr.rel (%p187) target = $region36
    $region35: #{generator_forward.8} parent=5 // pred_region
      %s191 = ssub.s32 %s10, 1
      %s192 = smul.u32 64, %s20
      %p193 = scmp.lt.s32.totalorder %s19, 3
      %s194 = scalar_select %p193, %s19, 3
      %p195 = scmp.lt.s32.totalorder %s192, 63
      %s196 = scalar_select %p195, %s192, 63
      %s197 = smul.addr %s194, 64
      %s198 = sadd.s32 %s196, %s197
      %s199 = smul.addr %s198, 4
      %s200 = scalar_lea.vmem %s0, %s199
      %p201 = pneg %p50
      %p202 = pneg %p47
      %p203 = scmp.lt.s32.totalorder %s19, 3
      %s204 = scalar_select %p203, %s19, 3
      %s205 = smul.addr %s204, 16
      %s206 = smul.addr %s205, 4
      %s207 = scalar_lea.vmem %s1, %s206
      %p208 = pneg %p76
      %p209 = pneg %p73
      %p210 = pneg %p97
      %p211 = pneg %p94
      %p212 = pneg %p118
      %p213 = pneg %p115
      %p214 = pneg %p139
      %p215 = pneg %p136
      %s216 = smul.u32 64, %s20
      %p217 = scmp.lt.s32.totalorder %s19, 3
      %s218 = scalar_select %p217, %s19, 3
      %p219 = scmp.lt.s32.totalorder %s216, 63
      %s220 = scalar_select %p219, %s216, 63
      %s221 = smul.addr %s218, 64
      %s222 = sadd.s32 %s220, %s221
      %s223 = smul.addr %s222, 4
      %s224 = scalar_lea.vmem %s0, %s223
      %s225 = smul.u32 64, %s20
      %p226 = scmp.lt.s32.totalorder %s19, 3
      %s227 = scalar_select %p226, %s19, 3
      %s228 = smul.addr %s227, 16
      %s229 = smul.addr %s228, 4
      %s230 = scalar_lea.vmem %s1, %s229
      %p232 = scmp.eq.s32.totalorder %s19, 0
      %p233 = scmp.eq.s32.totalorder %s20, 0
      %p234 = pnand %p232, %p233
      %p235 = pneg %p234
      // Predicated region
      $region37: #{generator_forward.8} parent=35 // pred_check
        _
      $region38: #{generator_forward.8} parent=35 // pred_check_branch
        %237 = sbr.rel (%p234) target = $region40
      $region39: #{generator_forward.8} parent=35 // pred_region
        %238 = vst [vmem:[#allocation2] sm:$0xff] 0.0
        %239 = vst [vmem:[#allocation3] sm:$0xff] 0.0
      $region40: #{generator_forward.8} parent=35 // pred_fallthru
        _
      %s240 = smul.u32 %s19, 512
      %s241 = smul.u32 %s20, 512
      %s242 = sadd.s32 %s240, %s241
      %v243 = vld [vmem:[%s224] sm:$0xf]
      %v244 = vld [vmem:[%s224 + $0x4] sm:$0xf]
      %v245 = vld [vmem:[%s224 + $0x8] sm:$0xf]
      %v246 = vld [vmem:[%s224 + $0xc] sm:$0xf]
      %v247 = vld [vmem:[%s224 + $0x10] sm:$0xf]
      %v248 = vld [vmem:[%s224 + $0x14] sm:$0xf]
      %v249 = vld [vmem:[%s224 + $0x18] sm:$0xf]
      %v250 = vld [vmem:[%s224 + $0x1c] sm:$0xf]
      %v251 = vld [vmem:[%s224 + $0x20] sm:$0xf]
      %v252 = vld [vmem:[%s224 + $0x24] sm:$0xf]
      %v253 = vld [vmem:[%s224 + $0x28] sm:$0xf]
      %v254 = vld [vmem:[%s224 + $0x2c] sm:$0xf]
      %v255 = vld [vmem:[%s224 + $0x30] sm:$0xf]
      %v256 = vld [vmem:[%s224 + $0x34] sm:$0xf]
      %v257 = vld [vmem:[%s224 + $0x38] sm:$0xf]
      %v258 = vld [vmem:[%s224 + $0x3c] sm:$0xf]
      %v259 = vld [vmem:[%s224 + $0x40] sm:$0xf]
      %v260 = vld [vmem:[%s224 + $0x44] sm:$0xf]
      %v261 = vld [vmem:[%s224 + $0x48] sm:$0xf]
      %v262 = vld [vmem:[%s224 + $0x4c] sm:$0xf]
      %v263 = vld [vmem:[%s224 + $0x50] sm:$0xf]
      %v264 = vld [vmem:[%s224 + $0x54] sm:$0xf]
      %v265 = vld [vmem:[%s224 + $0x58] sm:$0xf]
      %v266 = vld [vmem:[%s224 + $0x5c] sm:$0xf]
      %v267 = vld [vmem:[%s224 + $0x60] sm:$0xf]
      %v268 = vld [vmem:[%s224 + $0x64] sm:$0xf]
      %v269 = vld [vmem:[%s224 + $0x68] sm:$0xf]
      %v270 = vld [vmem:[%s224 + $0x6c] sm:$0xf]
      %v271 = vld [vmem:[%s224 + $0x70] sm:$0xf]
      %v272 = vld [vmem:[%s224 + $0x74] sm:$0xf]
      %v273 = vld [vmem:[%s224 + $0x78] sm:$0xf]
      %v274 = vld [vmem:[%s224 + $0x7c] sm:$0xf]
      %v275 = vld [vmem:[%s230] sm:$0xf]
      %v276 = vld [vmem:[%s230 + $0x4] sm:$0xf]
      %v277 = vld [vmem:[%s230 + $0x8] sm:$0xf]
      %v278 = vld [vmem:[%s230 + $0xc] sm:$0xf]
      %v279 = vld [vmem:[%s230 + $0x10] sm:$0xf]
      %v280 = vld [vmem:[%s230 + $0x14] sm:$0xf]
      %v281 = vld [vmem:[%s230 + $0x18] sm:$0xf]
      %v282 = vld [vmem:[%s230 + $0x1c] sm:$0xf]
      %v283 = vld [vmem:[%s230 + $0x20] sm:$0xf]
      %v284 = vld [vmem:[%s230 + $0x24] sm:$0xf]
      %v285 = vld [vmem:[%s230 + $0x28] sm:$0xf]
      %v286 = vld [vmem:[%s230 + $0x2c] sm:$0xf]
      %v287 = vld [vmem:[%s230 + $0x30] sm:$0xf]
      %v288 = vld [vmem:[%s230 + $0x34] sm:$0xf]
      %v289 = vld [vmem:[%s230 + $0x38] sm:$0xf]
      %v290 = vld [vmem:[%s230 + $0x3c] sm:$0xf]
      %v323 = vunpack.c.l.b16 %v243
      %v324 = vunpack.c.l.b16 %v244
      %v325 = vunpack.c.l.b16 %v245
      %v326 = vunpack.c.l.b16 %v246
      %v327 = vunpack.c.l.b16 %v247
      %v328 = vunpack.c.l.b16 %v248
      %v329 = vunpack.c.l.b16 %v249
      %v330 = vunpack.c.l.b16 %v250
      %v331 = vunpack.c.l.b16 %v251
      %v332 = vunpack.c.l.b16 %v252
      %v333 = vunpack.c.l.b16 %v253
      %v334 = vunpack.c.l.b16 %v254
      %v335 = vunpack.c.l.b16 %v255
      %v336 = vunpack.c.l.b16 %v256
      %v337 = vunpack.c.l.b16 %v257
      %v338 = vunpack.c.l.b16 %v258
      %v339 = vunpack.c.l.b16 %v259
      %v340 = vunpack.c.l.b16 %v260
      %v341 = vunpack.c.l.b16 %v261
      %v342 = vunpack.c.l.b16 %v262
      %v343 = vunpack.c.l.b16 %v263
      %v344 = vunpack.c.l.b16 %v264
      %v345 = vunpack.c.l.b16 %v265
      %v346 = vunpack.c.l.b16 %v266
      %v347 = vunpack.c.l.b16 %v267
      %v348 = vunpack.c.l.b16 %v268
      %v349 = vunpack.c.l.b16 %v269
      %v350 = vunpack.c.l.b16 %v270
      %v351 = vunpack.c.l.b16 %v271
      %v352 = vunpack.c.l.b16 %v272
      %v353 = vunpack.c.l.b16 %v273
      %v354 = vunpack.c.l.b16 %v274
      %v355 = vpack.c.b16 %v324, %v323
      %v356 = vpack.c.b16 %v326, %v325
      %v357 = vpack.c.b16 %v328, %v327
      %v358 = vpack.c.b16 %v330, %v329
      %v359 = vpack.c.b16 %v332, %v331
      %v360 = vpack.c.b16 %v334, %v333
      %v361 = vpack.c.b16 %v336, %v335
      %v362 = vpack.c.b16 %v338, %v337
      %v363 = vpack.c.b16 %v340, %v339
      %v364 = vpack.c.b16 %v342, %v341
      %v365 = vpack.c.b16 %v344, %v343
      %v366 = vpack.c.b16 %v346, %v345
      %v367 = vpack.c.b16 %v348, %v347
      %v368 = vpack.c.b16 %v350, %v349
      %v369 = vpack.c.b16 %v352, %v351
      %v370 = vpack.c.b16 %v354, %v353
      %v403 = vunpack.c.l.b16 %v275
      %v404 = vunpack.c.l.b16 %v276
      %v405 = vunpack.c.l.b16 %v277
      %v406 = vunpack.c.l.b16 %v278
      %v407 = vunpack.c.l.b16 %v279
      %v408 = vunpack.c.l.b16 %v280
      %v409 = vunpack.c.l.b16 %v281
      %v410 = vunpack.c.l.b16 %v282
      %v411 = vunpack.c.l.b16 %v283
      %v412 = vunpack.c.l.b16 %v284
      %v413 = vunpack.c.l.b16 %v285
      %v414 = vunpack.c.l.b16 %v286
      %v415 = vunpack.c.l.b16 %v287
      %v416 = vunpack.c.l.b16 %v288
      %v417 = vunpack.c.l.b16 %v289
      %v418 = vunpack.c.l.b16 %v290
      %v419 = vpack.c.b16 %v404, %v403
      %v420 = vpack.c.b16 %v406, %v405
      %v421 = vpack.c.b16 %v408, %v407
      %v422 = vpack.c.b16 %v410, %v409
      %v423 = vpack.c.b16 %v412, %v411
      %v424 = vpack.c.b16 %v414, %v413
      %v425 = vpack.c.b16 %v416, %v415
      %v426 = vpack.c.b16 %v418, %v417
      %435 = vmatprep.subr.bf16.mxu0 0
      %436 = vmatpush1.bf16.msra.mxu0 %v419
      %437 = vmatprep.subr.bf16.mxu0 0
      %438 = vmatpush1.bf16.msra.mxu0 %v420
      %439 = vmatprep.subr.bf16.mxu0 0
      %440 = vmatpush1.bf16.msra.mxu0 %v421
      %441 = vmatprep.subr.bf16.mxu0 0
      %442 = vmatpush1.bf16.msra.mxu0 %v422
      %443 = vmatprep.subr.bf16.mxu0 0
      %444 = vmatpush1.bf16.msra.mxu0 %v423
      %445 = vmatprep.subr.bf16.mxu0 0
      %446 = vmatpush1.bf16.msra.mxu0 %v424
      %447 = vmatprep.subr.bf16.mxu0 0
      %448 = vmatpush1.bf16.msra.mxu0 %v425
      %449 = vmatprep.subr.bf16.mxu0 0
      %450 = vmatpush1.bf16.msra.mxu0 %v426
      %451 = vmatprep.subr.bf16.mxu0 0
      %452 = vmatpush1.bf16.msra.mxu0 0
      %453 = vmatprep.subr.bf16.mxu0 0
      %454 = vmatpush1.bf16.msra.mxu0 0
      %455 = vmatprep.subr.bf16.mxu0 0
      %456 = vmatpush1.bf16.msra.mxu0 0
      %457 = vmatprep.subr.bf16.mxu0 0
      %458 = vmatpush1.bf16.msra.mxu0 0
      %459 = vmatprep.subr.bf16.mxu0 0
      %460 = vmatpush1.bf16.msra.mxu0 0
      %461 = vmatprep.subr.bf16.mxu0 0
      %462 = vmatpush1.bf16.msra.mxu0 0
      %463 = vmatprep.subr.bf16.mxu0 0
      %464 = vmatpush1.bf16.msra.mxu0 0
      %465 = vmatprep.subr.bf16.mxu0 0
      %466 = vmatpush1.bf16.msra.mxu0 0
      %467 = vmatprep.mubr.bf16.mxu0 0
      %468 = vmatmul.mubr.bf16.gmra.mrb[0].mxu0 %v355
      %v469 = vpop.f32.mrb[0].mxu0
      %v470 = vadd.f32 0.0, %v469
      %v471 = vpop.f32.mrb[0].mxu0
      %v472 = vpop.f32.mrb[0].mxu0
      %v473 = vadd.f32 0.0, %v472
      %v474 = vpop.f32.mrb[0].mxu0
      %475 = vmatprep.mubr.bf16.mxu0 0
      %476 = vmatmul.mubr.bf16.gmra.mrb[0].mxu0 %v356
      %v477 = vpop.f32.mrb[0].mxu0
      %v478 = vadd.f32 0.0, %v477
      %v479 = vpop.f32.mrb[0].mxu0
      %v480 = vpop.f32.mrb[0].mxu0
      %v481 = vadd.f32 0.0, %v480
      %v482 = vpop.f32.mrb[0].mxu0
      %483 = vmatprep.mubr.bf16.mxu0 0
      %484 = vmatmul.mubr.bf16.gmra.mrb[0].mxu0 %v357
      %v485 = vpop.f32.mrb[0].mxu0
      %v486 = vadd.f32 0.0, %v485
      %v487 = vpop.f32.mrb[0].mxu0
      %v488 = vpop.f32.mrb[0].mxu0
      %v489 = vadd.f32 0.0, %v488
      %v490 = vpop.f32.mrb[0].mxu0
      %491 = vmatprep.mubr.bf16.mxu0 0
      %492 = vmatmul.mubr.bf16.gmra.mrb[0].mxu0 %v358
      %v493 = vpop.f32.mrb[0].mxu0
      %v494 = vadd.f32 0.0, %v493
      %v495 = vpop.f32.mrb[0].mxu0
      %v496 = vpop.f32.mrb[0].mxu0
      %v497 = vadd.f32 0.0, %v496
      %v498 = vpop.f32.mrb[0].mxu0
      %499 = vmatprep.mubr.bf16.mxu0 0
      %500 = vmatmul.mubr.bf16.gmra.mrb[0].mxu0 %v359
      %v501 = vpop.f32.mrb[0].mxu0
      %v502 = vadd.f32 0.0, %v501
      %v503 = vpop.f32.mrb[0].mxu0
      %v504 = vpop.f32.mrb[0].mxu0
      %v505 = vadd.f32 0.0, %v504
      %v506 = vpop.f32.mrb[0].mxu0
      %507 = vmatprep.mubr.bf16.mxu0 0
      %508 = vmatmul.mubr.bf16.gmra.mrb[0].mxu0 %v360
      %v509 = vpop.f32.mrb[0].mxu0
      %v510 = vadd.f32 0.0, %v509
      %v511 = vpop.f32.mrb[0].mxu0
      %v512 = vpop.f32.mrb[0].mxu0
      %v513 = vadd.f32 0.0, %v512
      %v514 = vpop.f32.mrb[0].mxu0
      %515 = vmatprep.mubr.bf16.mxu0 0
      %516 = vmatmul.mubr.bf16.gmra.mrb[0].mxu0 %v361
      %v517 = vpop.f32.mrb[0].mxu0
      %v518 = vadd.f32 0.0, %v517
      %v519 = vpop.f32.mrb[0].mxu0
      %v520 = vpop.f32.mrb[0].mxu0
      %v521 = vadd.f32 0.0, %v520
      %v522 = vpop.f32.mrb[0].mxu0
      %523 = vmatprep.mubr.bf16.mxu0 0
      %524 = vmatmul.mubr.bf16.gmra.mrb[0].mxu0 %v362
      %v525 = vpop.f32.mrb[0].mxu0
      %v526 = vadd.f32 0.0, %v525
      %v527 = vpop.f32.mrb[0].mxu0
      %v528 = vpop.f32.mrb[0].mxu0
      %v529 = vadd.f32 0.0, %v528
      %v530 = vpop.f32.mrb[0].mxu0
      %531 = vmatprep.mubr.bf16.mxu0 0
      %532 = vmatmul.mubr.bf16.gmra.mrb[0].mxu0 %v363
      %v533 = vpop.f32.mrb[0].mxu0
      %v534 = vadd.f32 0.0, %v533
      %v535 = vpop.f32.mrb[0].mxu0
      %v536 = vpop.f32.mrb[0].mxu0
      %v537 = vadd.f32 0.0, %v536
      %v538 = vpop.f32.mrb[0].mxu0
      %539 = vmatprep.mubr.bf16.mxu0 0
      %540 = vmatmul.mubr.bf16.gmra.mrb[0].mxu0 %v364
      %v541 = vpop.f32.mrb[0].mxu0
      %v542 = vadd.f32 0.0, %v541
      %v543 = vpop.f32.mrb[0].mxu0
      %v544 = vpop.f32.mrb[0].mxu0
      %v545 = vadd.f32 0.0, %v544
      %v546 = vpop.f32.mrb[0].mxu0
      %547 = vmatprep.mubr.bf16.mxu0 0
      %548 = vmatmul.mubr.bf16.gmra.mrb[0].mxu0 %v365
      %v549 = vpop.f32.mrb[0].mxu0
      %v550 = vadd.f32 0.0, %v549
      %v551 = vpop.f32.mrb[0].mxu0
      %v552 = vpop.f32.mrb[0].mxu0
      %v553 = vadd.f32 0.0, %v552
      %v554 = vpop.f32.mrb[0].mxu0
      %555 = vmatprep.mubr.bf16.mxu0 0
      %556 = vmatmul.mubr.bf16.gmra.mrb[0].mxu0 %v366
      %v557 = vpop.f32.mrb[0].mxu0
      %v558 = vadd.f32 0.0, %v557
      %v559 = vpop.f32.mrb[0].mxu0
      %v560 = vpop.f32.mrb[0].mxu0
      %v561 = vadd.f32 0.0, %v560
      %v562 = vpop.f32.mrb[0].mxu0
      %563 = vmatprep.mubr.bf16.mxu0 0
      %564 = vmatmul.mubr.bf16.gmra.mrb[0].mxu0 %v367
      %v565 = vpop.f32.mrb[0].mxu0
      %v566 = vadd.f32 0.0, %v565
      %v567 = vpop.f32.mrb[0].mxu0
      %v568 = vpop.f32.mrb[0].mxu0
      %v569 = vadd.f32 0.0, %v568
      %v570 = vpop.f32.mrb[0].mxu0
      %571 = vmatprep.mubr.bf16.mxu0 0
      %572 = vmatmul.mubr.bf16.gmra.mrb[0].mxu0 %v368
      %v573 = vpop.f32.mrb[0].mxu0
      %v574 = vadd.f32 0.0, %v573
      %v575 = vpop.f32.mrb[0].mxu0
      %v576 = vpop.f32.mrb[0].mxu0
      %v577 = vadd.f32 0.0, %v576
      %v578 = vpop.f32.mrb[0].mxu0
      %579 = vmatprep.mubr.bf16.mxu0 0
      %580 = vmatmul.mubr.bf16.gmra.mrb[0].mxu0 %v369
      %v581 = vpop.f32.mrb[0].mxu0
      %v582 = vadd.f32 0.0, %v581
      %v583 = vpop.f32.mrb[0].mxu0
      %v584 = vpop.f32.mrb[0].mxu0
      %v585 = vadd.f32 0.0, %v584
      %v586 = vpop.f32.mrb[0].mxu0
      %587 = vmatprep.mubr.bf16.mxu0 0
      %588 = vmatmul.mubr.bf16.gmra.mrb[0].mxu0 %v370
      %v589 = vpop.f32.mrb[0].mxu0
      %v590 = vadd.f32 0.0, %v589
      %v591 = vpop.f32.mrb[0].mxu0
      %v592 = vpop.f32.mrb[0].mxu0
      %v593 = vadd.f32 0.0, %v592
      %v594 = vpop.f32.mrb[0].mxu0
      %595 = vdwg.mxu0
      %v596 = vpack.c.bf16 %v473, %v470
      %v597 = vpack.c.bf16 %v481, %v478
      %v598 = vpack.c.bf16 %v489, %v486
      %v599 = vpack.c.bf16 %v497, %v494
      %v600 = vpack.c.bf16 %v505, %v502
      %v601 = vpack.c.bf16 %v513, %v510
      %v602 = vpack.c.bf16 %v521, %v518
      %v603 = vpack.c.bf16 %v529, %v526
      %v604 = vpack.c.bf16 %v537, %v534
      %v605 = vpack.c.bf16 %v545, %v542
      %v606 = vpack.c.bf16 %v553, %v550
      %v607 = vpack.c.bf16 %v561, %v558
      %v608 = vpack.c.bf16 %v569, %v566
      %v609 = vpack.c.bf16 %v577, %v574
      %v610 = vpack.c.bf16 %v585, %v582
      %v611 = vpack.c.bf16 %v593, %v590
      %v628 = vunpack.c.l.b16 %v596
      %v629 = vunpack.c.h.b16 %v596
      %v630 = vunpack.c.l.b16 %v597
      %v631 = vunpack.c.h.b16 %v597
      %v632 = vunpack.c.l.b16 %v598
      %v633 = vunpack.c.h.b16 %v598
      %v634 = vunpack.c.l.b16 %v599
      %v635 = vunpack.c.h.b16 %v599
      %v636 = vunpack.c.l.b16 %v600
      %v637 = vunpack.c.h.b16 %v600
      %v638 = vunpack.c.l.b16 %v601
      %v639 = vunpack.c.h.b16 %v601
      %v640 = vunpack.c.l.b16 %v602
      %v641 = vunpack.c.h.b16 %v602
      %v642 = vunpack.c.l.b16 %v603
      %v643 = vunpack.c.h.b16 %v603
      %v644 = vunpack.c.l.b16 %v604
      %v645 = vunpack.c.h.b16 %v604
      %v646 = vunpack.c.l.b16 %v605
      %v647 = vunpack.c.h.b16 %v605
      %v648 = vunpack.c.l.b16 %v606
      %v649 = vunpack.c.h.b16 %v606
      %v650 = vunpack.c.l.b16 %v607
      %v651 = vunpack.c.h.b16 %v607
      %v652 = vunpack.c.l.b16 %v608
      %v653 = vunpack.c.h.b16 %v608
      %v654 = vunpack.c.l.b16 %v609
      %v655 = vunpack.c.h.b16 %v609
      %v656 = vunpack.c.l.b16 %v610
      %v657 = vunpack.c.h.b16 %v610
      %v658 = vunpack.c.l.b16 %v611
      %v659 = vunpack.c.h.b16 %v611
      %v660 = vpack.c.b16 %v628, %v628
      %v661 = vpack.c.b16 %v629, %v629
      %v662 = vpack.c.b16 %v630, %v630
      %v663 = vpack.c.b16 %v631, %v631
      %v664 = vpack.c.b16 %v632, %v632
      %v665 = vpack.c.b16 %v633, %v633
      %v666 = vpack.c.b16 %v634, %v634
      %v667 = vpack.c.b16 %v635, %v635
      %v668 = vpack.c.b16 %v636, %v636
      %v669 = vpack.c.b16 %v637, %v637
      %v670 = vpack.c.b16 %v638, %v638
      %v671 = vpack.c.b16 %v639, %v639
      %v672 = vpack.c.b16 %v640, %v640
      %v673 = vpack.c.b16 %v641, %v641
      %v674 = vpack.c.b16 %v642, %v642
      %v675 = vpack.c.b16 %v643, %v643
      %v676 = vpack.c.b16 %v644, %v644
      %v677 = vpack.c.b16 %v645, %v645
      %v678 = vpack.c.b16 %v646, %v646
      %v679 = vpack.c.b16 %v647, %v647
      %v680 = vpack.c.b16 %v648, %v648
      %v681 = vpack.c.b16 %v649, %v649
      %v682 = vpack.c.b16 %v650, %v650
      %v683 = vpack.c.b16 %v651, %v651
      %v684 = vpack.c.b16 %v652, %v652
      %v685 = vpack.c.b16 %v653, %v653
      %v686 = vpack.c.b16 %v654, %v654
      %v687 = vpack.c.b16 %v655, %v655
      %v688 = vpack.c.b16 %v656, %v656
      %v689 = vpack.c.b16 %v657, %v657
      %v690 = vpack.c.b16 %v658, %v658
      %v691 = vpack.c.b16 %v659, %v659
      %s724 = sshra.s32 %s242, 3
      %s725 = sand.u32 %s242, 7
      %s726 = smul.addr %s724, 4
      %s727 = scalar_lea.vmem %s4, %s726
      %728 = vst [vmem:[%s727] sm:$0xf] %v660
      %729 = vst [vmem:[%s727 + $0x4] sm:$0xf] %v661
      %730 = vst [vmem:[%s727 + $0x8] sm:$0xf] %v662
      %731 = vst [vmem:[%s727 + $0xc] sm:$0xf] %v663
      %732 = vst [vmem:[%s727 + $0x10] sm:$0xf] %v664
      %733 = vst [vmem:[%s727 + $0x14] sm:$0xf] %v665
      %734 = vst [vmem:[%s727 + $0x18] sm:$0xf] %v666
      %735 = vst [vmem:[%s727 + $0x1c] sm:$0xf] %v667
      %736 = vst [vmem:[%s727 + $0x20] sm:$0xf] %v668
      %737 = vst [vmem:[%s727 + $0x24] sm:$0xf] %v669
      %738 = vst [vmem:[%s727 + $0x28] sm:$0xf] %v670
      %739 = vst [vmem:[%s727 + $0x2c] sm:$0xf] %v671
      %740 = vst [vmem:[%s727 + $0x30] sm:$0xf] %v672
      %741 = vst [vmem:[%s727 + $0x34] sm:$0xf] %v673
      %742 = vst [vmem:[%s727 + $0x38] sm:$0xf] %v674
      %743 = vst [vmem:[%s727 + $0x3c] sm:$0xf] %v675
      %744 = vst [vmem:[%s727 + $0x40] sm:$0xf] %v676
      %745 = vst [vmem:[%s727 + $0x44] sm:$0xf] %v677
      %746 = vst [vmem:[%s727 + $0x48] sm:$0xf] %v678
      %747 = vst [vmem:[%s727 + $0x4c] sm:$0xf] %v679
      %748 = vst [vmem:[%s727 + $0x50] sm:$0xf] %v680
      %749 = vst [vmem:[%s727 + $0x54] sm:$0xf] %v681
      %750 = vst [vmem:[%s727 + $0x58] sm:$0xf] %v682
      %751 = vst [vmem:[%s727 + $0x5c] sm:$0xf] %v683
      %752 = vst [vmem:[%s727 + $0x60] sm:$0xf] %v684
      %753 = vst [vmem:[%s727 + $0x64] sm:$0xf] %v685
      %754 = vst [vmem:[%s727 + $0x68] sm:$0xf] %v686
      %755 = vst [vmem:[%s727 + $0x6c] sm:$0xf] %v687
      %756 = vst [vmem:[%s727 + $0x70] sm:$0xf] %v688
      %757 = vst [vmem:[%s727 + $0x74] sm:$0xf] %v689
      %758 = vst [vmem:[%s727 + $0x78] sm:$0xf] %v690
      %759 = vst [vmem:[%s727 + $0x7c] sm:$0xf] %v691
      %v760 = vld [vmem:[#allocation2] sm:$0xff]
      %v761 = vadd.f32 %v470, %v473
      %v762 = vadd.f32 %v761, %v478
      %v763 = vadd.f32 %v762, %v481
      %v764 = vadd.f32 %v763, %v486
      %v765 = vadd.f32 %v764, %v489
      %v766 = vadd.f32 %v765, %v494
      %v767 = vadd.f32 %v766, %v497
      %v768 = vadd.f32 %v767, %v502
      %v769 = vadd.f32 %v768, %v505
      %v770 = vadd.f32 %v769, %v510
      %v771 = vadd.f32 %v770, %v513
      %v772 = vadd.f32 %v771, %v518
      %v773 = vadd.f32 %v772, %v521
      %v774 = vadd.f32 %v773, %v526
      %v775 = vadd.f32 %v774, %v529
      %v776 = vadd.f32 %v775, %v534
      %v777 = vadd.f32 %v776, %v537
      %v778 = vadd.f32 %v777, %v542
      %v779 = vadd.f32 %v778, %v545
      %v780 = vadd.f32 %v779, %v550
      %v781 = vadd.f32 %v780, %v553
      %v782 = vadd.f32 %v781, %v558
      %v783 = vadd.f32 %v782, %v561
      %v784 = vadd.f32 %v783, %v566
      %v785 = vadd.f32 %v784, %v569
      %v786 = vadd.f32 %v785, %v574
      %v787 = vadd.f32 %v786, %v577
      %v788 = vadd.f32 %v787, %v582
      %v789 = vadd.f32 %v788, %v585
      %v790 = vadd.f32 %v789, %v590
      %v791 = vadd.f32 %v790, %v593
      %v792 = vadd.f32 %v760, %v791
      %793 = vst [vmem:[#allocation2] sm:$0xff] %v792
      %v794 = vld [vmem:[#allocation3] sm:$0xff]
      %v795 = vmul.f32 %v470, %v470
      %v796 = vmul.f32 %v473, %v473
      %v797 = vmul.f32 %v478, %v478
      %v798 = vmul.f32 %v481, %v481
      %v799 = vmul.f32 %v486, %v486
      %v800 = vmul.f32 %v489, %v489
      %v801 = vmul.f32 %v494, %v494
      %v802 = vmul.f32 %v497, %v497
      %v803 = vmul.f32 %v502, %v502
      %v804 = vmul.f32 %v505, %v505
      %v805 = vmul.f32 %v510, %v510
      %v806 = vmul.f32 %v513, %v513
      %v807 = vmul.f32 %v518, %v518
      %v808 = vmul.f32 %v521, %v521
      %v809 = vmul.f32 %v526, %v526
      %v810 = vmul.f32 %v529, %v529
      %v811 = vmul.f32 %v534, %v534
      %v812 = vmul.f32 %v537, %v537
      %v813 = vmul.f32 %v542, %v542
      %v814 = vmul.f32 %v545, %v545
      %v815 = vmul.f32 %v550, %v550
      %v816 = vmul.f32 %v553, %v553
      %v817 = vmul.f32 %v558, %v558
      %v818 = vmul.f32 %v561, %v561
      %v819 = vmul.f32 %v566, %v566
      %v820 = vmul.f32 %v569, %v569
      %v821 = vmul.f32 %v574, %v574
      %v822 = vmul.f32 %v577, %v577
      %v823 = vmul.f32 %v582, %v582
      %v824 = vmul.f32 %v585, %v585
      %v825 = vmul.f32 %v590, %v590
      %v826 = vmul.f32 %v593, %v593
      %v827 = vadd.f32 %v795, %v796
      %v828 = vadd.f32 %v827, %v797
      %v829 = vadd.f32 %v828, %v798
      %v830 = vadd.f32 %v829, %v799
      %v831 = vadd.f32 %v830, %v800
      %v832 = vadd.f32 %v831, %v801
      %v833 = vadd.f32 %v832, %v802
      %v834 = vadd.f32 %v833, %v803
      %v835 = vadd.f32 %v834, %v804
      %v836 = vadd.f32 %v835, %v805
      %v837 = vadd.f32 %v836, %v806
      %v838 = vadd.f32 %v837, %v807
      %v839 = vadd.f32 %v838, %v808
      %v840 = vadd.f32 %v839, %v809
      %v841 = vadd.f32 %v840, %v810
      %v842 = vadd.f32 %v841, %v811
      %v843 = vadd.f32 %v842, %v812
      %v844 = vadd.f32 %v843, %v813
      %v845 = vadd.f32 %v844, %v814
      %v846 = vadd.f32 %v845, %v815
      %v847 = vadd.f32 %v846, %v816
      %v848 = vadd.f32 %v847, %v817
      %v849 = vadd.f32 %v848, %v818
      %v850 = vadd.f32 %v849, %v819
      %v851 = vadd.f32 %v850, %v820
      %v852 = vadd.f32 %v851, %v821
      %v853 = vadd.f32 %v852, %v822
      %v854 = vadd.f32 %v853, %v823
      %v855 = vadd.f32 %v854, %v824
      %v856 = vadd.f32 %v855, %v825
      %v857 = vadd.f32 %v856, %v826
      %v858 = vadd.f32 %v794, %v857
      %859 = vst [vmem:[#allocation3] sm:$0xff] %v858
      %s860 = sadd.s32 %s242, 256
      %v861 = vld [vmem:[%s224 + $0x80] sm:$0xf]
      %v862 = vld [vmem:[%s224 + $0x84] sm:$0xf]
      %v863 = vld [vmem:[%s224 + $0x88] sm:$0xf]
      %v864 = vld [vmem:[%s224 + $0x8c] sm:$0xf]
      %v865 = vld [vmem:[%s224 + $0x90] sm:$0xf]
      %v866 = vld [vmem:[%s224 + $0x94] sm:$0xf]
      %v867 = vld [vmem:[%s224 + $0x98] sm:$0xf]
      %v868 = vld [vmem:[%s224 + $0x9c] sm:$0xf]
      %v869 = vld [vmem:[%s224 + $0xa0] sm:$0xf]
      %v870 = vld [vmem:[%s224 + $0xa4] sm:$0xf]
      %v871 = vld [vmem:[%s224 + $0xa8] sm:$0xf]
      %v872 = vld [vmem:[%s224 + $0xac] sm:$0xf]
      %v873 = vld [vmem:[%s224 + $0xb0] sm:$0xf]
      %v874 = vld [vmem:[%s224 + $0xb4] sm:$0xf]
      %v875 = vld [vmem:[%s224 + $0xb8] sm:$0xf]
      %v876 = vld [vmem:[%s224 + $0xbc] sm:$0xf]
      %v877 = vld [vmem:[%s224 + $0xc0] sm:$0xf]
      %v878 = vld [vmem:[%s224 + $0xc4] sm:$0xf]
      %v879 = vld [vmem:[%s224 + $0xc8] sm:$0xf]
      %v880 = vld [vmem:[%s224 + $0xcc] sm:$0xf]
      %v881 = vld [vmem:[%s224 + $0xd0] sm:$0xf]
      %v882 = vld [vmem:[%s224 + $0xd4] sm:$0xf]
      %v883 = vld [vmem:[%s224 + $0xd8] sm:$0xf]
      %v884 = vld [vmem:[%s224 + $0xdc] sm:$0xf]
      %v885 = vld [vmem:[%s224 + $0xe0] sm:$0xf]
      %v886 = vld [vmem:[%s224 + $0xe4] sm:$0xf]
      %v887 = vld [vmem:[%s224 + $0xe8] sm:$0xf]
      %v888 = vld [vmem:[%s224 + $0xec] sm:$0xf]
      %v889 = vld [vmem:[%s224 + $0xf0] sm:$0xf]
      %v890 = vld [vmem:[%s224 + $0xf4] sm:$0xf]
      %v891 = vld [vmem:[%s224 + $0xf8] sm:$0xf]
      %v892 = vld [vmem:[%s224 + $0xfc] sm:$0xf]
      %v893 = vld [vmem:[%s230] sm:$0xf]
      %v894 = vld [vmem:[%s230 + $0x4] sm:$0xf]
      %v895 = vld [vmem:[%s230 + $0x8] sm:$0xf]
      %v896 = vld [vmem:[%s230 + $0xc] sm:$0xf]
      %v897 = vld [vmem:[%s230 + $0x10] sm:$0xf]
      %v898 = vld [vmem:[%s230 + $0x14] sm:$0xf]
      %v899 = vld [vmem:[%s230 + $0x18] sm:$0xf]
      %v900 = vld [vmem:[%s230 + $0x1c] sm:$0xf]
      %v901 = vld [vmem:[%s230 + $0x20] sm:$0xf]
      %v902 = vld [vmem:[%s230 + $0x24] sm:$0xf]
      %v903 = vld [vmem:[%s230 + $0x28] sm:$0xf]
      %v904 = vld [vmem:[%s230 + $0x2c] sm:$0xf]
      %v905 = vld [vmem:[%s230 + $0x30] sm:$0xf]
      %v906 = vld [vmem:[%s230 + $0x34] sm:$0xf]
      %v907 = vld [vmem:[%s230 + $0x38] sm:$0xf]
      %v908 = vld [vmem:[%s230 + $0x3c] sm:$0xf]
      %v941 = vunpack.c.l.b16 %v861
      %v942 = vunpack.c.l.b16 %v862
      %v943 = vunpack.c.l.b16 %v863
      %v944 = vunpack.c.l.b16 %v864
      %v945 = vunpack.c.l.b16 %v865
      %v946 = vunpack.c.l.b16 %v866
      %v947 = vunpack.c.l.b16 %v867
      %v948 = vunpack.c.l.b16 %v868
      %v949 = vunpack.c.l.b16 %v869
      %v950 = vunpack.c.l.b16 %v870
      %v951 = vunpack.c.l.b16 %v871
      %v952 = vunpack.c.l.b16 %v872
      %v953 = vunpack.c.l.b16 %v873
      %v954 = vunpack.c.l.b16 %v874
      %v955 = vunpack.c.l.b16 %v875
      %v956 = vunpack.c.l.b16 %v876
      %v957 = vunpack.c.l.b16 %v877
      %v958 = vunpack.c.l.b16 %v878
      %v959 = vunpack.c.l.b16 %v879
      %v960 = vunpack.c.l.b16 %v880
      %v961 = vunpack.c.l.b16 %v881
      %v962 = vunpack.c.l.b16 %v882
      %v963 = vunpack.c.l.b16 %v883
      %v964 = vunpack.c.l.b16 %v884
      %v965 = vunpack.c.l.b16 %v885
      %v966 = vunpack.c.l.b16 %v886
      %v967 = vunpack.c.l.b16 %v887
      %v968 = vunpack.c.l.b16 %v888
      %v969 = vunpack.c.l.b16 %v889
      %v970 = vunpack.c.l.b16 %v890
      %v971 = vunpack.c.l.b16 %v891
      %v972 = vunpack.c.l.b16 %v892
      %v973 = vpack.c.b16 %v942, %v941
      %v974 = vpack.c.b16 %v944, %v943
      %v975 = vpack.c.b16 %v946, %v945
      %v976 = vpack.c.b16 %v948, %v947
      %v977 = vpack.c.b16 %v950, %v949
      %v978 = vpack.c.b16 %v952, %v951
      %v979 = vpack.c.b16 %v954, %v953
      %v980 = vpack.c.b16 %v956, %v955
      %v981 = vpack.c.b16 %v958, %v957
      %v982 = vpack.c.b16 %v960, %v959
      %v983 = vpack.c.b16 %v962, %v961
      %v984 = vpack.c.b16 %v964, %v963
      %v985 = vpack.c.b16 %v966, %v965
      %v986 = vpack.c.b16 %v968, %v967
      %v987 = vpack.c.b16 %v970, %v969
      %v988 = vpack.c.b16 %v972, %v971
      %v1021 = vunpack.c.l.b16 %v893
      %v1022 = vunpack.c.l.b16 %v894
      %v1023 = vunpack.c.l.b16 %v895
      %v1024 = vunpack.c.l.b16 %v896
      %v1025 = vunpack.c.l.b16 %v897
      %v1026 = vunpack.c.l.b16 %v898
      %v1027 = vunpack.c.l.b16 %v899
      %v1028 = vunpack.c.l.b16 %v900
      %v1029 = vunpack.c.l.b16 %v901
      %v1030 = vunpack.c.l.b16 %v902
      %v1031 = vunpack.c.l.b16 %v903
      %v1032 = vunpack.c.l.b16 %v904
      %v1033 = vunpack.c.l.b16 %v905
      %v1034 = vunpack.c.l.b16 %v906
      %v1035 = vunpack.c.l.b16 %v907
      %v1036 = vunpack.c.l.b16 %v908
      %v1037 = vpack.c.b16 %v1022, %v1021
      %v1038 = vpack.c.b16 %v1024, %v1023
      %v1039 = vpack.c.b16 %v1026, %v1025
      %v1040 = vpack.c.b16 %v1028, %v1027
      %v1041 = vpack.c.b16 %v1030, %v1029
      %v1042 = vpack.c.b16 %v1032, %v1031
      %v1043 = vpack.c.b16 %v1034, %v1033
      %v1044 = vpack.c.b16 %v1036, %v1035
      %1053 = vmatprep.subr.bf16.mxu0 0
      %1054 = vmatpush1.bf16.msra.mxu0 %v1037
      %1055 = vmatprep.subr.bf16.mxu0 0
      %1056 = vmatpush1.bf16.msra.mxu0 %v1038
      %1057 = vmatprep.subr.bf16.mxu0 0
      %1058 = vmatpush1.bf16.msra.mxu0 %v1039
      %1059 = vmatprep.subr.bf16.mxu0 0
      %1060 = vmatpush1.bf16.msra.mxu0 %v1040
      %1061 = vmatprep.subr.bf16.mxu0 0
      %1062 = vmatpush1.bf16.msra.mxu0 %v1041
      %1063 = vmatprep.subr.bf16.mxu0 0
      %1064 = vmatpush1.bf16.msra.mxu0 %v1042
      %1065 = vmatprep.subr.bf16.mxu0 0
      %1066 = vmatpush1.bf16.msra.mxu0 %v1043
      %1067 = vmatprep.subr.bf16.mxu0 0
      %1068 = vmatpush1.bf16.msra.mxu0 %v1044
      %1069 = vmatprep.subr.bf16.mxu0 0
      %1070 = vmatpush1.bf16.msra.mxu0 0
      %1071 = vmatprep.subr.bf16.mxu0 0
      %1072 = vmatpush1.bf16.msra.mxu0 0
      %1073 = vmatprep.subr.bf16.mxu0 0
      %1074 = vmatpush1.bf16.msra.mxu0 0
      %1075 = vmatprep.subr.bf16.mxu0 0
      %1076 = vmatpush1.bf16.msra.mxu0 0
      %1077 = vmatprep.subr.bf16.mxu0 0
      %1078 = vmatpush1.bf16.msra.mxu0 0
      %1079 = vmatprep.subr.bf16.mxu0 0
      %1080 = vmatpush1.bf16.msra.mxu0 0
      %1081 = vmatprep.subr.bf16.mxu0 0
      %1082 = vmatpush1.bf16.msra.mxu0 0
      %1083 = vmatprep.subr.bf16.mxu0 0
      %1084 = vmatpush1.bf16.msra.mxu0 0
      %1085 = vmatprep.mubr.bf16.mxu0 0
      %1086 = vmatmul.mubr.bf16.gmra.mrb[0].mxu0 %v973
      %v1087 = vpop.f32.mrb[0].mxu0
      %v1088 = vadd.f32 0.0, %v1087
      %v1089 = vpop.f32.mrb[0].mxu0
      %v1090 = vpop.f32.mrb[0].mxu0
      %v1091 = vadd.f32 0.0, %v1090
      %v1092 = vpop.f32.mrb[0].mxu0
      %1093 = vmatprep.mubr.bf16.mxu0 0
      %1094 = vmatmul.mubr.bf16.gmra.mrb[0].mxu0 %v974
      %v1095 = vpop.f32.mrb[0].mxu0
      %v1096 = vadd.f32 0.0, %v1095
      %v1097 = vpop.f32.mrb[0].mxu0
      %v1098 = vpop.f32.mrb[0].mxu0
      %v1099 = vadd.f32 0.0, %v1098
      %v1100 = vpop.f32.mrb[0].mxu0
      %1101 = vmatprep.mubr.bf16.mxu0 0
      %1102 = vmatmul.mubr.bf16.gmra.mrb[0].mxu0 %v975
      %v1103 = vpop.f32.mrb[0].mxu0
      %v1104 = vadd.f32 0.0, %v1103
      %v1105 = vpop.f32.mrb[0].mxu0
      %v1106 = vpop.f32.mrb[0].mxu0
      %v1107 = vadd.f32 0.0, %v1106
      %v1108 = vpop.f32.mrb[0].mxu0
      %1109 = vmatprep.mubr.bf16.mxu0 0
      %1110 = vmatmul.mubr.bf16.gmra.mrb[0].mxu0 %v976
      %v1111 = vpop.f32.mrb[0].mxu0
      %v1112 = vadd.f32 0.0, %v1111
      %v1113 = vpop.f32.mrb[0].mxu0
      %v1114 = vpop.f32.mrb[0].mxu0
      %v1115 = vadd.f32 0.0, %v1114
      %v1116 = vpop.f32.mrb[0].mxu0
      %1117 = vmatprep.mubr.bf16.mxu0 0
      %1118 = vmatmul.mubr.bf16.gmra.mrb[0].mxu0 %v977
      %v1119 = vpop.f32.mrb[0].mxu0
      %v1120 = vadd.f32 0.0, %v1119
      %v1121 = vpop.f32.mrb[0].mxu0
      %v1122 = vpop.f32.mrb[0].mxu0
      %v1123 = vadd.f32 0.0, %v1122
      %v1124 = vpop.f32.mrb[0].mxu0
      %1125 = vmatprep.mubr.bf16.mxu0 0
      %1126 = vmatmul.mubr.bf16.gmra.mrb[0].mxu0 %v978
      %v1127 = vpop.f32.mrb[0].mxu0
      %v1128 = vadd.f32 0.0, %v1127
      %v1129 = vpop.f32.mrb[0].mxu0
      %v1130 = vpop.f32.mrb[0].mxu0
      %v1131 = vadd.f32 0.0, %v1130
      %v1132 = vpop.f32.mrb[0].mxu0
      %1133 = vmatprep.mubr.bf16.mxu0 0
      %1134 = vmatmul.mubr.bf16.gmra.mrb[0].mxu0 %v979
      %v1135 = vpop.f32.mrb[0].mxu0
      %v1136 = vadd.f32 0.0, %v1135
      %v1137 = vpop.f32.mrb[0].mxu0
      %v1138 = vpop.f32.mrb[0].mxu0
      %v1139 = vadd.f32 0.0, %v1138
      %v1140 = vpop.f32.mrb[0].mxu0
      %1141 = vmatprep.mubr.bf16.mxu0 0
      %1142 = vmatmul.mubr.bf16.gmra.mrb[0].mxu0 %v980
      %v1143 = vpop.f32.mrb[0].mxu0
      %v1144 = vadd.f32 0.0, %v1143
      %v1145 = vpop.f32.mrb[0].mxu0
      %v1146 = vpop.f32.mrb[0].mxu0
      %v1147 = vadd.f32 0.0, %v1146
      %v1148 = vpop.f32.mrb[0].mxu0
      %1149 = vmatprep.mubr.bf16.mxu0 0
      %1150 = vmatmul.mubr.bf16.gmra.mrb[0].mxu0 %v981
      %v1151 = vpop.f32.mrb[0].mxu0
      %v1152 = vadd.f32 0.0, %v1151
      %v1153 = vpop.f32.mrb[0].mxu0
      %v1154 = vpop.f32.mrb[0].mxu0
      %v1155 = vadd.f32 0.0, %v1154
      %v1156 = vpop.f32.mrb[0].mxu0
      %1157 = vmatprep.mubr.bf16.mxu0 0
      %1158 = vmatmul.mubr.bf16.gmra.mrb[0].mxu0 %v982
      %v1159 = vpop.f32.mrb[0].mxu0
      %v1160 = vadd.f32 0.0, %v1159
      %v1161 = vpop.f32.mrb[0].mxu0
      %v1162 = vpop.f32.mrb[0].mxu0
      %v1163 = vadd.f32 0.0, %v1162
      %v1164 = vpop.f32.mrb[0].mxu0
      %1165 = vmatprep.mubr.bf16.mxu0 0
      %1166 = vmatmul.mubr.bf16.gmra.mrb[0].mxu0 %v983
      %v1167 = vpop.f32.mrb[0].mxu0
      %v1168 = vadd.f32 0.0, %v1167
      %v1169 = vpop.f32.mrb[0].mxu0
      %v1170 = vpop.f32.mrb[0].mxu0
      %v1171 = vadd.f32 0.0, %v1170
      %v1172 = vpop.f32.mrb[0].mxu0
      %1173 = vmatprep.mubr.bf16.mxu0 0
      %1174 = vmatmul.mubr.bf16.gmra.mrb[0].mxu0 %v984
      %v1175 = vpop.f32.mrb[0].mxu0
      %v1176 = vadd.f32 0.0, %v1175
      %v1177 = vpop.f32.mrb[0].mxu0
      %v1178 = vpop.f32.mrb[0].mxu0
      %v1179 = vadd.f32 0.0, %v1178
      %v1180 = vpop.f32.mrb[0].mxu0
      %1181 = vmatprep.mubr.bf16.mxu0 0
      %1182 = vmatmul.mubr.bf16.gmra.mrb[0].mxu0 %v985
      %v1183 = vpop.f32.mrb[0].mxu0
      %v1184 = vadd.f32 0.0, %v1183
      %v1185 = vpop.f32.mrb[0].mxu0
      %v1186 = vpop.f32.mrb[0].mxu0
      %v1187 = vadd.f32 0.0, %v1186
      %v1188 = vpop.f32.mrb[0].mxu0
      %1189 = vmatprep.mubr.bf16.mxu0 0
      %1190 = vmatmul.mubr.bf16.gmra.mrb[0].mxu0 %v986
      %v1191 = vpop.f32.mrb[0].mxu0
      %v1192 = vadd.f32 0.0, %v1191
      %v1193 = vpop.f32.mrb[0].mxu0
      %v1194 = vpop.f32.mrb[0].mxu0
      %v1195 = vadd.f32 0.0, %v1194
      %v1196 = vpop.f32.mrb[0].mxu0
      %1197 = vmatprep.mubr.bf16.mxu0 0
      %1198 = vmatmul.mubr.bf16.gmra.mrb[0].mxu0 %v987
      %v1199 = vpop.f32.mrb[0].mxu0
      %v1200 = vadd.f32 0.0, %v1199
      %v1201 = vpop.f32.mrb[0].mxu0
      %v1202 = vpop.f32.mrb[0].mxu0
      %v1203 = vadd.f32 0.0, %v1202
      %v1204 = vpop.f32.mrb[0].mxu0
      %1205 = vmatprep.mubr.bf16.mxu0 0
      %1206 = vmatmul.mubr.bf16.gmra.mrb[0].mxu0 %v988
      %v1207 = vpop.f32.mrb[0].mxu0
      %v1208 = vadd.f32 0.0, %v1207
      %v1209 = vpop.f32.mrb[0].mxu0
      %v1210 = vpop.f32.mrb[0].mxu0
      %v1211 = vadd.f32 0.0, %v1210
      %v1212 = vpop.f32.mrb[0].mxu0
      %1213 = vdwg.mxu0
      %v1214 = vpack.c.bf16 %v1091, %v1088
      %v1215 = vpack.c.bf16 %v1099, %v1096
      %v1216 = vpack.c.bf16 %v1107, %v1104
      %v1217 = vpack.c.bf16 %v1115, %v1112
      %v1218 = vpack.c.bf16 %v1123, %v1120
      %v1219 = vpack.c.bf16 %v1131, %v1128
      %v1220 = vpack.c.bf16 %v1139, %v1136
      %v1221 = vpack.c.bf16 %v1147, %v1144
      %v1222 = vpack.c.bf16 %v1155, %v1152
      %v1223 = vpack.c.bf16 %v1163, %v1160
      %v1224 = vpack.c.bf16 %v1171, %v1168
      %v1225 = vpack.c.bf16 %v1179, %v1176
      %v1226 = vpack.c.bf16 %v1187, %v1184
      %v1227 = vpack.c.bf16 %v1195, %v1192
      %v1228 = vpack.c.bf16 %v1203, %v1200
      %v1229 = vpack.c.bf16 %v1211, %v1208
      %v1246 = vunpack.c.l.b16 %v1214
      %v1247 = vunpack.c.h.b16 %v1214
      %v1248 = vunpack.c.l.b16 %v1215
      %v1249 = vunpack.c.h.b16 %v1215
      %v1250 = vunpack.c.l.b16 %v1216
      %v1251 = vunpack.c.h.b16 %v1216
      %v1252 = vunpack.c.l.b16 %v1217
      %v1253 = vunpack.c.h.b16 %v1217
      %v1254 = vunpack.c.l.b16 %v1218
      %v1255 = vunpack.c.h.b16 %v1218
      %v1256 = vunpack.c.l.b16 %v1219
      %v1257 = vunpack.c.h.b16 %v1219
      %v1258 = vunpack.c.l.b16 %v1220
      %v1259 = vunpack.c.h.b16 %v1220
      %v1260 = vunpack.c.l.b16 %v1221
      %v1261 = vunpack.c.h.b16 %v1221
      %v1262 = vunpack.c.l.b16 %v1222
      %v1263 = vunpack.c.h.b16 %v1222
      %v1264 = vunpack.c.l.b16 %v1223
      %v1265 = vunpack.c.h.b16 %v1223
      %v1266 = vunpack.c.l.b16 %v1224
      %v1267 = vunpack.c.h.b16 %v1224
      %v1268 = vunpack.c.l.b16 %v1225
      %v1269 = vunpack.c.h.b16 %v1225
      %v1270 = vunpack.c.l.b16 %v1226
      %v1271 = vunpack.c.h.b16 %v1226
      %v1272 = vunpack.c.l.b16 %v1227
      %v1273 = vunpack.c.h.b16 %v1227
      %v1274 = vunpack.c.l.b16 %v1228
      %v1275 = vunpack.c.h.b16 %v1228
      %v1276 = vunpack.c.l.b16 %v1229
      %v1277 = vunpack.c.h.b16 %v1229
      %v1278 = vpack.c.b16 %v1246, %v1246
      %v1279 = vpack.c.b16 %v1247, %v1247
      %v1280 = vpack.c.b16 %v1248, %v1248
      %v1281 = vpack.c.b16 %v1249, %v1249
      %v1282 = vpack.c.b16 %v1250, %v1250
      %v1283 = vpack.c.b16 %v1251, %v1251
      %v1284 = vpack.c.b16 %v1252, %v1252
      %v1285 = vpack.c.b16 %v1253, %v1253
      %v1286 = vpack.c.b16 %v1254, %v1254
      %v1287 = vpack.c.b16 %v1255, %v1255
      %v1288 = vpack.c.b16 %v1256, %v1256
      %v1289 = vpack.c.b16 %v1257, %v1257
      %v1290 = vpack.c.b16 %v1258, %v1258
      %v1291 = vpack.c.b16 %v1259, %v1259
      %v1292 = vpack.c.b16 %v1260, %v1260
      %v1293 = vpack.c.b16 %v1261, %v1261
      %v1294 = vpack.c.b16 %v1262, %v1262
      %v1295 = vpack.c.b16 %v1263, %v1263
      %v1296 = vpack.c.b16 %v1264, %v1264
      %v1297 = vpack.c.b16 %v1265, %v1265
      %v1298 = vpack.c.b16 %v1266, %v1266
      %v1299 = vpack.c.b16 %v1267, %v1267
      %v1300 = vpack.c.b16 %v1268, %v1268
      %v1301 = vpack.c.b16 %v1269, %v1269
      %v1302 = vpack.c.b16 %v1270, %v1270
      %v1303 = vpack.c.b16 %v1271, %v1271
      %v1304 = vpack.c.b16 %v1272, %v1272
      %v1305 = vpack.c.b16 %v1273, %v1273
      %v1306 = vpack.c.b16 %v1274, %v1274
      %v1307 = vpack.c.b16 %v1275, %v1275
      %v1308 = vpack.c.b16 %v1276, %v1276
      %v1309 = vpack.c.b16 %v1277, %v1277
      %s1342 = sshra.s32 %s860, 3
      %s1343 = sand.u32 %s860, 7
      %s1344 = smul.addr %s1342, 4
      %s1345 = scalar_lea.vmem %s4, %s1344
      %1346 = vst [vmem:[%s1345] sm:$0xf] %v1278
      %1347 = vst [vmem:[%s1345 + $0x4] sm:$0xf] %v1279
      %1348 = vst [vmem:[%s1345 + $0x8] sm:$0xf] %v1280
      %1349 = vst [vmem:[%s1345 + $0xc] sm:$0xf] %v1281
      %1350 = vst [vmem:[%s1345 + $0x10] sm:$0xf] %v1282
      %1351 = vst [vmem:[%s1345 + $0x14] sm:$0xf] %v1283
      %1352 = vst [vmem:[%s1345 + $0x18] sm:$0xf] %v1284
      %1353 = vst [vmem:[%s1345 + $0x1c] sm:$0xf] %v1285
      %1354 = vst [vmem:[%s1345 + $0x20] sm:$0xf] %v1286
      %1355 = vst [vmem:[%s1345 + $0x24] sm:$0xf] %v1287
      %1356 = vst [vmem:[%s1345 + $0x28] sm:$0xf] %v1288
      %1357 = vst [vmem:[%s1345 + $0x2c] sm:$0xf] %v1289
      %1358 = vst [vmem:[%s1345 + $0x30] sm:$0xf] %v1290
      %1359 = vst [vmem:[%s1345 + $0x34] sm:$0xf] %v1291
      %1360 = vst [vmem:[%s1345 + $0x38] sm:$0xf] %v1292
      %1361 = vst [vmem:[%s1345 + $0x3c] sm:$0xf] %v1293
      %1362 = vst [vmem:[%s1345 + $0x40] sm:$0xf] %v1294
      %1363 = vst [vmem:[%s1345 + $0x44] sm:$0xf] %v1295
      %1364 = vst [vmem:[%s1345 + $0x48] sm:$0xf] %v1296
      %1365 = vst [vmem:[%s1345 + $0x4c] sm:$0xf] %v1297
      %1366 = vst [vmem:[%s1345 + $0x50] sm:$0xf] %v1298
      %1367 = vst [vmem:[%s1345 + $0x54] sm:$0xf] %v1299
      %1368 = vst [vmem:[%s1345 + $0x58] sm:$0xf] %v1300
      %1369 = vst [vmem:[%s1345 + $0x5c] sm:$0xf] %v1301
      %1370 = vst [vmem:[%s1345 + $0x60] sm:$0xf] %v1302
      %1371 = vst [vmem:[%s1345 + $0x64] sm:$0xf] %v1303
      %1372 = vst [vmem:[%s1345 + $0x68] sm:$0xf] %v1304
      %1373 = vst [vmem:[%s1345 + $0x6c] sm:$0xf] %v1305
      %1374 = vst [vmem:[%s1345 + $0x70] sm:$0xf] %v1306
      %1375 = vst [vmem:[%s1345 + $0x74] sm:$0xf] %v1307
      %1376 = vst [vmem:[%s1345 + $0x78] sm:$0xf] %v1308
      %1377 = vst [vmem:[%s1345 + $0x7c] sm:$0xf] %v1309
      %v1378 = vld [vmem:[#allocation2] sm:$0xff]
      %v1379 = vadd.f32 %v1088, %v1091
      %v1380 = vadd.f32 %v1379, %v1096
      %v1381 = vadd.f32 %v1380, %v1099
      %v1382 = vadd.f32 %v1381, %v1104
      %v1383 = vadd.f32 %v1382, %v1107
      %v1384 = vadd.f32 %v1383, %v1112
      %v1385 = vadd.f32 %v1384, %v1115
      %v1386 = vadd.f32 %v1385, %v1120
      %v1387 = vadd.f32 %v1386, %v1123
      %v1388 = vadd.f32 %v1387, %v1128
      %v1389 = vadd.f32 %v1388, %v1131
      %v1390 = vadd.f32 %v1389, %v1136
      %v1391 = vadd.f32 %v1390, %v1139
      %v1392 = vadd.f32 %v1391, %v1144
      %v1393 = vadd.f32 %v1392, %v1147
      %v1394 = vadd.f32 %v1393, %v1152
      %v1395 = vadd.f32 %v1394, %v1155
      %v1396 = vadd.f32 %v1395, %v1160
      %v1397 = vadd.f32 %v1396, %v1163
      %v1398 = vadd.f32 %v1397, %v1168
      %v1399 = vadd.f32 %v1398, %v1171
      %v1400 = vadd.f32 %v1399, %v1176
      %v1401 = vadd.f32 %v1400, %v1179
      %v1402 = vadd.f32 %v1401, %v1184
      %v1403 = vadd.f32 %v1402, %v1187
      %v1404 = vadd.f32 %v1403, %v1192
      %v1405 = vadd.f32 %v1404, %v1195
      %v1406 = vadd.f32 %v1405, %v1200
      %v1407 = vadd.f32 %v1406, %v1203
      %v1408 = vadd.f32 %v1407, %v1208
      %v1409 = vadd.f32 %v1408, %v1211
      %v1410 = vadd.f32 %v1378, %v1409
      %1411 = vst [vmem:[#allocation2] sm:$0xff] %v1410
      %v1412 = vld [vmem:[#allocation3] sm:$0xff]
      %v1413 = vmul.f32 %v1088, %v1088
      %v1414 = vmul.f32 %v1091, %v1091
      %v1415 = vmul.f32 %v1096, %v1096
      %v1416 = vmul.f32 %v1099, %v1099
      %v1417 = vmul.f32 %v1104, %v1104
      %v1418 = vmul.f32 %v1107, %v1107
      %v1419 = vmul.f32 %v1112, %v1112
      %v1420 = vmul.f32 %v1115, %v1115
      %v1421 = vmul.f32 %v1120, %v1120
      %v1422 = vmul.f32 %v1123, %v1123
      %v1423 = vmul.f32 %v1128, %v1128
      %v1424 = vmul.f32 %v1131, %v1131
      %v1425 = vmul.f32 %v1136, %v1136
      %v1426 = vmul.f32 %v1139, %v1139
      %v1427 = vmul.f32 %v1144, %v1144
      %v1428 = vmul.f32 %v1147, %v1147
      %v1429 = vmul.f32 %v1152, %v1152
      %v1430 = vmul.f32 %v1155, %v1155
      %v1431 = vmul.f32 %v1160, %v1160
      %v1432 = vmul.f32 %v1163, %v1163
      %v1433 = vmul.f32 %v1168, %v1168
      %v1434 = vmul.f32 %v1171, %v1171
      %v1435 = vmul.f32 %v1176, %v1176
      %v1436 = vmul.f32 %v1179, %v1179
      %v1437 = vmul.f32 %v1184, %v1184
      %v1438 = vmul.f32 %v1187, %v1187
      %v1439 = vmul.f32 %v1192, %v1192
      %v1440 = vmul.f32 %v1195, %v1195
      %v1441 = vmul.f32 %v1200, %v1200
      %v1442 = vmul.f32 %v1203, %v1203
      %v1443 = vmul.f32 %v1208, %v1208
      %v1444 = vmul.f32 %v1211, %v1211
      %v1445 = vadd.f32 %v1413, %v1414
      %v1446 = vadd.f32 %v1445, %v1415
      %v1447 = vadd.f32 %v1446, %v1416
      %v1448 = vadd.f32 %v1447, %v1417
      %v1449 = vadd.f32 %v1448, %v1418
      %v1450 = vadd.f32 %v1449, %v1419
      %v1451 = vadd.f32 %v1450, %v1420
      %v1452 = vadd.f32 %v1451, %v1421
      %v1453 = vadd.f32 %v1452, %v1422
      %v1454 = vadd.f32 %v1453, %v1423
      %v1455 = vadd.f32 %v1454, %v1424
      %v1456 = vadd.f32 %v1455, %v1425
      %v1457 = vadd.f32 %v1456, %v1426
      %v1458 = vadd.f32 %v1457, %v1427
      %v1459 = vadd.f32 %v1458, %v1428
      %v1460 = vadd.f32 %v1459, %v1429
      %v1461 = vadd.f32 %v1460, %v1430
      %v1462 = vadd.f32 %v1461, %v1431
      %v1463 = vadd.f32 %v1462, %v1432
      %v1464 = vadd.f32 %v1463, %v1433
      %v1465 = vadd.f32 %v1464, %v1434
      %v1466 = vadd.f32 %v1465, %v1435
      %v1467 = vadd.f32 %v1466, %v1436
      %v1468 = vadd.f32 %v1467, %v1437
      %v1469 = vadd.f32 %v1468, %v1438
      %v1470 = vadd.f32 %v1469, %v1439
      %v1471 = vadd.f32 %v1470, %v1440
      %v1472 = vadd.f32 %v1471, %v1441
      %v1473 = vadd.f32 %v1472, %v1442
      %v1474 = vadd.f32 %v1473, %v1443
      %v1475 = vadd.f32 %v1474, %v1444
      %v1476 = vadd.f32 %v1412, %v1475
      %1477 = vst [vmem:[#allocation3] sm:$0xff] %v1476
      %p1478 = scmp.eq.s32.totalorder %s19, 3
      %p1479 = pnand %p1478, %p233
      %p1480 = pneg %p1479
      // Predicated region
      $region41: #{generator_forward.8} parent=35 // pred_check
        _
      $region42: #{generator_forward.8} parent=35 // pred_check_branch
        %1482 = sbr.rel (%p1479) target = $region44
      $region43: #{generator_forward.8} parent=35 // pred_region
        %v1483 = vld [vmem:[#allocation2] sm:$0xff]
        %v1484 = vrot.slane %v1483, 4
        %v1485 = vadd.f32 %v1483, %v1484
        %v1486 = vrot.slane %v1485, 2
        %v1487 = vadd.f32 %v1485, %v1486
        %v1488 = vrot.slane %v1487, 1
        %v1489 = vadd.f32 %v1487, %v1488
        %v1490 = vrcp.pop 2048.0
        %v1491 = vmul.f32 %v1489, %v1490
        %v1492 = vld [vmem:[#allocation3] sm:$0xff]
        %v1493 = vrot.slane %v1492, 4
        %v1494 = vadd.f32 %v1492, %v1493
        %v1495 = vrot.slane %v1494, 2
        %v1496 = vadd.f32 %v1494, %v1495
        %v1497 = vrot.slane %v1496, 1
        %v1498 = vadd.f32 %v1496, %v1497
        %v1499 = vmul.f32 %v1498, %v1490
        %v1500 = vmul.f32 %v1491, %v1491
        %v1501 = vsub.f32 %v1499, %v1500
        %v1502 = vmax.f32 %v1501, 0.0
        %v1503 = vadd.f32 %v1502, 1e-05
        %v1504 = vrsqrt.pop %v1503
        %v1505 = vld [vmem:[%s2] sm:$0x1]
        %v1506 = vmul.f32 %v1505, %v1504
        %v1507 = vld [vmem:[%s3] sm:$0x1]
        %v1508 = vmul.f32 %v1491, %v1506
        %v1509 = vsub.f32 %v1507, %v1508
        %v1510 = vld [vmem:[%s4] sm:$0xf]
        %v1511 = vld [vmem:[%s4 + $0x4] sm:$0xf]
        %v1512 = vld [vmem:[%s4 + $0x8] sm:$0xf]
        %v1513 = vld [vmem:[%s4 + $0xc] sm:$0xf]
        %v1514 = vld [vmem:[%s4 + $0x10] sm:$0xf]
        %v1515 = vld [vmem:[%s4 + $0x14] sm:$0xf]
        %v1516 = vld [vmem:[%s4 + $0x18] sm:$0xf]
        %v1517 = vld [vmem:[%s4 + $0x1c] sm:$0xf]
        %v1518 = vld [vmem:[%s4 + $0x20] sm:$0xf]
        %v1519 = vld [vmem:[%s4 + $0x24] sm:$0xf]
        %v1520 = vld [vmem:[%s4 + $0x28] sm:$0xf]
        %v1521 = vld [vmem:[%s4 + $0x2c] sm:$0xf]
        %v1522 = vld [vmem:[%s4 + $0x30] sm:$0xf]
        %v1523 = vld [vmem:[%s4 + $0x34] sm:$0xf]
        %v1524 = vld [vmem:[%s4 + $0x38] sm:$0xf]
        %v1525 = vld [vmem:[%s4 + $0x3c] sm:$0xf]
        %v1526 = vld [vmem:[%s4 + $0x40] sm:$0xf]
        %v1527 = vld [vmem:[%s4 + $0x44] sm:$0xf]
        %v1528 = vld [vmem:[%s4 + $0x48] sm:$0xf]
        %v1529 = vld [vmem:[%s4 + $0x4c] sm:$0xf]
        %v1530 = vld [vmem:[%s4 + $0x50] sm:$0xf]
        %v1531 = vld [vmem:[%s4 + $0x54] sm:$0xf]
        %v1532 = vld [vmem:[%s4 + $0x58] sm:$0xf]
        %v1533 = vld [vmem:[%s4 + $0x5c] sm:$0xf]
        %v1534 = vld [vmem:[%s4 + $0x60] sm:$0xf]
        %v1535 = vld [vmem:[%s4 + $0x64] sm:$0xf]
        %v1536 = vld [vmem:[%s4 + $0x68] sm:$0xf]
        %v1537 = vld [vmem:[%s4 + $0x6c] sm:$0xf]
        %v1538 = vld [vmem:[%s4 + $0x70] sm:$0xf]
        %v1539 = vld [vmem:[%s4 + $0x74] sm:$0xf]
        %v1540 = vld [vmem:[%s4 + $0x78] sm:$0xf]
        %v1541 = vld [vmem:[%s4 + $0x7c] sm:$0xf]
        %v1542 = vunpack.c.l.bf16 %v1510
        %v1543 = vunpack.c.l.bf16 %v1511
        %v1544 = vunpack.c.l.bf16 %v1512
        %v1545 = vunpack.c.l.bf16 %v1513
        %v1546 = vunpack.c.l.bf16 %v1514
        %v1547 = vunpack.c.l.bf16 %v1515
        %v1548 = vunpack.c.l.bf16 %v1516
        %v1549 = vunpack.c.l.bf16 %v1517
        %v1550 = vunpack.c.l.bf16 %v1518
        %v1551 = vunpack.c.l.bf16 %v1519
        %v1552 = vunpack.c.l.bf16 %v1520
        %v1553 = vunpack.c.l.bf16 %v1521
        %v1554 = vunpack.c.l.bf16 %v1522
        %v1555 = vunpack.c.l.bf16 %v1523
        %v1556 = vunpack.c.l.bf16 %v1524
        %v1557 = vunpack.c.l.bf16 %v1525
        %v1558 = vunpack.c.l.bf16 %v1526
        %v1559 = vunpack.c.l.bf16 %v1527
        %v1560 = vunpack.c.l.bf16 %v1528
        %v1561 = vunpack.c.l.bf16 %v1529
        %v1562 = vunpack.c.l.bf16 %v1530
        %v1563 = vunpack.c.l.bf16 %v1531
        %v1564 = vunpack.c.l.bf16 %v1532
        %v1565 = vunpack.c.l.bf16 %v1533
        %v1566 = vunpack.c.l.bf16 %v1534
        %v1567 = vunpack.c.l.bf16 %v1535
        %v1568 = vunpack.c.l.bf16 %v1536
        %v1569 = vunpack.c.l.bf16 %v1537
        %v1570 = vunpack.c.l.bf16 %v1538
        %v1571 = vunpack.c.l.bf16 %v1539
        %v1572 = vunpack.c.l.bf16 %v1540
        %v1573 = vunpack.c.l.bf16 %v1541
        %v1575 = vlaneseq
        %v1576 = vshrl.u32 %v1575, 7
        %v1577 = vsub.s32 0, %v1576
        %v1578 = vrot.slane %v1506, %v1577
        %v1580 = vmul.f32 %v1542, %v1578
        %v1581 = vmul.f32 %v1543, %v1578
        %v1582 = vmul.f32 %v1544, %v1578
        %v1583 = vmul.f32 %v1545, %v1578
        %v1584 = vmul.f32 %v1546, %v1578
        %v1585 = vmul.f32 %v1547, %v1578
        %v1586 = vmul.f32 %v1548, %v1578
        %v1587 = vmul.f32 %v1549, %v1578
        %v1588 = vmul.f32 %v1550, %v1578
        %v1589 = vmul.f32 %v1551, %v1578
        %v1590 = vmul.f32 %v1552, %v1578
        %v1591 = vmul.f32 %v1553, %v1578
        %v1592 = vmul.f32 %v1554, %v1578
        %v1593 = vmul.f32 %v1555, %v1578
        %v1594 = vmul.f32 %v1556, %v1578
        %v1595 = vmul.f32 %v1557, %v1578
        %v1596 = vmul.f32 %v1558, %v1578
        %v1597 = vmul.f32 %v1559, %v1578
        %v1598 = vmul.f32 %v1560, %v1578
        %v1599 = vmul.f32 %v1561, %v1578
        %v1600 = vmul.f32 %v1562, %v1578
        %v1601 = vmul.f32 %v1563, %v1578
        %v1602 = vmul.f32 %v1564, %v1578
        %v1603 = vmul.f32 %v1565, %v1578
        %v1604 = vmul.f32 %v1566, %v1578
        %v1605 = vmul.f32 %v1567, %v1578
        %v1606 = vmul.f32 %v1568, %v1578
        %v1607 = vmul.f32 %v1569, %v1578
        %v1608 = vmul.f32 %v1570, %v1578
        %v1609 = vmul.f32 %v1571, %v1578
        %v1610 = vmul.f32 %v1572, %v1578
        %v1611 = vmul.f32 %v1573, %v1578
        %v1613 = vlaneseq
        %v1614 = vshrl.u32 %v1613, 7
        %v1615 = vsub.s32 0, %v1614
        %v1616 = vrot.slane %v1509, %v1615
        %v1618 = vadd.f32 %v1580, %v1616
        %v1619 = vadd.f32 %v1581, %v1616
        %v1620 = vadd.f32 %v1582, %v1616
        %v1621 = vadd.f32 %v1583, %v1616
        %v1622 = vadd.f32 %v1584, %v1616
        %v1623 = vadd.f32 %v1585, %v1616
        %v1624 = vadd.f32 %v1586, %v1616
        %v1625 = vadd.f32 %v1587, %v1616
        %v1626 = vadd.f32 %v1588, %v1616
        %v1627 = vadd.f32 %v1589, %v1616
        %v1628 = vadd.f32 %v1590, %v1616
        %v1629 = vadd.f32 %v1591, %v1616
        %v1630 = vadd.f32 %v1592, %v1616
        %v1631 = vadd.f32 %v1593, %v1616
        %v1632 = vadd.f32 %v1594, %v1616
        %v1633 = vadd.f32 %v1595, %v1616
        %v1634 = vadd.f32 %v1596, %v1616
        %v1635 = vadd.f32 %v1597, %v1616
        %v1636 = vadd.f32 %v1598, %v1616
        %v1637 = vadd.f32 %v1599, %v1616
        %v1638 = vadd.f32 %v1600, %v1616
        %v1639 = vadd.f32 %v1601, %v1616
        %v1640 = vadd.f32 %v1602, %v1616
        %v1641 = vadd.f32 %v1603, %v1616
        %v1642 = vadd.f32 %v1604, %v1616
        %v1643 = vadd.f32 %v1605, %v1616
        %v1644 = vadd.f32 %v1606, %v1616
        %v1645 = vadd.f32 %v1607, %v1616
        %v1646 = vadd.f32 %v1608, %v1616
        %v1647 = vadd.f32 %v1609, %v1616
        %v1648 = vadd.f32 %v1610, %v1616
        %v1649 = vadd.f32 %v1611, %v1616
        %v1650 = vmax.f32 %v1618, 0.0
        %v1651 = vmax.f32 %v1619, 0.0
        %v1652 = vmax.f32 %v1620, 0.0
        %v1653 = vmax.f32 %v1621, 0.0
        %v1654 = vmax.f32 %v1622, 0.0
        %v1655 = vmax.f32 %v1623, 0.0
        %v1656 = vmax.f32 %v1624, 0.0
        %v1657 = vmax.f32 %v1625, 0.0
        %v1658 = vmax.f32 %v1626, 0.0
        %v1659 = vmax.f32 %v1627, 0.0
        %v1660 = vmax.f32 %v1628, 0.0
        %v1661 = vmax.f32 %v1629, 0.0
        %v1662 = vmax.f32 %v1630, 0.0
        %v1663 = vmax.f32 %v1631, 0.0
        %v1664 = vmax.f32 %v1632, 0.0
        %v1665 = vmax.f32 %v1633, 0.0
        %v1666 = vmax.f32 %v1634, 0.0
        %v1667 = vmax.f32 %v1635, 0.0
        %v1668 = vmax.f32 %v1636, 0.0
        %v1669 = vmax.f32 %v1637, 0.0
        %v1670 = vmax.f32 %v1638, 0.0
        %v1671 = vmax.f32 %v1639, 0.0
        %v1672 = vmax.f32 %v1640, 0.0
        %v1673 = vmax.f32 %v1641, 0.0
        %v1674 = vmax.f32 %v1642, 0.0
        %v1675 = vmax.f32 %v1643, 0.0
        %v1676 = vmax.f32 %v1644, 0.0
        %v1677 = vmax.f32 %v1645, 0.0
        %v1678 = vmax.f32 %v1646, 0.0
        %v1679 = vmax.f32 %v1647, 0.0
        %v1680 = vmax.f32 %v1648, 0.0
        %v1681 = vmax.f32 %v1649, 0.0
        %v1682 = vpack.c.bf16 %v1651, %v1650
        %v1683 = vpack.c.bf16 %v1653, %v1652
        %v1684 = vpack.c.bf16 %v1655, %v1654
        %v1685 = vpack.c.bf16 %v1657, %v1656
        %v1686 = vpack.c.bf16 %v1659, %v1658
        %v1687 = vpack.c.bf16 %v1661, %v1660
        %v1688 = vpack.c.bf16 %v1663, %v1662
        %v1689 = vpack.c.bf16 %v1665, %v1664
        %v1690 = vpack.c.bf16 %v1667, %v1666
        %v1691 = vpack.c.bf16 %v1669, %v1668
        %v1692 = vpack.c.bf16 %v1671, %v1670
        %v1693 = vpack.c.bf16 %v1673, %v1672
        %v1694 = vpack.c.bf16 %v1675, %v1674
        %v1695 = vpack.c.bf16 %v1677, %v1676
        %v1696 = vpack.c.bf16 %v1679, %v1678
        %v1697 = vpack.c.bf16 %v1681, %v1680
        %v1714 = vunpack.c.l.b16 %v1682
        %v1715 = vunpack.c.h.b16 %v1682
        %v1716 = vunpack.c.l.b16 %v1683
        %v1717 = vunpack.c.h.b16 %v1683
        %v1718 = vunpack.c.l.b16 %v1684
        %v1719 = vunpack.c.h.b16 %v1684
        %v1720 = vunpack.c.l.b16 %v1685
        %v1721 = vunpack.c.h.b16 %v1685
        %v1722 = vunpack.c.l.b16 %v1686
        %v1723 = vunpack.c.h.b16 %v1686
        %v1724 = vunpack.c.l.b16 %v1687
        %v1725 = vunpack.c.h.b16 %v1687
        %v1726 = vunpack.c.l.b16 %v1688
        %v1727 = vunpack.c.h.b16 %v1688
        %v1728 = vunpack.c.l.b16 %v1689
        %v1729 = vunpack.c.h.b16 %v1689
        %v1730 = vunpack.c.l.b16 %v1690
        %v1731 = vunpack.c.h.b16 %v1690
        %v1732 = vunpack.c.l.b16 %v1691
        %v1733 = vunpack.c.h.b16 %v1691
        %v1734 = vunpack.c.l.b16 %v1692
        %v1735 = vunpack.c.h.b16 %v1692
        %v1736 = vunpack.c.l.b16 %v1693
        %v1737 = vunpack.c.h.b16 %v1693
        %v1738 = vunpack.c.l.b16 %v1694
        %v1739 = vunpack.c.h.b16 %v1694
        %v1740 = vunpack.c.l.b16 %v1695
        %v1741 = vunpack.c.h.b16 %v1695
        %v1742 = vunpack.c.l.b16 %v1696
        %v1743 = vunpack.c.h.b16 %v1696
        %v1744 = vunpack.c.l.b16 %v1697
        %v1745 = vunpack.c.h.b16 %v1697
        %v1746 = vpack.c.b16 %v1714, %v1714
        %v1747 = vpack.c.b16 %v1715, %v1715
        %v1748 = vpack.c.b16 %v1716, %v1716
        %v1749 = vpack.c.b16 %v1717, %v1717
        %v1750 = vpack.c.b16 %v1718, %v1718
        %v1751 = vpack.c.b16 %v1719, %v1719
        %v1752 = vpack.c.b16 %v1720, %v1720
        %v1753 = vpack.c.b16 %v1721, %v1721
        %v1754 = vpack.c.b16 %v1722, %v1722
        %v1755 = vpack.c.b16 %v1723, %v1723
        %v1756 = vpack.c.b16 %v1724, %v1724
        %v1757 = vpack.c.b16 %v1725, %v1725
        %v1758 = vpack.c.b16 %v1726, %v1726
        %v1759 = vpack.c.b16 %v1727, %v1727
        %v1760 = vpack.c.b16 %v1728, %v1728
        %v1761 = vpack.c.b16 %v1729, %v1729
        %v1762 = vpack.c.b16 %v1730, %v1730
        %v1763 = vpack.c.b16 %v1731, %v1731
        %v1764 = vpack.c.b16 %v1732, %v1732
        %v1765 = vpack.c.b16 %v1733, %v1733
        %v1766 = vpack.c.b16 %v1734, %v1734
        %v1767 = vpack.c.b16 %v1735, %v1735
        %v1768 = vpack.c.b16 %v1736, %v1736
        %v1769 = vpack.c.b16 %v1737, %v1737
        %v1770 = vpack.c.b16 %v1738, %v1738
        %v1771 = vpack.c.b16 %v1739, %v1739
        %v1772 = vpack.c.b16 %v1740, %v1740
        %v1773 = vpack.c.b16 %v1741, %v1741
        %v1774 = vpack.c.b16 %v1742, %v1742
        %v1775 = vpack.c.b16 %v1743, %v1743
        %v1776 = vpack.c.b16 %v1744, %v1744
        %v1777 = vpack.c.b16 %v1745, %v1745
        %1810 = vst [vmem:[%s4] sm:$0xf] %v1746
        %1811 = vst [vmem:[%s4 + $0x4] sm:$0xf] %v1747
        %1812 = vst [vmem:[%s4 + $0x8] sm:$0xf] %v1748
        %1813 = vst [vmem:[%s4 + $0xc] sm:$0xf] %v1749
        %1814 = vst [vmem:[%s4 + $0x10] sm:$0xf] %v1750
        %1815 = vst [vmem:[%s4 + $0x14] sm:$0xf] %v1751
        %1816 = vst [vmem:[%s4 + $0x18] sm:$0xf] %v1752
        %1817 = vst [vmem:[%s4 + $0x1c] sm:$0xf] %v1753
        %1818 = vst [vmem:[%s4 + $0x20] sm:$0xf] %v1754
        %1819 = vst [vmem:[%s4 + $0x24] sm:$0xf] %v1755
        %1820 = vst [vmem:[%s4 + $0x28] sm:$0xf] %v1756
        %1821 = vst [vmem:[%s4 + $0x2c] sm:$0xf] %v1757
        %1822 = vst [vmem:[%s4 + $0x30] sm:$0xf] %v1758
        %1823 = vst [vmem:[%s4 + $0x34] sm:$0xf] %v1759
        %1824 = vst [vmem:[%s4 + $0x38] sm:$0xf] %v1760
        %1825 = vst [vmem:[%s4 + $0x3c] sm:$0xf] %v1761
        %1826 = vst [vmem:[%s4 + $0x40] sm:$0xf] %v1762
        %1827 = vst [vmem:[%s4 + $0x44] sm:$0xf] %v1763
        %1828 = vst [vmem:[%s4 + $0x48] sm:$0xf] %v1764
        %1829 = vst [vmem:[%s4 + $0x4c] sm:$0xf] %v1765
        %1830 = vst [vmem:[%s4 + $0x50] sm:$0xf] %v1766
        %1831 = vst [vmem:[%s4 + $0x54] sm:$0xf] %v1767
        %1832 = vst [vmem:[%s4 + $0x58] sm:$0xf] %v1768
        %1833 = vst [vmem:[%s4 + $0x5c] sm:$0xf] %v1769
        %1834 = vst [vmem:[%s4 + $0x60] sm:$0xf] %v1770
        %1835 = vst [vmem:[%s4 + $0x64] sm:$0xf] %v1771
        %1836 = vst [vmem:[%s4 + $0x68] sm:$0xf] %v1772
        %1837 = vst [vmem:[%s4 + $0x6c] sm:$0xf] %v1773
        %1838 = vst [vmem:[%s4 + $0x70] sm:$0xf] %v1774
        %1839 = vst [vmem:[%s4 + $0x74] sm:$0xf] %v1775
        %1840 = vst [vmem:[%s4 + $0x78] sm:$0xf] %v1776
        %1841 = vst [vmem:[%s4 + $0x7c] sm:$0xf] %v1777
        %v1842 = vld [vmem:[%s4 + $0x80] sm:$0xf]
        %v1843 = vld [vmem:[%s4 + $0x84] sm:$0xf]
        %v1844 = vld [vmem:[%s4 + $0x88] sm:$0xf]
        %v1845 = vld [vmem:[%s4 + $0x8c] sm:$0xf]
        %v1846 = vld [vmem:[%s4 + $0x90] sm:$0xf]
        %v1847 = vld [vmem:[%s4 + $0x94] sm:$0xf]
        %v1848 = vld [vmem:[%s4 + $0x98] sm:$0xf]
        %v1849 = vld [vmem:[%s4 + $0x9c] sm:$0xf]
        %v1850 = vld [vmem:[%s4 + $0xa0] sm:$0xf]
        %v1851 = vld [vmem:[%s4 + $0xa4] sm:$0xf]
        %v1852 = vld [vmem:[%s4 + $0xa8] sm:$0xf]
        %v1853 = vld [vmem:[%s4 + $0xac] sm:$0xf]
        %v1854 = vld [vmem:[%s4 + $0xb0] sm:$0xf]
        %v1855 = vld [vmem:[%s4 + $0xb4] sm:$0xf]
        %v1856 = vld [vmem:[%s4 + $0xb8] sm:$0xf]
        %v1857 = vld [vmem:[%s4 + $0xbc] sm:$0xf]
        %v1858 = vld [vmem:[%s4 + $0xc0] sm:$0xf]
        %v1859 = vld [vmem:[%s4 + $0xc4] sm:$0xf]
        %v1860 = vld [vmem:[%s4 + $0xc8] sm:$0xf]
        %v1861 = vld [vmem:[%s4 + $0xcc] sm:$0xf]
        %v1862 = vld [vmem:[%s4 + $0xd0] sm:$0xf]
        %v1863 = vld [vmem:[%s4 + $0xd4] sm:$0xf]
        %v1864 = vld [vmem:[%s4 + $0xd8] sm:$0xf]
        %v1865 = vld [vmem:[%s4 + $0xdc] sm:$0xf]
        %v1866 = vld [vmem:[%s4 + $0xe0] sm:$0xf]
        %v1867 = vld [vmem:[%s4 + $0xe4] sm:$0xf]
        %v1868 = vld [vmem:[%s4 + $0xe8] sm:$0xf]
        %v1869 = vld [vmem:[%s4 + $0xec] sm:$0xf]
        %v1870 = vld [vmem:[%s4 + $0xf0] sm:$0xf]
        %v1871 = vld [vmem:[%s4 + $0xf4] sm:$0xf]
        %v1872 = vld [vmem:[%s4 + $0xf8] sm:$0xf]
        %v1873 = vld [vmem:[%s4 + $0xfc] sm:$0xf]
        %v1874 = vunpack.c.l.bf16 %v1842
        %v1875 = vunpack.c.l.bf16 %v1843
        %v1876 = vunpack.c.l.bf16 %v1844
        %v1877 = vunpack.c.l.bf16 %v1845
        %v1878 = vunpack.c.l.bf16 %v1846
        %v1879 = vunpack.c.l.bf16 %v1847
        %v1880 = vunpack.c.l.bf16 %v1848
        %v1881 = vunpack.c.l.bf16 %v1849
        %v1882 = vunpack.c.l.bf16 %v1850
        %v1883 = vunpack.c.l.bf16 %v1851
        %v1884 = vunpack.c.l.bf16 %v1852
        %v1885 = vunpack.c.l.bf16 %v1853
        %v1886 = vunpack.c.l.bf16 %v1854
        %v1887 = vunpack.c.l.bf16 %v1855
        %v1888 = vunpack.c.l.bf16 %v1856
        %v1889 = vunpack.c.l.bf16 %v1857
        %v1890 = vunpack.c.l.bf16 %v1858
        %v1891 = vunpack.c.l.bf16 %v1859
        %v1892 = vunpack.c.l.bf16 %v1860
        %v1893 = vunpack.c.l.bf16 %v1861
        %v1894 = vunpack.c.l.bf16 %v1862
        %v1895 = vunpack.c.l.bf16 %v1863
        %v1896 = vunpack.c.l.bf16 %v1864
        %v1897 = vunpack.c.l.bf16 %v1865
        %v1898 = vunpack.c.l.bf16 %v1866
        %v1899 = vunpack.c.l.bf16 %v1867
        %v1900 = vunpack.c.l.bf16 %v1868
        %v1901 = vunpack.c.l.bf16 %v1869
        %v1902 = vunpack.c.l.bf16 %v1870
        %v1903 = vunpack.c.l.bf16 %v1871
        %v1904 = vunpack.c.l.bf16 %v1872
        %v1905 = vunpack.c.l.bf16 %v1873
        %v1906 = vmul.f32 %v1874, %v1578
        %v1907 = vmul.f32 %v1875, %v1578
        %v1908 = vmul.f32 %v1876, %v1578
        %v1909 = vmul.f32 %v1877, %v1578
        %v1910 = vmul.f32 %v1878, %v1578
        %v1911 = vmul.f32 %v1879, %v1578
        %v1912 = vmul.f32 %v1880, %v1578
        %v1913 = vmul.f32 %v1881, %v1578
        %v1914 = vmul.f32 %v1882, %v1578
        %v1915 = vmul.f32 %v1883, %v1578
        %v1916 = vmul.f32 %v1884, %v1578
        %v1917 = vmul.f32 %v1885, %v1578
        %v1918 = vmul.f32 %v1886, %v1578
        %v1919 = vmul.f32 %v1887, %v1578
        %v1920 = vmul.f32 %v1888, %v1578
        %v1921 = vmul.f32 %v1889, %v1578
        %v1922 = vmul.f32 %v1890, %v1578
        %v1923 = vmul.f32 %v1891, %v1578
        %v1924 = vmul.f32 %v1892, %v1578
        %v1925 = vmul.f32 %v1893, %v1578
        %v1926 = vmul.f32 %v1894, %v1578
        %v1927 = vmul.f32 %v1895, %v1578
        %v1928 = vmul.f32 %v1896, %v1578
        %v1929 = vmul.f32 %v1897, %v1578
        %v1930 = vmul.f32 %v1898, %v1578
        %v1931 = vmul.f32 %v1899, %v1578
        %v1932 = vmul.f32 %v1900, %v1578
        %v1933 = vmul.f32 %v1901, %v1578
        %v1934 = vmul.f32 %v1902, %v1578
        %v1935 = vmul.f32 %v1903, %v1578
        %v1936 = vmul.f32 %v1904, %v1578
        %v1937 = vmul.f32 %v1905, %v1578
        %v1938 = vadd.f32 %v1906, %v1616
        %v1939 = vadd.f32 %v1907, %v1616
        %v1940 = vadd.f32 %v1908, %v1616
        %v1941 = vadd.f32 %v1909, %v1616
        %v1942 = vadd.f32 %v1910, %v1616
        %v1943 = vadd.f32 %v1911, %v1616
        %v1944 = vadd.f32 %v1912, %v1616
        %v1945 = vadd.f32 %v1913, %v1616
        %v1946 = vadd.f32 %v1914, %v1616
        %v1947 = vadd.f32 %v1915, %v1616
        %v1948 = vadd.f32 %v1916, %v1616
        %v1949 = vadd.f32 %v1917, %v1616
        %v1950 = vadd.f32 %v1918, %v1616
        %v1951 = vadd.f32 %v1919, %v1616
        %v1952 = vadd.f32 %v1920, %v1616
        %v1953 = vadd.f32 %v1921, %v1616
        %v1954 = vadd.f32 %v1922, %v1616
        %v1955 = vadd.f32 %v1923, %v1616
        %v1956 = vadd.f32 %v1924, %v1616
        %v1957 = vadd.f32 %v1925, %v1616
        %v1958 = vadd.f32 %v1926, %v1616
        %v1959 = vadd.f32 %v1927, %v1616
        %v1960 = vadd.f32 %v1928, %v1616
        %v1961 = vadd.f32 %v1929, %v1616
        %v1962 = vadd.f32 %v1930, %v1616
        %v1963 = vadd.f32 %v1931, %v1616
        %v1964 = vadd.f32 %v1932, %v1616
        %v1965 = vadd.f32 %v1933, %v1616
        %v1966 = vadd.f32 %v1934, %v1616
        %v1967 = vadd.f32 %v1935, %v1616
        %v1968 = vadd.f32 %v1936, %v1616
        %v1969 = vadd.f32 %v1937, %v1616
        %v1970 = vmax.f32 %v1938, 0.0
        %v1971 = vmax.f32 %v1939, 0.0
        %v1972 = vmax.f32 %v1940, 0.0
        %v1973 = vmax.f32 %v1941, 0.0
        %v1974 = vmax.f32 %v1942, 0.0
        %v1975 = vmax.f32 %v1943, 0.0
        %v1976 = vmax.f32 %v1944, 0.0
        %v1977 = vmax.f32 %v1945, 0.0
        %v1978 = vmax.f32 %v1946, 0.0
        %v1979 = vmax.f32 %v1947, 0.0
        %v1980 = vmax.f32 %v1948, 0.0
        %v1981 = vmax.f32 %v1949, 0.0
        %v1982 = vmax.f32 %v1950, 0.0
        %v1983 = vmax.f32 %v1951, 0.0
        %v1984 = vmax.f32 %v1952, 0.0
        %v1985 = vmax.f32 %v1953, 0.0
        %v1986 = vmax.f32 %v1954, 0.0
        %v1987 = vmax.f32 %v1955, 0.0
        %v1988 = vmax.f32 %v1956, 0.0
        %v1989 = vmax.f32 %v1957, 0.0
        %v1990 = vmax.f32 %v1958, 0.0
        %v1991 = vmax.f32 %v1959, 0.0
        %v1992 = vmax.f32 %v1960, 0.0
        %v1993 = vmax.f32 %v1961, 0.0
        %v1994 = vmax.f32 %v1962, 0.0
        %v1995 = vmax.f32 %v1963, 0.0
        %v1996 = vmax.f32 %v1964, 0.0
        %v1997 = vmax.f32 %v1965, 0.0
        %v1998 = vmax.f32 %v1966, 0.0
        %v1999 = vmax.f32 %v1967, 0.0
        %v2000 = vmax.f32 %v1968, 0.0
        %v2001 = vmax.f32 %v1969, 0.0
        %v2002 = vpack.c.bf16 %v1971, %v1970
        %v2003 = vpack.c.bf16 %v1973, %v1972
        %v2004 = vpack.c.bf16 %v1975, %v1974
        %v2005 = vpack.c.bf16 %v1977, %v1976
        %v2006 = vpack.c.bf16 %v1979, %v1978
        %v2007 = vpack.c.bf16 %v1981, %v1980
        %v2008 = vpack.c.bf16 %v1983, %v1982
        %v2009 = vpack.c.bf16 %v1985, %v1984
        %v2010 = vpack.c.bf16 %v1987, %v1986
        %v2011 = vpack.c.bf16 %v1989, %v1988
        %v2012 = vpack.c.bf16 %v1991, %v1990
        %v2013 = vpack.c.bf16 %v1993, %v1992
        %v2014 = vpack.c.bf16 %v1995, %v1994
        %v2015 = vpack.c.bf16 %v1997, %v1996
        %v2016 = vpack.c.bf16 %v1999, %v1998
        %v2017 = vpack.c.bf16 %v2001, %v2000
        %v2034 = vunpack.c.l.b16 %v2002
        %v2035 = vunpack.c.h.b16 %v2002
        %v2036 = vunpack.c.l.b16 %v2003
        %v2037 = vunpack.c.h.b16 %v2003
        %v2038 = vunpack.c.l.b16 %v2004
        %v2039 = vunpack.c.h.b16 %v2004
        %v2040 = vunpack.c.l.b16 %v2005
        %v2041 = vunpack.c.h.b16 %v2005
        %v2042 = vunpack.c.l.b16 %v2006
        %v2043 = vunpack.c.h.b16 %v2006
        %v2044 = vunpack.c.l.b16 %v2007
        %v2045 = vunpack.c.h.b16 %v2007
        %v2046 = vunpack.c.l.b16 %v2008
        %v2047 = vunpack.c.h.b16 %v2008
        %v2048 = vunpack.c.l.b16 %v2009
        %v2049 = vunpack.c.h.b16 %v2009
        %v2050 = vunpack.c.l.b16 %v2010
        %v2051 = vunpack.c.h.b16 %v2010
        %v2052 = vunpack.c.l.b16 %v2011
        %v2053 = vunpack.c.h.b16 %v2011
        %v2054 = vunpack.c.l.b16 %v2012
        %v2055 = vunpack.c.h.b16 %v2012
        %v2056 = vunpack.c.l.b16 %v2013
        %v2057 = vunpack.c.h.b16 %v2013
        %v2058 = vunpack.c.l.b16 %v2014
        %v2059 = vunpack.c.h.b16 %v2014
        %v2060 = vunpack.c.l.b16 %v2015
        %v2061 = vunpack.c.h.b16 %v2015
        %v2062 = vunpack.c.l.b16 %v2016
        %v2063 = vunpack.c.h.b16 %v2016
        %v2064 = vunpack.c.l.b16 %v2017
        %v2065 = vunpack.c.h.b16 %v2017
        %v2066 = vpack.c.b16 %v2034, %v2034
        %v2067 = vpack.c.b16 %v2035, %v2035
        %v2068 = vpack.c.b16 %v2036, %v2036
        %v2069 = vpack.c.b16 %v2037, %v2037
        %v2070 = vpack.c.b16 %v2038, %v2038
        %v2071 = vpack.c.b16 %v2039, %v2039
        %v2072 = vpack.c.b16 %v2040, %v2040
        %v2073 = vpack.c.b16 %v2041, %v2041
        %v2074 = vpack.c.b16 %v2042, %v2042
        %v2075 = vpack.c.b16 %v2043, %v2043
        %v2076 = vpack.c.b16 %v2044, %v2044
        %v2077 = vpack.c.b16 %v2045, %v2045
        %v2078 = vpack.c.b16 %v2046, %v2046
        %v2079 = vpack.c.b16 %v2047, %v2047
        %v2080 = vpack.c.b16 %v2048, %v2048
        %v2081 = vpack.c.b16 %v2049, %v2049
        %v2082 = vpack.c.b16 %v2050, %v2050
        %v2083 = vpack.c.b16 %v2051, %v2051
        %v2084 = vpack.c.b16 %v2052, %v2052
        %v2085 = vpack.c.b16 %v2053, %v2053
        %v2086 = vpack.c.b16 %v2054, %v2054
        %v2087 = vpack.c.b16 %v2055, %v2055
        %v2088 = vpack.c.b16 %v2056, %v2056
        %v2089 = vpack.c.b16 %v2057, %v2057
        %v2090 = vpack.c.b16 %v2058, %v2058
        %v2091 = vpack.c.b16 %v2059, %v2059
        %v2092 = vpack.c.b16 %v2060, %v2060
        %v2093 = vpack.c.b16 %v2061, %v2061
        %v2094 = vpack.c.b16 %v2062, %v2062
        %v2095 = vpack.c.b16 %v2063, %v2063
        %v2096 = vpack.c.b16 %v2064, %v2064
        %v2097 = vpack.c.b16 %v2065, %v2065
        %2130 = vst [vmem:[%s4 + $0x80] sm:$0xf] %v2066
        %2131 = vst [vmem:[%s4 + $0x84] sm:$0xf] %v2067
        %2132 = vst [vmem:[%s4 + $0x88] sm:$0xf] %v2068
        %2133 = vst [vmem:[%s4 + $0x8c] sm:$0xf] %v2069
        %2134 = vst [vmem:[%s4 + $0x90] sm:$0xf] %v2070
        %2135 = vst [vmem:[%s4 + $0x94] sm:$0xf] %v2071
        %2136 = vst [vmem:[%s4 + $0x98] sm:$0xf] %v2072
        %2137 = vst [vmem:[%s4 + $0x9c] sm:$0xf] %v2073
        %2138 = vst [vmem:[%s4 + $0xa0] sm:$0xf] %v2074
        %2139 = vst [vmem:[%s4 + $0xa4] sm:$0xf] %v2075
        %2140 = vst [vmem:[%s4 + $0xa8] sm:$0xf] %v2076
        %2141 = vst [vmem:[%s4 + $0xac] sm:$0xf] %v2077
        %2142 = vst [vmem:[%s4 + $0xb0] sm:$0xf] %v2078
        %2143 = vst [vmem:[%s4 + $0xb4] sm:$0xf] %v2079
        %2144 = vst [vmem:[%s4 + $0xb8] sm:$0xf] %v2080
        %2145 = vst [vmem:[%s4 + $0xbc] sm:$0xf] %v2081
        %2146 = vst [vmem:[%s4 + $0xc0] sm:$0xf] %v2082
        %2147 = vst [vmem:[%s4 + $0xc4] sm:$0xf] %v2083
        %2148 = vst [vmem:[%s4 + $0xc8] sm:$0xf] %v2084
        %2149 = vst [vmem:[%s4 + $0xcc] sm:$0xf] %v2085
        %2150 = vst [vmem:[%s4 + $0xd0] sm:$0xf] %v2086
        %2151 = vst [vmem:[%s4 + $0xd4] sm:$0xf] %v2087
        %2152 = vst [vmem:[%s4 + $0xd8] sm:$0xf] %v2088
        %2153 = vst [vmem:[%s4 + $0xdc] sm:$0xf] %v2089
        %2154 = vst [vmem:[%s4 + $0xe0] sm:$0xf] %v2090
        %2155 = vst [vmem:[%s4 + $0xe4] sm:$0xf] %v2091
        %2156 = vst [vmem:[%s4 + $0xe8] sm:$0xf] %v2092
        %2157 = vst [vmem:[%s4 + $0xec] sm:$0xf] %v2093
        %2158 = vst [vmem:[%s4 + $0xf0] sm:$0xf] %v2094
        %2159 = vst [vmem:[%s4 + $0xf4] sm:$0xf] %v2095
        %2160 = vst [vmem:[%s4 + $0xf8] sm:$0xf] %v2096
        %2161 = vst [vmem:[%s4 + $0xfc] sm:$0xf] %v2097
        %v2162 = vld [vmem:[%s4 + $0x100] sm:$0xf]
        %v2163 = vld [vmem:[%s4 + $0x104] sm:$0xf]
        %v2164 = vld [vmem:[%s4 + $0x108] sm:$0xf]
        %v2165 = vld [vmem:[%s4 + $0x10c] sm:$0xf]
        %v2166 = vld [vmem:[%s4 + $0x110] sm:$0xf]
        %v2167 = vld [vmem:[%s4 + $0x114] sm:$0xf]
        %v2168 = vld [vmem:[%s4 + $0x118] sm:$0xf]
        %v2169 = vld [vmem:[%s4 + $0x11c] sm:$0xf]
        %v2170 = vld [vmem:[%s4 + $0x120] sm:$0xf]
        %v2171 = vld [vmem:[%s4 + $0x124] sm:$0xf]
        %v2172 = vld [vmem:[%s4 + $0x128] sm:$0xf]
        %v2173 = vld [vmem:[%s4 + $0x12c] sm:$0xf]
        %v2174 = vld [vmem:[%s4 + $0x130] sm:$0xf]
        %v2175 = vld [vmem:[%s4 + $0x134] sm:$0xf]
        %v2176 = vld [vmem:[%s4 + $0x138] sm:$0xf]
        %v2177 = vld [vmem:[%s4 + $0x13c] sm:$0xf]
        %v2178 = vld [vmem:[%s4 + $0x140] sm:$0xf]
        %v2179 = vld [vmem:[%s4 + $0x144] sm:$0xf]
        %v2180 = vld [vmem:[%s4 + $0x148] sm:$0xf]
        %v2181 = vld [vmem:[%s4 + $0x14c] sm:$0xf]
        %v2182 = vld [vmem:[%s4 + $0x150] sm:$0xf]
        %v2183 = vld [vmem:[%s4 + $0x154] sm:$0xf]
        %v2184 = vld [vmem:[%s4 + $0x158] sm:$0xf]
        %v2185 = vld [vmem:[%s4 + $0x15c] sm:$0xf]
        %v2186 = vld [vmem:[%s4 + $0x160] sm:$0xf]
        %v2187 = vld [vmem:[%s4 + $0x164] sm:$0xf]
        %v2188 = vld [vmem:[%s4 + $0x168] sm:$0xf]
        %v2189 = vld [vmem:[%s4 + $0x16c] sm:$0xf]
        %v2190 = vld [vmem:[%s4 + $0x170] sm:$0xf]
        %v2191 = vld [vmem:[%s4 + $0x174] sm:$0xf]
        %v2192 = vld [vmem:[%s4 + $0x178] sm:$0xf]
        %v2193 = vld [vmem:[%s4 + $0x17c] sm:$0xf]
        %v2194 = vunpack.c.l.bf16 %v2162
        %v2195 = vunpack.c.l.bf16 %v2163
        %v2196 = vunpack.c.l.bf16 %v2164
        %v2197 = vunpack.c.l.bf16 %v2165
        %v2198 = vunpack.c.l.bf16 %v2166
        %v2199 = vunpack.c.l.bf16 %v2167
        %v2200 = vunpack.c.l.bf16 %v2168
        %v2201 = vunpack.c.l.bf16 %v2169
        %v2202 = vunpack.c.l.bf16 %v2170
        %v2203 = vunpack.c.l.bf16 %v2171
        %v2204 = vunpack.c.l.bf16 %v2172
        %v2205 = vunpack.c.l.bf16 %v2173
        %v2206 = vunpack.c.l.bf16 %v2174
        %v2207 = vunpack.c.l.bf16 %v2175
        %v2208 = vunpack.c.l.bf16 %v2176
        %v2209 = vunpack.c.l.bf16 %v2177
        %v2210 = vunpack.c.l.bf16 %v2178
        %v2211 = vunpack.c.l.bf16 %v2179
        %v2212 = vunpack.c.l.bf16 %v2180
        %v2213 = vunpack.c.l.bf16 %v2181
        %v2214 = vunpack.c.l.bf16 %v2182
        %v2215 = vunpack.c.l.bf16 %v2183
        %v2216 = vunpack.c.l.bf16 %v2184
        %v2217 = vunpack.c.l.bf16 %v2185
        %v2218 = vunpack.c.l.bf16 %v2186
        %v2219 = vunpack.c.l.bf16 %v2187
        %v2220 = vunpack.c.l.bf16 %v2188
        %v2221 = vunpack.c.l.bf16 %v2189
        %v2222 = vunpack.c.l.bf16 %v2190
        %v2223 = vunpack.c.l.bf16 %v2191
        %v2224 = vunpack.c.l.bf16 %v2192
        %v2225 = vunpack.c.l.bf16 %v2193
        %v2226 = vmul.f32 %v2194, %v1578
        %v2227 = vmul.f32 %v2195, %v1578
        %v2228 = vmul.f32 %v2196, %v1578
        %v2229 = vmul.f32 %v2197, %v1578
        %v2230 = vmul.f32 %v2198, %v1578
        %v2231 = vmul.f32 %v2199, %v1578
        %v2232 = vmul.f32 %v2200, %v1578
        %v2233 = vmul.f32 %v2201, %v1578
        %v2234 = vmul.f32 %v2202, %v1578
        %v2235 = vmul.f32 %v2203, %v1578
        %v2236 = vmul.f32 %v2204, %v1578
        %v2237 = vmul.f32 %v2205, %v1578
        %v2238 = vmul.f32 %v2206, %v1578
        %v2239 = vmul.f32 %v2207, %v1578
        %v2240 = vmul.f32 %v2208, %v1578
        %v2241 = vmul.f32 %v2209, %v1578
        %v2242 = vmul.f32 %v2210, %v1578
        %v2243 = vmul.f32 %v2211, %v1578
        %v2244 = vmul.f32 %v2212, %v1578
        %v2245 = vmul.f32 %v2213, %v1578
        %v2246 = vmul.f32 %v2214, %v1578
        %v2247 = vmul.f32 %v2215, %v1578
        %v2248 = vmul.f32 %v2216, %v1578
        %v2249 = vmul.f32 %v2217, %v1578
        %v2250 = vmul.f32 %v2218, %v1578
        %v2251 = vmul.f32 %v2219, %v1578
        %v2252 = vmul.f32 %v2220, %v1578
        %v2253 = vmul.f32 %v2221, %v1578
        %v2254 = vmul.f32 %v2222, %v1578
        %v2255 = vmul.f32 %v2223, %v1578
        %v2256 = vmul.f32 %v2224, %v1578
        %v2257 = vmul.f32 %v2225, %v1578
        %v2258 = vadd.f32 %v2226, %v1616
        %v2259 = vadd.f32 %v2227, %v1616
        %v2260 = vadd.f32 %v2228, %v1616
        %v2261 = vadd.f32 %v2229, %v1616
        %v2262 = vadd.f32 %v2230, %v1616
        %v2263 = vadd.f32 %v2231, %v1616
        %v2264 = vadd.f32 %v2232, %v1616
        %v2265 = vadd.f32 %v2233, %v1616
        %v2266 = vadd.f32 %v2234, %v1616
        %v2267 = vadd.f32 %v2235, %v1616
        %v2268 = vadd.f32 %v2236, %v1616
        %v2269 = vadd.f32 %v2237, %v1616
        %v2270 = vadd.f32 %v2238, %v1616
        %v2271 = vadd.f32 %v2239, %v1616
        %v2272 = vadd.f32 %v2240, %v1616
        %v2273 = vadd.f32 %v2241, %v1616
        %v2274 = vadd.f32 %v2242, %v1616
        %v2275 = vadd.f32 %v2243, %v1616
        %v2276 = vadd.f32 %v2244, %v1616
        %v2277 = vadd.f32 %v2245, %v1616
        %v2278 = vadd.f32 %v2246, %v1616
        %v2279 = vadd.f32 %v2247, %v1616
        %v2280 = vadd.f32 %v2248, %v1616
        %v2281 = vadd.f32 %v2249, %v1616
        %v2282 = vadd.f32 %v2250, %v1616
        %v2283 = vadd.f32 %v2251, %v1616
        %v2284 = vadd.f32 %v2252, %v1616
        %v2285 = vadd.f32 %v2253, %v1616
        %v2286 = vadd.f32 %v2254, %v1616
        %v2287 = vadd.f32 %v2255, %v1616
        %v2288 = vadd.f32 %v2256, %v1616
        %v2289 = vadd.f32 %v2257, %v1616
        %v2290 = vmax.f32 %v2258, 0.0
        %v2291 = vmax.f32 %v2259, 0.0
        %v2292 = vmax.f32 %v2260, 0.0
        %v2293 = vmax.f32 %v2261, 0.0
        %v2294 = vmax.f32 %v2262, 0.0
        %v2295 = vmax.f32 %v2263, 0.0
        %v2296 = vmax.f32 %v2264, 0.0
        %v2297 = vmax.f32 %v2265, 0.0
        %v2298 = vmax.f32 %v2266, 0.0
        %v2299 = vmax.f32 %v2267, 0.0
        %v2300 = vmax.f32 %v2268, 0.0
        %v2301 = vmax.f32 %v2269, 0.0
        %v2302 = vmax.f32 %v2270, 0.0
        %v2303 = vmax.f32 %v2271, 0.0
        %v2304 = vmax.f32 %v2272, 0.0
        %v2305 = vmax.f32 %v2273, 0.0
        %v2306 = vmax.f32 %v2274, 0.0
        %v2307 = vmax.f32 %v2275, 0.0
        %v2308 = vmax.f32 %v2276, 0.0
        %v2309 = vmax.f32 %v2277, 0.0
        %v2310 = vmax.f32 %v2278, 0.0
        %v2311 = vmax.f32 %v2279, 0.0
        %v2312 = vmax.f32 %v2280, 0.0
        %v2313 = vmax.f32 %v2281, 0.0
        %v2314 = vmax.f32 %v2282, 0.0
        %v2315 = vmax.f32 %v2283, 0.0
        %v2316 = vmax.f32 %v2284, 0.0
        %v2317 = vmax.f32 %v2285, 0.0
        %v2318 = vmax.f32 %v2286, 0.0
        %v2319 = vmax.f32 %v2287, 0.0
        %v2320 = vmax.f32 %v2288, 0.0
        %v2321 = vmax.f32 %v2289, 0.0
        %v2322 = vpack.c.bf16 %v2291, %v2290
        %v2323 = vpack.c.bf16 %v2293, %v2292
        %v2324 = vpack.c.bf16 %v2295, %v2294
        %v2325 = vpack.c.bf16 %v2297, %v2296
        %v2326 = vpack.c.bf16 %v2299, %v2298
        %v2327 = vpack.c.bf16 %v2301, %v2300
        %v2328 = vpack.c.bf16 %v2303, %v2302
        %v2329 = vpack.c.bf16 %v2305, %v2304
        %v2330 = vpack.c.bf16 %v2307, %v2306
        %v2331 = vpack.c.bf16 %v2309, %v2308
        %v2332 = vpack.c.bf16 %v2311, %v2310
        %v2333 = vpack.c.bf16 %v2313, %v2312
        %v2334 = vpack.c.bf16 %v2315, %v2314
        %v2335 = vpack.c.bf16 %v2317, %v2316
        %v2336 = vpack.c.bf16 %v2319, %v2318
        %v2337 = vpack.c.bf16 %v2321, %v2320
        %v2354 = vunpack.c.l.b16 %v2322
        %v2355 = vunpack.c.h.b16 %v2322
        %v2356 = vunpack.c.l.b16 %v2323
        %v2357 = vunpack.c.h.b16 %v2323
        %v2358 = vunpack.c.l.b16 %v2324
        %v2359 = vunpack.c.h.b16 %v2324
        %v2360 = vunpack.c.l.b16 %v2325
        %v2361 = vunpack.c.h.b16 %v2325
        %v2362 = vunpack.c.l.b16 %v2326
        %v2363 = vunpack.c.h.b16 %v2326
        %v2364 = vunpack.c.l.b16 %v2327
        %v2365 = vunpack.c.h.b16 %v2327
        %v2366 = vunpack.c.l.b16 %v2328
        %v2367 = vunpack.c.h.b16 %v2328
        %v2368 = vunpack.c.l.b16 %v2329
        %v2369 = vunpack.c.h.b16 %v2329
        %v2370 = vunpack.c.l.b16 %v2330
        %v2371 = vunpack.c.h.b16 %v2330
        %v2372 = vunpack.c.l.b16 %v2331
        %v2373 = vunpack.c.h.b16 %v2331
        %v2374 = vunpack.c.l.b16 %v2332
        %v2375 = vunpack.c.h.b16 %v2332
        %v2376 = vunpack.c.l.b16 %v2333
        %v2377 = vunpack.c.h.b16 %v2333
        %v2378 = vunpack.c.l.b16 %v2334
        %v2379 = vunpack.c.h.b16 %v2334
        %v2380 = vunpack.c.l.b16 %v2335
        %v2381 = vunpack.c.h.b16 %v2335
        %v2382 = vunpack.c.l.b16 %v2336
        %v2383 = vunpack.c.h.b16 %v2336
        %v2384 = vunpack.c.l.b16 %v2337
        %v2385 = vunpack.c.h.b16 %v2337
        %v2386 = vpack.c.b16 %v2354, %v2354
        %v2387 = vpack.c.b16 %v2355, %v2355
        %v2388 = vpack.c.b16 %v2356, %v2356
        %v2389 = vpack.c.b16 %v2357, %v2357
        %v2390 = vpack.c.b16 %v2358, %v2358
        %v2391 = vpack.c.b16 %v2359, %v2359
        %v2392 = vpack.c.b16 %v2360, %v2360
        %v2393 = vpack.c.b16 %v2361, %v2361
        %v2394 = vpack.c.b16 %v2362, %v2362
        %v2395 = vpack.c.b16 %v2363, %v2363
        %v2396 = vpack.c.b16 %v2364, %v2364
        %v2397 = vpack.c.b16 %v2365, %v2365
        %v2398 = vpack.c.b16 %v2366, %v2366
        %v2399 = vpack.c.b16 %v2367, %v2367
        %v2400 = vpack.c.b16 %v2368, %v2368
        %v2401 = vpack.c.b16 %v2369, %v2369
        %v2402 = vpack.c.b16 %v2370, %v2370
        %v2403 = vpack.c.b16 %v2371, %v2371
        %v2404 = vpack.c.b16 %v2372, %v2372
        %v2405 = vpack.c.b16 %v2373, %v2373
        %v2406 = vpack.c.b16 %v2374, %v2374
        %v2407 = vpack.c.b16 %v2375, %v2375
        %v2408 = vpack.c.b16 %v2376, %v2376
        %v2409 = vpack.c.b16 %v2377, %v2377
        %v2410 = vpack.c.b16 %v2378, %v2378
        %v2411 = vpack.c.b16 %v2379, %v2379
        %v2412 = vpack.c.b16 %v2380, %v2380
        %v2413 = vpack.c.b16 %v2381, %v2381
        %v2414 = vpack.c.b16 %v2382, %v2382
        %v2415 = vpack.c.b16 %v2383, %v2383
        %v2416 = vpack.c.b16 %v2384, %v2384
        %v2417 = vpack.c.b16 %v2385, %v2385
        %2450 = vst [vmem:[%s4 + $0x100] sm:$0xf] %v2386
        %2451 = vst [vmem:[%s4 + $0x104] sm:$0xf] %v2387
        %2452 = vst [vmem:[%s4 + $0x108] sm:$0xf] %v2388
        %2453 = vst [vmem:[%s4 + $0x10c] sm:$0xf] %v2389
        %2454 = vst [vmem:[%s4 + $0x110] sm:$0xf] %v2390
        %2455 = vst [vmem:[%s4 + $0x114] sm:$0xf] %v2391
        %2456 = vst [vmem:[%s4 + $0x118] sm:$0xf] %v2392
        %2457 = vst [vmem:[%s4 + $0x11c] sm:$0xf] %v2393
        %2458 = vst [vmem:[%s4 + $0x120] sm:$0xf] %v2394
        %2459 = vst [vmem:[%s4 + $0x124] sm:$0xf] %v2395
        %2460 = vst [vmem:[%s4 + $0x128] sm:$0xf] %v2396
        %2461 = vst [vmem:[%s4 + $0x12c] sm:$0xf] %v2397
        %2462 = vst [vmem:[%s4 + $0x130] sm:$0xf] %v2398
        %2463 = vst [vmem:[%s4 + $0x134] sm:$0xf] %v2399
        %2464 = vst [vmem:[%s4 + $0x138] sm:$0xf] %v2400
        %2465 = vst [vmem:[%s4 + $0x13c] sm:$0xf] %v2401
        %2466 = vst [vmem:[%s4 + $0x140] sm:$0xf] %v2402
        %2467 = vst [vmem:[%s4 + $0x144] sm:$0xf] %v2403
        %2468 = vst [vmem:[%s4 + $0x148] sm:$0xf] %v2404
        %2469 = vst [vmem:[%s4 + $0x14c] sm:$0xf] %v2405
        %2470 = vst [vmem:[%s4 + $0x150] sm:$0xf] %v2406
        %2471 = vst [vmem:[%s4 + $0x154] sm:$0xf] %v2407
        %2472 = vst [vmem:[%s4 + $0x158] sm:$0xf] %v2408
        %2473 = vst [vmem:[%s4 + $0x15c] sm:$0xf] %v2409
        %2474 = vst [vmem:[%s4 + $0x160] sm:$0xf] %v2410
        %2475 = vst [vmem:[%s4 + $0x164] sm:$0xf] %v2411
        %2476 = vst [vmem:[%s4 + $0x168] sm:$0xf] %v2412
        %2477 = vst [vmem:[%s4 + $0x16c] sm:$0xf] %v2413
        %2478 = vst [vmem:[%s4 + $0x170] sm:$0xf] %v2414
        %2479 = vst [vmem:[%s4 + $0x174] sm:$0xf] %v2415
        %2480 = vst [vmem:[%s4 + $0x178] sm:$0xf] %v2416
        %2481 = vst [vmem:[%s4 + $0x17c] sm:$0xf] %v2417
        %v2482 = vld [vmem:[%s4 + $0x180] sm:$0xf]
        %v2483 = vld [vmem:[%s4 + $0x184] sm:$0xf]
        %v2484 = vld [vmem:[%s4 + $0x188] sm:$0xf]
        %v2485 = vld [vmem:[%s4 + $0x18c] sm:$0xf]
        %v2486 = vld [vmem:[%s4 + $0x190] sm:$0xf]
        %v2487 = vld [vmem:[%s4 + $0x194] sm:$0xf]
        %v2488 = vld [vmem:[%s4 + $0x198] sm:$0xf]
        %v2489 = vld [vmem:[%s4 + $0x19c] sm:$0xf]
        %v2490 = vld [vmem:[%s4 + $0x1a0] sm:$0xf]
        %v2491 = vld [vmem:[%s4 + $0x1a4] sm:$0xf]
        %v2492 = vld [vmem:[%s4 + $0x1a8] sm:$0xf]
        %v2493 = vld [vmem:[%s4 + $0x1ac] sm:$0xf]
        %v2494 = vld [vmem:[%s4 + $0x1b0] sm:$0xf]
        %v2495 = vld [vmem:[%s4 + $0x1b4] sm:$0xf]
        %v2496 = vld [vmem:[%s4 + $0x1b8] sm:$0xf]
        %v2497 = vld [vmem:[%s4 + $0x1bc] sm:$0xf]
        %v2498 = vld [vmem:[%s4 + $0x1c0] sm:$0xf]
        %v2499 = vld [vmem:[%s4 + $0x1c4] sm:$0xf]
        %v2500 = vld [vmem:[%s4 + $0x1c8] sm:$0xf]
        %v2501 = vld [vmem:[%s4 + $0x1cc] sm:$0xf]
        %v2502 = vld [vmem:[%s4 + $0x1d0] sm:$0xf]
        %v2503 = vld [vmem:[%s4 + $0x1d4] sm:$0xf]
        %v2504 = vld [vmem:[%s4 + $0x1d8] sm:$0xf]
        %v2505 = vld [vmem:[%s4 + $0x1dc] sm:$0xf]
        %v2506 = vld [vmem:[%s4 + $0x1e0] sm:$0xf]
        %v2507 = vld [vmem:[%s4 + $0x1e4] sm:$0xf]
        %v2508 = vld [vmem:[%s4 + $0x1e8] sm:$0xf]
        %v2509 = vld [vmem:[%s4 + $0x1ec] sm:$0xf]
        %v2510 = vld [vmem:[%s4 + $0x1f0] sm:$0xf]
        %v2511 = vld [vmem:[%s4 + $0x1f4] sm:$0xf]
        %v2512 = vld [vmem:[%s4 + $0x1f8] sm:$0xf]
        %v2513 = vld [vmem:[%s4 + $0x1fc] sm:$0xf]
        %v2514 = vunpack.c.l.bf16 %v2482
        %v2515 = vunpack.c.l.bf16 %v2483
        %v2516 = vunpack.c.l.bf16 %v2484
        %v2517 = vunpack.c.l.bf16 %v2485
        %v2518 = vunpack.c.l.bf16 %v2486
        %v2519 = vunpack.c.l.bf16 %v2487
        %v2520 = vunpack.c.l.bf16 %v2488
        %v2521 = vunpack.c.l.bf16 %v2489
        %v2522 = vunpack.c.l.bf16 %v2490
        %v2523 = vunpack.c.l.bf16 %v2491
        %v2524 = vunpack.c.l.bf16 %v2492
        %v2525 = vunpack.c.l.bf16 %v2493
        %v2526 = vunpack.c.l.bf16 %v2494
        %v2527 = vunpack.c.l.bf16 %v2495
        %v2528 = vunpack.c.l.bf16 %v2496
        %v2529 = vunpack.c.l.bf16 %v2497
        %v2530 = vunpack.c.l.bf16 %v2498
        %v2531 = vunpack.c.l.bf16 %v2499
        %v2532 = vunpack.c.l.bf16 %v2500
        %v2533 = vunpack.c.l.bf16 %v2501
        %v2534 = vunpack.c.l.bf16 %v2502
        %v2535 = vunpack.c.l.bf16 %v2503
        %v2536 = vunpack.c.l.bf16 %v2504
        %v2537 = vunpack.c.l.bf16 %v2505
        %v2538 = vunpack.c.l.bf16 %v2506
        %v2539 = vunpack.c.l.bf16 %v2507
        %v2540 = vunpack.c.l.bf16 %v2508
        %v2541 = vunpack.c.l.bf16 %v2509
        %v2542 = vunpack.c.l.bf16 %v2510
        %v2543 = vunpack.c.l.bf16 %v2511
        %v2544 = vunpack.c.l.bf16 %v2512
        %v2545 = vunpack.c.l.bf16 %v2513
        %v2546 = vmul.f32 %v2514, %v1578
        %v2547 = vmul.f32 %v2515, %v1578
        %v2548 = vmul.f32 %v2516, %v1578
        %v2549 = vmul.f32 %v2517, %v1578
        %v2550 = vmul.f32 %v2518, %v1578
        %v2551 = vmul.f32 %v2519, %v1578
        %v2552 = vmul.f32 %v2520, %v1578
        %v2553 = vmul.f32 %v2521, %v1578
        %v2554 = vmul.f32 %v2522, %v1578
        %v2555 = vmul.f32 %v2523, %v1578
        %v2556 = vmul.f32 %v2524, %v1578
        %v2557 = vmul.f32 %v2525, %v1578
        %v2558 = vmul.f32 %v2526, %v1578
        %v2559 = vmul.f32 %v2527, %v1578
        %v2560 = vmul.f32 %v2528, %v1578
        %v2561 = vmul.f32 %v2529, %v1578
        %v2562 = vmul.f32 %v2530, %v1578
        %v2563 = vmul.f32 %v2531, %v1578
        %v2564 = vmul.f32 %v2532, %v1578
        %v2565 = vmul.f32 %v2533, %v1578
        %v2566 = vmul.f32 %v2534, %v1578
        %v2567 = vmul.f32 %v2535, %v1578
        %v2568 = vmul.f32 %v2536, %v1578
        %v2569 = vmul.f32 %v2537, %v1578
        %v2570 = vmul.f32 %v2538, %v1578
        %v2571 = vmul.f32 %v2539, %v1578
        %v2572 = vmul.f32 %v2540, %v1578
        %v2573 = vmul.f32 %v2541, %v1578
        %v2574 = vmul.f32 %v2542, %v1578
        %v2575 = vmul.f32 %v2543, %v1578
        %v2576 = vmul.f32 %v2544, %v1578
        %v2577 = vmul.f32 %v2545, %v1578
        %v2578 = vadd.f32 %v2546, %v1616
        %v2579 = vadd.f32 %v2547, %v1616
        %v2580 = vadd.f32 %v2548, %v1616
        %v2581 = vadd.f32 %v2549, %v1616
        %v2582 = vadd.f32 %v2550, %v1616
        %v2583 = vadd.f32 %v2551, %v1616
        %v2584 = vadd.f32 %v2552, %v1616
        %v2585 = vadd.f32 %v2553, %v1616
        %v2586 = vadd.f32 %v2554, %v1616
        %v2587 = vadd.f32 %v2555, %v1616
        %v2588 = vadd.f32 %v2556, %v1616
        %v2589 = vadd.f32 %v2557, %v1616
        %v2590 = vadd.f32 %v2558, %v1616
        %v2591 = vadd.f32 %v2559, %v1616
        %v2592 = vadd.f32 %v2560, %v1616
        %v2593 = vadd.f32 %v2561, %v1616
        %v2594 = vadd.f32 %v2562, %v1616
        %v2595 = vadd.f32 %v2563, %v1616
        %v2596 = vadd.f32 %v2564, %v1616
        %v2597 = vadd.f32 %v2565, %v1616
        %v2598 = vadd.f32 %v2566, %v1616
        %v2599 = vadd.f32 %v2567, %v1616
        %v2600 = vadd.f32 %v2568, %v1616
        %v2601 = vadd.f32 %v2569, %v1616
        %v2602 = vadd.f32 %v2570, %v1616
        %v2603 = vadd.f32 %v2571, %v1616
        %v2604 = vadd.f32 %v2572, %v1616
        %v2605 = vadd.f32 %v2573, %v1616
        %v2606 = vadd.f32 %v2574, %v1616
        %v2607 = vadd.f32 %v2575, %v1616
        %v2608 = vadd.f32 %v2576, %v1616
        %v2609 = vadd.f32 %v2577, %v1616
        %v2610 = vmax.f32 %v2578, 0.0
        %v2611 = vmax.f32 %v2579, 0.0
        %v2612 = vmax.f32 %v2580, 0.0
        %v2613 = vmax.f32 %v2581, 0.0
        %v2614 = vmax.f32 %v2582, 0.0
        %v2615 = vmax.f32 %v2583, 0.0
        %v2616 = vmax.f32 %v2584, 0.0
        %v2617 = vmax.f32 %v2585, 0.0
        %v2618 = vmax.f32 %v2586, 0.0
        %v2619 = vmax.f32 %v2587, 0.0
        %v2620 = vmax.f32 %v2588, 0.0
        %v2621 = vmax.f32 %v2589, 0.0
        %v2622 = vmax.f32 %v2590, 0.0
        %v2623 = vmax.f32 %v2591, 0.0
        %v2624 = vmax.f32 %v2592, 0.0
        %v2625 = vmax.f32 %v2593, 0.0
        %v2626 = vmax.f32 %v2594, 0.0
        %v2627 = vmax.f32 %v2595, 0.0
        %v2628 = vmax.f32 %v2596, 0.0
        %v2629 = vmax.f32 %v2597, 0.0
        %v2630 = vmax.f32 %v2598, 0.0
        %v2631 = vmax.f32 %v2599, 0.0
        %v2632 = vmax.f32 %v2600, 0.0
        %v2633 = vmax.f32 %v2601, 0.0
        %v2634 = vmax.f32 %v2602, 0.0
        %v2635 = vmax.f32 %v2603, 0.0
        %v2636 = vmax.f32 %v2604, 0.0
        %v2637 = vmax.f32 %v2605, 0.0
        %v2638 = vmax.f32 %v2606, 0.0
        %v2639 = vmax.f32 %v2607, 0.0
        %v2640 = vmax.f32 %v2608, 0.0
        %v2641 = vmax.f32 %v2609, 0.0
        %v2642 = vpack.c.bf16 %v2611, %v2610
        %v2643 = vpack.c.bf16 %v2613, %v2612
        %v2644 = vpack.c.bf16 %v2615, %v2614
        %v2645 = vpack.c.bf16 %v2617, %v2616
        %v2646 = vpack.c.bf16 %v2619, %v2618
        %v2647 = vpack.c.bf16 %v2621, %v2620
        %v2648 = vpack.c.bf16 %v2623, %v2622
        %v2649 = vpack.c.bf16 %v2625, %v2624
        %v2650 = vpack.c.bf16 %v2627, %v2626
        %v2651 = vpack.c.bf16 %v2629, %v2628
        %v2652 = vpack.c.bf16 %v2631, %v2630
        %v2653 = vpack.c.bf16 %v2633, %v2632
        %v2654 = vpack.c.bf16 %v2635, %v2634
        %v2655 = vpack.c.bf16 %v2637, %v2636
        %v2656 = vpack.c.bf16 %v2639, %v2638
        %v2657 = vpack.c.bf16 %v2641, %v2640
        %v2674 = vunpack.c.l.b16 %v2642
        %v2675 = vunpack.c.h.b16 %v2642
        %v2676 = vunpack.c.l.b16 %v2643
        %v2677 = vunpack.c.h.b16 %v2643
        %v2678 = vunpack.c.l.b16 %v2644
        %v2679 = vunpack.c.h.b16 %v2644
        %v2680 = vunpack.c.l.b16 %v2645
        %v2681 = vunpack.c.h.b16 %v2645
        %v2682 = vunpack.c.l.b16 %v2646
        %v2683 = vunpack.c.h.b16 %v2646
        %v2684 = vunpack.c.l.b16 %v2647
        %v2685 = vunpack.c.h.b16 %v2647
        %v2686 = vunpack.c.l.b16 %v2648
        %v2687 = vunpack.c.h.b16 %v2648
        %v2688 = vunpack.c.l.b16 %v2649
        %v2689 = vunpack.c.h.b16 %v2649
        %v2690 = vunpack.c.l.b16 %v2650
        %v2691 = vunpack.c.h.b16 %v2650
        %v2692 = vunpack.c.l.b16 %v2651
        %v2693 = vunpack.c.h.b16 %v2651
        %v2694 = vunpack.c.l.b16 %v2652
        %v2695 = vunpack.c.h.b16 %v2652
        %v2696 = vunpack.c.l.b16 %v2653
        %v2697 = vunpack.c.h.b16 %v2653
        %v2698 = vunpack.c.l.b16 %v2654
        %v2699 = vunpack.c.h.b16 %v2654
        %v2700 = vunpack.c.l.b16 %v2655
        %v2701 = vunpack.c.h.b16 %v2655
        %v2702 = vunpack.c.l.b16 %v2656
        %v2703 = vunpack.c.h.b16 %v2656
        %v2704 = vunpack.c.l.b16 %v2657
        %v2705 = vunpack.c.h.b16 %v2657
        %v2706 = vpack.c.b16 %v2674, %v2674
        %v2707 = vpack.c.b16 %v2675, %v2675
        %v2708 = vpack.c.b16 %v2676, %v2676
        %v2709 = vpack.c.b16 %v2677, %v2677
        %v2710 = vpack.c.b16 %v2678, %v2678
        %v2711 = vpack.c.b16 %v2679, %v2679
        %v2712 = vpack.c.b16 %v2680, %v2680
        %v2713 = vpack.c.b16 %v2681, %v2681
        %v2714 = vpack.c.b16 %v2682, %v2682
        %v2715 = vpack.c.b16 %v2683, %v2683
        %v2716 = vpack.c.b16 %v2684, %v2684
        %v2717 = vpack.c.b16 %v2685, %v2685
        %v2718 = vpack.c.b16 %v2686, %v2686
        %v2719 = vpack.c.b16 %v2687, %v2687
        %v2720 = vpack.c.b16 %v2688, %v2688
        %v2721 = vpack.c.b16 %v2689, %v2689
        %v2722 = vpack.c.b16 %v2690, %v2690
        %v2723 = vpack.c.b16 %v2691, %v2691
        %v2724 = vpack.c.b16 %v2692, %v2692
        %v2725 = vpack.c.b16 %v2693, %v2693
        %v2726 = vpack.c.b16 %v2694, %v2694
        %v2727 = vpack.c.b16 %v2695, %v2695
        %v2728 = vpack.c.b16 %v2696, %v2696
        %v2729 = vpack.c.b16 %v2697, %v2697
        %v2730 = vpack.c.b16 %v2698, %v2698
        %v2731 = vpack.c.b16 %v2699, %v2699
        %v2732 = vpack.c.b16 %v2700, %v2700
        %v2733 = vpack.c.b16 %v2701, %v2701
        %v2734 = vpack.c.b16 %v2702, %v2702
        %v2735 = vpack.c.b16 %v2703, %v2703
        %v2736 = vpack.c.b16 %v2704, %v2704
        %v2737 = vpack.c.b16 %v2705, %v2705
        %2770 = vst [vmem:[%s4 + $0x180] sm:$0xf] %v2706
        %2771 = vst [vmem:[%s4 + $0x184] sm:$0xf] %v2707
        %2772 = vst [vmem:[%s4 + $0x188] sm:$0xf] %v2708
        %2773 = vst [vmem:[%s4 + $0x18c] sm:$0xf] %v2709
        %2774 = vst [vmem:[%s4 + $0x190] sm:$0xf] %v2710
        %2775 = vst [vmem:[%s4 + $0x194] sm:$0xf] %v2711
        %2776 = vst [vmem:[%s4 + $0x198] sm:$0xf] %v2712
        %2777 = vst [vmem:[%s4 + $0x19c] sm:$0xf] %v2713
        %2778 = vst [vmem:[%s4 + $0x1a0] sm:$0xf] %v2714
        %2779 = vst [vmem:[%s4 + $0x1a4] sm:$0xf] %v2715
        %2780 = vst [vmem:[%s4 + $0x1a8] sm:$0xf] %v2716
        %2781 = vst [vmem:[%s4 + $0x1ac] sm:$0xf] %v2717
        %2782 = vst [vmem:[%s4 + $0x1b0] sm:$0xf] %v2718
        %2783 = vst [vmem:[%s4 + $0x1b4] sm:$0xf] %v2719
        %2784 = vst [vmem:[%s4 + $0x1b8] sm:$0xf] %v2720
        %2785 = vst [vmem:[%s4 + $0x1bc] sm:$0xf] %v2721
        %2786 = vst [vmem:[%s4 + $0x1c0] sm:$0xf] %v2722
        %2787 = vst [vmem:[%s4 + $0x1c4] sm:$0xf] %v2723
        %2788 = vst [vmem:[%s4 + $0x1c8] sm:$0xf] %v2724
        %2789 = vst [vmem:[%s4 + $0x1cc] sm:$0xf] %v2725
        %2790 = vst [vmem:[%s4 + $0x1d0] sm:$0xf] %v2726
        %2791 = vst [vmem:[%s4 + $0x1d4] sm:$0xf] %v2727
        %2792 = vst [vmem:[%s4 + $0x1d8] sm:$0xf] %v2728
        %2793 = vst [vmem:[%s4 + $0x1dc] sm:$0xf] %v2729
        %2794 = vst [vmem:[%s4 + $0x1e0] sm:$0xf] %v2730
        %2795 = vst [vmem:[%s4 + $0x1e4] sm:$0xf] %v2731
        %2796 = vst [vmem:[%s4 + $0x1e8] sm:$0xf] %v2732
        %2797 = vst [vmem:[%s4 + $0x1ec] sm:$0xf] %v2733
        %2798 = vst [vmem:[%s4 + $0x1f0] sm:$0xf] %v2734
        %2799 = vst [vmem:[%s4 + $0x1f4] sm:$0xf] %v2735
        %2800 = vst [vmem:[%s4 + $0x1f8] sm:$0xf] %v2736
        %2801 = vst [vmem:[%s4 + $0x1fc] sm:$0xf] %v2737
        %v2802 = vld [vmem:[%s4 + $0x200] sm:$0xf]
        %v2803 = vld [vmem:[%s4 + $0x204] sm:$0xf]
        %v2804 = vld [vmem:[%s4 + $0x208] sm:$0xf]
        %v2805 = vld [vmem:[%s4 + $0x20c] sm:$0xf]
        %v2806 = vld [vmem:[%s4 + $0x210] sm:$0xf]
        %v2807 = vld [vmem:[%s4 + $0x214] sm:$0xf]
        %v2808 = vld [vmem:[%s4 + $0x218] sm:$0xf]
        %v2809 = vld [vmem:[%s4 + $0x21c] sm:$0xf]
        %v2810 = vld [vmem:[%s4 + $0x220] sm:$0xf]
        %v2811 = vld [vmem:[%s4 + $0x224] sm:$0xf]
        %v2812 = vld [vmem:[%s4 + $0x228] sm:$0xf]
        %v2813 = vld [vmem:[%s4 + $0x22c] sm:$0xf]
        %v2814 = vld [vmem:[%s4 + $0x230] sm:$0xf]
        %v2815 = vld [vmem:[%s4 + $0x234] sm:$0xf]
        %v2816 = vld [vmem:[%s4 + $0x238] sm:$0xf]
        %v2817 = vld [vmem:[%s4 + $0x23c] sm:$0xf]
        %v2818 = vld [vmem:[%s4 + $0x240] sm:$0xf]
        %v2819 = vld [vmem:[%s4 + $0x244] sm:$0xf]
        %v2820 = vld [vmem:[%s4 + $0x248] sm:$0xf]
        %v2821 = vld [vmem:[%s4 + $0x24c] sm:$0xf]
        %v2822 = vld [vmem:[%s4 + $0x250] sm:$0xf]
        %v2823 = vld [vmem:[%s4 + $0x254] sm:$0xf]
        %v2824 = vld [vmem:[%s4 + $0x258] sm:$0xf]
        %v2825 = vld [vmem:[%s4 + $0x25c] sm:$0xf]
        %v2826 = vld [vmem:[%s4 + $0x260] sm:$0xf]
        %v2827 = vld [vmem:[%s4 + $0x264] sm:$0xf]
        %v2828 = vld [vmem:[%s4 + $0x268] sm:$0xf]
        %v2829 = vld [vmem:[%s4 + $0x26c] sm:$0xf]
        %v2830 = vld [vmem:[%s4 + $0x270] sm:$0xf]
        %v2831 = vld [vmem:[%s4 + $0x274] sm:$0xf]
        %v2832 = vld [vmem:[%s4 + $0x278] sm:$0xf]
        %v2833 = vld [vmem:[%s4 + $0x27c] sm:$0xf]
        %v2834 = vunpack.c.l.bf16 %v2802
        %v2835 = vunpack.c.l.bf16 %v2803
        %v2836 = vunpack.c.l.bf16 %v2804
        %v2837 = vunpack.c.l.bf16 %v2805
        %v2838 = vunpack.c.l.bf16 %v2806
        %v2839 = vunpack.c.l.bf16 %v2807
        %v2840 = vunpack.c.l.bf16 %v2808
        %v2841 = vunpack.c.l.bf16 %v2809
        %v2842 = vunpack.c.l.bf16 %v2810
        %v2843 = vunpack.c.l.bf16 %v2811
        %v2844 = vunpack.c.l.bf16 %v2812
        %v2845 = vunpack.c.l.bf16 %v2813
        %v2846 = vunpack.c.l.bf16 %v2814
        %v2847 = vunpack.c.l.bf16 %v2815
        %v2848 = vunpack.c.l.bf16 %v2816
        %v2849 = vunpack.c.l.bf16 %v2817
        %v2850 = vunpack.c.l.bf16 %v2818
        %v2851 = vunpack.c.l.bf16 %v2819
        %v2852 = vunpack.c.l.bf16 %v2820
        %v2853 = vunpack.c.l.bf16 %v2821
        %v2854 = vunpack.c.l.bf16 %v2822
        %v2855 = vunpack.c.l.bf16 %v2823
        %v2856 = vunpack.c.l.bf16 %v2824
        %v2857 = vunpack.c.l.bf16 %v2825
        %v2858 = vunpack.c.l.bf16 %v2826
        %v2859 = vunpack.c.l.bf16 %v2827
        %v2860 = vunpack.c.l.bf16 %v2828
        %v2861 = vunpack.c.l.bf16 %v2829
        %v2862 = vunpack.c.l.bf16 %v2830
        %v2863 = vunpack.c.l.bf16 %v2831
        %v2864 = vunpack.c.l.bf16 %v2832
        %v2865 = vunpack.c.l.bf16 %v2833
        %v2866 = vmul.f32 %v2834, %v1578
        %v2867 = vmul.f32 %v2835, %v1578
        %v2868 = vmul.f32 %v2836, %v1578
        %v2869 = vmul.f32 %v2837, %v1578
        %v2870 = vmul.f32 %v2838, %v1578
        %v2871 = vmul.f32 %v2839, %v1578
        %v2872 = vmul.f32 %v2840, %v1578
        %v2873 = vmul.f32 %v2841, %v1578
        %v2874 = vmul.f32 %v2842, %v1578
        %v2875 = vmul.f32 %v2843, %v1578
        %v2876 = vmul.f32 %v2844, %v1578
        %v2877 = vmul.f32 %v2845, %v1578
        %v2878 = vmul.f32 %v2846, %v1578
        %v2879 = vmul.f32 %v2847, %v1578
        %v2880 = vmul.f32 %v2848, %v1578
        %v2881 = vmul.f32 %v2849, %v1578
        %v2882 = vmul.f32 %v2850, %v1578
        %v2883 = vmul.f32 %v2851, %v1578
        %v2884 = vmul.f32 %v2852, %v1578
        %v2885 = vmul.f32 %v2853, %v1578
        %v2886 = vmul.f32 %v2854, %v1578
        %v2887 = vmul.f32 %v2855, %v1578
        %v2888 = vmul.f32 %v2856, %v1578
        %v2889 = vmul.f32 %v2857, %v1578
        %v2890 = vmul.f32 %v2858, %v1578
        %v2891 = vmul.f32 %v2859, %v1578
        %v2892 = vmul.f32 %v2860, %v1578
        %v2893 = vmul.f32 %v2861, %v1578
        %v2894 = vmul.f32 %v2862, %v1578
        %v2895 = vmul.f32 %v2863, %v1578
        %v2896 = vmul.f32 %v2864, %v1578
        %v2897 = vmul.f32 %v2865, %v1578
        %v2898 = vadd.f32 %v2866, %v1616
        %v2899 = vadd.f32 %v2867, %v1616
        %v2900 = vadd.f32 %v2868, %v1616
        %v2901 = vadd.f32 %v2869, %v1616
        %v2902 = vadd.f32 %v2870, %v1616
        %v2903 = vadd.f32 %v2871, %v1616
        %v2904 = vadd.f32 %v2872, %v1616
        %v2905 = vadd.f32 %v2873, %v1616
        %v2906 = vadd.f32 %v2874, %v1616
        %v2907 = vadd.f32 %v2875, %v1616
        %v2908 = vadd.f32 %v2876, %v1616
        %v2909 = vadd.f32 %v2877, %v1616
        %v2910 = vadd.f32 %v2878, %v1616
        %v2911 = vadd.f32 %v2879, %v1616
        %v2912 = vadd.f32 %v2880, %v1616
        %v2913 = vadd.f32 %v2881, %v1616
        %v2914 = vadd.f32 %v2882, %v1616
        %v2915 = vadd.f32 %v2883, %v1616
        %v2916 = vadd.f32 %v2884, %v1616
        %v2917 = vadd.f32 %v2885, %v1616
        %v2918 = vadd.f32 %v2886, %v1616
        %v2919 = vadd.f32 %v2887, %v1616
        %v2920 = vadd.f32 %v2888, %v1616
        %v2921 = vadd.f32 %v2889, %v1616
        %v2922 = vadd.f32 %v2890, %v1616
        %v2923 = vadd.f32 %v2891, %v1616
        %v2924 = vadd.f32 %v2892, %v1616
        %v2925 = vadd.f32 %v2893, %v1616
        %v2926 = vadd.f32 %v2894, %v1616
        %v2927 = vadd.f32 %v2895, %v1616
        %v2928 = vadd.f32 %v2896, %v1616
        %v2929 = vadd.f32 %v2897, %v1616
        %v2930 = vmax.f32 %v2898, 0.0
        %v2931 = vmax.f32 %v2899, 0.0
        %v2932 = vmax.f32 %v2900, 0.0
        %v2933 = vmax.f32 %v2901, 0.0
        %v2934 = vmax.f32 %v2902, 0.0
        %v2935 = vmax.f32 %v2903, 0.0
        %v2936 = vmax.f32 %v2904, 0.0
        %v2937 = vmax.f32 %v2905, 0.0
        %v2938 = vmax.f32 %v2906, 0.0
        %v2939 = vmax.f32 %v2907, 0.0
        %v2940 = vmax.f32 %v2908, 0.0
        %v2941 = vmax.f32 %v2909, 0.0
        %v2942 = vmax.f32 %v2910, 0.0
        %v2943 = vmax.f32 %v2911, 0.0
        %v2944 = vmax.f32 %v2912, 0.0
        %v2945 = vmax.f32 %v2913, 0.0
        %v2946 = vmax.f32 %v2914, 0.0
        %v2947 = vmax.f32 %v2915, 0.0
        %v2948 = vmax.f32 %v2916, 0.0
        %v2949 = vmax.f32 %v2917, 0.0
        %v2950 = vmax.f32 %v2918, 0.0
        %v2951 = vmax.f32 %v2919, 0.0
        %v2952 = vmax.f32 %v2920, 0.0
        %v2953 = vmax.f32 %v2921, 0.0
        %v2954 = vmax.f32 %v2922, 0.0
        %v2955 = vmax.f32 %v2923, 0.0
        %v2956 = vmax.f32 %v2924, 0.0
        %v2957 = vmax.f32 %v2925, 0.0
        %v2958 = vmax.f32 %v2926, 0.0
        %v2959 = vmax.f32 %v2927, 0.0
        %v2960 = vmax.f32 %v2928, 0.0
        %v2961 = vmax.f32 %v2929, 0.0
        %v2962 = vpack.c.bf16 %v2931, %v2930
        %v2963 = vpack.c.bf16 %v2933, %v2932
        %v2964 = vpack.c.bf16 %v2935, %v2934
        %v2965 = vpack.c.bf16 %v2937, %v2936
        %v2966 = vpack.c.bf16 %v2939, %v2938
        %v2967 = vpack.c.bf16 %v2941, %v2940
        %v2968 = vpack.c.bf16 %v2943, %v2942
        %v2969 = vpack.c.bf16 %v2945, %v2944
        %v2970 = vpack.c.bf16 %v2947, %v2946
        %v2971 = vpack.c.bf16 %v2949, %v2948
        %v2972 = vpack.c.bf16 %v2951, %v2950
        %v2973 = vpack.c.bf16 %v2953, %v2952
        %v2974 = vpack.c.bf16 %v2955, %v2954
        %v2975 = vpack.c.bf16 %v2957, %v2956
        %v2976 = vpack.c.bf16 %v2959, %v2958
        %v2977 = vpack.c.bf16 %v2961, %v2960
        %v2994 = vunpack.c.l.b16 %v2962
        %v2995 = vunpack.c.h.b16 %v2962
        %v2996 = vunpack.c.l.b16 %v2963
        %v2997 = vunpack.c.h.b16 %v2963
        %v2998 = vunpack.c.l.b16 %v2964
        %v2999 = vunpack.c.h.b16 %v2964
        %v3000 = vunpack.c.l.b16 %v2965
        %v3001 = vunpack.c.h.b16 %v2965
        %v3002 = vunpack.c.l.b16 %v2966
        %v3003 = vunpack.c.h.b16 %v2966
        %v3004 = vunpack.c.l.b16 %v2967
        %v3005 = vunpack.c.h.b16 %v2967
        %v3006 = vunpack.c.l.b16 %v2968
        %v3007 = vunpack.c.h.b16 %v2968
        %v3008 = vunpack.c.l.b16 %v2969
        %v3009 = vunpack.c.h.b16 %v2969
        %v3010 = vunpack.c.l.b16 %v2970
        %v3011 = vunpack.c.h.b16 %v2970
        %v3012 = vunpack.c.l.b16 %v2971
        %v3013 = vunpack.c.h.b16 %v2971
        %v3014 = vunpack.c.l.b16 %v2972
        %v3015 = vunpack.c.h.b16 %v2972
        %v3016 = vunpack.c.l.b16 %v2973
        %v3017 = vunpack.c.h.b16 %v2973
        %v3018 = vunpack.c.l.b16 %v2974
        %v3019 = vunpack.c.h.b16 %v2974
        %v3020 = vunpack.c.l.b16 %v2975
        %v3021 = vunpack.c.h.b16 %v2975
        %v3022 = vunpack.c.l.b16 %v2976
        %v3023 = vunpack.c.h.b16 %v2976
        %v3024 = vunpack.c.l.b16 %v2977
        %v3025 = vunpack.c.h.b16 %v2977
        %v3026 = vpack.c.b16 %v2994, %v2994
        %v3027 = vpack.c.b16 %v2995, %v2995
        %v3028 = vpack.c.b16 %v2996, %v2996
        %v3029 = vpack.c.b16 %v2997, %v2997
        %v3030 = vpack.c.b16 %v2998, %v2998
        %v3031 = vpack.c.b16 %v2999, %v2999
        %v3032 = vpack.c.b16 %v3000, %v3000
        %v3033 = vpack.c.b16 %v3001, %v3001
        %v3034 = vpack.c.b16 %v3002, %v3002
        %v3035 = vpack.c.b16 %v3003, %v3003
        %v3036 = vpack.c.b16 %v3004, %v3004
        %v3037 = vpack.c.b16 %v3005, %v3005
        %v3038 = vpack.c.b16 %v3006, %v3006
        %v3039 = vpack.c.b16 %v3007, %v3007
        %v3040 = vpack.c.b16 %v3008, %v3008
        %v3041 = vpack.c.b16 %v3009, %v3009
        %v3042 = vpack.c.b16 %v3010, %v3010
        %v3043 = vpack.c.b16 %v3011, %v3011
        %v3044 = vpack.c.b16 %v3012, %v3012
        %v3045 = vpack.c.b16 %v3013, %v3013
        %v3046 = vpack.c.b16 %v3014, %v3014
        %v3047 = vpack.c.b16 %v3015, %v3015
        %v3048 = vpack.c.b16 %v3016, %v3016
        %v3049 = vpack.c.b16 %v3017, %v3017
        %v3050 = vpack.c.b16 %v3018, %v3018
        %v3051 = vpack.c.b16 %v3019, %v3019
        %v3052 = vpack.c.b16 %v3020, %v3020
        %v3053 = vpack.c.b16 %v3021, %v3021
        %v3054 = vpack.c.b16 %v3022, %v3022
        %v3055 = vpack.c.b16 %v3023, %v3023
        %v3056 = vpack.c.b16 %v3024, %v3024
        %v3057 = vpack.c.b16 %v3025, %v3025
        %3090 = vst [vmem:[%s4 + $0x200] sm:$0xf] %v3026
        %3091 = vst [vmem:[%s4 + $0x204] sm:$0xf] %v3027
        %3092 = vst [vmem:[%s4 + $0x208] sm:$0xf] %v3028
        %3093 = vst [vmem:[%s4 + $0x20c] sm:$0xf] %v3029
        %3094 = vst [vmem:[%s4 + $0x210] sm:$0xf] %v3030
        %3095 = vst [vmem:[%s4 + $0x214] sm:$0xf] %v3031
        %3096 = vst [vmem:[%s4 + $0x218] sm:$0xf] %v3032
        %3097 = vst [vmem:[%s4 + $0x21c] sm:$0xf] %v3033
        %3098 = vst [vmem:[%s4 + $0x220] sm:$0xf] %v3034
        %3099 = vst [vmem:[%s4 + $0x224] sm:$0xf] %v3035
        %3100 = vst [vmem:[%s4 + $0x228] sm:$0xf] %v3036
        %3101 = vst [vmem:[%s4 + $0x22c] sm:$0xf] %v3037
        %3102 = vst [vmem:[%s4 + $0x230] sm:$0xf] %v3038
        %3103 = vst [vmem:[%s4 + $0x234] sm:$0xf] %v3039
        %3104 = vst [vmem:[%s4 + $0x238] sm:$0xf] %v3040
        %3105 = vst [vmem:[%s4 + $0x23c] sm:$0xf] %v3041
        %3106 = vst [vmem:[%s4 + $0x240] sm:$0xf] %v3042
        %3107 = vst [vmem:[%s4 + $0x244] sm:$0xf] %v3043
        %3108 = vst [vmem:[%s4 + $0x248] sm:$0xf] %v3044
        %3109 = vst [vmem:[%s4 + $0x24c] sm:$0xf] %v3045
        %3110 = vst [vmem:[%s4 + $0x250] sm:$0xf] %v3046
        %3111 = vst [vmem:[%s4 + $0x254] sm:$0xf] %v3047
        %3112 = vst [vmem:[%s4 + $0x258] sm:$0xf] %v3048
        %3113 = vst [vmem:[%s4 + $0x25c] sm:$0xf] %v3049
        %3114 = vst [vmem:[%s4 + $0x260] sm:$0xf] %v3050
        %3115 = vst [vmem:[%s4 + $0x264] sm:$0xf] %v3051
        %3116 = vst [vmem:[%s4 + $0x268] sm:$0xf] %v3052
        %3117 = vst [vmem:[%s4 + $0x26c] sm:$0xf] %v3053
        %3118 = vst [vmem:[%s4 + $0x270] sm:$0xf] %v3054
        %3119 = vst [vmem:[%s4 + $0x274] sm:$0xf] %v3055
        %3120 = vst [vmem:[%s4 + $0x278] sm:$0xf] %v3056
        %3121 = vst [vmem:[%s4 + $0x27c] sm:$0xf] %v3057
        %v3122 = vld [vmem:[%s4 + $0x280] sm:$0xf]
        %v3123 = vld [vmem:[%s4 + $0x284] sm:$0xf]
        %v3124 = vld [vmem:[%s4 + $0x288] sm:$0xf]
        %v3125 = vld [vmem:[%s4 + $0x28c] sm:$0xf]
        %v3126 = vld [vmem:[%s4 + $0x290] sm:$0xf]
        %v3127 = vld [vmem:[%s4 + $0x294] sm:$0xf]
        %v3128 = vld [vmem:[%s4 + $0x298] sm:$0xf]
        %v3129 = vld [vmem:[%s4 + $0x29c] sm:$0xf]
        %v3130 = vld [vmem:[%s4 + $0x2a0] sm:$0xf]
        %v3131 = vld [vmem:[%s4 + $0x2a4] sm:$0xf]
        %v3132 = vld [vmem:[%s4 + $0x2a8] sm:$0xf]
        %v3133 = vld [vmem:[%s4 + $0x2ac] sm:$0xf]
        %v3134 = vld [vmem:[%s4 + $0x2b0] sm:$0xf]
        %v3135 = vld [vmem:[%s4 + $0x2b4] sm:$0xf]
        %v3136 = vld [vmem:[%s4 + $0x2b8] sm:$0xf]
        %v3137 = vld [vmem:[%s4 + $0x2bc] sm:$0xf]
        %v3138 = vld [vmem:[%s4 + $0x2c0] sm:$0xf]
        %v3139 = vld [vmem:[%s4 + $0x2c4] sm:$0xf]
        %v3140 = vld [vmem:[%s4 + $0x2c8] sm:$0xf]
        %v3141 = vld [vmem:[%s4 + $0x2cc] sm:$0xf]
        %v3142 = vld [vmem:[%s4 + $0x2d0] sm:$0xf]
        %v3143 = vld [vmem:[%s4 + $0x2d4] sm:$0xf]
        %v3144 = vld [vmem:[%s4 + $0x2d8] sm:$0xf]
        %v3145 = vld [vmem:[%s4 + $0x2dc] sm:$0xf]
        %v3146 = vld [vmem:[%s4 + $0x2e0] sm:$0xf]
        %v3147 = vld [vmem:[%s4 + $0x2e4] sm:$0xf]
        %v3148 = vld [vmem:[%s4 + $0x2e8] sm:$0xf]
        %v3149 = vld [vmem:[%s4 + $0x2ec] sm:$0xf]
        %v3150 = vld [vmem:[%s4 + $0x2f0] sm:$0xf]
        %v3151 = vld [vmem:[%s4 + $0x2f4] sm:$0xf]
        %v3152 = vld [vmem:[%s4 + $0x2f8] sm:$0xf]
        %v3153 = vld [vmem:[%s4 + $0x2fc] sm:$0xf]
        %v3154 = vunpack.c.l.bf16 %v3122
        %v3155 = vunpack.c.l.bf16 %v3123
        %v3156 = vunpack.c.l.bf16 %v3124
        %v3157 = vunpack.c.l.bf16 %v3125
        %v3158 = vunpack.c.l.bf16 %v3126
        %v3159 = vunpack.c.l.bf16 %v3127
        %v3160 = vunpack.c.l.bf16 %v3128
        %v3161 = vunpack.c.l.bf16 %v3129
        %v3162 = vunpack.c.l.bf16 %v3130
        %v3163 = vunpack.c.l.bf16 %v3131
        %v3164 = vunpack.c.l.bf16 %v3132
        %v3165 = vunpack.c.l.bf16 %v3133
        %v3166 = vunpack.c.l.bf16 %v3134
        %v3167 = vunpack.c.l.bf16 %v3135
        %v3168 = vunpack.c.l.bf16 %v3136
        %v3169 = vunpack.c.l.bf16 %v3137
        %v3170 = vunpack.c.l.bf16 %v3138
        %v3171 = vunpack.c.l.bf16 %v3139
        %v3172 = vunpack.c.l.bf16 %v3140
        %v3173 = vunpack.c.l.bf16 %v3141
        %v3174 = vunpack.c.l.bf16 %v3142
        %v3175 = vunpack.c.l.bf16 %v3143
        %v3176 = vunpack.c.l.bf16 %v3144
        %v3177 = vunpack.c.l.bf16 %v3145
        %v3178 = vunpack.c.l.bf16 %v3146
        %v3179 = vunpack.c.l.bf16 %v3147
        %v3180 = vunpack.c.l.bf16 %v3148
        %v3181 = vunpack.c.l.bf16 %v3149
        %v3182 = vunpack.c.l.bf16 %v3150
        %v3183 = vunpack.c.l.bf16 %v3151
        %v3184 = vunpack.c.l.bf16 %v3152
        %v3185 = vunpack.c.l.bf16 %v3153
        %v3186 = vmul.f32 %v3154, %v1578
        %v3187 = vmul.f32 %v3155, %v1578
        %v3188 = vmul.f32 %v3156, %v1578
        %v3189 = vmul.f32 %v3157, %v1578
        %v3190 = vmul.f32 %v3158, %v1578
        %v3191 = vmul.f32 %v3159, %v1578
        %v3192 = vmul.f32 %v3160, %v1578
        %v3193 = vmul.f32 %v3161, %v1578
        %v3194 = vmul.f32 %v3162, %v1578
        %v3195 = vmul.f32 %v3163, %v1578
        %v3196 = vmul.f32 %v3164, %v1578
        %v3197 = vmul.f32 %v3165, %v1578
        %v3198 = vmul.f32 %v3166, %v1578
        %v3199 = vmul.f32 %v3167, %v1578
        %v3200 = vmul.f32 %v3168, %v1578
        %v3201 = vmul.f32 %v3169, %v1578
        %v3202 = vmul.f32 %v3170, %v1578
        %v3203 = vmul.f32 %v3171, %v1578
        %v3204 = vmul.f32 %v3172, %v1578
        %v3205 = vmul.f32 %v3173, %v1578
        %v3206 = vmul.f32 %v3174, %v1578
        %v3207 = vmul.f32 %v3175, %v1578
        %v3208 = vmul.f32 %v3176, %v1578
        %v3209 = vmul.f32 %v3177, %v1578
        %v3210 = vmul.f32 %v3178, %v1578
        %v3211 = vmul.f32 %v3179, %v1578
        %v3212 = vmul.f32 %v3180, %v1578
        %v3213 = vmul.f32 %v3181, %v1578
        %v3214 = vmul.f32 %v3182, %v1578
        %v3215 = vmul.f32 %v3183, %v1578
        %v3216 = vmul.f32 %v3184, %v1578
        %v3217 = vmul.f32 %v3185, %v1578
        %v3218 = vadd.f32 %v3186, %v1616
        %v3219 = vadd.f32 %v3187, %v1616
        %v3220 = vadd.f32 %v3188, %v1616
        %v3221 = vadd.f32 %v3189, %v1616
        %v3222 = vadd.f32 %v3190, %v1616
        %v3223 = vadd.f32 %v3191, %v1616
        %v3224 = vadd.f32 %v3192, %v1616
        %v3225 = vadd.f32 %v3193, %v1616
        %v3226 = vadd.f32 %v3194, %v1616
        %v3227 = vadd.f32 %v3195, %v1616
        %v3228 = vadd.f32 %v3196, %v1616
        %v3229 = vadd.f32 %v3197, %v1616
        %v3230 = vadd.f32 %v3198, %v1616
        %v3231 = vadd.f32 %v3199, %v1616
        %v3232 = vadd.f32 %v3200, %v1616
        %v3233 = vadd.f32 %v3201, %v1616
        %v3234 = vadd.f32 %v3202, %v1616
        %v3235 = vadd.f32 %v3203, %v1616
        %v3236 = vadd.f32 %v3204, %v1616
        %v3237 = vadd.f32 %v3205, %v1616
        %v3238 = vadd.f32 %v3206, %v1616
        %v3239 = vadd.f32 %v3207, %v1616
        %v3240 = vadd.f32 %v3208, %v1616
        %v3241 = vadd.f32 %v3209, %v1616
        %v3242 = vadd.f32 %v3210, %v1616
        %v3243 = vadd.f32 %v3211, %v1616
        %v3244 = vadd.f32 %v3212, %v1616
        %v3245 = vadd.f32 %v3213, %v1616
        %v3246 = vadd.f32 %v3214, %v1616
        %v3247 = vadd.f32 %v3215, %v1616
        %v3248 = vadd.f32 %v3216, %v1616
        %v3249 = vadd.f32 %v3217, %v1616
        %v3250 = vmax.f32 %v3218, 0.0
        %v3251 = vmax.f32 %v3219, 0.0
        %v3252 = vmax.f32 %v3220, 0.0
        %v3253 = vmax.f32 %v3221, 0.0
        %v3254 = vmax.f32 %v3222, 0.0
        %v3255 = vmax.f32 %v3223, 0.0
        %v3256 = vmax.f32 %v3224, 0.0
        %v3257 = vmax.f32 %v3225, 0.0
        %v3258 = vmax.f32 %v3226, 0.0
        %v3259 = vmax.f32 %v3227, 0.0
        %v3260 = vmax.f32 %v3228, 0.0
        %v3261 = vmax.f32 %v3229, 0.0
        %v3262 = vmax.f32 %v3230, 0.0
        %v3263 = vmax.f32 %v3231, 0.0
        %v3264 = vmax.f32 %v3232, 0.0
        %v3265 = vmax.f32 %v3233, 0.0
        %v3266 = vmax.f32 %v3234, 0.0
        %v3267 = vmax.f32 %v3235, 0.0
        %v3268 = vmax.f32 %v3236, 0.0
        %v3269 = vmax.f32 %v3237, 0.0
        %v3270 = vmax.f32 %v3238, 0.0
        %v3271 = vmax.f32 %v3239, 0.0
        %v3272 = vmax.f32 %v3240, 0.0
        %v3273 = vmax.f32 %v3241, 0.0
        %v3274 = vmax.f32 %v3242, 0.0
        %v3275 = vmax.f32 %v3243, 0.0
        %v3276 = vmax.f32 %v3244, 0.0
        %v3277 = vmax.f32 %v3245, 0.0
        %v3278 = vmax.f32 %v3246, 0.0
        %v3279 = vmax.f32 %v3247, 0.0
        %v3280 = vmax.f32 %v3248, 0.0
        %v3281 = vmax.f32 %v3249, 0.0
        %v3282 = vpack.c.bf16 %v3251, %v3250
        %v3283 = vpack.c.bf16 %v3253, %v3252
        %v3284 = vpack.c.bf16 %v3255, %v3254
        %v3285 = vpack.c.bf16 %v3257, %v3256
        %v3286 = vpack.c.bf16 %v3259, %v3258
        %v3287 = vpack.c.bf16 %v3261, %v3260
        %v3288 = vpack.c.bf16 %v3263, %v3262
        %v3289 = vpack.c.bf16 %v3265, %v3264
        %v3290 = vpack.c.bf16 %v3267, %v3266
        %v3291 = vpack.c.bf16 %v3269, %v3268
        %v3292 = vpack.c.bf16 %v3271, %v3270
        %v3293 = vpack.c.bf16 %v3273, %v3272
        %v3294 = vpack.c.bf16 %v3275, %v3274
        %v3295 = vpack.c.bf16 %v3277, %v3276
        %v3296 = vpack.c.bf16 %v3279, %v3278
        %v3297 = vpack.c.bf16 %v3281, %v3280
        %v3314 = vunpack.c.l.b16 %v3282
        %v3315 = vunpack.c.h.b16 %v3282
        %v3316 = vunpack.c.l.b16 %v3283
        %v3317 = vunpack.c.h.b16 %v3283
        %v3318 = vunpack.c.l.b16 %v3284
        %v3319 = vunpack.c.h.b16 %v3284
        %v3320 = vunpack.c.l.b16 %v3285
        %v3321 = vunpack.c.h.b16 %v3285
        %v3322 = vunpack.c.l.b16 %v3286
        %v3323 = vunpack.c.h.b16 %v3286
        %v3324 = vunpack.c.l.b16 %v3287
        %v3325 = vunpack.c.h.b16 %v3287
        %v3326 = vunpack.c.l.b16 %v3288
        %v3327 = vunpack.c.h.b16 %v3288
        %v3328 = vunpack.c.l.b16 %v3289
        %v3329 = vunpack.c.h.b16 %v3289
        %v3330 = vunpack.c.l.b16 %v3290
        %v3331 = vunpack.c.h.b16 %v3290
        %v3332 = vunpack.c.l.b16 %v3291
        %v3333 = vunpack.c.h.b16 %v3291
        %v3334 = vunpack.c.l.b16 %v3292
        %v3335 = vunpack.c.h.b16 %v3292
        %v3336 = vunpack.c.l.b16 %v3293
        %v3337 = vunpack.c.h.b16 %v3293
        %v3338 = vunpack.c.l.b16 %v3294
        %v3339 = vunpack.c.h.b16 %v3294
        %v3340 = vunpack.c.l.b16 %v3295
        %v3341 = vunpack.c.h.b16 %v3295
        %v3342 = vunpack.c.l.b16 %v3296
        %v3343 = vunpack.c.h.b16 %v3296
        %v3344 = vunpack.c.l.b16 %v3297
        %v3345 = vunpack.c.h.b16 %v3297
        %v3346 = vpack.c.b16 %v3314, %v3314
        %v3347 = vpack.c.b16 %v3315, %v3315
        %v3348 = vpack.c.b16 %v3316, %v3316
        %v3349 = vpack.c.b16 %v3317, %v3317
        %v3350 = vpack.c.b16 %v3318, %v3318
        %v3351 = vpack.c.b16 %v3319, %v3319
        %v3352 = vpack.c.b16 %v3320, %v3320
        %v3353 = vpack.c.b16 %v3321, %v3321
        %v3354 = vpack.c.b16 %v3322, %v3322
        %v3355 = vpack.c.b16 %v3323, %v3323
        %v3356 = vpack.c.b16 %v3324, %v3324
        %v3357 = vpack.c.b16 %v3325, %v3325
        %v3358 = vpack.c.b16 %v3326, %v3326
        %v3359 = vpack.c.b16 %v3327, %v3327
        %v3360 = vpack.c.b16 %v3328, %v3328
        %v3361 = vpack.c.b16 %v3329, %v3329
        %v3362 = vpack.c.b16 %v3330, %v3330
        %v3363 = vpack.c.b16 %v3331, %v3331
        %v3364 = vpack.c.b16 %v3332, %v3332
        %v3365 = vpack.c.b16 %v3333, %v3333
        %v3366 = vpack.c.b16 %v3334, %v3334
        %v3367 = vpack.c.b16 %v3335, %v3335
        %v3368 = vpack.c.b16 %v3336, %v3336
        %v3369 = vpack.c.b16 %v3337, %v3337
        %v3370 = vpack.c.b16 %v3338, %v3338
        %v3371 = vpack.c.b16 %v3339, %v3339
        %v3372 = vpack.c.b16 %v3340, %v3340
        %v3373 = vpack.c.b16 %v3341, %v3341
        %v3374 = vpack.c.b16 %v3342, %v3342
        %v3375 = vpack.c.b16 %v3343, %v3343
        %v3376 = vpack.c.b16 %v3344, %v3344
        %v3377 = vpack.c.b16 %v3345, %v3345
        %3410 = vst [vmem:[%s4 + $0x280] sm:$0xf] %v3346
        %3411 = vst [vmem:[%s4 + $0x284] sm:$0xf] %v3347
        %3412 = vst [vmem:[%s4 + $0x288] sm:$0xf] %v3348
        %3413 = vst [vmem:[%s4 + $0x28c] sm:$0xf] %v3349
        %3414 = vst [vmem:[%s4 + $0x290] sm:$0xf] %v3350
        %3415 = vst [vmem:[%s4 + $0x294] sm:$0xf] %v3351
        %3416 = vst [vmem:[%s4 + $0x298] sm:$0xf] %v3352
        %3417 = vst [vmem:[%s4 + $0x29c] sm:$0xf] %v3353
        %3418 = vst [vmem:[%s4 + $0x2a0] sm:$0xf] %v3354
        %3419 = vst [vmem:[%s4 + $0x2a4] sm:$0xf] %v3355
        %3420 = vst [vmem:[%s4 + $0x2a8] sm:$0xf] %v3356
        %3421 = vst [vmem:[%s4 + $0x2ac] sm:$0xf] %v3357
        %3422 = vst [vmem:[%s4 + $0x2b0] sm:$0xf] %v3358
        %3423 = vst [vmem:[%s4 + $0x2b4] sm:$0xf] %v3359
        %3424 = vst [vmem:[%s4 + $0x2b8] sm:$0xf] %v3360
        %3425 = vst [vmem:[%s4 + $0x2bc] sm:$0xf] %v3361
        %3426 = vst [vmem:[%s4 + $0x2c0] sm:$0xf] %v3362
        %3427 = vst [vmem:[%s4 + $0x2c4] sm:$0xf] %v3363
        %3428 = vst [vmem:[%s4 + $0x2c8] sm:$0xf] %v3364
        %3429 = vst [vmem:[%s4 + $0x2cc] sm:$0xf] %v3365
        %3430 = vst [vmem:[%s4 + $0x2d0] sm:$0xf] %v3366
        %3431 = vst [vmem:[%s4 + $0x2d4] sm:$0xf] %v3367
        %3432 = vst [vmem:[%s4 + $0x2d8] sm:$0xf] %v3368
        %3433 = vst [vmem:[%s4 + $0x2dc] sm:$0xf] %v3369
        %3434 = vst [vmem:[%s4 + $0x2e0] sm:$0xf] %v3370
        %3435 = vst [vmem:[%s4 + $0x2e4] sm:$0xf] %v3371
        %3436 = vst [vmem:[%s4 + $0x2e8] sm:$0xf] %v3372
        %3437 = vst [vmem:[%s4 + $0x2ec] sm:$0xf] %v3373
        %3438 = vst [vmem:[%s4 + $0x2f0] sm:$0xf] %v3374
        %3439 = vst [vmem:[%s4 + $0x2f4] sm:$0xf] %v3375
        %3440 = vst [vmem:[%s4 + $0x2f8] sm:$0xf] %v3376
        %3441 = vst [vmem:[%s4 + $0x2fc] sm:$0xf] %v3377
        %v3442 = vld [vmem:[%s4 + $0x300] sm:$0xf]
        %v3443 = vld [vmem:[%s4 + $0x304] sm:$0xf]
        %v3444 = vld [vmem:[%s4 + $0x308] sm:$0xf]
        %v3445 = vld [vmem:[%s4 + $0x30c] sm:$0xf]
        %v3446 = vld [vmem:[%s4 + $0x310] sm:$0xf]
        %v3447 = vld [vmem:[%s4 + $0x314] sm:$0xf]
        %v3448 = vld [vmem:[%s4 + $0x318] sm:$0xf]
        %v3449 = vld [vmem:[%s4 + $0x31c] sm:$0xf]
        %v3450 = vld [vmem:[%s4 + $0x320] sm:$0xf]
        %v3451 = vld [vmem:[%s4 + $0x324] sm:$0xf]
        %v3452 = vld [vmem:[%s4 + $0x328] sm:$0xf]
        %v3453 = vld [vmem:[%s4 + $0x32c] sm:$0xf]
        %v3454 = vld [vmem:[%s4 + $0x330] sm:$0xf]
        %v3455 = vld [vmem:[%s4 + $0x334] sm:$0xf]
        %v3456 = vld [vmem:[%s4 + $0x338] sm:$0xf]
        %v3457 = vld [vmem:[%s4 + $0x33c] sm:$0xf]
        %v3458 = vld [vmem:[%s4 + $0x340] sm:$0xf]
        %v3459 = vld [vmem:[%s4 + $0x344] sm:$0xf]
        %v3460 = vld [vmem:[%s4 + $0x348] sm:$0xf]
        %v3461 = vld [vmem:[%s4 + $0x34c] sm:$0xf]
        %v3462 = vld [vmem:[%s4 + $0x350] sm:$0xf]
        %v3463 = vld [vmem:[%s4 + $0x354] sm:$0xf]
        %v3464 = vld [vmem:[%s4 + $0x358] sm:$0xf]
        %v3465 = vld [vmem:[%s4 + $0x35c] sm:$0xf]
        %v3466 = vld [vmem:[%s4 + $0x360] sm:$0xf]
        %v3467 = vld [vmem:[%s4 + $0x364] sm:$0xf]
        %v3468 = vld [vmem:[%s4 + $0x368] sm:$0xf]
        %v3469 = vld [vmem:[%s4 + $0x36c] sm:$0xf]
        %v3470 = vld [vmem:[%s4 + $0x370] sm:$0xf]
        %v3471 = vld [vmem:[%s4 + $0x374] sm:$0xf]
        %v3472 = vld [vmem:[%s4 + $0x378] sm:$0xf]
        %v3473 = vld [vmem:[%s4 + $0x37c] sm:$0xf]
        %v3474 = vunpack.c.l.bf16 %v3442
        %v3475 = vunpack.c.l.bf16 %v3443
        %v3476 = vunpack.c.l.bf16 %v3444
        %v3477 = vunpack.c.l.bf16 %v3445
        %v3478 = vunpack.c.l.bf16 %v3446
        %v3479 = vunpack.c.l.bf16 %v3447
        %v3480 = vunpack.c.l.bf16 %v3448
        %v3481 = vunpack.c.l.bf16 %v3449
        %v3482 = vunpack.c.l.bf16 %v3450
        %v3483 = vunpack.c.l.bf16 %v3451
        %v3484 = vunpack.c.l.bf16 %v3452
        %v3485 = vunpack.c.l.bf16 %v3453
        %v3486 = vunpack.c.l.bf16 %v3454
        %v3487 = vunpack.c.l.bf16 %v3455
        %v3488 = vunpack.c.l.bf16 %v3456
        %v3489 = vunpack.c.l.bf16 %v3457
        %v3490 = vunpack.c.l.bf16 %v3458
        %v3491 = vunpack.c.l.bf16 %v3459
        %v3492 = vunpack.c.l.bf16 %v3460
        %v3493 = vunpack.c.l.bf16 %v3461
        %v3494 = vunpack.c.l.bf16 %v3462
        %v3495 = vunpack.c.l.bf16 %v3463
        %v3496 = vunpack.c.l.bf16 %v3464
        %v3497 = vunpack.c.l.bf16 %v3465
        %v3498 = vunpack.c.l.bf16 %v3466
        %v3499 = vunpack.c.l.bf16 %v3467
        %v3500 = vunpack.c.l.bf16 %v3468
        %v3501 = vunpack.c.l.bf16 %v3469
        %v3502 = vunpack.c.l.bf16 %v3470
        %v3503 = vunpack.c.l.bf16 %v3471
        %v3504 = vunpack.c.l.bf16 %v3472
        %v3505 = vunpack.c.l.bf16 %v3473
        %v3506 = vmul.f32 %v3474, %v1578
        %v3507 = vmul.f32 %v3475, %v1578
        %v3508 = vmul.f32 %v3476, %v1578
        %v3509 = vmul.f32 %v3477, %v1578
        %v3510 = vmul.f32 %v3478, %v1578
        %v3511 = vmul.f32 %v3479, %v1578
        %v3512 = vmul.f32 %v3480, %v1578
        %v3513 = vmul.f32 %v3481, %v1578
        %v3514 = vmul.f32 %v3482, %v1578
        %v3515 = vmul.f32 %v3483, %v1578
        %v3516 = vmul.f32 %v3484, %v1578
        %v3517 = vmul.f32 %v3485, %v1578
        %v3518 = vmul.f32 %v3486, %v1578
        %v3519 = vmul.f32 %v3487, %v1578
        %v3520 = vmul.f32 %v3488, %v1578
        %v3521 = vmul.f32 %v3489, %v1578
        %v3522 = vmul.f32 %v3490, %v1578
        %v3523 = vmul.f32 %v3491, %v1578
        %v3524 = vmul.f32 %v3492, %v1578
        %v3525 = vmul.f32 %v3493, %v1578
        %v3526 = vmul.f32 %v3494, %v1578
        %v3527 = vmul.f32 %v3495, %v1578
        %v3528 = vmul.f32 %v3496, %v1578
        %v3529 = vmul.f32 %v3497, %v1578
        %v3530 = vmul.f32 %v3498, %v1578
        %v3531 = vmul.f32 %v3499, %v1578
        %v3532 = vmul.f32 %v3500, %v1578
        %v3533 = vmul.f32 %v3501, %v1578
        %v3534 = vmul.f32 %v3502, %v1578
        %v3535 = vmul.f32 %v3503, %v1578
        %v3536 = vmul.f32 %v3504, %v1578
        %v3537 = vmul.f32 %v3505, %v1578
        %v3538 = vadd.f32 %v3506, %v1616
        %v3539 = vadd.f32 %v3507, %v1616
        %v3540 = vadd.f32 %v3508, %v1616
        %v3541 = vadd.f32 %v3509, %v1616
        %v3542 = vadd.f32 %v3510, %v1616
        %v3543 = vadd.f32 %v3511, %v1616
        %v3544 = vadd.f32 %v3512, %v1616
        %v3545 = vadd.f32 %v3513, %v1616
        %v3546 = vadd.f32 %v3514, %v1616
        %v3547 = vadd.f32 %v3515, %v1616
        %v3548 = vadd.f32 %v3516, %v1616
        %v3549 = vadd.f32 %v3517, %v1616
        %v3550 = vadd.f32 %v3518, %v1616
        %v3551 = vadd.f32 %v3519, %v1616
        %v3552 = vadd.f32 %v3520, %v1616
        %v3553 = vadd.f32 %v3521, %v1616
        %v3554 = vadd.f32 %v3522, %v1616
        %v3555 = vadd.f32 %v3523, %v1616
        %v3556 = vadd.f32 %v3524, %v1616
        %v3557 = vadd.f32 %v3525, %v1616
        %v3558 = vadd.f32 %v3526, %v1616
        %v3559 = vadd.f32 %v3527, %v1616
        %v3560 = vadd.f32 %v3528, %v1616
        %v3561 = vadd.f32 %v3529, %v1616
        %v3562 = vadd.f32 %v3530, %v1616
        %v3563 = vadd.f32 %v3531, %v1616
        %v3564 = vadd.f32 %v3532, %v1616
        %v3565 = vadd.f32 %v3533, %v1616
        %v3566 = vadd.f32 %v3534, %v1616
        %v3567 = vadd.f32 %v3535, %v1616
        %v3568 = vadd.f32 %v3536, %v1616
        %v3569 = vadd.f32 %v3537, %v1616
        %v3570 = vmax.f32 %v3538, 0.0
        %v3571 = vmax.f32 %v3539, 0.0
        %v3572 = vmax.f32 %v3540, 0.0
        %v3573 = vmax.f32 %v3541, 0.0
        %v3574 = vmax.f32 %v3542, 0.0
        %v3575 = vmax.f32 %v3543, 0.0
        %v3576 = vmax.f32 %v3544, 0.0
        %v3577 = vmax.f32 %v3545, 0.0
        %v3578 = vmax.f32 %v3546, 0.0
        %v3579 = vmax.f32 %v3547, 0.0
        %v3580 = vmax.f32 %v3548, 0.0
        %v3581 = vmax.f32 %v3549, 0.0
        %v3582 = vmax.f32 %v3550, 0.0
        %v3583 = vmax.f32 %v3551, 0.0
        %v3584 = vmax.f32 %v3552, 0.0
        %v3585 = vmax.f32 %v3553, 0.0
        %v3586 = vmax.f32 %v3554, 0.0
        %v3587 = vmax.f32 %v3555, 0.0
        %v3588 = vmax.f32 %v3556, 0.0
        %v3589 = vmax.f32 %v3557, 0.0
        %v3590 = vmax.f32 %v3558, 0.0
        %v3591 = vmax.f32 %v3559, 0.0
        %v3592 = vmax.f32 %v3560, 0.0
        %v3593 = vmax.f32 %v3561, 0.0
        %v3594 = vmax.f32 %v3562, 0.0
        %v3595 = vmax.f32 %v3563, 0.0
        %v3596 = vmax.f32 %v3564, 0.0
        %v3597 = vmax.f32 %v3565, 0.0
        %v3598 = vmax.f32 %v3566, 0.0
        %v3599 = vmax.f32 %v3567, 0.0
        %v3600 = vmax.f32 %v3568, 0.0
        %v3601 = vmax.f32 %v3569, 0.0
        %v3602 = vpack.c.bf16 %v3571, %v3570
        %v3603 = vpack.c.bf16 %v3573, %v3572
        %v3604 = vpack.c.bf16 %v3575, %v3574
        %v3605 = vpack.c.bf16 %v3577, %v3576
        %v3606 = vpack.c.bf16 %v3579, %v3578
        %v3607 = vpack.c.bf16 %v3581, %v3580
        %v3608 = vpack.c.bf16 %v3583, %v3582
        %v3609 = vpack.c.bf16 %v3585, %v3584
        %v3610 = vpack.c.bf16 %v3587, %v3586
        %v3611 = vpack.c.bf16 %v3589, %v3588
        %v3612 = vpack.c.bf16 %v3591, %v3590
        %v3613 = vpack.c.bf16 %v3593, %v3592
        %v3614 = vpack.c.bf16 %v3595, %v3594
        %v3615 = vpack.c.bf16 %v3597, %v3596
        %v3616 = vpack.c.bf16 %v3599, %v3598
        %v3617 = vpack.c.bf16 %v3601, %v3600
        %v3634 = vunpack.c.l.b16 %v3602
        %v3635 = vunpack.c.h.b16 %v3602
        %v3636 = vunpack.c.l.b16 %v3603
        %v3637 = vunpack.c.h.b16 %v3603
        %v3638 = vunpack.c.l.b16 %v3604
        %v3639 = vunpack.c.h.b16 %v3604
        %v3640 = vunpack.c.l.b16 %v3605
        %v3641 = vunpack.c.h.b16 %v3605
        %v3642 = vunpack.c.l.b16 %v3606
        %v3643 = vunpack.c.h.b16 %v3606
        %v3644 = vunpack.c.l.b16 %v3607
        %v3645 = vunpack.c.h.b16 %v3607
        %v3646 = vunpack.c.l.b16 %v3608
        %v3647 = vunpack.c.h.b16 %v3608
        %v3648 = vunpack.c.l.b16 %v3609
        %v3649 = vunpack.c.h.b16 %v3609
        %v3650 = vunpack.c.l.b16 %v3610
        %v3651 = vunpack.c.h.b16 %v3610
        %v3652 = vunpack.c.l.b16 %v3611
        %v3653 = vunpack.c.h.b16 %v3611
        %v3654 = vunpack.c.l.b16 %v3612
        %v3655 = vunpack.c.h.b16 %v3612
        %v3656 = vunpack.c.l.b16 %v3613
        %v3657 = vunpack.c.h.b16 %v3613
        %v3658 = vunpack.c.l.b16 %v3614
        %v3659 = vunpack.c.h.b16 %v3614
        %v3660 = vunpack.c.l.b16 %v3615
        %v3661 = vunpack.c.h.b16 %v3615
        %v3662 = vunpack.c.l.b16 %v3616
        %v3663 = vunpack.c.h.b16 %v3616
        %v3664 = vunpack.c.l.b16 %v3617
        %v3665 = vunpack.c.h.b16 %v3617
        %v3666 = vpack.c.b16 %v3634, %v3634
        %v3667 = vpack.c.b16 %v3635, %v3635
        %v3668 = vpack.c.b16 %v3636, %v3636
        %v3669 = vpack.c.b16 %v3637, %v3637
        %v3670 = vpack.c.b16 %v3638, %v3638
        %v3671 = vpack.c.b16 %v3639, %v3639
        %v3672 = vpack.c.b16 %v3640, %v3640
        %v3673 = vpack.c.b16 %v3641, %v3641
        %v3674 = vpack.c.b16 %v3642, %v3642
        %v3675 = vpack.c.b16 %v3643, %v3643
        %v3676 = vpack.c.b16 %v3644, %v3644
        %v3677 = vpack.c.b16 %v3645, %v3645
        %v3678 = vpack.c.b16 %v3646, %v3646
        %v3679 = vpack.c.b16 %v3647, %v3647
        %v3680 = vpack.c.b16 %v3648, %v3648
        %v3681 = vpack.c.b16 %v3649, %v3649
        %v3682 = vpack.c.b16 %v3650, %v3650
        %v3683 = vpack.c.b16 %v3651, %v3651
        %v3684 = vpack.c.b16 %v3652, %v3652
        %v3685 = vpack.c.b16 %v3653, %v3653
        %v3686 = vpack.c.b16 %v3654, %v3654
        %v3687 = vpack.c.b16 %v3655, %v3655
        %v3688 = vpack.c.b16 %v3656, %v3656
        %v3689 = vpack.c.b16 %v3657, %v3657
        %v3690 = vpack.c.b16 %v3658, %v3658
        %v3691 = vpack.c.b16 %v3659, %v3659
        %v3692 = vpack.c.b16 %v3660, %v3660
        %v3693 = vpack.c.b16 %v3661, %v3661
        %v3694 = vpack.c.b16 %v3662, %v3662
        %v3695 = vpack.c.b16 %v3663, %v3663
        %v3696 = vpack.c.b16 %v3664, %v3664
        %v3697 = vpack.c.b16 %v3665, %v3665
        %3730 = vst [vmem:[%s4 + $0x300] sm:$0xf] %v3666
        %3731 = vst [vmem:[%s4 + $0x304] sm:$0xf] %v3667
        %3732 = vst [vmem:[%s4 + $0x308] sm:$0xf] %v3668
        %3733 = vst [vmem:[%s4 + $0x30c] sm:$0xf] %v3669
        %3734 = vst [vmem:[%s4 + $0x310] sm:$0xf] %v3670
        %3735 = vst [vmem:[%s4 + $0x314] sm:$0xf] %v3671
        %3736 = vst [vmem:[%s4 + $0x318] sm:$0xf] %v3672
        %3737 = vst [vmem:[%s4 + $0x31c] sm:$0xf] %v3673
        %3738 = vst [vmem:[%s4 + $0x320] sm:$0xf] %v3674
        %3739 = vst [vmem:[%s4 + $0x324] sm:$0xf] %v3675
        %3740 = vst [vmem:[%s4 + $0x328] sm:$0xf] %v3676
        %3741 = vst [vmem:[%s4 + $0x32c] sm:$0xf] %v3677
        %3742 = vst [vmem:[%s4 + $0x330] sm:$0xf] %v3678
        %3743 = vst [vmem:[%s4 + $0x334] sm:$0xf] %v3679
        %3744 = vst [vmem:[%s4 + $0x338] sm:$0xf] %v3680
        %3745 = vst [vmem:[%s4 + $0x33c] sm:$0xf] %v3681
        %3746 = vst [vmem:[%s4 + $0x340] sm:$0xf] %v3682
        %3747 = vst [vmem:[%s4 + $0x344] sm:$0xf] %v3683
        %3748 = vst [vmem:[%s4 + $0x348] sm:$0xf] %v3684
        %3749 = vst [vmem:[%s4 + $0x34c] sm:$0xf] %v3685
        %3750 = vst [vmem:[%s4 + $0x350] sm:$0xf] %v3686
        %3751 = vst [vmem:[%s4 + $0x354] sm:$0xf] %v3687
        %3752 = vst [vmem:[%s4 + $0x358] sm:$0xf] %v3688
        %3753 = vst [vmem:[%s4 + $0x35c] sm:$0xf] %v3689
        %3754 = vst [vmem:[%s4 + $0x360] sm:$0xf] %v3690
        %3755 = vst [vmem:[%s4 + $0x364] sm:$0xf] %v3691
        %3756 = vst [vmem:[%s4 + $0x368] sm:$0xf] %v3692
        %3757 = vst [vmem:[%s4 + $0x36c] sm:$0xf] %v3693
        %3758 = vst [vmem:[%s4 + $0x370] sm:$0xf] %v3694
        %3759 = vst [vmem:[%s4 + $0x374] sm:$0xf] %v3695
        %3760 = vst [vmem:[%s4 + $0x378] sm:$0xf] %v3696
        %3761 = vst [vmem:[%s4 + $0x37c] sm:$0xf] %v3697
        %v3762 = vld [vmem:[%s4 + $0x380] sm:$0xf]
        %v3763 = vld [vmem:[%s4 + $0x384] sm:$0xf]
        %v3764 = vld [vmem:[%s4 + $0x388] sm:$0xf]
        %v3765 = vld [vmem:[%s4 + $0x38c] sm:$0xf]
        %v3766 = vld [vmem:[%s4 + $0x390] sm:$0xf]
        %v3767 = vld [vmem:[%s4 + $0x394] sm:$0xf]
        %v3768 = vld [vmem:[%s4 + $0x398] sm:$0xf]
        %v3769 = vld [vmem:[%s4 + $0x39c] sm:$0xf]
        %v3770 = vld [vmem:[%s4 + $0x3a0] sm:$0xf]
        %v3771 = vld [vmem:[%s4 + $0x3a4] sm:$0xf]
        %v3772 = vld [vmem:[%s4 + $0x3a8] sm:$0xf]
        %v3773 = vld [vmem:[%s4 + $0x3ac] sm:$0xf]
        %v3774 = vld [vmem:[%s4 + $0x3b0] sm:$0xf]
        %v3775 = vld [vmem:[%s4 + $0x3b4] sm:$0xf]
        %v3776 = vld [vmem:[%s4 + $0x3b8] sm:$0xf]
        %v3777 = vld [vmem:[%s4 + $0x3bc] sm:$0xf]
        %v3778 = vld [vmem:[%s4 + $0x3c0] sm:$0xf]
        %v3779 = vld [vmem:[%s4 + $0x3c4] sm:$0xf]
        %v3780 = vld [vmem:[%s4 + $0x3c8] sm:$0xf]
        %v3781 = vld [vmem:[%s4 + $0x3cc] sm:$0xf]
        %v3782 = vld [vmem:[%s4 + $0x3d0] sm:$0xf]
        %v3783 = vld [vmem:[%s4 + $0x3d4] sm:$0xf]
        %v3784 = vld [vmem:[%s4 + $0x3d8] sm:$0xf]
        %v3785 = vld [vmem:[%s4 + $0x3dc] sm:$0xf]
        %v3786 = vld [vmem:[%s4 + $0x3e0] sm:$0xf]
        %v3787 = vld [vmem:[%s4 + $0x3e4] sm:$0xf]
        %v3788 = vld [vmem:[%s4 + $0x3e8] sm:$0xf]
        %v3789 = vld [vmem:[%s4 + $0x3ec] sm:$0xf]
        %v3790 = vld [vmem:[%s4 + $0x3f0] sm:$0xf]
        %v3791 = vld [vmem:[%s4 + $0x3f4] sm:$0xf]
        %v3792 = vld [vmem:[%s4 + $0x3f8] sm:$0xf]
        %v3793 = vld [vmem:[%s4 + $0x3fc] sm:$0xf]
        %v3794 = vunpack.c.l.bf16 %v3762
        %v3795 = vunpack.c.l.bf16 %v3763
        %v3796 = vunpack.c.l.bf16 %v3764
        %v3797 = vunpack.c.l.bf16 %v3765
        %v3798 = vunpack.c.l.bf16 %v3766
        %v3799 = vunpack.c.l.bf16 %v3767
        %v3800 = vunpack.c.l.bf16 %v3768
        %v3801 = vunpack.c.l.bf16 %v3769
        %v3802 = vunpack.c.l.bf16 %v3770
        %v3803 = vunpack.c.l.bf16 %v3771
        %v3804 = vunpack.c.l.bf16 %v3772
        %v3805 = vunpack.c.l.bf16 %v3773
        %v3806 = vunpack.c.l.bf16 %v3774
        %v3807 = vunpack.c.l.bf16 %v3775
        %v3808 = vunpack.c.l.bf16 %v3776
        %v3809 = vunpack.c.l.bf16 %v3777
        %v3810 = vunpack.c.l.bf16 %v3778
        %v3811 = vunpack.c.l.bf16 %v3779
        %v3812 = vunpack.c.l.bf16 %v3780
        %v3813 = vunpack.c.l.bf16 %v3781
        %v3814 = vunpack.c.l.bf16 %v3782
        %v3815 = vunpack.c.l.bf16 %v3783
        %v3816 = vunpack.c.l.bf16 %v3784
        %v3817 = vunpack.c.l.bf16 %v3785
        %v3818 = vunpack.c.l.bf16 %v3786
        %v3819 = vunpack.c.l.bf16 %v3787
        %v3820 = vunpack.c.l.bf16 %v3788
        %v3821 = vunpack.c.l.bf16 %v3789
        %v3822 = vunpack.c.l.bf16 %v3790
        %v3823 = vunpack.c.l.bf16 %v3791
        %v3824 = vunpack.c.l.bf16 %v3792
        %v3825 = vunpack.c.l.bf16 %v3793
        %v3826 = vmul.f32 %v3794, %v1578
        %v3827 = vmul.f32 %v3795, %v1578
        %v3828 = vmul.f32 %v3796, %v1578
        %v3829 = vmul.f32 %v3797, %v1578
        %v3830 = vmul.f32 %v3798, %v1578
        %v3831 = vmul.f32 %v3799, %v1578
        %v3832 = vmul.f32 %v3800, %v1578
        %v3833 = vmul.f32 %v3801, %v1578
        %v3834 = vmul.f32 %v3802, %v1578
        %v3835 = vmul.f32 %v3803, %v1578
        %v3836 = vmul.f32 %v3804, %v1578
        %v3837 = vmul.f32 %v3805, %v1578
        %v3838 = vmul.f32 %v3806, %v1578
        %v3839 = vmul.f32 %v3807, %v1578
        %v3840 = vmul.f32 %v3808, %v1578
        %v3841 = vmul.f32 %v3809, %v1578
        %v3842 = vmul.f32 %v3810, %v1578
        %v3843 = vmul.f32 %v3811, %v1578
        %v3844 = vmul.f32 %v3812, %v1578
        %v3845 = vmul.f32 %v3813, %v1578
        %v3846 = vmul.f32 %v3814, %v1578
        %v3847 = vmul.f32 %v3815, %v1578
        %v3848 = vmul.f32 %v3816, %v1578
        %v3849 = vmul.f32 %v3817, %v1578
        %v3850 = vmul.f32 %v3818, %v1578
        %v3851 = vmul.f32 %v3819, %v1578
        %v3852 = vmul.f32 %v3820, %v1578
        %v3853 = vmul.f32 %v3821, %v1578
        %v3854 = vmul.f32 %v3822, %v1578
        %v3855 = vmul.f32 %v3823, %v1578
        %v3856 = vmul.f32 %v3824, %v1578
        %v3857 = vmul.f32 %v3825, %v1578
        %v3858 = vadd.f32 %v3826, %v1616
        %v3859 = vadd.f32 %v3827, %v1616
        %v3860 = vadd.f32 %v3828, %v1616
        %v3861 = vadd.f32 %v3829, %v1616
        %v3862 = vadd.f32 %v3830, %v1616
        %v3863 = vadd.f32 %v3831, %v1616
        %v3864 = vadd.f32 %v3832, %v1616
        %v3865 = vadd.f32 %v3833, %v1616
        %v3866 = vadd.f32 %v3834, %v1616
        %v3867 = vadd.f32 %v3835, %v1616
        %v3868 = vadd.f32 %v3836, %v1616
        %v3869 = vadd.f32 %v3837, %v1616
        %v3870 = vadd.f32 %v3838, %v1616
        %v3871 = vadd.f32 %v3839, %v1616
        %v3872 = vadd.f32 %v3840, %v1616
        %v3873 = vadd.f32 %v3841, %v1616
        %v3874 = vadd.f32 %v3842, %v1616
        %v3875 = vadd.f32 %v3843, %v1616
        %v3876 = vadd.f32 %v3844, %v1616
        %v3877 = vadd.f32 %v3845, %v1616
        %v3878 = vadd.f32 %v3846, %v1616
        %v3879 = vadd.f32 %v3847, %v1616
        %v3880 = vadd.f32 %v3848, %v1616
        %v3881 = vadd.f32 %v3849, %v1616
        %v3882 = vadd.f32 %v3850, %v1616
        %v3883 = vadd.f32 %v3851, %v1616
        %v3884 = vadd.f32 %v3852, %v1616
        %v3885 = vadd.f32 %v3853, %v1616
        %v3886 = vadd.f32 %v3854, %v1616
        %v3887 = vadd.f32 %v3855, %v1616
        %v3888 = vadd.f32 %v3856, %v1616
        %v3889 = vadd.f32 %v3857, %v1616
        %v3890 = vmax.f32 %v3858, 0.0
        %v3891 = vmax.f32 %v3859, 0.0
        %v3892 = vmax.f32 %v3860, 0.0
        %v3893 = vmax.f32 %v3861, 0.0
        %v3894 = vmax.f32 %v3862, 0.0
        %v3895 = vmax.f32 %v3863, 0.0
        %v3896 = vmax.f32 %v3864, 0.0
        %v3897 = vmax.f32 %v3865, 0.0
        %v3898 = vmax.f32 %v3866, 0.0
        %v3899 = vmax.f32 %v3867, 0.0
        %v3900 = vmax.f32 %v3868, 0.0
        %v3901 = vmax.f32 %v3869, 0.0
        %v3902 = vmax.f32 %v3870, 0.0
        %v3903 = vmax.f32 %v3871, 0.0
        %v3904 = vmax.f32 %v3872, 0.0
        %v3905 = vmax.f32 %v3873, 0.0
        %v3906 = vmax.f32 %v3874, 0.0
        %v3907 = vmax.f32 %v3875, 0.0
        %v3908 = vmax.f32 %v3876, 0.0
        %v3909 = vmax.f32 %v3877, 0.0
        %v3910 = vmax.f32 %v3878, 0.0
        %v3911 = vmax.f32 %v3879, 0.0
        %v3912 = vmax.f32 %v3880, 0.0
        %v3913 = vmax.f32 %v3881, 0.0
        %v3914 = vmax.f32 %v3882, 0.0
        %v3915 = vmax.f32 %v3883, 0.0
        %v3916 = vmax.f32 %v3884, 0.0
        %v3917 = vmax.f32 %v3885, 0.0
        %v3918 = vmax.f32 %v3886, 0.0
        %v3919 = vmax.f32 %v3887, 0.0
        %v3920 = vmax.f32 %v3888, 0.0
        %v3921 = vmax.f32 %v3889, 0.0
        %v3922 = vpack.c.bf16 %v3891, %v3890
        %v3923 = vpack.c.bf16 %v3893, %v3892
        %v3924 = vpack.c.bf16 %v3895, %v3894
        %v3925 = vpack.c.bf16 %v3897, %v3896
        %v3926 = vpack.c.bf16 %v3899, %v3898
        %v3927 = vpack.c.bf16 %v3901, %v3900
        %v3928 = vpack.c.bf16 %v3903, %v3902
        %v3929 = vpack.c.bf16 %v3905, %v3904
        %v3930 = vpack.c.bf16 %v3907, %v3906
        %v3931 = vpack.c.bf16 %v3909, %v3908
        %v3932 = vpack.c.bf16 %v3911, %v3910
        %v3933 = vpack.c.bf16 %v3913, %v3912
        %v3934 = vpack.c.bf16 %v3915, %v3914
        %v3935 = vpack.c.bf16 %v3917, %v3916
        %v3936 = vpack.c.bf16 %v3919, %v3918
        %v3937 = vpack.c.bf16 %v3921, %v3920
        %v3954 = vunpack.c.l.b16 %v3922
        %v3955 = vunpack.c.h.b16 %v3922
        %v3956 = vunpack.c.l.b16 %v3923
        %v3957 = vunpack.c.h.b16 %v3923
        %v3958 = vunpack.c.l.b16 %v3924
        %v3959 = vunpack.c.h.b16 %v3924
        %v3960 = vunpack.c.l.b16 %v3925
        %v3961 = vunpack.c.h.b16 %v3925
        %v3962 = vunpack.c.l.b16 %v3926
        %v3963 = vunpack.c.h.b16 %v3926
        %v3964 = vunpack.c.l.b16 %v3927
        %v3965 = vunpack.c.h.b16 %v3927
        %v3966 = vunpack.c.l.b16 %v3928
        %v3967 = vunpack.c.h.b16 %v3928
        %v3968 = vunpack.c.l.b16 %v3929
        %v3969 = vunpack.c.h.b16 %v3929
        %v3970 = vunpack.c.l.b16 %v3930
        %v3971 = vunpack.c.h.b16 %v3930
        %v3972 = vunpack.c.l.b16 %v3931
        %v3973 = vunpack.c.h.b16 %v3931
        %v3974 = vunpack.c.l.b16 %v3932
        %v3975 = vunpack.c.h.b16 %v3932
        %v3976 = vunpack.c.l.b16 %v3933
        %v3977 = vunpack.c.h.b16 %v3933
        %v3978 = vunpack.c.l.b16 %v3934
        %v3979 = vunpack.c.h.b16 %v3934
        %v3980 = vunpack.c.l.b16 %v3935
        %v3981 = vunpack.c.h.b16 %v3935
        %v3982 = vunpack.c.l.b16 %v3936
        %v3983 = vunpack.c.h.b16 %v3936
        %v3984 = vunpack.c.l.b16 %v3937
        %v3985 = vunpack.c.h.b16 %v3937
        %v3986 = vpack.c.b16 %v3954, %v3954
        %v3987 = vpack.c.b16 %v3955, %v3955
        %v3988 = vpack.c.b16 %v3956, %v3956
        %v3989 = vpack.c.b16 %v3957, %v3957
        %v3990 = vpack.c.b16 %v3958, %v3958
        %v3991 = vpack.c.b16 %v3959, %v3959
        %v3992 = vpack.c.b16 %v3960, %v3960
        %v3993 = vpack.c.b16 %v3961, %v3961
        %v3994 = vpack.c.b16 %v3962, %v3962
        %v3995 = vpack.c.b16 %v3963, %v3963
        %v3996 = vpack.c.b16 %v3964, %v3964
        %v3997 = vpack.c.b16 %v3965, %v3965
        %v3998 = vpack.c.b16 %v3966, %v3966
        %v3999 = vpack.c.b16 %v3967, %v3967
        %v4000 = vpack.c.b16 %v3968, %v3968
        %v4001 = vpack.c.b16 %v3969, %v3969
        %v4002 = vpack.c.b16 %v3970, %v3970
        %v4003 = vpack.c.b16 %v3971, %v3971
        %v4004 = vpack.c.b16 %v3972, %v3972
        %v4005 = vpack.c.b16 %v3973, %v3973
        %v4006 = vpack.c.b16 %v3974, %v3974
        %v4007 = vpack.c.b16 %v3975, %v3975
        %v4008 = vpack.c.b16 %v3976, %v3976
        %v4009 = vpack.c.b16 %v3977, %v3977
        %v4010 = vpack.c.b16 %v3978, %v3978
        %v4011 = vpack.c.b16 %v3979, %v3979
        %v4012 = vpack.c.b16 %v3980, %v3980
        %v4013 = vpack.c.b16 %v3981, %v3981
        %v4014 = vpack.c.b16 %v3982, %v3982
        %v4015 = vpack.c.b16 %v3983, %v3983
        %v4016 = vpack.c.b16 %v3984, %v3984
        %v4017 = vpack.c.b16 %v3985, %v3985
        %4050 = vst [vmem:[%s4 + $0x380] sm:$0xf] %v3986
        %4051 = vst [vmem:[%s4 + $0x384] sm:$0xf] %v3987
        %4052 = vst [vmem:[%s4 + $0x388] sm:$0xf] %v3988
        %4053 = vst [vmem:[%s4 + $0x38c] sm:$0xf] %v3989
        %4054 = vst [vmem:[%s4 + $0x390] sm:$0xf] %v3990
        %4055 = vst [vmem:[%s4 + $0x394] sm:$0xf] %v3991
        %4056 = vst [vmem:[%s4 + $0x398] sm:$0xf] %v3992
        %4057 = vst [vmem:[%s4 + $0x39c] sm:$0xf] %v3993
        %4058 = vst [vmem:[%s4 + $0x3a0] sm:$0xf] %v3994
        %4059 = vst [vmem:[%s4 + $0x3a4] sm:$0xf] %v3995
        %4060 = vst [vmem:[%s4 + $0x3a8] sm:$0xf] %v3996
        %4061 = vst [vmem:[%s4 + $0x3ac] sm:$0xf] %v3997
        %4062 = vst [vmem:[%s4 + $0x3b0] sm:$0xf] %v3998
        %4063 = vst [vmem:[%s4 + $0x3b4] sm:$0xf] %v3999
        %4064 = vst [vmem:[%s4 + $0x3b8] sm:$0xf] %v4000
        %4065 = vst [vmem:[%s4 + $0x3bc] sm:$0xf] %v4001
        %4066 = vst [vmem:[%s4 + $0x3c0] sm:$0xf] %v4002
        %4067 = vst [vmem:[%s4 + $0x3c4] sm:$0xf] %v4003
        %4068 = vst [vmem:[%s4 + $0x3c8] sm:$0xf] %v4004
        %4069 = vst [vmem:[%s4 + $0x3cc] sm:$0xf] %v4005
        %4070 = vst [vmem:[%s4 + $0x3d0] sm:$0xf] %v4006
        %4071 = vst [vmem:[%s4 + $0x3d4] sm:$0xf] %v4007
        %4072 = vst [vmem:[%s4 + $0x3d8] sm:$0xf] %v4008
        %4073 = vst [vmem:[%s4 + $0x3dc] sm:$0xf] %v4009
        %4074 = vst [vmem:[%s4 + $0x3e0] sm:$0xf] %v4010
        %4075 = vst [vmem:[%s4 + $0x3e4] sm:$0xf] %v4011
        %4076 = vst [vmem:[%s4 + $0x3e8] sm:$0xf] %v4012
        %4077 = vst [vmem:[%s4 + $0x3ec] sm:$0xf] %v4013
        %4078 = vst [vmem:[%s4 + $0x3f0] sm:$0xf] %v4014
        %4079 = vst [vmem:[%s4 + $0x3f4] sm:$0xf] %v4015
        %4080 = vst [vmem:[%s4 + $0x3f8] sm:$0xf] %v4016
        %4081 = vst [vmem:[%s4 + $0x3fc] sm:$0xf] %v4017
      $region44: #{generator_forward.8} parent=35 // pred_fallthru
        _
      // Predicated region
      $region45: #{generator_forward.8} parent=35 // pred_check
        %p4082 = pneg %p136
      $region46: #{generator_forward.8} parent=35 // pred_check_branch
        %4084 = sbr.rel (%p4082) target = $region48
      $region47: #{generator_forward.8} parent=35 // pred_region
        _
      $region48: #{generator_forward.8} parent=35 // pred_fallthru
        _
      // Predicated region
      $region49: #{generator_forward.8} parent=35 // pred_check
        %p4085 = pneg %p136
      $region50: #{generator_forward.8} parent=35 // pred_check_branch
        %4087 = sbr.rel (%p4085) target = $region52
      $region51: #{generator_forward.8} parent=35 // pred_region
        _
      $region52: #{generator_forward.8} parent=35 // pred_fallthru
        _
    $region36: #{generator_forward.8} parent=5 // pred_fallthru
      _
    %p4088 = scmp.le.s32.totalorder 2, %s10
    // Predicated region
    $region53: #{generator_forward.8} parent=5 // pred_check
      %p4089 = pneg %p4088
    $region54: #{generator_forward.8} parent=5 // pred_check_branch
      %4091 = sbr.rel (%p4089) target = $region56
    $region55: #{generator_forward.8} parent=5 // pred_region
      %s4092 = ssub.s32 %s10, 2
    $region56: #{generator_forward.8} parent=5 // pred_fallthru
      _
  $region6: #{generator_forward.8} parent=0 // loop_footer
    %s14 = sadd.s32 1, %s10
  $region7: #{generator_forward.8} parent=0 // loop_footer_branch
    %9 = sbr.rel target = $region3
  $region8: #{generator_forward.8} parent=0 // loop_exit
    _

// kernel: generator_forward.9
$region0: #{generator_forward.9}
  #allocation0 [shape = 'u32[]', space=smem, size = 0x4, offset = 0x4, fixed_abs, tag = 'smem constant byte address 0x4 - core index']
  #allocation1 [shape = 'u32[144,128]{1,0:T(1,128)}', space=vmem, size = 0x12000, scoped, tag = 'internal scratch']
  %s0 = inlined_call_operand.vmem [shape: bf16[4,2048,128], index: 0, kind: input, shape index: {}]
  %s1 = inlined_call_operand.vmem [shape: bf16[4,128,128], index: 1, kind: input, shape index: {}]
  %s2 = inlined_call_operand.vmem [shape: bf16[4,2048,128], index: 2, kind: output, shape index: {}]
  %s3 = sld [smem:[#allocation0]]
  $region41: #{generator_forward.9} parent=0
    _
  %s5 = ssub.s32 1, %s3
  %s6 = scalar_select 0, %s5, %s3
  loop: start=0, step=1, limit=10
  $region2: #{generator_forward.9} parent=0 // loop_pre_header
    _
  $region3: #{generator_forward.9} parent=0 // loop_header
    %s8 = sphi 0, %s12
    %p9 = scmp.ge.s32.totalorder %s8, 10
    %s15 = sphi 0, %s27
    %s16 = sphi 0, %s23
    %s17 = sphi 0, %s15
    %s18 = sphi 0, %s16
    %s19 = sphi 0, %s17
    %s20 = sphi 0, %s18
    %s32 = sphi 0, %s34
    %s35 = sphi 0, %s32
    %s36 = sphi 0, %s35
    %s52 = sphi 0, %s36
    %s58 = sphi 0, %s60
    %s61 = sphi 0, %s58
    %s62 = sphi 0, %s61
    %s78 = sphi 0, %s62
    %s86 = sphi 0, %s88
    %s89 = sphi 0, %s86
    %s90 = sphi 0, %s89
    %s106 = sphi 0, %s90
  $region4: #{generator_forward.9} parent=0 // loop_header_branch
    %11 = sbr.rel (%p9) target = $region8
  $region5: #{generator_forward.9} parent=0 // loop_body
    %s13 = ssub.s32 %s8, 1
    %s14 = ssub.s32 %s8, 2
    %s21 = sadd.s32 1, %s16
    %p22 = scmp.ge.s32.totalorder %s21, 2
    %s23 = scalar_select %p22, 0, %s21
    %s24 = sadd.s32 1, %s15
    %s25 = scalar_select %p22, %s24, %s15
    %p26 = scmp.ge.s32.totalorder %s25, 4
    %s27 = scalar_select %p26, 0, %s25
    %s28 = ssub.s32 %s15, %s27
    %s29 = ssub.s32 %s16, %s23
    %s30 = sor.u32 %s28, %s29
    %p31 = scmp.eq.s32.totalorder %s30, 0
    %s33 = sadd.s32 %s32, 1
    %s34 = scalar_select %p31, %s32, %s33
    %p37 = pneg %p31
    %p38 = scmp.eq.s32.totalorder %s8, 7
    %p39 = por %p37, %p38
    %p40 = scmp.ne.s32.totalorder %s32, %s35
    %p41 = scmp.eq.s32.totalorder %s8, 0
    %p42 = por %p40, %p41
    %p43 = scmp.ne.s32.totalorder %s32, %s35
    %p44 = scmp.eq.s32.totalorder %s13, 7
    %p45 = por %p43, %p44
    %p46 = scmp.ne.s32.totalorder %s35, %s36
    %p47 = scmp.eq.s32.totalorder %s13, 0
    %p48 = por %p46, %p47
    %p49 = scmp.ne.s32.totalorder %s35, %s36
    %p50 = scmp.eq.s32.totalorder %s14, 7
    %p51 = por %p49, %p50
    %p53 = scmp.ne.s32.totalorder %s36, %s52
    %p54 = scmp.eq.s32.totalorder %s14, 0
    %p55 = por %p53, %p54
    %s56 = ssub.s32 %s15, %s27
    %p57 = scmp.eq.s32.totalorder %s56, 0
    %s59 = sadd.s32 %s58, 1
    %s60 = scalar_select %p57, %s58, %s59
    %p63 = pneg %p57
    %p64 = scmp.eq.s32.totalorder %s8, 7
    %p65 = por %p63, %p64
    %p66 = scmp.ne.s32.totalorder %s58, %s61
    %p67 = scmp.eq.s32.totalorder %s8, 0
    %p68 = por %p66, %p67
    %p69 = scmp.ne.s32.totalorder %s58, %s61
    %p70 = scmp.eq.s32.totalorder %s13, 7
    %p71 = por %p69, %p70
    %p72 = scmp.ne.s32.totalorder %s61, %s62
    %p73 = scmp.eq.s32.totalorder %s13, 0
    %p74 = por %p72, %p73
    %p75 = scmp.ne.s32.totalorder %s61, %s62
    %p76 = scmp.eq.s32.totalorder %s14, 7
    %p77 = por %p75, %p76
    %p79 = scmp.ne.s32.totalorder %s62, %s78
    %p80 = scmp.eq.s32.totalorder %s14, 0
    %p81 = por %p79, %p80
    %s82 = ssub.s32 %s15, %s27
    %s83 = ssub.s32 %s16, %s23
    %s84 = sor.u32 %s82, %s83
    %p85 = scmp.eq.s32.totalorder %s84, 0
    %s87 = sadd.s32 %s86, 1
    %s88 = scalar_select %p85, %s86, %s87
    %p91 = pneg %p85
    %p92 = scmp.eq.s32.totalorder %s8, 7
    %p93 = por %p91, %p92
    %p94 = scmp.ne.s32.totalorder %s86, %s89
    %p95 = scmp.eq.s32.totalorder %s8, 0
    %p96 = por %p94, %p95
    %p97 = scmp.ne.s32.totalorder %s86, %s89
    %p98 = scmp.eq.s32.totalorder %s13, 7
    %p99 = por %p97, %p98
    %p100 = scmp.ne.s32.totalorder %s89, %s90
    %p101 = scmp.eq.s32.totalorder %s13, 0
    %p102 = por %p100, %p101
    %p103 = scmp.ne.s32.totalorder %s89, %s90
    %p104 = scmp.eq.s32.totalorder %s14, 7
    %p105 = por %p103, %p104
    %p107 = scmp.ne.s32.totalorder %s90, %s106
    %p108 = scmp.eq.s32.totalorder %s14, 0
    %p109 = por %p107, %p108
    %p110 = scmp.le.s32.totalorder 1, %s8
    %p111 = scmp.lt.s32.totalorder %s8, 9
    %p112 = pnand %p110, %p111
    %p113 = pneg %p112
    // Predicated region
    $region9: #{generator_forward.9} parent=5 // pred_check
      _
    $region10: #{generator_forward.9} parent=5 // pred_check_branch
      %115 = sbr.rel (%p112) target = $region12
    $region11: #{generator_forward.9} parent=5 // pred_region
      %s116 = ssub.s32 %s8, 1
    $region12: #{generator_forward.9} parent=5 // pred_fallthru
      _
    %p117 = scmp.lt.s32.totalorder %s8, 8
    // Predicated region
    $region13: #{generator_forward.9} parent=5 // pred_check
      %p118 = pneg %p117
    $region14: #{generator_forward.9} parent=5 // pred_check_branch
      %120 = sbr.rel (%p118) target = $region16
    $region15: #{generator_forward.9} parent=5 // pred_region
      // Predicated region
      $region17: #{generator_forward.9} parent=15 // pred_check
        %p121 = pneg %p42
      $region18: #{generator_forward.9} parent=15 // pred_check_branch
        %123 = sbr.rel (%p121) target = $region20
      $region19: #{generator_forward.9} parent=15 // pred_region
        %s124 = smul.u32 128, %s16
        %p125 = scmp.lt.s32.totalorder %s15, 3
        %s126 = scalar_select %p125, %s15, 3
        %p127 = scmp.lt.s32.totalorder %s124, 255
        %s128 = scalar_select %p127, %s124, 255
        %s129 = smul.addr %s126, 256
        %s130 = sadd.s32 %s128, %s129
        %s131 = smul.addr %s130, 4
        %s132 = scalar_lea.vmem %s0, %s131
        %s133 = smul.u32 128, %s16
      $region20: #{generator_forward.9} parent=15 // pred_fallthru
        _
      // Predicated region
      $region21: #{generator_forward.9} parent=15 // pred_check
        %p134 = pneg %p68
      $region22: #{generator_forward.9} parent=15 // pred_check_branch
        %136 = sbr.rel (%p134) target = $region24
      $region23: #{generator_forward.9} parent=15 // pred_region
        %p137 = scmp.lt.s32.totalorder %s15, 3
        %s138 = scalar_select %p137, %s15, 3
        %s139 = smul.addr %s138, 16
        %s140 = smul.addr %s139, 4
        %s141 = scalar_lea.vmem %s1, %s140
      $region24: #{generator_forward.9} parent=15 // pred_fallthru
        _
    $region16: #{generator_forward.9} parent=5 // pred_fallthru
      _
    %p142 = scmp.le.s32.totalorder 1, %s8
    %p143 = scmp.lt.s32.totalorder %s8, 9
    %p144 = pnand %p142, %p143
    %p145 = pneg %p144
    // Predicated region
    $region25: #{generator_forward.9} parent=5 // pred_check
      _
    $region26: #{generator_forward.9} parent=5 // pred_check_branch
      %147 = sbr.rel (%p144) target = $region28
    $region27: #{generator_forward.9} parent=5 // pred_region
      %s148 = ssub.s32 %s8, 1
      %s149 = smul.u32 128, %s18
      %p150 = scmp.lt.s32.totalorder %s17, 3
      %s151 = scalar_select %p150, %s17, 3
      %p152 = scmp.lt.s32.totalorder %s149, 255
      %s153 = scalar_select %p152, %s149, 255
      %s154 = smul.addr %s151, 256
      %s155 = sadd.s32 %s153, %s154
      %s156 = smul.addr %s155, 4
      %s157 = scalar_lea.vmem %s0, %s156
      %p158 = pneg %p48
      %p159 = pneg %p45
      %p160 = scmp.lt.s32.totalorder %s17, 3
      %s161 = scalar_select %p160, %s17, 3
      %s162 = smul.addr %s161, 16
      %s163 = smul.addr %s162, 4
      %s164 = scalar_lea.vmem %s1, %s163
      %p165 = pneg %p74
      %p166 = pneg %p71
      %p167 = pneg %p102
      %p168 = pneg %p99
      %s169 = smul.u32 128, %s18
      %p170 = scmp.lt.s32.totalorder %s17, 3
      %s171 = scalar_select %p170, %s17, 3
      %p172 = scmp.lt.s32.totalorder %s169, 255
      %s173 = scalar_select %p172, %s169, 255
      %s174 = smul.addr %s171, 256
      %s175 = sadd.s32 %s173, %s174
      %s176 = smul.addr %s175, 4
      %s177 = scalar_lea.vmem %s2, %s176
      %s178 = smul.u32 128, %s18
      %p179 = scmp.lt.s32.totalorder %s17, 3
      %s180 = scalar_select %p179, %s17, 3
      %p181 = scmp.lt.s32.totalorder %s178, 255
      %s182 = scalar_select %p181, %s178, 255
      %s183 = smul.addr %s180, 256
      %s184 = sadd.s32 %s182, %s183
      %s185 = smul.addr %s184, 4
      %s186 = scalar_lea.vmem %s0, %s185
      %s187 = smul.u32 128, %s18
      %p188 = scmp.lt.s32.totalorder %s17, 3
      %s189 = scalar_select %p188, %s17, 3
      %s190 = smul.addr %s189, 16
      %s191 = smul.addr %s190, 4
      %s192 = scalar_lea.vmem %s1, %s191
      %s193 = smul.u32 128, %s18
      %p194 = scmp.lt.s32.totalorder %s17, 3
      %s195 = scalar_select %p194, %s17, 3
      %p196 = scmp.lt.s32.totalorder %s193, 255
      %s197 = scalar_select %p196, %s193, 255
      %s198 = smul.addr %s195, 256
      %s199 = sadd.s32 %s197, %s198
      %s200 = smul.addr %s199, 4
      %s201 = scalar_lea.vmem %s2, %s200
      %s202 = smul.u32 128, %s18
      %v204 = vld [vmem:[%s186] sm:$0xf]
      %v205 = vld [vmem:[%s186 + $0x4] sm:$0xf]
      %v206 = vld [vmem:[%s186 + $0x8] sm:$0xf]
      %v207 = vld [vmem:[%s186 + $0xc] sm:$0xf]
      %v208 = vld [vmem:[%s186 + $0x10] sm:$0xf]
      %v209 = vld [vmem:[%s186 + $0x14] sm:$0xf]
      %v210 = vld [vmem:[%s186 + $0x18] sm:$0xf]
      %v211 = vld [vmem:[%s186 + $0x1c] sm:$0xf]
      %v212 = vld [vmem:[%s186 + $0x20] sm:$0xf]
      %v213 = vld [vmem:[%s186 + $0x24] sm:$0xf]
      %v214 = vld [vmem:[%s186 + $0x28] sm:$0xf]
      %v215 = vld [vmem:[%s186 + $0x2c] sm:$0xf]
      %v216 = vld [vmem:[%s186 + $0x30] sm:$0xf]
      %v217 = vld [vmem:[%s186 + $0x34] sm:$0xf]
      %v218 = vld [vmem:[%s186 + $0x38] sm:$0xf]
      %v219 = vld [vmem:[%s186 + $0x3c] sm:$0xf]
      %v220 = vld [vmem:[%s186 + $0x40] sm:$0xf]
      %v221 = vld [vmem:[%s186 + $0x44] sm:$0xf]
      %v222 = vld [vmem:[%s186 + $0x48] sm:$0xf]
      %v223 = vld [vmem:[%s186 + $0x4c] sm:$0xf]
      %v224 = vld [vmem:[%s186 + $0x50] sm:$0xf]
      %v225 = vld [vmem:[%s186 + $0x54] sm:$0xf]
      %v226 = vld [vmem:[%s186 + $0x58] sm:$0xf]
      %v227 = vld [vmem:[%s186 + $0x5c] sm:$0xf]
      %v228 = vld [vmem:[%s186 + $0x60] sm:$0xf]
      %v229 = vld [vmem:[%s186 + $0x64] sm:$0xf]
      %v230 = vld [vmem:[%s186 + $0x68] sm:$0xf]
      %v231 = vld [vmem:[%s186 + $0x6c] sm:$0xf]
      %v232 = vld [vmem:[%s186 + $0x70] sm:$0xf]
      %v233 = vld [vmem:[%s186 + $0x74] sm:$0xf]
      %v234 = vld [vmem:[%s186 + $0x78] sm:$0xf]
      %v235 = vld [vmem:[%s186 + $0x7c] sm:$0xf]
      %v236 = vld [vmem:[%s192] sm:$0xf]
      %v237 = vld [vmem:[%s192 + $0x4] sm:$0xf]
      %v238 = vld [vmem:[%s192 + $0x8] sm:$0xf]
      %v239 = vld [vmem:[%s192 + $0xc] sm:$0xf]
      %v240 = vld [vmem:[%s192 + $0x10] sm:$0xf]
      %v241 = vld [vmem:[%s192 + $0x14] sm:$0xf]
      %v242 = vld [vmem:[%s192 + $0x18] sm:$0xf]
      %v243 = vld [vmem:[%s192 + $0x1c] sm:$0xf]
      %v244 = vld [vmem:[%s192 + $0x20] sm:$0xf]
      %v245 = vld [vmem:[%s192 + $0x24] sm:$0xf]
      %v246 = vld [vmem:[%s192 + $0x28] sm:$0xf]
      %v247 = vld [vmem:[%s192 + $0x2c] sm:$0xf]
      %v248 = vld [vmem:[%s192 + $0x30] sm:$0xf]
      %v249 = vld [vmem:[%s192 + $0x34] sm:$0xf]
      %v250 = vld [vmem:[%s192 + $0x38] sm:$0xf]
      %v251 = vld [vmem:[%s192 + $0x3c] sm:$0xf]
      %v284 = vunpack.c.l.b16 %v204
      %v285 = vunpack.c.l.b16 %v205
      %v286 = vunpack.c.l.b16 %v206
      %v287 = vunpack.c.l.b16 %v207
      %v288 = vunpack.c.l.b16 %v208
      %v289 = vunpack.c.l.b16 %v209
      %v290 = vunpack.c.l.b16 %v210
      %v291 = vunpack.c.l.b16 %v211
      %v292 = vunpack.c.l.b16 %v212
      %v293 = vunpack.c.l.b16 %v213
      %v294 = vunpack.c.l.b16 %v214
      %v295 = vunpack.c.l.b16 %v215
      %v296 = vunpack.c.l.b16 %v216
      %v297 = vunpack.c.l.b16 %v217
      %v298 = vunpack.c.l.b16 %v218
      %v299 = vunpack.c.l.b16 %v219
      %v300 = vunpack.c.l.b16 %v220
      %v301 = vunpack.c.l.b16 %v221
      %v302 = vunpack.c.l.b16 %v222
      %v303 = vunpack.c.l.b16 %v223
      %v304 = vunpack.c.l.b16 %v224
      %v305 = vunpack.c.l.b16 %v225
      %v306 = vunpack.c.l.b16 %v226
      %v307 = vunpack.c.l.b16 %v227
      %v308 = vunpack.c.l.b16 %v228
      %v309 = vunpack.c.l.b16 %v229
      %v310 = vunpack.c.l.b16 %v230
      %v311 = vunpack.c.l.b16 %v231
      %v312 = vunpack.c.l.b16 %v232
      %v313 = vunpack.c.l.b16 %v233
      %v314 = vunpack.c.l.b16 %v234
      %v315 = vunpack.c.l.b16 %v235
      %v316 = vpack.c.b16 %v285, %v284
      %v317 = vpack.c.b16 %v287, %v286
      %v318 = vpack.c.b16 %v289, %v288
      %v319 = vpack.c.b16 %v291, %v290
      %v320 = vpack.c.b16 %v293, %v292
      %v321 = vpack.c.b16 %v295, %v294
      %v322 = vpack.c.b16 %v297, %v296
      %v323 = vpack.c.b16 %v299, %v298
      %v324 = vpack.c.b16 %v301, %v300
      %v325 = vpack.c.b16 %v303, %v302
      %v326 = vpack.c.b16 %v305, %v304
      %v327 = vpack.c.b16 %v307, %v306
      %v328 = vpack.c.b16 %v309, %v308
      %v329 = vpack.c.b16 %v311, %v310
      %v330 = vpack.c.b16 %v313, %v312
      %v331 = vpack.c.b16 %v315, %v314
      %v364 = vunpack.c.l.b16 %v236
      %v365 = vunpack.c.l.b16 %v237
      %v366 = vunpack.c.l.b16 %v238
      %v367 = vunpack.c.l.b16 %v239
      %v368 = vunpack.c.l.b16 %v240
      %v369 = vunpack.c.l.b16 %v241
      %v370 = vunpack.c.l.b16 %v242
      %v371 = vunpack.c.l.b16 %v243
      %v372 = vunpack.c.l.b16 %v244
      %v373 = vunpack.c.l.b16 %v245
      %v374 = vunpack.c.l.b16 %v246
      %v375 = vunpack.c.l.b16 %v247
      %v376 = vunpack.c.l.b16 %v248
      %v377 = vunpack.c.l.b16 %v249
      %v378 = vunpack.c.l.b16 %v250
      %v379 = vunpack.c.l.b16 %v251
      %v380 = vpack.c.b16 %v365, %v364
      %v381 = vpack.c.b16 %v367, %v366
      %v382 = vpack.c.b16 %v369, %v368
      %v383 = vpack.c.b16 %v371, %v370
      %v384 = vpack.c.b16 %v373, %v372
      %v385 = vpack.c.b16 %v375, %v374
      %v386 = vpack.c.b16 %v377, %v376
      %v387 = vpack.c.b16 %v379, %v378
      %396 = vmatprep.subr.bf16.mxu0 0
      %397 = vmatpush1.bf16.msra.mxu0 %v380
      %398 = vmatprep.subr.bf16.mxu0 0
      %399 = vmatpush1.bf16.msra.mxu0 %v381
      %400 = vmatprep.subr.bf16.mxu0 0
      %401 = vmatpush1.bf16.msra.mxu0 %v382
      %402 = vmatprep.subr.bf16.mxu0 0
      %403 = vmatpush1.bf16.msra.mxu0 %v383
      %404 = vmatprep.subr.bf16.mxu0 0
      %405 = vmatpush1.bf16.msra.mxu0 %v384
      %406 = vmatprep.subr.bf16.mxu0 0
      %407 = vmatpush1.bf16.msra.mxu0 %v385
      %408 = vmatprep.subr.bf16.mxu0 0
      %409 = vmatpush1.bf16.msra.mxu0 %v386
      %410 = vmatprep.subr.bf16.mxu0 0
      %411 = vmatpush1.bf16.msra.mxu0 %v387
      %412 = vmatprep.subr.bf16.mxu0 0
      %413 = vmatpush1.bf16.msra.mxu0 0
      %414 = vmatprep.subr.bf16.mxu0 0
      %415 = vmatpush1.bf16.msra.mxu0 0
      %416 = vmatprep.subr.bf16.mxu0 0
      %417 = vmatpush1.bf16.msra.mxu0 0
      %418 = vmatprep.subr.bf16.mxu0 0
      %419 = vmatpush1.bf16.msra.mxu0 0
      %420 = vmatprep.subr.bf16.mxu0 0
      %421 = vmatpush1.bf16.msra.mxu0 0
      %422 = vmatprep.subr.bf16.mxu0 0
      %423 = vmatpush1.bf16.msra.mxu0 0
      %424 = vmatprep.subr.bf16.mxu0 0
      %425 = vmatpush1.bf16.msra.mxu0 0
      %426 = vmatprep.subr.bf16.mxu0 0
      %427 = vmatpush1.bf16.msra.mxu0 0
      %428 = vmatprep.mubr.bf16.mxu0 0
      %429 = vmatmul.mubr.bf16.gmra.mrb[0].mxu0 %v316
      %v430 = vpop.f32.mrb[0].mxu0
      %v431 = vadd.f32 0.0, %v430
      %v432 = vpop.f32.mrb[0].mxu0
      %v433 = vpop.f32.mrb[0].mxu0
      %v434 = vadd.f32 0.0, %v433
      %v435 = vpop.f32.mrb[0].mxu0
      %436 = vmatprep.mubr.bf16.mxu0 0
      %437 = vmatmul.mubr.bf16.gmra.mrb[0].mxu0 %v317
      %v438 = vpop.f32.mrb[0].mxu0
      %v439 = vadd.f32 0.0, %v438
      %v440 = vpop.f32.mrb[0].mxu0
      %v441 = vpop.f32.mrb[0].mxu0
      %v442 = vadd.f32 0.0, %v441
      %v443 = vpop.f32.mrb[0].mxu0
      %444 = vmatprep.mubr.bf16.mxu0 0
      %445 = vmatmul.mubr.bf16.gmra.mrb[0].mxu0 %v318
      %v446 = vpop.f32.mrb[0].mxu0
      %v447 = vadd.f32 0.0, %v446
      %v448 = vpop.f32.mrb[0].mxu0
      %v449 = vpop.f32.mrb[0].mxu0
      %v450 = vadd.f32 0.0, %v449
      %v451 = vpop.f32.mrb[0].mxu0
      %452 = vmatprep.mubr.bf16.mxu0 0
      %453 = vmatmul.mubr.bf16.gmra.mrb[0].mxu0 %v319
      %v454 = vpop.f32.mrb[0].mxu0
      %v455 = vadd.f32 0.0, %v454
      %v456 = vpop.f32.mrb[0].mxu0
      %v457 = vpop.f32.mrb[0].mxu0
      %v458 = vadd.f32 0.0, %v457
      %v459 = vpop.f32.mrb[0].mxu0
      %460 = vmatprep.mubr.bf16.mxu0 0
      %461 = vmatmul.mubr.bf16.gmra.mrb[0].mxu0 %v320
      %v462 = vpop.f32.mrb[0].mxu0
      %v463 = vadd.f32 0.0, %v462
      %v464 = vpop.f32.mrb[0].mxu0
      %v465 = vpop.f32.mrb[0].mxu0
      %v466 = vadd.f32 0.0, %v465
      %v467 = vpop.f32.mrb[0].mxu0
      %468 = vmatprep.mubr.bf16.mxu0 0
      %469 = vmatmul.mubr.bf16.gmra.mrb[0].mxu0 %v321
      %v470 = vpop.f32.mrb[0].mxu0
      %v471 = vadd.f32 0.0, %v470
      %v472 = vpop.f32.mrb[0].mxu0
      %v473 = vpop.f32.mrb[0].mxu0
      %v474 = vadd.f32 0.0, %v473
      %v475 = vpop.f32.mrb[0].mxu0
      %476 = vmatprep.mubr.bf16.mxu0 0
      %477 = vmatmul.mubr.bf16.gmra.mrb[0].mxu0 %v322
      %v478 = vpop.f32.mrb[0].mxu0
      %v479 = vadd.f32 0.0, %v478
      %v480 = vpop.f32.mrb[0].mxu0
      %v481 = vpop.f32.mrb[0].mxu0
      %v482 = vadd.f32 0.0, %v481
      %v483 = vpop.f32.mrb[0].mxu0
      %484 = vmatprep.mubr.bf16.mxu0 0
      %485 = vmatmul.mubr.bf16.gmra.mrb[0].mxu0 %v323
      %v486 = vpop.f32.mrb[0].mxu0
      %v487 = vadd.f32 0.0, %v486
      %v488 = vpop.f32.mrb[0].mxu0
      %v489 = vpop.f32.mrb[0].mxu0
      %v490 = vadd.f32 0.0, %v489
      %v491 = vpop.f32.mrb[0].mxu0
      %492 = vmatprep.mubr.bf16.mxu0 0
      %493 = vmatmul.mubr.bf16.gmra.mrb[0].mxu0 %v324
      %v494 = vpop.f32.mrb[0].mxu0
      %v495 = vadd.f32 0.0, %v494
      %v496 = vpop.f32.mrb[0].mxu0
      %v497 = vpop.f32.mrb[0].mxu0
      %v498 = vadd.f32 0.0, %v497
      %v499 = vpop.f32.mrb[0].mxu0
      %500 = vmatprep.mubr.bf16.mxu0 0
      %501 = vmatmul.mubr.bf16.gmra.mrb[0].mxu0 %v325
      %v502 = vpop.f32.mrb[0].mxu0
      %v503 = vadd.f32 0.0, %v502
      %v504 = vpop.f32.mrb[0].mxu0
      %v505 = vpop.f32.mrb[0].mxu0
      %v506 = vadd.f32 0.0, %v505
      %v507 = vpop.f32.mrb[0].mxu0
      %508 = vmatprep.mubr.bf16.mxu0 0
      %509 = vmatmul.mubr.bf16.gmra.mrb[0].mxu0 %v326
      %v510 = vpop.f32.mrb[0].mxu0
      %v511 = vadd.f32 0.0, %v510
      %v512 = vpop.f32.mrb[0].mxu0
      %v513 = vpop.f32.mrb[0].mxu0
      %v514 = vadd.f32 0.0, %v513
      %v515 = vpop.f32.mrb[0].mxu0
      %516 = vmatprep.mubr.bf16.mxu0 0
      %517 = vmatmul.mubr.bf16.gmra.mrb[0].mxu0 %v327
      %v518 = vpop.f32.mrb[0].mxu0
      %v519 = vadd.f32 0.0, %v518
      %v520 = vpop.f32.mrb[0].mxu0
      %v521 = vpop.f32.mrb[0].mxu0
      %v522 = vadd.f32 0.0, %v521
      %v523 = vpop.f32.mrb[0].mxu0
      %524 = vmatprep.mubr.bf16.mxu0 0
      %525 = vmatmul.mubr.bf16.gmra.mrb[0].mxu0 %v328
      %v526 = vpop.f32.mrb[0].mxu0
      %v527 = vadd.f32 0.0, %v526
      %v528 = vpop.f32.mrb[0].mxu0
      %v529 = vpop.f32.mrb[0].mxu0
      %v530 = vadd.f32 0.0, %v529
      %v531 = vpop.f32.mrb[0].mxu0
      %532 = vmatprep.mubr.bf16.mxu0 0
      %533 = vmatmul.mubr.bf16.gmra.mrb[0].mxu0 %v329
      %v534 = vpop.f32.mrb[0].mxu0
      %v535 = vadd.f32 0.0, %v534
      %v536 = vpop.f32.mrb[0].mxu0
      %v537 = vpop.f32.mrb[0].mxu0
      %v538 = vadd.f32 0.0, %v537
      %v539 = vpop.f32.mrb[0].mxu0
      %540 = vmatprep.mubr.bf16.mxu0 0
      %541 = vmatmul.mubr.bf16.gmra.mrb[0].mxu0 %v330
      %v542 = vpop.f32.mrb[0].mxu0
      %v543 = vadd.f32 0.0, %v542
      %v544 = vpop.f32.mrb[0].mxu0
      %v545 = vpop.f32.mrb[0].mxu0
      %v546 = vadd.f32 0.0, %v545
      %v547 = vpop.f32.mrb[0].mxu0
      %548 = vmatprep.mubr.bf16.mxu0 0
      %549 = vmatmul.mubr.bf16.gmra.mrb[0].mxu0 %v331
      %v550 = vpop.f32.mrb[0].mxu0
      %v551 = vadd.f32 0.0, %v550
      %v552 = vpop.f32.mrb[0].mxu0
      %v553 = vpop.f32.mrb[0].mxu0
      %v554 = vadd.f32 0.0, %v553
      %v555 = vpop.f32.mrb[0].mxu0
      %556 = vdwg.mxu0
      %v557 = vtanh.pop %v431
      %v558 = vtanh.pop %v434
      %v559 = vtanh.pop %v439
      %v560 = vtanh.pop %v442
      %v561 = vtanh.pop %v447
      %v562 = vtanh.pop %v450
      %v563 = vtanh.pop %v455
      %v564 = vtanh.pop %v458
      %v565 = vtanh.pop %v463
      %v566 = vtanh.pop %v466
      %v567 = vtanh.pop %v471
      %v568 = vtanh.pop %v474
      %v569 = vtanh.pop %v479
      %v570 = vtanh.pop %v482
      %v571 = vtanh.pop %v487
      %v572 = vtanh.pop %v490
      %v573 = vtanh.pop %v495
      %v574 = vtanh.pop %v498
      %v575 = vtanh.pop %v503
      %v576 = vtanh.pop %v506
      %v577 = vtanh.pop %v511
      %v578 = vtanh.pop %v514
      %v579 = vtanh.pop %v519
      %v580 = vtanh.pop %v522
      %v581 = vtanh.pop %v527
      %v582 = vtanh.pop %v530
      %v583 = vtanh.pop %v535
      %v584 = vtanh.pop %v538
      %v585 = vtanh.pop %v543
      %v586 = vtanh.pop %v546
      %v587 = vtanh.pop %v551
      %v588 = vtanh.pop %v554
      %v589 = vpack.c.bf16 %v558, %v557
      %v590 = vpack.c.bf16 %v560, %v559
      %v591 = vpack.c.bf16 %v562, %v561
      %v592 = vpack.c.bf16 %v564, %v563
      %v593 = vpack.c.bf16 %v566, %v565
      %v594 = vpack.c.bf16 %v568, %v567
      %v595 = vpack.c.bf16 %v570, %v569
      %v596 = vpack.c.bf16 %v572, %v571
      %v597 = vpack.c.bf16 %v574, %v573
      %v598 = vpack.c.bf16 %v576, %v575
      %v599 = vpack.c.bf16 %v578, %v577
      %v600 = vpack.c.bf16 %v580, %v579
      %v601 = vpack.c.bf16 %v582, %v581
      %v602 = vpack.c.bf16 %v584, %v583
      %v603 = vpack.c.bf16 %v586, %v585
      %v604 = vpack.c.bf16 %v588, %v587
      %v621 = vunpack.c.l.b16 %v589
      %v622 = vunpack.c.h.b16 %v589
      %v623 = vunpack.c.l.b16 %v590
      %v624 = vunpack.c.h.b16 %v590
      %v625 = vunpack.c.l.b16 %v591
      %v626 = vunpack.c.h.b16 %v591
      %v627 = vunpack.c.l.b16 %v592
      %v628 = vunpack.c.h.b16 %v592
      %v629 = vunpack.c.l.b16 %v593
      %v630 = vunpack.c.h.b16 %v593
      %v631 = vunpack.c.l.b16 %v594
      %v632 = vunpack.c.h.b16 %v594
      %v633 = vunpack.c.l.b16 %v595
      %v634 = vunpack.c.h.b16 %v595
      %v635 = vunpack.c.l.b16 %v596
      %v636 = vunpack.c.h.b16 %v596
      %v637 = vunpack.c.l.b16 %v597
      %v638 = vunpack.c.h.b16 %v597
      %v639 = vunpack.c.l.b16 %v598
      %v640 = vunpack.c.h.b16 %v598
      %v641 = vunpack.c.l.b16 %v599
      %v642 = vunpack.c.h.b16 %v599
      %v643 = vunpack.c.l.b16 %v600
      %v644 = vunpack.c.h.b16 %v600
      %v645 = vunpack.c.l.b16 %v601
      %v646 = vunpack.c.h.b16 %v601
      %v647 = vunpack.c.l.b16 %v602
      %v648 = vunpack.c.h.b16 %v602
      %v649 = vunpack.c.l.b16 %v603
      %v650 = vunpack.c.h.b16 %v603
      %v651 = vunpack.c.l.b16 %v604
      %v652 = vunpack.c.h.b16 %v604
      %v653 = vpack.c.b16 %v621, %v621
      %v654 = vpack.c.b16 %v622, %v622
      %v655 = vpack.c.b16 %v623, %v623
      %v656 = vpack.c.b16 %v624, %v624
      %v657 = vpack.c.b16 %v625, %v625
      %v658 = vpack.c.b16 %v626, %v626
      %v659 = vpack.c.b16 %v627, %v627
      %v660 = vpack.c.b16 %v628, %v628
      %v661 = vpack.c.b16 %v629, %v629
      %v662 = vpack.c.b16 %v630, %v630
      %v663 = vpack.c.b16 %v631, %v631
      %v664 = vpack.c.b16 %v632, %v632
      %v665 = vpack.c.b16 %v633, %v633
      %v666 = vpack.c.b16 %v634, %v634
      %v667 = vpack.c.b16 %v635, %v635
      %v668 = vpack.c.b16 %v636, %v636
      %v669 = vpack.c.b16 %v637, %v637
      %v670 = vpack.c.b16 %v638, %v638
      %v671 = vpack.c.b16 %v639, %v639
      %v672 = vpack.c.b16 %v640, %v640
      %v673 = vpack.c.b16 %v641, %v641
      %v674 = vpack.c.b16 %v642, %v642
      %v675 = vpack.c.b16 %v643, %v643
      %v676 = vpack.c.b16 %v644, %v644
      %v677 = vpack.c.b16 %v645, %v645
      %v678 = vpack.c.b16 %v646, %v646
      %v679 = vpack.c.b16 %v647, %v647
      %v680 = vpack.c.b16 %v648, %v648
      %v681 = vpack.c.b16 %v649, %v649
      %v682 = vpack.c.b16 %v650, %v650
      %v683 = vpack.c.b16 %v651, %v651
      %v684 = vpack.c.b16 %v652, %v652
      %717 = vst [vmem:[%s201] sm:$0xf] %v653
      %718 = vst [vmem:[%s201 + $0x4] sm:$0xf] %v654
      %719 = vst [vmem:[%s201 + $0x8] sm:$0xf] %v655
      %720 = vst [vmem:[%s201 + $0xc] sm:$0xf] %v656
      %721 = vst [vmem:[%s201 + $0x10] sm:$0xf] %v657
      %722 = vst [vmem:[%s201 + $0x14] sm:$0xf] %v658
      %723 = vst [vmem:[%s201 + $0x18] sm:$0xf] %v659
      %724 = vst [vmem:[%s201 + $0x1c] sm:$0xf] %v660
      %725 = vst [vmem:[%s201 + $0x20] sm:$0xf] %v661
      %726 = vst [vmem:[%s201 + $0x24] sm:$0xf] %v662
      %727 = vst [vmem:[%s201 + $0x28] sm:$0xf] %v663
      %728 = vst [vmem:[%s201 + $0x2c] sm:$0xf] %v664
      %729 = vst [vmem:[%s201 + $0x30] sm:$0xf] %v665
      %730 = vst [vmem:[%s201 + $0x34] sm:$0xf] %v666
      %731 = vst [vmem:[%s201 + $0x38] sm:$0xf] %v667
      %732 = vst [vmem:[%s201 + $0x3c] sm:$0xf] %v668
      %733 = vst [vmem:[%s201 + $0x40] sm:$0xf] %v669
      %734 = vst [vmem:[%s201 + $0x44] sm:$0xf] %v670
      %735 = vst [vmem:[%s201 + $0x48] sm:$0xf] %v671
      %736 = vst [vmem:[%s201 + $0x4c] sm:$0xf] %v672
      %737 = vst [vmem:[%s201 + $0x50] sm:$0xf] %v673
      %738 = vst [vmem:[%s201 + $0x54] sm:$0xf] %v674
      %739 = vst [vmem:[%s201 + $0x58] sm:$0xf] %v675
      %740 = vst [vmem:[%s201 + $0x5c] sm:$0xf] %v676
      %741 = vst [vmem:[%s201 + $0x60] sm:$0xf] %v677
      %742 = vst [vmem:[%s201 + $0x64] sm:$0xf] %v678
      %743 = vst [vmem:[%s201 + $0x68] sm:$0xf] %v679
      %744 = vst [vmem:[%s201 + $0x6c] sm:$0xf] %v680
      %745 = vst [vmem:[%s201 + $0x70] sm:$0xf] %v681
      %746 = vst [vmem:[%s201 + $0x74] sm:$0xf] %v682
      %747 = vst [vmem:[%s201 + $0x78] sm:$0xf] %v683
      %748 = vst [vmem:[%s201 + $0x7c] sm:$0xf] %v684
      %v749 = vld [vmem:[%s186 + $0x80] sm:$0xf]
      %v750 = vld [vmem:[%s186 + $0x84] sm:$0xf]
      %v751 = vld [vmem:[%s186 + $0x88] sm:$0xf]
      %v752 = vld [vmem:[%s186 + $0x8c] sm:$0xf]
      %v753 = vld [vmem:[%s186 + $0x90] sm:$0xf]
      %v754 = vld [vmem:[%s186 + $0x94] sm:$0xf]
      %v755 = vld [vmem:[%s186 + $0x98] sm:$0xf]
      %v756 = vld [vmem:[%s186 + $0x9c] sm:$0xf]
      %v757 = vld [vmem:[%s186 + $0xa0] sm:$0xf]
      %v758 = vld [vmem:[%s186 + $0xa4] sm:$0xf]
      %v759 = vld [vmem:[%s186 + $0xa8] sm:$0xf]
      %v760 = vld [vmem:[%s186 + $0xac] sm:$0xf]
      %v761 = vld [vmem:[%s186 + $0xb0] sm:$0xf]
      %v762 = vld [vmem:[%s186 + $0xb4] sm:$0xf]
      %v763 = vld [vmem:[%s186 + $0xb8] sm:$0xf]
      %v764 = vld [vmem:[%s186 + $0xbc] sm:$0xf]
      %v765 = vld [vmem:[%s186 + $0xc0] sm:$0xf]
      %v766 = vld [vmem:[%s186 + $0xc4] sm:$0xf]
      %v767 = vld [vmem:[%s186 + $0xc8] sm:$0xf]
      %v768 = vld [vmem:[%s186 + $0xcc] sm:$0xf]
      %v769 = vld [vmem:[%s186 + $0xd0] sm:$0xf]
      %v770 = vld [vmem:[%s186 + $0xd4] sm:$0xf]
      %v771 = vld [vmem:[%s186 + $0xd8] sm:$0xf]
      %v772 = vld [vmem:[%s186 + $0xdc] sm:$0xf]
      %v773 = vld [vmem:[%s186 + $0xe0] sm:$0xf]
      %v774 = vld [vmem:[%s186 + $0xe4] sm:$0xf]
      %v775 = vld [vmem:[%s186 + $0xe8] sm:$0xf]
      %v776 = vld [vmem:[%s186 + $0xec] sm:$0xf]
      %v777 = vld [vmem:[%s186 + $0xf0] sm:$0xf]
      %v778 = vld [vmem:[%s186 + $0xf4] sm:$0xf]
      %v779 = vld [vmem:[%s186 + $0xf8] sm:$0xf]
      %v780 = vld [vmem:[%s186 + $0xfc] sm:$0xf]
      %v781 = vld [vmem:[%s192] sm:$0xf]
      %v782 = vld [vmem:[%s192 + $0x4] sm:$0xf]
      %v783 = vld [vmem:[%s192 + $0x8] sm:$0xf]
      %v784 = vld [vmem:[%s192 + $0xc] sm:$0xf]
      %v785 = vld [vmem:[%s192 + $0x10] sm:$0xf]
      %v786 = vld [vmem:[%s192 + $0x14] sm:$0xf]
      %v787 = vld [vmem:[%s192 + $0x18] sm:$0xf]
      %v788 = vld [vmem:[%s192 + $0x1c] sm:$0xf]
      %v789 = vld [vmem:[%s192 + $0x20] sm:$0xf]
      %v790 = vld [vmem:[%s192 + $0x24] sm:$0xf]
      %v791 = vld [vmem:[%s192 + $0x28] sm:$0xf]
      %v792 = vld [vmem:[%s192 + $0x2c] sm:$0xf]
      %v793 = vld [vmem:[%s192 + $0x30] sm:$0xf]
      %v794 = vld [vmem:[%s192 + $0x34] sm:$0xf]
      %v795 = vld [vmem:[%s192 + $0x38] sm:$0xf]
      %v796 = vld [vmem:[%s192 + $0x3c] sm:$0xf]
      %v829 = vunpack.c.l.b16 %v749
      %v830 = vunpack.c.l.b16 %v750
      %v831 = vunpack.c.l.b16 %v751
      %v832 = vunpack.c.l.b16 %v752
      %v833 = vunpack.c.l.b16 %v753
      %v834 = vunpack.c.l.b16 %v754
      %v835 = vunpack.c.l.b16 %v755
      %v836 = vunpack.c.l.b16 %v756
      %v837 = vunpack.c.l.b16 %v757
      %v838 = vunpack.c.l.b16 %v758
      %v839 = vunpack.c.l.b16 %v759
      %v840 = vunpack.c.l.b16 %v760
      %v841 = vunpack.c.l.b16 %v761
      %v842 = vunpack.c.l.b16 %v762
      %v843 = vunpack.c.l.b16 %v763
      %v844 = vunpack.c.l.b16 %v764
      %v845 = vunpack.c.l.b16 %v765
      %v846 = vunpack.c.l.b16 %v766
      %v847 = vunpack.c.l.b16 %v767
      %v848 = vunpack.c.l.b16 %v768
      %v849 = vunpack.c.l.b16 %v769
      %v850 = vunpack.c.l.b16 %v770
      %v851 = vunpack.c.l.b16 %v771
      %v852 = vunpack.c.l.b16 %v772
      %v853 = vunpack.c.l.b16 %v773
      %v854 = vunpack.c.l.b16 %v774
      %v855 = vunpack.c.l.b16 %v775
      %v856 = vunpack.c.l.b16 %v776
      %v857 = vunpack.c.l.b16 %v777
      %v858 = vunpack.c.l.b16 %v778
      %v859 = vunpack.c.l.b16 %v779
      %v860 = vunpack.c.l.b16 %v780
      %v861 = vpack.c.b16 %v830, %v829
      %v862 = vpack.c.b16 %v832, %v831
      %v863 = vpack.c.b16 %v834, %v833
      %v864 = vpack.c.b16 %v836, %v835
      %v865 = vpack.c.b16 %v838, %v837
      %v866 = vpack.c.b16 %v840, %v839
      %v867 = vpack.c.b16 %v842, %v841
      %v868 = vpack.c.b16 %v844, %v843
      %v869 = vpack.c.b16 %v846, %v845
      %v870 = vpack.c.b16 %v848, %v847
      %v871 = vpack.c.b16 %v850, %v849
      %v872 = vpack.c.b16 %v852, %v851
      %v873 = vpack.c.b16 %v854, %v853
      %v874 = vpack.c.b16 %v856, %v855
      %v875 = vpack.c.b16 %v858, %v857
      %v876 = vpack.c.b16 %v860, %v859
      %v909 = vunpack.c.l.b16 %v781
      %v910 = vunpack.c.l.b16 %v782
      %v911 = vunpack.c.l.b16 %v783
      %v912 = vunpack.c.l.b16 %v784
      %v913 = vunpack.c.l.b16 %v785
      %v914 = vunpack.c.l.b16 %v786
      %v915 = vunpack.c.l.b16 %v787
      %v916 = vunpack.c.l.b16 %v788
      %v917 = vunpack.c.l.b16 %v789
      %v918 = vunpack.c.l.b16 %v790
      %v919 = vunpack.c.l.b16 %v791
      %v920 = vunpack.c.l.b16 %v792
      %v921 = vunpack.c.l.b16 %v793
      %v922 = vunpack.c.l.b16 %v794
      %v923 = vunpack.c.l.b16 %v795
      %v924 = vunpack.c.l.b16 %v796
      %v925 = vpack.c.b16 %v910, %v909
      %v926 = vpack.c.b16 %v912, %v911
      %v927 = vpack.c.b16 %v914, %v913
      %v928 = vpack.c.b16 %v916, %v915
      %v929 = vpack.c.b16 %v918, %v917
      %v930 = vpack.c.b16 %v920, %v919
      %v931 = vpack.c.b16 %v922, %v921
      %v932 = vpack.c.b16 %v924, %v923
      %941 = vmatprep.subr.bf16.mxu0 0
      %942 = vmatpush1.bf16.msra.mxu0 %v925
      %943 = vmatprep.subr.bf16.mxu0 0
      %944 = vmatpush1.bf16.msra.mxu0 %v926
      %945 = vmatprep.subr.bf16.mxu0 0
      %946 = vmatpush1.bf16.msra.mxu0 %v927
      %947 = vmatprep.subr.bf16.mxu0 0
      %948 = vmatpush1.bf16.msra.mxu0 %v928
      %949 = vmatprep.subr.bf16.mxu0 0
      %950 = vmatpush1.bf16.msra.mxu0 %v929
      %951 = vmatprep.subr.bf16.mxu0 0
      %952 = vmatpush1.bf16.msra.mxu0 %v930
      %953 = vmatprep.subr.bf16.mxu0 0
      %954 = vmatpush1.bf16.msra.mxu0 %v931
      %955 = vmatprep.subr.bf16.mxu0 0
      %956 = vmatpush1.bf16.msra.mxu0 %v932
      %957 = vmatprep.subr.bf16.mxu0 0
      %958 = vmatpush1.bf16.msra.mxu0 0
      %959 = vmatprep.subr.bf16.mxu0 0
      %960 = vmatpush1.bf16.msra.mxu0 0
      %961 = vmatprep.subr.bf16.mxu0 0
      %962 = vmatpush1.bf16.msra.mxu0 0
      %963 = vmatprep.subr.bf16.mxu0 0
      %964 = vmatpush1.bf16.msra.mxu0 0
      %965 = vmatprep.subr.bf16.mxu0 0
      %966 = vmatpush1.bf16.msra.mxu0 0
      %967 = vmatprep.subr.bf16.mxu0 0
      %968 = vmatpush1.bf16.msra.mxu0 0
      %969 = vmatprep.subr.bf16.mxu0 0
      %970 = vmatpush1.bf16.msra.mxu0 0
      %971 = vmatprep.subr.bf16.mxu0 0
      %972 = vmatpush1.bf16.msra.mxu0 0
      %973 = vmatprep.mubr.bf16.mxu0 0
      %974 = vmatmul.mubr.bf16.gmra.mrb[0].mxu0 %v861
      %v975 = vpop.f32.mrb[0].mxu0
      %v976 = vadd.f32 0.0, %v975
      %v977 = vpop.f32.mrb[0].mxu0
      %v978 = vpop.f32.mrb[0].mxu0
      %v979 = vadd.f32 0.0, %v978
      %v980 = vpop.f32.mrb[0].mxu0
      %981 = vmatprep.mubr.bf16.mxu0 0
      %982 = vmatmul.mubr.bf16.gmra.mrb[0].mxu0 %v862
      %v983 = vpop.f32.mrb[0].mxu0
      %v984 = vadd.f32 0.0, %v983
      %v985 = vpop.f32.mrb[0].mxu0
      %v986 = vpop.f32.mrb[0].mxu0
      %v987 = vadd.f32 0.0, %v986
      %v988 = vpop.f32.mrb[0].mxu0
      %989 = vmatprep.mubr.bf16.mxu0 0
      %990 = vmatmul.mubr.bf16.gmra.mrb[0].mxu0 %v863
      %v991 = vpop.f32.mrb[0].mxu0
      %v992 = vadd.f32 0.0, %v991
      %v993 = vpop.f32.mrb[0].mxu0
      %v994 = vpop.f32.mrb[0].mxu0
      %v995 = vadd.f32 0.0, %v994
      %v996 = vpop.f32.mrb[0].mxu0
      %997 = vmatprep.mubr.bf16.mxu0 0
      %998 = vmatmul.mubr.bf16.gmra.mrb[0].mxu0 %v864
      %v999 = vpop.f32.mrb[0].mxu0
      %v1000 = vadd.f32 0.0, %v999
      %v1001 = vpop.f32.mrb[0].mxu0
      %v1002 = vpop.f32.mrb[0].mxu0
      %v1003 = vadd.f32 0.0, %v1002
      %v1004 = vpop.f32.mrb[0].mxu0
      %1005 = vmatprep.mubr.bf16.mxu0 0
      %1006 = vmatmul.mubr.bf16.gmra.mrb[0].mxu0 %v865
      %v1007 = vpop.f32.mrb[0].mxu0
      %v1008 = vadd.f32 0.0, %v1007
      %v1009 = vpop.f32.mrb[0].mxu0
      %v1010 = vpop.f32.mrb[0].mxu0
      %v1011 = vadd.f32 0.0, %v1010
      %v1012 = vpop.f32.mrb[0].mxu0
      %1013 = vmatprep.mubr.bf16.mxu0 0
      %1014 = vmatmul.mubr.bf16.gmra.mrb[0].mxu0 %v866
      %v1015 = vpop.f32.mrb[0].mxu0
      %v1016 = vadd.f32 0.0, %v1015
      %v1017 = vpop.f32.mrb[0].mxu0
      %v1018 = vpop.f32.mrb[0].mxu0
      %v1019 = vadd.f32 0.0, %v1018
      %v1020 = vpop.f32.mrb[0].mxu0
      %1021 = vmatprep.mubr.bf16.mxu0 0
      %1022 = vmatmul.mubr.bf16.gmra.mrb[0].mxu0 %v867
      %v1023 = vpop.f32.mrb[0].mxu0
      %v1024 = vadd.f32 0.0, %v1023
      %v1025 = vpop.f32.mrb[0].mxu0
      %v1026 = vpop.f32.mrb[0].mxu0
      %v1027 = vadd.f32 0.0, %v1026
      %v1028 = vpop.f32.mrb[0].mxu0
      %1029 = vmatprep.mubr.bf16.mxu0 0
      %1030 = vmatmul.mubr.bf16.gmra.mrb[0].mxu0 %v868
      %v1031 = vpop.f32.mrb[0].mxu0
      %v1032 = vadd.f32 0.0, %v1031
      %v1033 = vpop.f32.mrb[0].mxu0
      %v1034 = vpop.f32.mrb[0].mxu0
      %v1035 = vadd.f32 0.0, %v1034
      %v1036 = vpop.f32.mrb[0].mxu0
      %1037 = vmatprep.mubr.bf16.mxu0 0
      %1038 = vmatmul.mubr.bf16.gmra.mrb[0].mxu0 %v869
      %v1039 = vpop.f32.mrb[0].mxu0
      %v1040 = vadd.f32 0.0, %v1039
      %v1041 = vpop.f32.mrb[0].mxu0
      %v1042 = vpop.f32.mrb[0].mxu0
      %v1043 = vadd.f32 0.0, %v1042
      %v1044 = vpop.f32.mrb[0].mxu0
      %1045 = vmatprep.mubr.bf16.mxu0 0
      %1046 = vmatmul.mubr.bf16.gmra.mrb[0].mxu0 %v870
      %v1047 = vpop.f32.mrb[0].mxu0
      %v1048 = vadd.f32 0.0, %v1047
      %v1049 = vpop.f32.mrb[0].mxu0
      %v1050 = vpop.f32.mrb[0].mxu0
      %v1051 = vadd.f32 0.0, %v1050
      %v1052 = vpop.f32.mrb[0].mxu0
      %1053 = vmatprep.mubr.bf16.mxu0 0
      %1054 = vmatmul.mubr.bf16.gmra.mrb[0].mxu0 %v871
      %v1055 = vpop.f32.mrb[0].mxu0
      %v1056 = vadd.f32 0.0, %v1055
      %v1057 = vpop.f32.mrb[0].mxu0
      %v1058 = vpop.f32.mrb[0].mxu0
      %v1059 = vadd.f32 0.0, %v1058
      %v1060 = vpop.f32.mrb[0].mxu0
      %1061 = vmatprep.mubr.bf16.mxu0 0
      %1062 = vmatmul.mubr.bf16.gmra.mrb[0].mxu0 %v872
      %v1063 = vpop.f32.mrb[0].mxu0
      %v1064 = vadd.f32 0.0, %v1063
      %v1065 = vpop.f32.mrb[0].mxu0
      %v1066 = vpop.f32.mrb[0].mxu0
      %v1067 = vadd.f32 0.0, %v1066
      %v1068 = vpop.f32.mrb[0].mxu0
      %1069 = vmatprep.mubr.bf16.mxu0 0
      %1070 = vmatmul.mubr.bf16.gmra.mrb[0].mxu0 %v873
      %v1071 = vpop.f32.mrb[0].mxu0
      %v1072 = vadd.f32 0.0, %v1071
      %v1073 = vpop.f32.mrb[0].mxu0
      %v1074 = vpop.f32.mrb[0].mxu0
      %v1075 = vadd.f32 0.0, %v1074
      %v1076 = vpop.f32.mrb[0].mxu0
      %1077 = vmatprep.mubr.bf16.mxu0 0
      %1078 = vmatmul.mubr.bf16.gmra.mrb[0].mxu0 %v874
      %v1079 = vpop.f32.mrb[0].mxu0
      %v1080 = vadd.f32 0.0, %v1079
      %v1081 = vpop.f32.mrb[0].mxu0
      %v1082 = vpop.f32.mrb[0].mxu0
      %v1083 = vadd.f32 0.0, %v1082
      %v1084 = vpop.f32.mrb[0].mxu0
      %1085 = vmatprep.mubr.bf16.mxu0 0
      %1086 = vmatmul.mubr.bf16.gmra.mrb[0].mxu0 %v875
      %v1087 = vpop.f32.mrb[0].mxu0
      %v1088 = vadd.f32 0.0, %v1087
      %v1089 = vpop.f32.mrb[0].mxu0
      %v1090 = vpop.f32.mrb[0].mxu0
      %v1091 = vadd.f32 0.0, %v1090
      %v1092 = vpop.f32.mrb[0].mxu0
      %1093 = vmatprep.mubr.bf16.mxu0 0
      %1094 = vmatmul.mubr.bf16.gmra.mrb[0].mxu0 %v876
      %v1095 = vpop.f32.mrb[0].mxu0
      %v1096 = vadd.f32 0.0, %v1095
      %v1097 = vpop.f32.mrb[0].mxu0
      %v1098 = vpop.f32.mrb[0].mxu0
      %v1099 = vadd.f32 0.0, %v1098
      %v1100 = vpop.f32.mrb[0].mxu0
      %1101 = vdwg.mxu0
      %v1102 = vtanh.pop %v976
      %v1103 = vtanh.pop %v979
      %v1104 = vtanh.pop %v984
      %v1105 = vtanh.pop %v987
      %v1106 = vtanh.pop %v992
      %v1107 = vtanh.pop %v995
      %v1108 = vtanh.pop %v1000
      %v1109 = vtanh.pop %v1003
      %v1110 = vtanh.pop %v1008
      %v1111 = vtanh.pop %v1011
      %v1112 = vtanh.pop %v1016
      %v1113 = vtanh.pop %v1019
      %v1114 = vtanh.pop %v1024
      %v1115 = vtanh.pop %v1027
      %v1116 = vtanh.pop %v1032
      %v1117 = vtanh.pop %v1035
      %v1118 = vtanh.pop %v1040
      %v1119 = vtanh.pop %v1043
      %v1120 = vtanh.pop %v1048
      %v1121 = vtanh.pop %v1051
      %v1122 = vtanh.pop %v1056
      %v1123 = vtanh.pop %v1059
      %v1124 = vtanh.pop %v1064
      %v1125 = vtanh.pop %v1067
      %v1126 = vtanh.pop %v1072
      %v1127 = vtanh.pop %v1075
      %v1128 = vtanh.pop %v1080
      %v1129 = vtanh.pop %v1083
      %v1130 = vtanh.pop %v1088
      %v1131 = vtanh.pop %v1091
      %v1132 = vtanh.pop %v1096
      %v1133 = vtanh.pop %v1099
      %v1134 = vpack.c.bf16 %v1103, %v1102
      %v1135 = vpack.c.bf16 %v1105, %v1104
      %v1136 = vpack.c.bf16 %v1107, %v1106
      %v1137 = vpack.c.bf16 %v1109, %v1108
      %v1138 = vpack.c.bf16 %v1111, %v1110
      %v1139 = vpack.c.bf16 %v1113, %v1112
      %v1140 = vpack.c.bf16 %v1115, %v1114
      %v1141 = vpack.c.bf16 %v1117, %v1116
      %v1142 = vpack.c.bf16 %v1119, %v1118
      %v1143 = vpack.c.bf16 %v1121, %v1120
      %v1144 = vpack.c.bf16 %v1123, %v1122
      %v1145 = vpack.c.bf16 %v1125, %v1124
      %v1146 = vpack.c.bf16 %v1127, %v1126
      %v1147 = vpack.c.bf16 %v1129, %v1128
      %v1148 = vpack.c.bf16 %v1131, %v1130
      %v1149 = vpack.c.bf16 %v1133, %v1132
      %v1166 = vunpack.c.l.b16 %v1134
      %v1167 = vunpack.c.h.b16 %v1134
      %v1168 = vunpack.c.l.b16 %v1135
      %v1169 = vunpack.c.h.b16 %v1135
      %v1170 = vunpack.c.l.b16 %v1136
      %v1171 = vunpack.c.h.b16 %v1136
      %v1172 = vunpack.c.l.b16 %v1137
      %v1173 = vunpack.c.h.b16 %v1137
      %v1174 = vunpack.c.l.b16 %v1138
      %v1175 = vunpack.c.h.b16 %v1138
      %v1176 = vunpack.c.l.b16 %v1139
      %v1177 = vunpack.c.h.b16 %v1139
      %v1178 = vunpack.c.l.b16 %v1140
      %v1179 = vunpack.c.h.b16 %v1140
      %v1180 = vunpack.c.l.b16 %v1141
      %v1181 = vunpack.c.h.b16 %v1141
      %v1182 = vunpack.c.l.b16 %v1142
      %v1183 = vunpack.c.h.b16 %v1142
      %v1184 = vunpack.c.l.b16 %v1143
      %v1185 = vunpack.c.h.b16 %v1143
      %v1186 = vunpack.c.l.b16 %v1144
      %v1187 = vunpack.c.h.b16 %v1144
      %v1188 = vunpack.c.l.b16 %v1145
      %v1189 = vunpack.c.h.b16 %v1145
      %v1190 = vunpack.c.l.b16 %v1146
      %v1191 = vunpack.c.h.b16 %v1146
      %v1192 = vunpack.c.l.b16 %v1147
      %v1193 = vunpack.c.h.b16 %v1147
      %v1194 = vunpack.c.l.b16 %v1148
      %v1195 = vunpack.c.h.b16 %v1148
      %v1196 = vunpack.c.l.b16 %v1149
      %v1197 = vunpack.c.h.b16 %v1149
      %v1198 = vpack.c.b16 %v1166, %v1166
      %v1199 = vpack.c.b16 %v1167, %v1167
      %v1200 = vpack.c.b16 %v1168, %v1168
      %v1201 = vpack.c.b16 %v1169, %v1169
      %v1202 = vpack.c.b16 %v1170, %v1170
      %v1203 = vpack.c.b16 %v1171, %v1171
      %v1204 = vpack.c.b16 %v1172, %v1172
      %v1205 = vpack.c.b16 %v1173, %v1173
      %v1206 = vpack.c.b16 %v1174, %v1174
      %v1207 = vpack.c.b16 %v1175, %v1175
      %v1208 = vpack.c.b16 %v1176, %v1176
      %v1209 = vpack.c.b16 %v1177, %v1177
      %v1210 = vpack.c.b16 %v1178, %v1178
      %v1211 = vpack.c.b16 %v1179, %v1179
      %v1212 = vpack.c.b16 %v1180, %v1180
      %v1213 = vpack.c.b16 %v1181, %v1181
      %v1214 = vpack.c.b16 %v1182, %v1182
      %v1215 = vpack.c.b16 %v1183, %v1183
      %v1216 = vpack.c.b16 %v1184, %v1184
      %v1217 = vpack.c.b16 %v1185, %v1185
      %v1218 = vpack.c.b16 %v1186, %v1186
      %v1219 = vpack.c.b16 %v1187, %v1187
      %v1220 = vpack.c.b16 %v1188, %v1188
      %v1221 = vpack.c.b16 %v1189, %v1189
      %v1222 = vpack.c.b16 %v1190, %v1190
      %v1223 = vpack.c.b16 %v1191, %v1191
      %v1224 = vpack.c.b16 %v1192, %v1192
      %v1225 = vpack.c.b16 %v1193, %v1193
      %v1226 = vpack.c.b16 %v1194, %v1194
      %v1227 = vpack.c.b16 %v1195, %v1195
      %v1228 = vpack.c.b16 %v1196, %v1196
      %v1229 = vpack.c.b16 %v1197, %v1197
      %1262 = vst [vmem:[%s201 + $0x80] sm:$0xf] %v1198
      %1263 = vst [vmem:[%s201 + $0x84] sm:$0xf] %v1199
      %1264 = vst [vmem:[%s201 + $0x88] sm:$0xf] %v1200
      %1265 = vst [vmem:[%s201 + $0x8c] sm:$0xf] %v1201
      %1266 = vst [vmem:[%s201 + $0x90] sm:$0xf] %v1202
      %1267 = vst [vmem:[%s201 + $0x94] sm:$0xf] %v1203
      %1268 = vst [vmem:[%s201 + $0x98] sm:$0xf] %v1204
      %1269 = vst [vmem:[%s201 + $0x9c] sm:$0xf] %v1205
      %1270 = vst [vmem:[%s201 + $0xa0] sm:$0xf] %v1206
      %1271 = vst [vmem:[%s201 + $0xa4] sm:$0xf] %v1207
      %1272 = vst [vmem:[%s201 + $0xa8] sm:$0xf] %v1208
      %1273 = vst [vmem:[%s201 + $0xac] sm:$0xf] %v1209
      %1274 = vst [vmem:[%s201 + $0xb0] sm:$0xf] %v1210
      %1275 = vst [vmem:[%s201 + $0xb4] sm:$0xf] %v1211
      %1276 = vst [vmem:[%s201 + $0xb8] sm:$0xf] %v1212
      %1277 = vst [vmem:[%s201 + $0xbc] sm:$0xf] %v1213
      %1278 = vst [vmem:[%s201 + $0xc0] sm:$0xf] %v1214
      %1279 = vst [vmem:[%s201 + $0xc4] sm:$0xf] %v1215
      %1280 = vst [vmem:[%s201 + $0xc8] sm:$0xf] %v1216
      %1281 = vst [vmem:[%s201 + $0xcc] sm:$0xf] %v1217
      %1282 = vst [vmem:[%s201 + $0xd0] sm:$0xf] %v1218
      %1283 = vst [vmem:[%s201 + $0xd4] sm:$0xf] %v1219
      %1284 = vst [vmem:[%s201 + $0xd8] sm:$0xf] %v1220
      %1285 = vst [vmem:[%s201 + $0xdc] sm:$0xf] %v1221
      %1286 = vst [vmem:[%s201 + $0xe0] sm:$0xf] %v1222
      %1287 = vst [vmem:[%s201 + $0xe4] sm:$0xf] %v1223
      %1288 = vst [vmem:[%s201 + $0xe8] sm:$0xf] %v1224
      %1289 = vst [vmem:[%s201 + $0xec] sm:$0xf] %v1225
      %1290 = vst [vmem:[%s201 + $0xf0] sm:$0xf] %v1226
      %1291 = vst [vmem:[%s201 + $0xf4] sm:$0xf] %v1227
      %1292 = vst [vmem:[%s201 + $0xf8] sm:$0xf] %v1228
      %1293 = vst [vmem:[%s201 + $0xfc] sm:$0xf] %v1229
      %v1294 = vld [vmem:[%s186 + $0x100] sm:$0xf]
      %v1295 = vld [vmem:[%s186 + $0x104] sm:$0xf]
      %v1296 = vld [vmem:[%s186 + $0x108] sm:$0xf]
      %v1297 = vld [vmem:[%s186 + $0x10c] sm:$0xf]
      %v1298 = vld [vmem:[%s186 + $0x110] sm:$0xf]
      %v1299 = vld [vmem:[%s186 + $0x114] sm:$0xf]
      %v1300 = vld [vmem:[%s186 + $0x118] sm:$0xf]
      %v1301 = vld [vmem:[%s186 + $0x11c] sm:$0xf]
      %v1302 = vld [vmem:[%s186 + $0x120] sm:$0xf]
      %v1303 = vld [vmem:[%s186 + $0x124] sm:$0xf]
      %v1304 = vld [vmem:[%s186 + $0x128] sm:$0xf]
      %v1305 = vld [vmem:[%s186 + $0x12c] sm:$0xf]
      %v1306 = vld [vmem:[%s186 + $0x130] sm:$0xf]
      %v1307 = vld [vmem:[%s186 + $0x134] sm:$0xf]
      %v1308 = vld [vmem:[%s186 + $0x138] sm:$0xf]
      %v1309 = vld [vmem:[%s186 + $0x13c] sm:$0xf]
      %v1310 = vld [vmem:[%s186 + $0x140] sm:$0xf]
      %v1311 = vld [vmem:[%s186 + $0x144] sm:$0xf]
      %v1312 = vld [vmem:[%s186 + $0x148] sm:$0xf]
      %v1313 = vld [vmem:[%s186 + $0x14c] sm:$0xf]
      %v1314 = vld [vmem:[%s186 + $0x150] sm:$0xf]
      %v1315 = vld [vmem:[%s186 + $0x154] sm:$0xf]
      %v1316 = vld [vmem:[%s186 + $0x158] sm:$0xf]
      %v1317 = vld [vmem:[%s186 + $0x15c] sm:$0xf]
      %v1318 = vld [vmem:[%s186 + $0x160] sm:$0xf]
      %v1319 = vld [vmem:[%s186 + $0x164] sm:$0xf]
      %v1320 = vld [vmem:[%s186 + $0x168] sm:$0xf]
      %v1321 = vld [vmem:[%s186 + $0x16c] sm:$0xf]
      %v1322 = vld [vmem:[%s186 + $0x170] sm:$0xf]
      %v1323 = vld [vmem:[%s186 + $0x174] sm:$0xf]
      %v1324 = vld [vmem:[%s186 + $0x178] sm:$0xf]
      %v1325 = vld [vmem:[%s186 + $0x17c] sm:$0xf]
      %v1326 = vld [vmem:[%s192] sm:$0xf]
      %v1327 = vld [vmem:[%s192 + $0x4] sm:$0xf]
      %v1328 = vld [vmem:[%s192 + $0x8] sm:$0xf]
      %v1329 = vld [vmem:[%s192 + $0xc] sm:$0xf]
      %v1330 = vld [vmem:[%s192 + $0x10] sm:$0xf]
      %v1331 = vld [vmem:[%s192 + $0x14] sm:$0xf]
      %v1332 = vld [vmem:[%s192 + $0x18] sm:$0xf]
      %v1333 = vld [vmem:[%s192 + $0x1c] sm:$0xf]
      %v1334 = vld [vmem:[%s192 + $0x20] sm:$0xf]
      %v1335 = vld [vmem:[%s192 + $0x24] sm:$0xf]
      %v1336 = vld [vmem:[%s192 + $0x28] sm:$0xf]
      %v1337 = vld [vmem:[%s192 + $0x2c] sm:$0xf]
      %v1338 = vld [vmem:[%s192 + $0x30] sm:$0xf]
      %v1339 = vld [vmem:[%s192 + $0x34] sm:$0xf]
      %v1340 = vld [vmem:[%s192 + $0x38] sm:$0xf]
      %v1341 = vld [vmem:[%s192 + $0x3c] sm:$0xf]
      %v1374 = vunpack.c.l.b16 %v1294
      %v1375 = vunpack.c.l.b16 %v1295
      %v1376 = vunpack.c.l.b16 %v1296
      %v1377 = vunpack.c.l.b16 %v1297
      %v1378 = vunpack.c.l.b16 %v1298
      %v1379 = vunpack.c.l.b16 %v1299
      %v1380 = vunpack.c.l.b16 %v1300
      %v1381 = vunpack.c.l.b16 %v1301
      %v1382 = vunpack.c.l.b16 %v1302
      %v1383 = vunpack.c.l.b16 %v1303
      %v1384 = vunpack.c.l.b16 %v1304
      %v1385 = vunpack.c.l.b16 %v1305
      %v1386 = vunpack.c.l.b16 %v1306
      %v1387 = vunpack.c.l.b16 %v1307
      %v1388 = vunpack.c.l.b16 %v1308
      %v1389 = vunpack.c.l.b16 %v1309
      %v1390 = vunpack.c.l.b16 %v1310
      %v1391 = vunpack.c.l.b16 %v1311
      %v1392 = vunpack.c.l.b16 %v1312
      %v1393 = vunpack.c.l.b16 %v1313
      %v1394 = vunpack.c.l.b16 %v1314
      %v1395 = vunpack.c.l.b16 %v1315
      %v1396 = vunpack.c.l.b16 %v1316
      %v1397 = vunpack.c.l.b16 %v1317
      %v1398 = vunpack.c.l.b16 %v1318
      %v1399 = vunpack.c.l.b16 %v1319
      %v1400 = vunpack.c.l.b16 %v1320
      %v1401 = vunpack.c.l.b16 %v1321
      %v1402 = vunpack.c.l.b16 %v1322
      %v1403 = vunpack.c.l.b16 %v1323
      %v1404 = vunpack.c.l.b16 %v1324
      %v1405 = vunpack.c.l.b16 %v1325
      %v1406 = vpack.c.b16 %v1375, %v1374
      %v1407 = vpack.c.b16 %v1377, %v1376
      %v1408 = vpack.c.b16 %v1379, %v1378
      %v1409 = vpack.c.b16 %v1381, %v1380
      %v1410 = vpack.c.b16 %v1383, %v1382
      %v1411 = vpack.c.b16 %v1385, %v1384
      %v1412 = vpack.c.b16 %v1387, %v1386
      %v1413 = vpack.c.b16 %v1389, %v1388
      %v1414 = vpack.c.b16 %v1391, %v1390
      %v1415 = vpack.c.b16 %v1393, %v1392
      %v1416 = vpack.c.b16 %v1395, %v1394
      %v1417 = vpack.c.b16 %v1397, %v1396
      %v1418 = vpack.c.b16 %v1399, %v1398
      %v1419 = vpack.c.b16 %v1401, %v1400
      %v1420 = vpack.c.b16 %v1403, %v1402
      %v1421 = vpack.c.b16 %v1405, %v1404
      %v1454 = vunpack.c.l.b16 %v1326
      %v1455 = vunpack.c.l.b16 %v1327
      %v1456 = vunpack.c.l.b16 %v1328
      %v1457 = vunpack.c.l.b16 %v1329
      %v1458 = vunpack.c.l.b16 %v1330
      %v1459 = vunpack.c.l.b16 %v1331
      %v1460 = vunpack.c.l.b16 %v1332
      %v1461 = vunpack.c.l.b16 %v1333
      %v1462 = vunpack.c.l.b16 %v1334
      %v1463 = vunpack.c.l.b16 %v1335
      %v1464 = vunpack.c.l.b16 %v1336
      %v1465 = vunpack.c.l.b16 %v1337
      %v1466 = vunpack.c.l.b16 %v1338
      %v1467 = vunpack.c.l.b16 %v1339
      %v1468 = vunpack.c.l.b16 %v1340
      %v1469 = vunpack.c.l.b16 %v1341
      %v1470 = vpack.c.b16 %v1455, %v1454
      %v1471 = vpack.c.b16 %v1457, %v1456
      %v1472 = vpack.c.b16 %v1459, %v1458
      %v1473 = vpack.c.b16 %v1461, %v1460
      %v1474 = vpack.c.b16 %v1463, %v1462
      %v1475 = vpack.c.b16 %v1465, %v1464
      %v1476 = vpack.c.b16 %v1467, %v1466
      %v1477 = vpack.c.b16 %v1469, %v1468
      %1486 = vmatprep.subr.bf16.mxu0 0
      %1487 = vmatpush1.bf16.msra.mxu0 %v1470
      %1488 = vmatprep.subr.bf16.mxu0 0
      %1489 = vmatpush1.bf16.msra.mxu0 %v1471
      %1490 = vmatprep.subr.bf16.mxu0 0
      %1491 = vmatpush1.bf16.msra.mxu0 %v1472
      %1492 = vmatprep.subr.bf16.mxu0 0
      %1493 = vmatpush1.bf16.msra.mxu0 %v1473
      %1494 = vmatprep.subr.bf16.mxu0 0
      %1495 = vmatpush1.bf16.msra.mxu0 %v1474
      %1496 = vmatprep.subr.bf16.mxu0 0
      %1497 = vmatpush1.bf16.msra.mxu0 %v1475
      %1498 = vmatprep.subr.bf16.mxu0 0
      %1499 = vmatpush1.bf16.msra.mxu0 %v1476
      %1500 = vmatprep.subr.bf16.mxu0 0
      %1501 = vmatpush1.bf16.msra.mxu0 %v1477
      %1502 = vmatprep.subr.bf16.mxu0 0
      %1503 = vmatpush1.bf16.msra.mxu0 0
      %1504 = vmatprep.subr.bf16.mxu0 0
      %1505 = vmatpush1.bf16.msra.mxu0 0
      %1506 = vmatprep.subr.bf16.mxu0 0
      %1507 = vmatpush1.bf16.msra.mxu0 0
      %1508 = vmatprep.subr.bf16.mxu0 0
      %1509 = vmatpush1.bf16.msra.mxu0 0
      %1510 = vmatprep.subr.bf16.mxu0 0
      %1511 = vmatpush1.bf16.msra.mxu0 0
      %1512 = vmatprep.subr.bf16.mxu0 0
      %1513 = vmatpush1.bf16.msra.mxu0 0
      %1514 = vmatprep.subr.bf16.mxu0 0
      %1515 = vmatpush1.bf16.msra.mxu0 0
      %1516 = vmatprep.subr.bf16.mxu0 0
      %1517 = vmatpush1.bf16.msra.mxu0 0
      %1518 = vmatprep.mubr.bf16.mxu0 0
      %1519 = vmatmul.mubr.bf16.gmra.mrb[0].mxu0 %v1406
      %v1520 = vpop.f32.mrb[0].mxu0
      %v1521 = vadd.f32 0.0, %v1520
      %v1522 = vpop.f32.mrb[0].mxu0
      %v1523 = vpop.f32.mrb[0].mxu0
      %v1524 = vadd.f32 0.0, %v1523
      %v1525 = vpop.f32.mrb[0].mxu0
      %1526 = vmatprep.mubr.bf16.mxu0 0
      %1527 = vmatmul.mubr.bf16.gmra.mrb[0].mxu0 %v1407
      %v1528 = vpop.f32.mrb[0].mxu0
      %v1529 = vadd.f32 0.0, %v1528
      %v1530 = vpop.f32.mrb[0].mxu0
      %v1531 = vpop.f32.mrb[0].mxu0
      %v1532 = vadd.f32 0.0, %v1531
      %v1533 = vpop.f32.mrb[0].mxu0
      %1534 = vmatprep.mubr.bf16.mxu0 0
      %1535 = vmatmul.mubr.bf16.gmra.mrb[0].mxu0 %v1408
      %v1536 = vpop.f32.mrb[0].mxu0
      %v1537 = vadd.f32 0.0, %v1536
      %v1538 = vpop.f32.mrb[0].mxu0
      %v1539 = vpop.f32.mrb[0].mxu0
      %v1540 = vadd.f32 0.0, %v1539
      %v1541 = vpop.f32.mrb[0].mxu0
      %1542 = vmatprep.mubr.bf16.mxu0 0
      %1543 = vmatmul.mubr.bf16.gmra.mrb[0].mxu0 %v1409
      %v1544 = vpop.f32.mrb[0].mxu0
      %v1545 = vadd.f32 0.0, %v1544
      %v1546 = vpop.f32.mrb[0].mxu0
      %v1547 = vpop.f32.mrb[0].mxu0
      %v1548 = vadd.f32 0.0, %v1547
      %v1549 = vpop.f32.mrb[0].mxu0
      %1550 = vmatprep.mubr.bf16.mxu0 0
      %1551 = vmatmul.mubr.bf16.gmra.mrb[0].mxu0 %v1410
      %v1552 = vpop.f32.mrb[0].mxu0
      %v1553 = vadd.f32 0.0, %v1552
      %v1554 = vpop.f32.mrb[0].mxu0
      %v1555 = vpop.f32.mrb[0].mxu0
      %v1556 = vadd.f32 0.0, %v1555
      %v1557 = vpop.f32.mrb[0].mxu0
      %1558 = vmatprep.mubr.bf16.mxu0 0
      %1559 = vmatmul.mubr.bf16.gmra.mrb[0].mxu0 %v1411
      %v1560 = vpop.f32.mrb[0].mxu0
      %v1561 = vadd.f32 0.0, %v1560
      %v1562 = vpop.f32.mrb[0].mxu0
      %v1563 = vpop.f32.mrb[0].mxu0
      %v1564 = vadd.f32 0.0, %v1563
      %v1565 = vpop.f32.mrb[0].mxu0
      %1566 = vmatprep.mubr.bf16.mxu0 0
      %1567 = vmatmul.mubr.bf16.gmra.mrb[0].mxu0 %v1412
      %v1568 = vpop.f32.mrb[0].mxu0
      %v1569 = vadd.f32 0.0, %v1568
      %v1570 = vpop.f32.mrb[0].mxu0
      %v1571 = vpop.f32.mrb[0].mxu0
      %v1572 = vadd.f32 0.0, %v1571
      %v1573 = vpop.f32.mrb[0].mxu0
      %1574 = vmatprep.mubr.bf16.mxu0 0
      %1575 = vmatmul.mubr.bf16.gmra.mrb[0].mxu0 %v1413
      %v1576 = vpop.f32.mrb[0].mxu0
      %v1577 = vadd.f32 0.0, %v1576
      %v1578 = vpop.f32.mrb[0].mxu0
      %v1579 = vpop.f32.mrb[0].mxu0
      %v1580 = vadd.f32 0.0, %v1579
      %v1581 = vpop.f32.mrb[0].mxu0
      %1582 = vmatprep.mubr.bf16.mxu0 0
      %1583 = vmatmul.mubr.bf16.gmra.mrb[0].mxu0 %v1414
      %v1584 = vpop.f32.mrb[0].mxu0
      %v1585 = vadd.f32 0.0, %v1584
      %v1586 = vpop.f32.mrb[0].mxu0
      %v1587 = vpop.f32.mrb[0].mxu0
      %v1588 = vadd.f32 0.0, %v1587
      %v1589 = vpop.f32.mrb[0].mxu0
      %1590 = vmatprep.mubr.bf16.mxu0 0
      %1591 = vmatmul.mubr.bf16.gmra.mrb[0].mxu0 %v1415
      %v1592 = vpop.f32.mrb[0].mxu0
      %v1593 = vadd.f32 0.0, %v1592
      %v1594 = vpop.f32.mrb[0].mxu0
      %v1595 = vpop.f32.mrb[0].mxu0
      %v1596 = vadd.f32 0.0, %v1595
      %v1597 = vpop.f32.mrb[0].mxu0
      %1598 = vmatprep.mubr.bf16.mxu0 0
      %1599 = vmatmul.mubr.bf16.gmra.mrb[0].mxu0 %v1416
      %v1600 = vpop.f32.mrb[0].mxu0
      %v1601 = vadd.f32 0.0, %v1600
      %v1602 = vpop.f32.mrb[0].mxu0
      %v1603 = vpop.f32.mrb[0].mxu0
      %v1604 = vadd.f32 0.0, %v1603
      %v1605 = vpop.f32.mrb[0].mxu0
      %1606 = vmatprep.mubr.bf16.mxu0 0
      %1607 = vmatmul.mubr.bf16.gmra.mrb[0].mxu0 %v1417
      %v1608 = vpop.f32.mrb[0].mxu0
      %v1609 = vadd.f32 0.0, %v1608
      %v1610 = vpop.f32.mrb[0].mxu0
      %v1611 = vpop.f32.mrb[0].mxu0
      %v1612 = vadd.f32 0.0, %v1611
      %v1613 = vpop.f32.mrb[0].mxu0
      %1614 = vmatprep.mubr.bf16.mxu0 0
      %1615 = vmatmul.mubr.bf16.gmra.mrb[0].mxu0 %v1418
      %v1616 = vpop.f32.mrb[0].mxu0
      %v1617 = vadd.f32 0.0, %v1616
      %v1618 = vpop.f32.mrb[0].mxu0
      %v1619 = vpop.f32.mrb[0].mxu0
      %v1620 = vadd.f32 0.0, %v1619
      %v1621 = vpop.f32.mrb[0].mxu0
      %1622 = vmatprep.mubr.bf16.mxu0 0
      %1623 = vmatmul.mubr.bf16.gmra.mrb[0].mxu0 %v1419
      %v1624 = vpop.f32.mrb[0].mxu0
      %v1625 = vadd.f32 0.0, %v1624
      %v1626 = vpop.f32.mrb[0].mxu0
      %v1627 = vpop.f32.mrb[0].mxu0
      %v1628 = vadd.f32 0.0, %v1627
      %v1629 = vpop.f32.mrb[0].mxu0
      %1630 = vmatprep.mubr.bf16.mxu0 0
      %1631 = vmatmul.mubr.bf16.gmra.mrb[0].mxu0 %v1420
      %v1632 = vpop.f32.mrb[0].mxu0
      %v1633 = vadd.f32 0.0, %v1632
      %v1634 = vpop.f32.mrb[0].mxu0
      %v1635 = vpop.f32.mrb[0].mxu0
      %v1636 = vadd.f32 0.0, %v1635
      %v1637 = vpop.f32.mrb[0].mxu0
      %1638 = vmatprep.mubr.bf16.mxu0 0
      %1639 = vmatmul.mubr.bf16.gmra.mrb[0].mxu0 %v1421
      %v1640 = vpop.f32.mrb[0].mxu0
      %v1641 = vadd.f32 0.0, %v1640
      %v1642 = vpop.f32.mrb[0].mxu0
      %v1643 = vpop.f32.mrb[0].mxu0
      %v1644 = vadd.f32 0.0, %v1643
      %v1645 = vpop.f32.mrb[0].mxu0
      %1646 = vdwg.mxu0
      %v1647 = vtanh.pop %v1521
      %v1648 = vtanh.pop %v1524
      %v1649 = vtanh.pop %v1529
      %v1650 = vtanh.pop %v1532
      %v1651 = vtanh.pop %v1537
      %v1652 = vtanh.pop %v1540
      %v1653 = vtanh.pop %v1545
      %v1654 = vtanh.pop %v1548
      %v1655 = vtanh.pop %v1553
      %v1656 = vtanh.pop %v1556
      %v1657 = vtanh.pop %v1561
      %v1658 = vtanh.pop %v1564
      %v1659 = vtanh.pop %v1569
      %v1660 = vtanh.pop %v1572
      %v1661 = vtanh.pop %v1577
      %v1662 = vtanh.pop %v1580
      %v1663 = vtanh.pop %v1585
      %v1664 = vtanh.pop %v1588
      %v1665 = vtanh.pop %v1593
      %v1666 = vtanh.pop %v1596
      %v1667 = vtanh.pop %v1601
      %v1668 = vtanh.pop %v1604
      %v1669 = vtanh.pop %v1609
      %v1670 = vtanh.pop %v1612
      %v1671 = vtanh.pop %v1617
      %v1672 = vtanh.pop %v1620
      %v1673 = vtanh.pop %v1625
      %v1674 = vtanh.pop %v1628
      %v1675 = vtanh.pop %v1633
      %v1676 = vtanh.pop %v1636
      %v1677 = vtanh.pop %v1641
      %v1678 = vtanh.pop %v1644
      %v1679 = vpack.c.bf16 %v1648, %v1647
      %v1680 = vpack.c.bf16 %v1650, %v1649
      %v1681 = vpack.c.bf16 %v1652, %v1651
      %v1682 = vpack.c.bf16 %v1654, %v1653
      %v1683 = vpack.c.bf16 %v1656, %v1655
      %v1684 = vpack.c.bf16 %v1658, %v1657
      %v1685 = vpack.c.bf16 %v1660, %v1659
      %v1686 = vpack.c.bf16 %v1662, %v1661
      %v1687 = vpack.c.bf16 %v1664, %v1663
      %v1688 = vpack.c.bf16 %v1666, %v1665
      %v1689 = vpack.c.bf16 %v1668, %v1667
      %v1690 = vpack.c.bf16 %v1670, %v1669
      %v1691 = vpack.c.bf16 %v1672, %v1671
      %v1692 = vpack.c.bf16 %v1674, %v1673
      %v1693 = vpack.c.bf16 %v1676, %v1675
      %v1694 = vpack.c.bf16 %v1678, %v1677
      %v1711 = vunpack.c.l.b16 %v1679
      %v1712 = vunpack.c.h.b16 %v1679
      %v1713 = vunpack.c.l.b16 %v1680
      %v1714 = vunpack.c.h.b16 %v1680
      %v1715 = vunpack.c.l.b16 %v1681
      %v1716 = vunpack.c.h.b16 %v1681
      %v1717 = vunpack.c.l.b16 %v1682
      %v1718 = vunpack.c.h.b16 %v1682
      %v1719 = vunpack.c.l.b16 %v1683
      %v1720 = vunpack.c.h.b16 %v1683
      %v1721 = vunpack.c.l.b16 %v1684
      %v1722 = vunpack.c.h.b16 %v1684
      %v1723 = vunpack.c.l.b16 %v1685
      %v1724 = vunpack.c.h.b16 %v1685
      %v1725 = vunpack.c.l.b16 %v1686
      %v1726 = vunpack.c.h.b16 %v1686
      %v1727 = vunpack.c.l.b16 %v1687
      %v1728 = vunpack.c.h.b16 %v1687
      %v1729 = vunpack.c.l.b16 %v1688
      %v1730 = vunpack.c.h.b16 %v1688
      %v1731 = vunpack.c.l.b16 %v1689
      %v1732 = vunpack.c.h.b16 %v1689
      %v1733 = vunpack.c.l.b16 %v1690
      %v1734 = vunpack.c.h.b16 %v1690
      %v1735 = vunpack.c.l.b16 %v1691
      %v1736 = vunpack.c.h.b16 %v1691
      %v1737 = vunpack.c.l.b16 %v1692
      %v1738 = vunpack.c.h.b16 %v1692
      %v1739 = vunpack.c.l.b16 %v1693
      %v1740 = vunpack.c.h.b16 %v1693
      %v1741 = vunpack.c.l.b16 %v1694
      %v1742 = vunpack.c.h.b16 %v1694
      %v1743 = vpack.c.b16 %v1711, %v1711
      %v1744 = vpack.c.b16 %v1712, %v1712
      %v1745 = vpack.c.b16 %v1713, %v1713
      %v1746 = vpack.c.b16 %v1714, %v1714
      %v1747 = vpack.c.b16 %v1715, %v1715
      %v1748 = vpack.c.b16 %v1716, %v1716
      %v1749 = vpack.c.b16 %v1717, %v1717
      %v1750 = vpack.c.b16 %v1718, %v1718
      %v1751 = vpack.c.b16 %v1719, %v1719
      %v1752 = vpack.c.b16 %v1720, %v1720
      %v1753 = vpack.c.b16 %v1721, %v1721
      %v1754 = vpack.c.b16 %v1722, %v1722
      %v1755 = vpack.c.b16 %v1723, %v1723
      %v1756 = vpack.c.b16 %v1724, %v1724
      %v1757 = vpack.c.b16 %v1725, %v1725
      %v1758 = vpack.c.b16 %v1726, %v1726
      %v1759 = vpack.c.b16 %v1727, %v1727
      %v1760 = vpack.c.b16 %v1728, %v1728
      %v1761 = vpack.c.b16 %v1729, %v1729
      %v1762 = vpack.c.b16 %v1730, %v1730
      %v1763 = vpack.c.b16 %v1731, %v1731
      %v1764 = vpack.c.b16 %v1732, %v1732
      %v1765 = vpack.c.b16 %v1733, %v1733
      %v1766 = vpack.c.b16 %v1734, %v1734
      %v1767 = vpack.c.b16 %v1735, %v1735
      %v1768 = vpack.c.b16 %v1736, %v1736
      %v1769 = vpack.c.b16 %v1737, %v1737
      %v1770 = vpack.c.b16 %v1738, %v1738
      %v1771 = vpack.c.b16 %v1739, %v1739
      %v1772 = vpack.c.b16 %v1740, %v1740
      %v1773 = vpack.c.b16 %v1741, %v1741
      %v1774 = vpack.c.b16 %v1742, %v1742
      %1807 = vst [vmem:[%s201 + $0x100] sm:$0xf] %v1743
      %1808 = vst [vmem:[%s201 + $0x104] sm:$0xf] %v1744
      %1809 = vst [vmem:[%s201 + $0x108] sm:$0xf] %v1745
      %1810 = vst [vmem:[%s201 + $0x10c] sm:$0xf] %v1746
      %1811 = vst [vmem:[%s201 + $0x110] sm:$0xf] %v1747
      %1812 = vst [vmem:[%s201 + $0x114] sm:$0xf] %v1748
      %1813 = vst [vmem:[%s201 + $0x118] sm:$0xf] %v1749
      %1814 = vst [vmem:[%s201 + $0x11c] sm:$0xf] %v1750
      %1815 = vst [vmem:[%s201 + $0x120] sm:$0xf] %v1751
      %1816 = vst [vmem:[%s201 + $0x124] sm:$0xf] %v1752
      %1817 = vst [vmem:[%s201 + $0x128] sm:$0xf] %v1753
      %1818 = vst [vmem:[%s201 + $0x12c] sm:$0xf] %v1754
      %1819 = vst [vmem:[%s201 + $0x130] sm:$0xf] %v1755
      %1820 = vst [vmem:[%s201 + $0x134] sm:$0xf] %v1756
      %1821 = vst [vmem:[%s201 + $0x138] sm:$0xf] %v1757
      %1822 = vst [vmem:[%s201 + $0x13c] sm:$0xf] %v1758
      %1823 = vst [vmem:[%s201 + $0x140] sm:$0xf] %v1759
      %1824 = vst [vmem:[%s201 + $0x144] sm:$0xf] %v1760
      %1825 = vst [vmem:[%s201 + $0x148] sm:$0xf] %v1761
      %1826 = vst [vmem:[%s201 + $0x14c] sm:$0xf] %v1762
      %1827 = vst [vmem:[%s201 + $0x150] sm:$0xf] %v1763
      %1828 = vst [vmem:[%s201 + $0x154] sm:$0xf] %v1764
      %1829 = vst [vmem:[%s201 + $0x158] sm:$0xf] %v1765
      %1830 = vst [vmem:[%s201 + $0x15c] sm:$0xf] %v1766
      %1831 = vst [vmem:[%s201 + $0x160] sm:$0xf] %v1767
      %1832 = vst [vmem:[%s201 + $0x164] sm:$0xf] %v1768
      %1833 = vst [vmem:[%s201 + $0x168] sm:$0xf] %v1769
      %1834 = vst [vmem:[%s201 + $0x16c] sm:$0xf] %v1770
      %1835 = vst [vmem:[%s201 + $0x170] sm:$0xf] %v1771
      %1836 = vst [vmem:[%s201 + $0x174] sm:$0xf] %v1772
      %1837 = vst [vmem:[%s201 + $0x178] sm:$0xf] %v1773
      %1838 = vst [vmem:[%s201 + $0x17c] sm:$0xf] %v1774
      %v1839 = vld [vmem:[%s186 + $0x180] sm:$0xf]
      %v1840 = vld [vmem:[%s186 + $0x184] sm:$0xf]
      %v1841 = vld [vmem:[%s186 + $0x188] sm:$0xf]
      %v1842 = vld [vmem:[%s186 + $0x18c] sm:$0xf]
      %v1843 = vld [vmem:[%s186 + $0x190] sm:$0xf]
      %v1844 = vld [vmem:[%s186 + $0x194] sm:$0xf]
      %v1845 = vld [vmem:[%s186 + $0x198] sm:$0xf]
      %v1846 = vld [vmem:[%s186 + $0x19c] sm:$0xf]
      %v1847 = vld [vmem:[%s186 + $0x1a0] sm:$0xf]
      %v1848 = vld [vmem:[%s186 + $0x1a4] sm:$0xf]
      %v1849 = vld [vmem:[%s186 + $0x1a8] sm:$0xf]
      %v1850 = vld [vmem:[%s186 + $0x1ac] sm:$0xf]
      %v1851 = vld [vmem:[%s186 + $0x1b0] sm:$0xf]
      %v1852 = vld [vmem:[%s186 + $0x1b4] sm:$0xf]
      %v1853 = vld [vmem:[%s186 + $0x1b8] sm:$0xf]
      %v1854 = vld [vmem:[%s186 + $0x1bc] sm:$0xf]
      %v1855 = vld [vmem:[%s186 + $0x1c0] sm:$0xf]
      %v1856 = vld [vmem:[%s186 + $0x1c4] sm:$0xf]
      %v1857 = vld [vmem:[%s186 + $0x1c8] sm:$0xf]
      %v1858 = vld [vmem:[%s186 + $0x1cc] sm:$0xf]
      %v1859 = vld [vmem:[%s186 + $0x1d0] sm:$0xf]
      %v1860 = vld [vmem:[%s186 + $0x1d4] sm:$0xf]
      %v1861 = vld [vmem:[%s186 + $0x1d8] sm:$0xf]
      %v1862 = vld [vmem:[%s186 + $0x1dc] sm:$0xf]
      %v1863 = vld [vmem:[%s186 + $0x1e0] sm:$0xf]
      %v1864 = vld [vmem:[%s186 + $0x1e4] sm:$0xf]
      %v1865 = vld [vmem:[%s186 + $0x1e8] sm:$0xf]
      %v1866 = vld [vmem:[%s186 + $0x1ec] sm:$0xf]
      %v1867 = vld [vmem:[%s186 + $0x1f0] sm:$0xf]
      %v1868 = vld [vmem:[%s186 + $0x1f4] sm:$0xf]
      %v1869 = vld [vmem:[%s186 + $0x1f8] sm:$0xf]
      %v1870 = vld [vmem:[%s186 + $0x1fc] sm:$0xf]
      %v1871 = vld [vmem:[%s192] sm:$0xf]
      %v1872 = vld [vmem:[%s192 + $0x4] sm:$0xf]
      %v1873 = vld [vmem:[%s192 + $0x8] sm:$0xf]
      %v1874 = vld [vmem:[%s192 + $0xc] sm:$0xf]
      %v1875 = vld [vmem:[%s192 + $0x10] sm:$0xf]
      %v1876 = vld [vmem:[%s192 + $0x14] sm:$0xf]
      %v1877 = vld [vmem:[%s192 + $0x18] sm:$0xf]
      %v1878 = vld [vmem:[%s192 + $0x1c] sm:$0xf]
      %v1879 = vld [vmem:[%s192 + $0x20] sm:$0xf]
      %v1880 = vld [vmem:[%s192 + $0x24] sm:$0xf]
      %v1881 = vld [vmem:[%s192 + $0x28] sm:$0xf]
      %v1882 = vld [vmem:[%s192 + $0x2c] sm:$0xf]
      %v1883 = vld [vmem:[%s192 + $0x30] sm:$0xf]
      %v1884 = vld [vmem:[%s192 + $0x34] sm:$0xf]
      %v1885 = vld [vmem:[%s192 + $0x38] sm:$0xf]
      %v1886 = vld [vmem:[%s192 + $0x3c] sm:$0xf]
      %v1919 = vunpack.c.l.b16 %v1839
      %v1920 = vunpack.c.l.b16 %v1840
      %v1921 = vunpack.c.l.b16 %v1841
      %v1922 = vunpack.c.l.b16 %v1842
      %v1923 = vunpack.c.l.b16 %v1843
      %v1924 = vunpack.c.l.b16 %v1844
      %v1925 = vunpack.c.l.b16 %v1845
      %v1926 = vunpack.c.l.b16 %v1846
      %v1927 = vunpack.c.l.b16 %v1847
      %v1928 = vunpack.c.l.b16 %v1848
      %v1929 = vunpack.c.l.b16 %v1849
      %v1930 = vunpack.c.l.b16 %v1850
      %v1931 = vunpack.c.l.b16 %v1851
      %v1932 = vunpack.c.l.b16 %v1852
      %v1933 = vunpack.c.l.b16 %v1853
      %v1934 = vunpack.c.l.b16 %v1854
      %v1935 = vunpack.c.l.b16 %v1855
      %v1936 = vunpack.c.l.b16 %v1856
      %v1937 = vunpack.c.l.b16 %v1857
      %v1938 = vunpack.c.l.b16 %v1858
      %v1939 = vunpack.c.l.b16 %v1859
      %v1940 = vunpack.c.l.b16 %v1860
      %v1941 = vunpack.c.l.b16 %v1861
      %v1942 = vunpack.c.l.b16 %v1862
      %v1943 = vunpack.c.l.b16 %v1863
      %v1944 = vunpack.c.l.b16 %v1864
      %v1945 = vunpack.c.l.b16 %v1865
      %v1946 = vunpack.c.l.b16 %v1866
      %v1947 = vunpack.c.l.b16 %v1867
      %v1948 = vunpack.c.l.b16 %v1868
      %v1949 = vunpack.c.l.b16 %v1869
      %v1950 = vunpack.c.l.b16 %v1870
      %v1951 = vpack.c.b16 %v1920, %v1919
      %v1952 = vpack.c.b16 %v1922, %v1921
      %v1953 = vpack.c.b16 %v1924, %v1923
      %v1954 = vpack.c.b16 %v1926, %v1925
      %v1955 = vpack.c.b16 %v1928, %v1927
      %v1956 = vpack.c.b16 %v1930, %v1929
      %v1957 = vpack.c.b16 %v1932, %v1931
      %v1958 = vpack.c.b16 %v1934, %v1933
      %v1959 = vpack.c.b16 %v1936, %v1935
      %v1960 = vpack.c.b16 %v1938, %v1937
      %v1961 = vpack.c.b16 %v1940, %v1939
      %v1962 = vpack.c.b16 %v1942, %v1941
      %v1963 = vpack.c.b16 %v1944, %v1943
      %v1964 = vpack.c.b16 %v1946, %v1945
      %v1965 = vpack.c.b16 %v1948, %v1947
      %v1966 = vpack.c.b16 %v1950, %v1949
      %v1999 = vunpack.c.l.b16 %v1871
      %v2000 = vunpack.c.l.b16 %v1872
      %v2001 = vunpack.c.l.b16 %v1873
      %v2002 = vunpack.c.l.b16 %v1874
      %v2003 = vunpack.c.l.b16 %v1875
      %v2004 = vunpack.c.l.b16 %v1876
      %v2005 = vunpack.c.l.b16 %v1877
      %v2006 = vunpack.c.l.b16 %v1878
      %v2007 = vunpack.c.l.b16 %v1879
      %v2008 = vunpack.c.l.b16 %v1880
      %v2009 = vunpack.c.l.b16 %v1881
      %v2010 = vunpack.c.l.b16 %v1882
      %v2011 = vunpack.c.l.b16 %v1883
      %v2012 = vunpack.c.l.b16 %v1884
      %v2013 = vunpack.c.l.b16 %v1885
      %v2014 = vunpack.c.l.b16 %v1886
      %v2015 = vpack.c.b16 %v2000, %v1999
      %v2016 = vpack.c.b16 %v2002, %v2001
      %v2017 = vpack.c.b16 %v2004, %v2003
      %v2018 = vpack.c.b16 %v2006, %v2005
      %v2019 = vpack.c.b16 %v2008, %v2007
      %v2020 = vpack.c.b16 %v2010, %v2009
      %v2021 = vpack.c.b16 %v2012, %v2011
      %v2022 = vpack.c.b16 %v2014, %v2013
      %2031 = vmatprep.subr.bf16.mxu0 0
      %2032 = vmatpush1.bf16.msra.mxu0 %v2015
      %2033 = vmatprep.subr.bf16.mxu0 0
      %2034 = vmatpush1.bf16.msra.mxu0 %v2016
      %2035 = vmatprep.subr.bf16.mxu0 0
      %2036 = vmatpush1.bf16.msra.mxu0 %v2017
      %2037 = vmatprep.subr.bf16.mxu0 0
      %2038 = vmatpush1.bf16.msra.mxu0 %v2018
      %2039 = vmatprep.subr.bf16.mxu0 0
      %2040 = vmatpush1.bf16.msra.mxu0 %v2019
      %2041 = vmatprep.subr.bf16.mxu0 0
      %2042 = vmatpush1.bf16.msra.mxu0 %v2020
      %2043 = vmatprep.subr.bf16.mxu0 0
      %2044 = vmatpush1.bf16.msra.mxu0 %v2021
      %2045 = vmatprep.subr.bf16.mxu0 0
      %2046 = vmatpush1.bf16.msra.mxu0 %v2022
      %2047 = vmatprep.subr.bf16.mxu0 0
      %2048 = vmatpush1.bf16.msra.mxu0 0
      %2049 = vmatprep.subr.bf16.mxu0 0
      %2050 = vmatpush1.bf16.msra.mxu0 0
      %2051 = vmatprep.subr.bf16.mxu0 0
      %2052 = vmatpush1.bf16.msra.mxu0 0
      %2053 = vmatprep.subr.bf16.mxu0 0
      %2054 = vmatpush1.bf16.msra.mxu0 0
      %2055 = vmatprep.subr.bf16.mxu0 0
      %2056 = vmatpush1.bf16.msra.mxu0 0
      %2057 = vmatprep.subr.bf16.mxu0 0
      %2058 = vmatpush1.bf16.msra.mxu0 0
      %2059 = vmatprep.subr.bf16.mxu0 0
      %2060 = vmatpush1.bf16.msra.mxu0 0
      %2061 = vmatprep.subr.bf16.mxu0 0
      %2062 = vmatpush1.bf16.msra.mxu0 0
      %2063 = vmatprep.mubr.bf16.mxu0 0
      %2064 = vmatmul.mubr.bf16.gmra.mrb[0].mxu0 %v1951
      %v2065 = vpop.f32.mrb[0].mxu0
      %v2066 = vadd.f32 0.0, %v2065
      %v2067 = vpop.f32.mrb[0].mxu0
      %v2068 = vpop.f32.mrb[0].mxu0
      %v2069 = vadd.f32 0.0, %v2068
      %v2070 = vpop.f32.mrb[0].mxu0
      %2071 = vmatprep.mubr.bf16.mxu0 0
      %2072 = vmatmul.mubr.bf16.gmra.mrb[0].mxu0 %v1952
      %v2073 = vpop.f32.mrb[0].mxu0
      %v2074 = vadd.f32 0.0, %v2073
      %v2075 = vpop.f32.mrb[0].mxu0
      %v2076 = vpop.f32.mrb[0].mxu0
      %v2077 = vadd.f32 0.0, %v2076
      %v2078 = vpop.f32.mrb[0].mxu0
      %2079 = vmatprep.mubr.bf16.mxu0 0
      %2080 = vmatmul.mubr.bf16.gmra.mrb[0].mxu0 %v1953
      %v2081 = vpop.f32.mrb[0].mxu0
      %v2082 = vadd.f32 0.0, %v2081
      %v2083 = vpop.f32.mrb[0].mxu0
      %v2084 = vpop.f32.mrb[0].mxu0
      %v2085 = vadd.f32 0.0, %v2084
      %v2086 = vpop.f32.mrb[0].mxu0
      %2087 = vmatprep.mubr.bf16.mxu0 0
      %2088 = vmatmul.mubr.bf16.gmra.mrb[0].mxu0 %v1954
      %v2089 = vpop.f32.mrb[0].mxu0
      %v2090 = vadd.f32 0.0, %v2089
      %v2091 = vpop.f32.mrb[0].mxu0
      %v2092 = vpop.f32.mrb[0].mxu0
      %v2093 = vadd.f32 0.0, %v2092
      %v2094 = vpop.f32.mrb[0].mxu0
      %2095 = vmatprep.mubr.bf16.mxu0 0
      %2096 = vmatmul.mubr.bf16.gmra.mrb[0].mxu0 %v1955
      %v2097 = vpop.f32.mrb[0].mxu0
      %v2098 = vadd.f32 0.0, %v2097
      %v2099 = vpop.f32.mrb[0].mxu0
      %v2100 = vpop.f32.mrb[0].mxu0
      %v2101 = vadd.f32 0.0, %v2100
      %v2102 = vpop.f32.mrb[0].mxu0
      %2103 = vmatprep.mubr.bf16.mxu0 0
      %2104 = vmatmul.mubr.bf16.gmra.mrb[0].mxu0 %v1956
      %v2105 = vpop.f32.mrb[0].mxu0
      %v2106 = vadd.f32 0.0, %v2105
      %v2107 = vpop.f32.mrb[0].mxu0
      %v2108 = vpop.f32.mrb[0].mxu0
      %v2109 = vadd.f32 0.0, %v2108
      %v2110 = vpop.f32.mrb[0].mxu0
      %2111 = vmatprep.mubr.bf16.mxu0 0
      %2112 = vmatmul.mubr.bf16.gmra.mrb[0].mxu0 %v1957
      %v2113 = vpop.f32.mrb[0].mxu0
      %v2114 = vadd.f32 0.0, %v2113
      %v2115 = vpop.f32.mrb[0].mxu0
      %v2116 = vpop.f32.mrb[0].mxu0
      %v2117 = vadd.f32 0.0, %v2116
      %v2118 = vpop.f32.mrb[0].mxu0
      %2119 = vmatprep.mubr.bf16.mxu0 0
      %2120 = vmatmul.mubr.bf16.gmra.mrb[0].mxu0 %v1958
      %v2121 = vpop.f32.mrb[0].mxu0
      %v2122 = vadd.f32 0.0, %v2121
      %v2123 = vpop.f32.mrb[0].mxu0
      %v2124 = vpop.f32.mrb[0].mxu0
      %v2125 = vadd.f32 0.0, %v2124
      %v2126 = vpop.f32.mrb[0].mxu0
      %2127 = vmatprep.mubr.bf16.mxu0 0
      %2128 = vmatmul.mubr.bf16.gmra.mrb[0].mxu0 %v1959
      %v2129 = vpop.f32.mrb[0].mxu0
      %v2130 = vadd.f32 0.0, %v2129
      %v2131 = vpop.f32.mrb[0].mxu0
      %v2132 = vpop.f32.mrb[0].mxu0
      %v2133 = vadd.f32 0.0, %v2132
      %v2134 = vpop.f32.mrb[0].mxu0
      %2135 = vmatprep.mubr.bf16.mxu0 0
      %2136 = vmatmul.mubr.bf16.gmra.mrb[0].mxu0 %v1960
      %v2137 = vpop.f32.mrb[0].mxu0
      %v2138 = vadd.f32 0.0, %v2137
      %v2139 = vpop.f32.mrb[0].mxu0
      %v2140 = vpop.f32.mrb[0].mxu0
      %v2141 = vadd.f32 0.0, %v2140
      %v2142 = vpop.f32.mrb[0].mxu0
      %2143 = vmatprep.mubr.bf16.mxu0 0
      %2144 = vmatmul.mubr.bf16.gmra.mrb[0].mxu0 %v1961
      %v2145 = vpop.f32.mrb[0].mxu0
      %v2146 = vadd.f32 0.0, %v2145
      %v2147 = vpop.f32.mrb[0].mxu0
      %v2148 = vpop.f32.mrb[0].mxu0
      %v2149 = vadd.f32 0.0, %v2148
      %v2150 = vpop.f32.mrb[0].mxu0
      %2151 = vmatprep.mubr.bf16.mxu0 0
      %2152 = vmatmul.mubr.bf16.gmra.mrb[0].mxu0 %v1962
      %v2153 = vpop.f32.mrb[0].mxu0
      %v2154 = vadd.f32 0.0, %v2153
      %v2155 = vpop.f32.mrb[0].mxu0
      %v2156 = vpop.f32.mrb[0].mxu0
      %v2157 = vadd.f32 0.0, %v2156
      %v2158 = vpop.f32.mrb[0].mxu0
      %2159 = vmatprep.mubr.bf16.mxu0 0
      %2160 = vmatmul.mubr.bf16.gmra.mrb[0].mxu0 %v1963
      %v2161 = vpop.f32.mrb[0].mxu0
      %v2162 = vadd.f32 0.0, %v2161
      %v2163 = vpop.f32.mrb[0].mxu0
      %v2164 = vpop.f32.mrb[0].mxu0
      %v2165 = vadd.f32 0.0, %v2164
      %v2166 = vpop.f32.mrb[0].mxu0
      %2167 = vmatprep.mubr.bf16.mxu0 0
      %2168 = vmatmul.mubr.bf16.gmra.mrb[0].mxu0 %v1964
      %v2169 = vpop.f32.mrb[0].mxu0
      %v2170 = vadd.f32 0.0, %v2169
      %v2171 = vpop.f32.mrb[0].mxu0
      %v2172 = vpop.f32.mrb[0].mxu0
      %v2173 = vadd.f32 0.0, %v2172
      %v2174 = vpop.f32.mrb[0].mxu0
      %2175 = vmatprep.mubr.bf16.mxu0 0
      %2176 = vmatmul.mubr.bf16.gmra.mrb[0].mxu0 %v1965
      %v2177 = vpop.f32.mrb[0].mxu0
      %v2178 = vadd.f32 0.0, %v2177
      %v2179 = vpop.f32.mrb[0].mxu0
      %v2180 = vpop.f32.mrb[0].mxu0
      %v2181 = vadd.f32 0.0, %v2180
      %v2182 = vpop.f32.mrb[0].mxu0
      %2183 = vmatprep.mubr.bf16.mxu0 0
      %2184 = vmatmul.mubr.bf16.gmra.mrb[0].mxu0 %v1966
      %v2185 = vpop.f32.mrb[0].mxu0
      %v2186 = vadd.f32 0.0, %v2185
      %v2187 = vpop.f32.mrb[0].mxu0
      %v2188 = vpop.f32.mrb[0].mxu0
      %v2189 = vadd.f32 0.0, %v2188
      %v2190 = vpop.f32.mrb[0].mxu0
      %2191 = vdwg.mxu0
      %v2192 = vtanh.pop %v2066
      %v2193 = vtanh.pop %v2069
      %v2194 = vtanh.pop %v2074
      %v2195 = vtanh.pop %v2077
      %v2196 = vtanh.pop %v2082
      %v2197 = vtanh.pop %v2085
      %v2198 = vtanh.pop %v2090
      %v2199 = vtanh.pop %v2093
      %v2200 = vtanh.pop %v2098
      %v2201 = vtanh.pop %v2101
      %v2202 = vtanh.pop %v2106
      %v2203 = vtanh.pop %v2109
      %v2204 = vtanh.pop %v2114
      %v2205 = vtanh.pop %v2117
      %v2206 = vtanh.pop %v2122
      %v2207 = vtanh.pop %v2125
      %v2208 = vtanh.pop %v2130
      %v2209 = vtanh.pop %v2133
      %v2210 = vtanh.pop %v2138
      %v2211 = vtanh.pop %v2141
      %v2212 = vtanh.pop %v2146
      %v2213 = vtanh.pop %v2149
      %v2214 = vtanh.pop %v2154
      %v2215 = vtanh.pop %v2157
      %v2216 = vtanh.pop %v2162
      %v2217 = vtanh.pop %v2165
      %v2218 = vtanh.pop %v2170
      %v2219 = vtanh.pop %v2173
      %v2220 = vtanh.pop %v2178
      %v2221 = vtanh.pop %v2181
      %v2222 = vtanh.pop %v2186
      %v2223 = vtanh.pop %v2189
      %v2224 = vpack.c.bf16 %v2193, %v2192
      %v2225 = vpack.c.bf16 %v2195, %v2194
      %v2226 = vpack.c.bf16 %v2197, %v2196
      %v2227 = vpack.c.bf16 %v2199, %v2198
      %v2228 = vpack.c.bf16 %v2201, %v2200
      %v2229 = vpack.c.bf16 %v2203, %v2202
      %v2230 = vpack.c.bf16 %v2205, %v2204
      %v2231 = vpack.c.bf16 %v2207, %v2206
      %v2232 = vpack.c.bf16 %v2209, %v2208
      %v2233 = vpack.c.bf16 %v2211, %v2210
      %v2234 = vpack.c.bf16 %v2213, %v2212
      %v2235 = vpack.c.bf16 %v2215, %v2214
      %v2236 = vpack.c.bf16 %v2217, %v2216
      %v2237 = vpack.c.bf16 %v2219, %v2218
      %v2238 = vpack.c.bf16 %v2221, %v2220
      %v2239 = vpack.c.bf16 %v2223, %v2222
      %v2256 = vunpack.c.l.b16 %v2224
      %v2257 = vunpack.c.h.b16 %v2224
      %v2258 = vunpack.c.l.b16 %v2225
      %v2259 = vunpack.c.h.b16 %v2225
      %v2260 = vunpack.c.l.b16 %v2226
      %v2261 = vunpack.c.h.b16 %v2226
      %v2262 = vunpack.c.l.b16 %v2227
      %v2263 = vunpack.c.h.b16 %v2227
      %v2264 = vunpack.c.l.b16 %v2228
      %v2265 = vunpack.c.h.b16 %v2228
      %v2266 = vunpack.c.l.b16 %v2229
      %v2267 = vunpack.c.h.b16 %v2229
      %v2268 = vunpack.c.l.b16 %v2230
      %v2269 = vunpack.c.h.b16 %v2230
      %v2270 = vunpack.c.l.b16 %v2231
      %v2271 = vunpack.c.h.b16 %v2231
      %v2272 = vunpack.c.l.b16 %v2232
      %v2273 = vunpack.c.h.b16 %v2232
      %v2274 = vunpack.c.l.b16 %v2233
      %v2275 = vunpack.c.h.b16 %v2233
      %v2276 = vunpack.c.l.b16 %v2234
      %v2277 = vunpack.c.h.b16 %v2234
      %v2278 = vunpack.c.l.b16 %v2235
      %v2279 = vunpack.c.h.b16 %v2235
      %v2280 = vunpack.c.l.b16 %v2236
      %v2281 = vunpack.c.h.b16 %v2236
      %v2282 = vunpack.c.l.b16 %v2237
      %v2283 = vunpack.c.h.b16 %v2237
      %v2284 = vunpack.c.l.b16 %v2238
      %v2285 = vunpack.c.h.b16 %v2238
      %v2286 = vunpack.c.l.b16 %v2239
      %v2287 = vunpack.c.h.b16 %v2239
      %v2288 = vpack.c.b16 %v2256, %v2256
      %v2289 = vpack.c.b16 %v2257, %v2257
      %v2290 = vpack.c.b16 %v2258, %v2258
      %v2291 = vpack.c.b16 %v2259, %v2259
      %v2292 = vpack.c.b16 %v2260, %v2260
      %v2293 = vpack.c.b16 %v2261, %v2261
      %v2294 = vpack.c.b16 %v2262, %v2262
      %v2295 = vpack.c.b16 %v2263, %v2263
      %v2296 = vpack.c.b16 %v2264, %v2264
      %v2297 = vpack.c.b16 %v2265, %v2265
      %v2298 = vpack.c.b16 %v2266, %v2266
      %v2299 = vpack.c.b16 %v2267, %v2267
      %v2300 = vpack.c.b16 %v2268, %v2268
      %v2301 = vpack.c.b16 %v2269, %v2269
      %v2302 = vpack.c.b16 %v2270, %v2270
      %v2303 = vpack.c.b16 %v2271, %v2271
      %v2304 = vpack.c.b16 %v2272, %v2272
      %v2305 = vpack.c.b16 %v2273, %v2273
      %v2306 = vpack.c.b16 %v2274, %v2274
      %v2307 = vpack.c.b16 %v2275, %v2275
      %v2308 = vpack.c.b16 %v2276, %v2276
      %v2309 = vpack.c.b16 %v2277, %v2277
      %v2310 = vpack.c.b16 %v2278, %v2278
      %v2311 = vpack.c.b16 %v2279, %v2279
      %v2312 = vpack.c.b16 %v2280, %v2280
      %v2313 = vpack.c.b16 %v2281, %v2281
      %v2314 = vpack.c.b16 %v2282, %v2282
      %v2315 = vpack.c.b16 %v2283, %v2283
      %v2316 = vpack.c.b16 %v2284, %v2284
      %v2317 = vpack.c.b16 %v2285, %v2285
      %v2318 = vpack.c.b16 %v2286, %v2286
      %v2319 = vpack.c.b16 %v2287, %v2287
      %2352 = vst [vmem:[%s201 + $0x180] sm:$0xf] %v2288
      %2353 = vst [vmem:[%s201 + $0x184] sm:$0xf] %v2289
      %2354 = vst [vmem:[%s201 + $0x188] sm:$0xf] %v2290
      %2355 = vst [vmem:[%s201 + $0x18c] sm:$0xf] %v2291
      %2356 = vst [vmem:[%s201 + $0x190] sm:$0xf] %v2292
      %2357 = vst [vmem:[%s201 + $0x194] sm:$0xf] %v2293
      %2358 = vst [vmem:[%s201 + $0x198] sm:$0xf] %v2294
      %2359 = vst [vmem:[%s201 + $0x19c] sm:$0xf] %v2295
      %2360 = vst [vmem:[%s201 + $0x1a0] sm:$0xf] %v2296
      %2361 = vst [vmem:[%s201 + $0x1a4] sm:$0xf] %v2297
      %2362 = vst [vmem:[%s201 + $0x1a8] sm:$0xf] %v2298
      %2363 = vst [vmem:[%s201 + $0x1ac] sm:$0xf] %v2299
      %2364 = vst [vmem:[%s201 + $0x1b0] sm:$0xf] %v2300
      %2365 = vst [vmem:[%s201 + $0x1b4] sm:$0xf] %v2301
      %2366 = vst [vmem:[%s201 + $0x1b8] sm:$0xf] %v2302
      %2367 = vst [vmem:[%s201 + $0x1bc] sm:$0xf] %v2303
      %2368 = vst [vmem:[%s201 + $0x1c0] sm:$0xf] %v2304
      %2369 = vst [vmem:[%s201 + $0x1c4] sm:$0xf] %v2305
      %2370 = vst [vmem:[%s201 + $0x1c8] sm:$0xf] %v2306
      %2371 = vst [vmem:[%s201 + $0x1cc] sm:$0xf] %v2307
      %2372 = vst [vmem:[%s201 + $0x1d0] sm:$0xf] %v2308
      %2373 = vst [vmem:[%s201 + $0x1d4] sm:$0xf] %v2309
      %2374 = vst [vmem:[%s201 + $0x1d8] sm:$0xf] %v2310
      %2375 = vst [vmem:[%s201 + $0x1dc] sm:$0xf] %v2311
      %2376 = vst [vmem:[%s201 + $0x1e0] sm:$0xf] %v2312
      %2377 = vst [vmem:[%s201 + $0x1e4] sm:$0xf] %v2313
      %2378 = vst [vmem:[%s201 + $0x1e8] sm:$0xf] %v2314
      %2379 = vst [vmem:[%s201 + $0x1ec] sm:$0xf] %v2315
      %2380 = vst [vmem:[%s201 + $0x1f0] sm:$0xf] %v2316
      %2381 = vst [vmem:[%s201 + $0x1f4] sm:$0xf] %v2317
      %2382 = vst [vmem:[%s201 + $0x1f8] sm:$0xf] %v2318
      %2383 = vst [vmem:[%s201 + $0x1fc] sm:$0xf] %v2319
      %s2384 = smul.u32 128, %s18
      %p2385 = scmp.lt.s32.totalorder %s17, 3
      %s2386 = scalar_select %p2385, %s17, 3
      %p2387 = scmp.lt.s32.totalorder %s2384, 255
      %s2388 = scalar_select %p2387, %s2384, 255
      %s2389 = smul.addr %s2386, 256
      %s2390 = sadd.s32 %s2388, %s2389
      %s2391 = smul.addr %s2390, 4
      %s2392 = scalar_lea.vmem %s2, %s2391
      // Predicated region
      $region29: #{generator_forward.9} parent=27 // pred_check
        %p2393 = pneg %p99
      $region30: #{generator_forward.9} parent=27 // pred_check_branch
        %2395 = sbr.rel (%p2393) target = $region32
      $region31: #{generator_forward.9} parent=27 // pred_region
        %s2396 = smul.u32 128, %s18
      $region32: #{generator_forward.9} parent=27 // pred_fallthru
        _
    $region28: #{generator_forward.9} parent=5 // pred_fallthru
      _
    %p2397 = scmp.le.s32.totalorder 2, %s8
    // Predicated region
    $region33: #{generator_forward.9} parent=5 // pred_check
      %p2398 = pneg %p2397
    $region34: #{generator_forward.9} parent=5 // pred_check_branch
      %2400 = sbr.rel (%p2398) target = $region36
    $region35: #{generator_forward.9} parent=5 // pred_region
      %s2401 = ssub.s32 %s8, 2
      // Predicated region
      $region37: #{generator_forward.9} parent=35 // pred_check
        %p2402 = pneg %p105
      $region38: #{generator_forward.9} parent=35 // pred_check_branch
        %2404 = sbr.rel (%p2402) target = $region40
      $region39: #{generator_forward.9} parent=35 // pred_region
        %s2405 = smul.u32 128, %s20
        %p2406 = scmp.lt.s32.totalorder %s19, 3
        %s2407 = scalar_select %p2406, %s19, 3
        %p2408 = scmp.lt.s32.totalorder %s2405, 255
        %s2409 = scalar_select %p2408, %s2405, 255
        %s2410 = smul.addr %s2407, 256
        %s2411 = sadd.s32 %s2409, %s2410
        %s2412 = smul.addr %s2411, 4
        %s2413 = scalar_lea.vmem %s2, %s2412
      $region40: #{generator_forward.9} parent=35 // pred_fallthru
        _
    $region36: #{generator_forward.9} parent=5 // pred_fallthru
      _
  $region6: #{generator_forward.9} parent=0 // loop_footer
    %s12 = sadd.s32 1, %s8
  $region7: #{generator_forward.9} parent=0 // loop_footer_branch
    %7 = sbr.rel target = $region3
  $region8: #{generator_forward.9} parent=0 // loop_exit
    _

</llo_original>
